<compile_context>
chip_gen: v6e
topology: v6e:2x2x1
jax: 0.10.0
libtpu: 0.0.40
codegen_flags: <defaults>
</compile_context>

<pallas_src>
import functools
import math

import jax
import jax.numpy as jnp
from jax.experimental import pallas as pl
from jax.experimental.pallas import tpu as pltpu


# ----------------------------------------------------------------------------
# Fused kernel: one grid step == b_step batch items, everything VMEM-resident.
# ----------------------------------------------------------------------------
def fused_action_recognizer_kernel(
    x_ref, akron_ref, pool_ref,
    gw1_ref, gb1_ref, gw2_ref, gb2_ref, gw3_ref, gb3_ref,
    pw_ref, pb_ref, pe_ref,
    wqkv_ref, bqkv_ref, wo_ref, bo_ref,
    w1_ref, b1_ref, w2_ref, b2_ref,
    g1_ref, be1_ref, g2_ref, be2_ref,
    cw_ref, cb_ref,
    o_ref,
    *, nhead, num_layers, b_step, seq_len):
    f32 = jnp.float32

    # ---------------- PoseGCN: 3x (A @ X @ W + b), ReLU on first two --------
    # Rows are (batch, frame, joint) flattened; akron = I_{b_step*T} (x) A_hat.
    h = x_ref[...].astype(f32)                    # (n_rows, F)
    akron = akron_ref[...]                        # (n_rows, n_rows)
    for w_ref, b_ref, relu in ((gw1_ref, gb1_ref, True),
                               (gw2_ref, gb2_ref, True),
                               (gw3_ref, gb3_ref, False)):
        xw = jnp.dot(h, w_ref[...], preferred_element_type=f32)   # X @ W
        h = jnp.dot(akron, xw, preferred_element_type=f32) + b_ref[...]
        if relu:
            h = jnp.maximum(h, 0.0)

    # joint mean-pool (padded joints excluded by the pooling matrix)
    emb = jnp.dot(pool_ref[...], h, preferred_element_type=f32)   # (B*T, Hg)

    # ---------------- input projection + positional encoding ----------------
    seq = (jnp.dot(emb, pw_ref[...], preferred_element_type=f32)
           + pb_ref[...] + pe_ref[...])                            # (B*T, D)

    n_seq, d = seq.shape
    dk = d // nhead
    scale = 1.0 / math.sqrt(dk)

    # ---------------- transformer encoder layers (post-norm, eval) ----------
    for l in range(num_layers):
        xl = seq                                                   # (B*T, D)

        # fused QKV projection: one (B*T, D) @ (D, 3D) matmul
        qkv = (jnp.dot(xl, wqkv_ref[l], preferred_element_type=f32)
               + bqkv_ref[l])                                      # (B*T, 3D)
        qkv3 = qkv.reshape(b_step, seq_len, 3 * d)                 # (B, T, 3D)

        ctx_parts = []
        for hh in range(nhead):                                    # static loop
            q_h = qkv3[..., hh * dk:(hh + 1) * dk]                 # (B, T, dk)
            k_h = qkv3[..., d + hh * dk: d + (hh + 1) * dk]
            v_h = qkv3[..., 2 * d + hh * dk: 2 * d + (hh + 1) * dk]
            s = jnp.einsum('bqe,bke->bqk', q_h, k_h,
                           preferred_element_type=f32) * scale     # (B, T, T)
            s = s - jnp.max(s, axis=-1, keepdims=True)
            p = jnp.exp(s)
            p = p * pl.reciprocal(jnp.sum(p, axis=-1, keepdims=True),
                                  approx=True)
            ctx_parts.append(jnp.einsum('bqk,bke->bqe', p, v_h,
                                        preferred_element_type=f32))

        # concat heads on the lane axis -> single output projection matmul
        ctx = jnp.concatenate(ctx_parts, axis=-1).reshape(n_seq, d)
        attn = (jnp.dot(ctx, wo_ref[l], preferred_element_type=f32)
                + bo_ref[l])                                       # (B*T, D)

        # residual + LayerNorm 1
        y = xl + attn
        mu = jnp.mean(y, axis=-1, keepdims=True)
        var = jnp.mean((y - mu) ** 2, axis=-1, keepdims=True)
        y = (y - mu) * jax.lax.rsqrt(var + 1e-5) * g1_ref[l] + be1_ref[l]

        # feed-forward (ReLU)
        f = jnp.maximum(
            jnp.dot(y, w1_ref[l], preferred_element_type=f32) + b1_ref[l], 0.0)
        f = jnp.dot(f, w2_ref[l], preferred_element_type=f32) + b2_ref[l]

        # residual + LayerNorm 2
        z = y + f
        mu = jnp.mean(z, axis=-1, keepdims=True)
        var = jnp.mean((z - mu) ** 2, axis=-1, keepdims=True)
        seq = (z - mu) * jax.lax.rsqrt(var + 1e-5) * g2_ref[l] + be2_ref[l]

    # ---------------- time mean-pool + classifier ---------------------------
    pooled = jnp.mean(seq.reshape(b_step, seq_len, d), axis=1)     # (B, D)
    logits = (jnp.dot(pooled, cw_ref[...], preferred_element_type=f32)
              + cb_ref[...])                                       # (B, C)
    o_ref[...] = logits.astype(o_ref.dtype)


# ----------------------------------------------------------------------------
# Wrapper
# ----------------------------------------------------------------------------
def action_recognizer_forward(params, batch, cfg, b_step=None):
    b, t, v, f = batch.shape
    d = cfg['d_model']
    nhead = cfg['nhead']
    num_layers = cfg['num_layers']
    c = cfg['num_classes']
    if b_step is None:
        b_step = b                      # whole batch per grid step by default
    assert b % b_step == 0, "batch must be divisible by b_step"
    assert d % nhead == 0, "d_model must be divisible by nhead"
    assert d % 2 == 0, "sinusoidal PE assumes even d_model"

    v_pad = ((v + 7) // 8) * 8          # pad joints to a sublane multiple
    n_seq = b_step * t                  # frames per grid step
    n_rows = n_seq * v_pad              # GCN rows per grid step

    # wrapper-side (plain XLA) constant prep -------------------------------
    xp = jnp.pad(batch.astype(jnp.float32),
                 ((0, 0), (0, 0), (0, v_pad - v), (0, 0)))
    x_flat = xp.reshape(b * t * v_pad, f)                  # (B*T*Vp, F)

    a_pad = jnp.pad(params['A'], ((0, v_pad - v), (0, v_pad - v)))
    eye = jnp.eye(n_seq, dtype=jnp.float32)
    a_kron = jnp.kron(eye, a_pad)                          # (n_rows, n_rows)
    pool_row = jnp.concatenate(
        [jnp.full((1, v), 1.0 / v, jnp.float32),
         jnp.zeros((1, v_pad - v), jnp.float32)], axis=1)
    pool = jnp.kron(eye, pool_row)                         # (n_seq, n_rows)
    pe_t = jnp.tile(params['pos_enc'][:t], (b_step, 1))    # (n_seq, D)

    g = params['gcn']
    e = params['enc']
    ws = [a_kron, pool,
          g['w1'], g['b1'], g['w2'], g['b2'], g['w3'], g['b3'],
          params['proj']['w'], params['proj']['b'], pe_t,
          e['wqkv'], e['bqkv'], e['wo'], e['bo'],
          e['w1'], e['b1'], e['w2'], e['b2'],
          e['g1'], e['be1'], e['g2'], e['be2'],
          params['cls']['w'], params['cls']['b']]

    # constants / weights: VMEM-resident, NOT pipelined (no double-buffering)
    vmem_spec = pl.BlockSpec(memory_space=pltpu.MemorySpace.VMEM)

    kernel = functools.partial(fused_action_recognizer_kernel,
                               nhead=nhead, num_layers=num_layers,
                               b_step=b_step, seq_len=t)
    return pl.pallas_call(
        kernel,
        grid=(b // b_step,),
        in_specs=[pl.BlockSpec((n_rows, f), lambda i: (i, 0))]
                 + [vmem_spec] * len(ws),
        out_specs=pl.BlockSpec((b_step, c), lambda i: (i, 0)),
        out_shape=jax.ShapeDtypeStruct((b, c), jnp.float32),
        compiler_params=pltpu.CompilerParams(
            dimension_semantics=("parallel",)),
    )(x_flat, *ws)


# ----------------------------------------------------------------------------
# Parameters
# ----------------------------------------------------------------------------
def normalized_adjacency(num_joints):
    # COCO-17 skeleton + self loops, symmetric normalization.
    edges = [(0, 1), (0, 2), (1, 3), (2, 4), (0, 5), (0, 6), (5, 7), (7, 9),
             (6, 8), (8, 10), (5, 11), (6, 12), (11, 13), (13, 15), (12, 14),
             (14, 16), (5, 6), (11, 12)]
    a = jnp.eye(num_joints, dtype=jnp.float32)
    for i, j in edges:
        if i < num_joints and j < num_joints:
            a = a.at[i, j].set(1.0)
            a = a.at[j, i].set(1.0)
    deg = jnp.sum(a, axis=1)
    d_inv_sqrt = 1.0 / jnp.sqrt(deg)
    return a * d_inv_sqrt[:, None] * d_inv_sqrt[None, :]


def sinusoidal_pe(max_len, d_model):
    pos = jnp.arange(max_len, dtype=jnp.float32)[:, None]
    i = jnp.arange(0, d_model, 2, dtype=jnp.float32)
    div = jnp.exp(-math.log(10000.0) * i / d_model)
    pe = jnp.zeros((max_len, d_model), jnp.float32)
    pe = pe.at[:, 0::2].set(jnp.sin(pos * div))
    pe = pe.at[:, 1::2].set(jnp.cos(pos * div))
    return pe


def init_params(key, cfg, num_joints, max_len):
    d = cfg['d_model']
    dff = cfg['dim_feedforward']
    num_layers = cfg['num_layers']
    keys = iter(jax.random.split(key, 64))

    def w(shape, scale=0.1):
        return scale * jax.random.normal(next(keys), shape, dtype=jnp.float32)

    params = {
        'A': normalized_adjacency(num_joints),
        'gcn': {
            'w1': w((cfg['gcn_num_features'], cfg['gcn_hidden_dim1'])),
            'b1': jnp.zeros((1, cfg['gcn_hidden_dim1']), jnp.float32),
            'w2': w((cfg['gcn_hidden_dim1'], cfg['gcn_hidden_dim2'])),
            'b2': jnp.zeros((1, cfg['gcn_hidden_dim2']), jnp.float32),
            'w3': w((cfg['gcn_hidden_dim2'], cfg['gcn_output_dim'])),
            'b3': jnp.zeros((1, cfg['gcn_output_dim']), jnp.float32),
        },
        'proj': {'w': w((cfg['gcn_output_dim'], d)),
                 'b': jnp.zeros((1, d), jnp.float32)},
        'pos_enc': sinusoidal_pe(max_len, d),
        'cls': {'w': w((d, cfg['num_classes'])),
                'b': jnp.zeros((1, cfg['num_classes']), jnp.float32)},
    }

    # Encoder weights, layer-stacked, standard (x @ W) layouts:
    #   wqkv = in_proj_weight^T (D, 3D), wo = out_proj.weight^T (D, D), etc.
    enc = {k: [] for k in ('wqkv', 'bqkv', 'wo', 'bo',
                           'w1', 'b1', 'w2', 'b2',
                           'g1', 'be1', 'g2', 'be2')}
    for _ in range(num_layers):
        enc['wqkv'].append(w((d, 3 * d)))
        enc['bqkv'].append(jnp.zeros((1, 3 * d), jnp.float32))
        enc['wo'].append(w((d, d)))
        enc['bo'].append(jnp.zeros((1, d), jnp.float32))
        enc['w1'].append(w((d, dff)))
        enc['b1'].append(jnp.zeros((1, dff), jnp.float32))
        enc['w2'].append(w((dff, d)))
        enc['b2'].append(jnp.zeros((1, d), jnp.float32))
        enc['g1'].append(jnp.ones((1, d), jnp.float32))
        enc['be1'].append(jnp.zeros((1, d), jnp.float32))
        enc['g2'].append(jnp.ones((1, d), jnp.float32))
        enc['be2'].append(jnp.zeros((1, d), jnp.float32))
    params['enc'] = {k: jnp.stack(vv) for k, vv in enc.items()}
    return params


# ----------------------------------------------------------------------------
# Demo
# ----------------------------------------------------------------------------
if __name__ == "__main__":
    B, T, V = 2, 8, 17
    cfg = dict(gcn_num_features=3, gcn_hidden_dim1=16, gcn_hidden_dim2=16,
               gcn_output_dim=32, d_model=32, nhead=4, num_layers=2,
               num_features=32, dim_feedforward=64, num_classes=2)

    key = jax.random.PRNGKey(0)
    pkey, xkey = jax.random.split(key)
    params = init_params(pkey, cfg, num_joints=V, max_len=T)
    batch = jax.random.normal(xkey, (B, T, V, cfg['gcn_num_features']),
                              dtype=jnp.float32)

    out = action_recognizer_forward(params, batch, cfg)
    out = jax.block_until_ready(out)
    assert out.shape == (B, cfg['num_classes']), out.shape
    assert jnp.all(jnp.isfinite(out))
    print("KERNEL_OK")
</pallas_src>

<mosaic_0001>
module attributes {stable_mosaic.version = 11 : i64} {
  func.func @fused_action_recognizer_kernel(%arg0: i32, %arg1: memref<384x3xf32, #tpu.memory_space<vmem>>, %arg2: memref<384x384xf32, #tpu.memory_space<vmem>>, %arg3: memref<16x384xf32, #tpu.memory_space<vmem>>, %arg4: memref<3x16xf32, #tpu.memory_space<vmem>>, %arg5: memref<1x16xf32, #tpu.memory_space<vmem>>, %arg6: memref<16x16xf32, #tpu.memory_space<vmem>>, %arg7: memref<1x16xf32, #tpu.memory_space<vmem>>, %arg8: memref<16x32xf32, #tpu.memory_space<vmem>>, %arg9: memref<1x32xf32, #tpu.memory_space<vmem>>, %arg10: memref<32x32xf32, #tpu.memory_space<vmem>>, %arg11: memref<1x32xf32, #tpu.memory_space<vmem>>, %arg12: memref<16x32xf32, #tpu.memory_space<vmem>>, %arg13: memref<2x32x96xf32, #tpu.memory_space<vmem>>, %arg14: memref<2x1x96xf32, #tpu.memory_space<vmem>>, %arg15: memref<2x32x32xf32, #tpu.memory_space<vmem>>, %arg16: memref<2x1x32xf32, #tpu.memory_space<vmem>>, %arg17: memref<2x32x64xf32, #tpu.memory_space<vmem>>, %arg18: memref<2x1x64xf32, #tpu.memory_space<vmem>>, %arg19: memref<2x64x32xf32, #tpu.memory_space<vmem>>, %arg20: memref<2x1x32xf32, #tpu.memory_space<vmem>>, %arg21: memref<2x1x32xf32, #tpu.memory_space<vmem>>, %arg22: memref<2x1x32xf32, #tpu.memory_space<vmem>>, %arg23: memref<2x1x32xf32, #tpu.memory_space<vmem>>, %arg24: memref<2x1x32xf32, #tpu.memory_space<vmem>>, %arg25: memref<32x2xf32, #tpu.memory_space<vmem>>, %arg26: memref<1x2xf32, #tpu.memory_space<vmem>>, %arg27: memref<2x2xf32, #tpu.memory_space<vmem>>) attributes {dimension_semantics = [#tpu.dimension_semantics<parallel>], iteration_bounds = array<i64: 1>, scalar_prefetch = 0 : i64, scratch_operands = 0 : i64, tpu.core_type = #tpu.core_type<tc>, window_params = [{transform_indices = @transform_0, window_bounds = array<i64: 384, 3>}, {pipeline_mode = #tpu.pipeline_mode<synchronous>, transform_indices = @transform_1, window_bounds = array<i64: 384, 384>}, {pipeline_mode = #tpu.pipeline_mode<synchronous>, transform_indices = @transform_2, window_bounds = array<i64: 16, 384>}, {pipeline_mode = #tpu.pipeline_mode<synchronous>, transform_indices = @transform_3, window_bounds = array<i64: 3, 16>}, {pipeline_mode = #tpu.pipeline_mode<synchronous>, transform_indices = @transform_4, window_bounds = array<i64: 1, 16>}, {pipeline_mode = #tpu.pipeline_mode<synchronous>, transform_indices = @transform_5, window_bounds = array<i64: 16, 16>}, {pipeline_mode = #tpu.pipeline_mode<synchronous>, transform_indices = @transform_6, window_bounds = array<i64: 1, 16>}, {pipeline_mode = #tpu.pipeline_mode<synchronous>, transform_indices = @transform_7, window_bounds = array<i64: 16, 32>}, {pipeline_mode = #tpu.pipeline_mode<synchronous>, transform_indices = @transform_8, window_bounds = array<i64: 1, 32>}, {pipeline_mode = #tpu.pipeline_mode<synchronous>, transform_indices = @transform_9, window_bounds = array<i64: 32, 32>}, {pipeline_mode = #tpu.pipeline_mode<synchronous>, transform_indices = @transform_10, window_bounds = array<i64: 1, 32>}, {pipeline_mode = #tpu.pipeline_mode<synchronous>, transform_indices = @transform_11, window_bounds = array<i64: 16, 32>}, {pipeline_mode = #tpu.pipeline_mode<synchronous>, transform_indices = @transform_12, window_bounds = array<i64: 2, 32, 96>}, {pipeline_mode = #tpu.pipeline_mode<synchronous>, transform_indices = @transform_13, window_bounds = array<i64: 2, 1, 96>}, {pipeline_mode = #tpu.pipeline_mode<synchronous>, transform_indices = @transform_14, window_bounds = array<i64: 2, 32, 32>}, {pipeline_mode = #tpu.pipeline_mode<synchronous>, transform_indices = @transform_15, window_bounds = array<i64: 2, 1, 32>}, {pipeline_mode = #tpu.pipeline_mode<synchronous>, transform_indices = @transform_16, window_bounds = array<i64: 2, 32, 64>}, {pipeline_mode = #tpu.pipeline_mode<synchronous>, transform_indices = @transform_17, window_bounds = array<i64: 2, 1, 64>}, {pipeline_mode = #tpu.pipeline_mode<synchronous>, transform_indices = @transform_18, window_bounds = array<i64: 2, 64, 32>}, {pipeline_mode = #tpu.pipeline_mode<synchronous>, transform_indices = @transform_19, window_bounds = array<i64: 2, 1, 32>}, {pipeline_mode = #tpu.pipeline_mode<synchronous>, transform_indices = @transform_20, window_bounds = array<i64: 2, 1, 32>}, {pipeline_mode = #tpu.pipeline_mode<synchronous>, transform_indices = @transform_21, window_bounds = array<i64: 2, 1, 32>}, {pipeline_mode = #tpu.pipeline_mode<synchronous>, transform_indices = @transform_22, window_bounds = array<i64: 2, 1, 32>}, {pipeline_mode = #tpu.pipeline_mode<synchronous>, transform_indices = @transform_23, window_bounds = array<i64: 2, 1, 32>}, {pipeline_mode = #tpu.pipeline_mode<synchronous>, transform_indices = @transform_24, window_bounds = array<i64: 32, 2>}, {pipeline_mode = #tpu.pipeline_mode<synchronous>, transform_indices = @transform_25, window_bounds = array<i64: 1, 2>}, {transform_indices = @transform_26, window_bounds = array<i64: 2, 2>}]} {
    %c0 = arith.constant 0 : index
    %c0_0 = arith.constant 0 : index
    %0 = vector.load %arg1[%c0, %c0_0] : memref<384x3xf32, #tpu.memory_space<vmem>>, vector<384x3xf32>
    %c0_1 = arith.constant 0 : index
    %c0_2 = arith.constant 0 : index
    %1 = vector.load %arg2[%c0_1, %c0_2] : memref<384x384xf32, #tpu.memory_space<vmem>>, vector<384x384xf32>
    %c0_3 = arith.constant 0 : index
    %c0_4 = arith.constant 0 : index
    %2 = vector.load %arg4[%c0_3, %c0_4] : memref<3x16xf32, #tpu.memory_space<vmem>>, vector<3x16xf32>
    %cst = arith.constant dense<0.000000e+00> : vector<384x16xf32>
    %3 = tpu.matmul %0, %2, %cst {dimension_numbers = #tpu.dot_dimension_numbers<[1], [0], [0], [1], [0, 0, 1, 1], [], []>} : vector<384x3xf32>, vector<3x16xf32>, vector<384x16xf32> -> vector<384x16xf32>
    %cst_5 = arith.constant dense<0.000000e+00> : vector<384x16xf32>
    %4 = tpu.matmul %1, %3, %cst_5 {dimension_numbers = #tpu.dot_dimension_numbers<[1], [0], [0], [1], [0, 0, 1, 1], [], []>} : vector<384x384xf32>, vector<384x16xf32>, vector<384x16xf32> -> vector<384x16xf32>
    %c0_6 = arith.constant 0 : index
    %c0_7 = arith.constant 0 : index
    %5 = vector.load %arg5[%c0_6, %c0_7] : memref<1x16xf32, #tpu.memory_space<vmem>>, vector<1x16xf32>
    %6 = vector.broadcast %5 : vector<1x16xf32> to vector<384x16xf32>
    %7 = arith.addf %4, %6 : vector<384x16xf32>
    %cst_8 = arith.constant 0.000000e+00 : f32
    %8 = vector.broadcast %cst_8 : f32 to vector<384x16xf32>
    %9 = arith.maximumf %7, %8 : vector<384x16xf32>
    %c0_9 = arith.constant 0 : index
    %c0_10 = arith.constant 0 : index
    %10 = vector.load %arg6[%c0_9, %c0_10] : memref<16x16xf32, #tpu.memory_space<vmem>>, vector<16x16xf32>
    %cst_11 = arith.constant dense<0.000000e+00> : vector<384x16xf32>
    %11 = tpu.matmul %9, %10, %cst_11 {dimension_numbers = #tpu.dot_dimension_numbers<[1], [0], [0], [1], [0, 0, 1, 1], [], []>} : vector<384x16xf32>, vector<16x16xf32>, vector<384x16xf32> -> vector<384x16xf32>
    %cst_12 = arith.constant dense<0.000000e+00> : vector<384x16xf32>
    %12 = tpu.matmul %1, %11, %cst_12 {dimension_numbers = #tpu.dot_dimension_numbers<[1], [0], [0], [1], [0, 0, 1, 1], [], []>} : vector<384x384xf32>, vector<384x16xf32>, vector<384x16xf32> -> vector<384x16xf32>
    %c0_13 = arith.constant 0 : index
    %c0_14 = arith.constant 0 : index
    %13 = vector.load %arg7[%c0_13, %c0_14] : memref<1x16xf32, #tpu.memory_space<vmem>>, vector<1x16xf32>
    %14 = vector.broadcast %13 : vector<1x16xf32> to vector<384x16xf32>
    %15 = arith.addf %12, %14 : vector<384x16xf32>
    %cst_15 = arith.constant 0.000000e+00 : f32
    %16 = vector.broadcast %cst_15 : f32 to vector<384x16xf32>
    %17 = arith.maximumf %15, %16 : vector<384x16xf32>
    %c0_16 = arith.constant 0 : index
    %c0_17 = arith.constant 0 : index
    %18 = vector.load %arg8[%c0_16, %c0_17] : memref<16x32xf32, #tpu.memory_space<vmem>>, vector<16x32xf32>
    %cst_18 = arith.constant dense<0.000000e+00> : vector<384x32xf32>
    %19 = tpu.matmul %17, %18, %cst_18 {dimension_numbers = #tpu.dot_dimension_numbers<[1], [0], [0], [1], [0, 0, 1, 1], [], []>} : vector<384x16xf32>, vector<16x32xf32>, vector<384x32xf32> -> vector<384x32xf32>
    %cst_19 = arith.constant dense<0.000000e+00> : vector<384x32xf32>
    %20 = tpu.matmul %1, %19, %cst_19 {dimension_numbers = #tpu.dot_dimension_numbers<[1], [0], [0], [1], [0, 0, 1, 1], [], []>} : vector<384x384xf32>, vector<384x32xf32>, vector<384x32xf32> -> vector<384x32xf32>
    %c0_20 = arith.constant 0 : index
    %c0_21 = arith.constant 0 : index
    %21 = vector.load %arg9[%c0_20, %c0_21] : memref<1x32xf32, #tpu.memory_space<vmem>>, vector<1x32xf32>
    %22 = vector.broadcast %21 : vector<1x32xf32> to vector<384x32xf32>
    %23 = arith.addf %20, %22 : vector<384x32xf32>
    %c0_22 = arith.constant 0 : index
    %c0_23 = arith.constant 0 : index
    %24 = vector.load %arg3[%c0_22, %c0_23] : memref<16x384xf32, #tpu.memory_space<vmem>>, vector<16x384xf32>
    %cst_24 = arith.constant dense<0.000000e+00> : vector<16x32xf32>
    %25 = tpu.matmul %24, %23, %cst_24 {dimension_numbers = #tpu.dot_dimension_numbers<[1], [0], [0], [1], [0, 0, 1, 1], [], []>} : vector<16x384xf32>, vector<384x32xf32>, vector<16x32xf32> -> vector<16x32xf32>
    %c0_25 = arith.constant 0 : index
    %c0_26 = arith.constant 0 : index
    %26 = vector.load %arg10[%c0_25, %c0_26] : memref<32x32xf32, #tpu.memory_space<vmem>>, vector<32x32xf32>
    %cst_27 = arith.constant dense<0.000000e+00> : vector<16x32xf32>
    %27 = tpu.matmul %25, %26, %cst_27 {dimension_numbers = #tpu.dot_dimension_numbers<[1], [0], [0], [1], [0, 0, 1, 1], [], []>} : vector<16x32xf32>, vector<32x32xf32>, vector<16x32xf32> -> vector<16x32xf32>
    %c0_28 = arith.constant 0 : index
    %c0_29 = arith.constant 0 : index
    %28 = vector.load %arg11[%c0_28, %c0_29] : memref<1x32xf32, #tpu.memory_space<vmem>>, vector<1x32xf32>
    %29 = vector.broadcast %28 : vector<1x32xf32> to vector<16x32xf32>
    %30 = arith.addf %27, %29 : vector<16x32xf32>
    %c0_30 = arith.constant 0 : index
    %c0_31 = arith.constant 0 : index
    %31 = vector.load %arg12[%c0_30, %c0_31] : memref<16x32xf32, #tpu.memory_space<vmem>>, vector<16x32xf32>
    %32 = arith.addf %30, %31 : vector<16x32xf32>
    %c0_32 = arith.constant 0 : index
    %c0_33 = arith.constant 0 : index
    %c0_34 = arith.constant 0 : index
    %33 = vector.load %arg13[%c0_32, %c0_33, %c0_34] : memref<2x32x96xf32, #tpu.memory_space<vmem>>, vector<1x32x96xf32>
    %34 = vector.shape_cast %33 : vector<1x32x96xf32> to vector<32x96xf32>
    %cst_35 = arith.constant dense<0.000000e+00> : vector<16x96xf32>
    %35 = tpu.matmul %32, %34, %cst_35 {dimension_numbers = #tpu.dot_dimension_numbers<[1], [0], [0], [1], [0, 0, 1, 1], [], []>} : vector<16x32xf32>, vector<32x96xf32>, vector<16x96xf32> -> vector<16x96xf32>
    %c0_36 = arith.constant 0 : index
    %c0_37 = arith.constant 0 : index
    %c0_38 = arith.constant 0 : index
    %36 = vector.load %arg14[%c0_36, %c0_37, %c0_38] : memref<2x1x96xf32, #tpu.memory_space<vmem>>, vector<1x1x96xf32>
    %37 = vector.shape_cast %36 : vector<1x1x96xf32> to vector<1x96xf32>
    %38 = vector.broadcast %37 : vector<1x96xf32> to vector<16x96xf32>
    %39 = arith.addf %35, %38 : vector<16x96xf32>
    %40 = vector.shape_cast %39 : vector<16x96xf32> to vector<2x8x96xf32>
    %41 = vector.extract_strided_slice %40 {offsets = [0, 0, 0], sizes = [2, 8, 8], strides = [1, 1, 1]} : vector<2x8x96xf32> to vector<2x8x8xf32>
    %42 = vector.extract_strided_slice %40 {offsets = [0, 0, 32], sizes = [2, 8, 8], strides = [1, 1, 1]} : vector<2x8x96xf32> to vector<2x8x8xf32>
    %43 = vector.extract_strided_slice %40 {offsets = [0, 0, 64], sizes = [2, 8, 8], strides = [1, 1, 1]} : vector<2x8x96xf32> to vector<2x8x8xf32>
    "tpu.trace_start"() <{level = 10 : i32, message = "bqe,bke->bqk"}> : () -> ()
    %cst_39 = arith.constant dense<0.000000e+00> : vector<2x8x8xf32>
    %44 = tpu.matmul %41, %42, %cst_39 {dimension_numbers = #tpu.dot_dimension_numbers<[2], [2], [1], [1], [0, 0, 0, 1, 1, 1], [0], [0]>} : vector<2x8x8xf32>, vector<2x8x8xf32>, vector<2x8x8xf32> -> vector<2x8x8xf32>
    "tpu.trace_stop"() : () -> ()
    %cst_40 = arith.constant 0.353553385 : f32
    %45 = vector.broadcast %cst_40 : f32 to vector<2x8x8xf32>
    %46 = arith.mulf %44, %45 : vector<2x8x8xf32>
    %cst_41 = arith.constant dense<0xFF800000> : vector<2x8xf32>
    %47 = vector.multi_reduction <maximumf>, %46, %cst_41 [2] : vector<2x8x8xf32> to vector<2x8xf32>
    %48 = vector.shape_cast %47 : vector<2x8xf32> to vector<2x8x1xf32>
    %49 = vector.broadcast %48 : vector<2x8x1xf32> to vector<2x8x8xf32>
    %50 = arith.subf %46, %49 : vector<2x8x8xf32>
    %51 = math.exp %50 : vector<2x8x8xf32>
    %cst_42 = arith.constant dense<0.000000e+00> : vector<2x8xf32>
    %52 = vector.multi_reduction <add>, %51, %cst_42 [2] : vector<2x8x8xf32> to vector<2x8xf32>
    %53 = vector.shape_cast %52 : vector<2x8xf32> to vector<2x8x1xf32>
    %54 = tpu.reciprocal %53 {approx = true} : vector<2x8x1xf32> -> vector<2x8x1xf32>
    %55 = vector.broadcast %54 : vector<2x8x1xf32> to vector<2x8x8xf32>
    %56 = arith.mulf %51, %55 : vector<2x8x8xf32>
    "tpu.trace_start"() <{level = 10 : i32, message = "bqk,bke->bqe"}> : () -> ()
    %cst_43 = arith.constant dense<0.000000e+00> : vector<2x8x8xf32>
    %57 = tpu.matmul %56, %43, %cst_43 {dimension_numbers = #tpu.dot_dimension_numbers<[2], [1], [1], [2], [0, 0, 0, 1, 1, 2], [0], [0]>} : vector<2x8x8xf32>, vector<2x8x8xf32>, vector<2x8x8xf32> -> vector<2x8x8xf32>
    "tpu.trace_stop"() : () -> ()
    %58 = vector.extract_strided_slice %40 {offsets = [0, 0, 8], sizes = [2, 8, 8], strides = [1, 1, 1]} : vector<2x8x96xf32> to vector<2x8x8xf32>
    %59 = vector.extract_strided_slice %40 {offsets = [0, 0, 40], sizes = [2, 8, 8], strides = [1, 1, 1]} : vector<2x8x96xf32> to vector<2x8x8xf32>
    %60 = vector.extract_strided_slice %40 {offsets = [0, 0, 72], sizes = [2, 8, 8], strides = [1, 1, 1]} : vector<2x8x96xf32> to vector<2x8x8xf32>
    "tpu.trace_start"() <{level = 10 : i32, message = "bqe,bke->bqk"}> : () -> ()
    %cst_44 = arith.constant dense<0.000000e+00> : vector<2x8x8xf32>
    %61 = tpu.matmul %58, %59, %cst_44 {dimension_numbers = #tpu.dot_dimension_numbers<[2], [2], [1], [1], [0, 0, 0, 1, 1, 1], [0], [0]>} : vector<2x8x8xf32>, vector<2x8x8xf32>, vector<2x8x8xf32> -> vector<2x8x8xf32>
    "tpu.trace_stop"() : () -> ()
    %cst_45 = arith.constant 0.353553385 : f32
    %62 = vector.broadcast %cst_45 : f32 to vector<2x8x8xf32>
    %63 = arith.mulf %61, %62 : vector<2x8x8xf32>
    %cst_46 = arith.constant dense<0xFF800000> : vector<2x8xf32>
    %64 = vector.multi_reduction <maximumf>, %63, %cst_46 [2] : vector<2x8x8xf32> to vector<2x8xf32>
    %65 = vector.shape_cast %64 : vector<2x8xf32> to vector<2x8x1xf32>
    %66 = vector.broadcast %65 : vector<2x8x1xf32> to vector<2x8x8xf32>
    %67 = arith.subf %63, %66 : vector<2x8x8xf32>
    %68 = math.exp %67 : vector<2x8x8xf32>
    %cst_47 = arith.constant dense<0.000000e+00> : vector<2x8xf32>
    %69 = vector.multi_reduction <add>, %68, %cst_47 [2] : vector<2x8x8xf32> to vector<2x8xf32>
    %70 = vector.shape_cast %69 : vector<2x8xf32> to vector<2x8x1xf32>
    %71 = tpu.reciprocal %70 {approx = true} : vector<2x8x1xf32> -> vector<2x8x1xf32>
    %72 = vector.broadcast %71 : vector<2x8x1xf32> to vector<2x8x8xf32>
    %73 = arith.mulf %68, %72 : vector<2x8x8xf32>
    "tpu.trace_start"() <{level = 10 : i32, message = "bqk,bke->bqe"}> : () -> ()
    %cst_48 = arith.constant dense<0.000000e+00> : vector<2x8x8xf32>
    %74 = tpu.matmul %73, %60, %cst_48 {dimension_numbers = #tpu.dot_dimension_numbers<[2], [1], [1], [2], [0, 0, 0, 1, 1, 2], [0], [0]>} : vector<2x8x8xf32>, vector<2x8x8xf32>, vector<2x8x8xf32> -> vector<2x8x8xf32>
    "tpu.trace_stop"() : () -> ()
    %75 = vector.extract_strided_slice %40 {offsets = [0, 0, 16], sizes = [2, 8, 8], strides = [1, 1, 1]} : vector<2x8x96xf32> to vector<2x8x8xf32>
    %76 = vector.extract_strided_slice %40 {offsets = [0, 0, 48], sizes = [2, 8, 8], strides = [1, 1, 1]} : vector<2x8x96xf32> to vector<2x8x8xf32>
    %77 = vector.extract_strided_slice %40 {offsets = [0, 0, 80], sizes = [2, 8, 8], strides = [1, 1, 1]} : vector<2x8x96xf32> to vector<2x8x8xf32>
    "tpu.trace_start"() <{level = 10 : i32, message = "bqe,bke->bqk"}> : () -> ()
    %cst_49 = arith.constant dense<0.000000e+00> : vector<2x8x8xf32>
    %78 = tpu.matmul %75, %76, %cst_49 {dimension_numbers = #tpu.dot_dimension_numbers<[2], [2], [1], [1], [0, 0, 0, 1, 1, 1], [0], [0]>} : vector<2x8x8xf32>, vector<2x8x8xf32>, vector<2x8x8xf32> -> vector<2x8x8xf32>
    "tpu.trace_stop"() : () -> ()
    %cst_50 = arith.constant 0.353553385 : f32
    %79 = vector.broadcast %cst_50 : f32 to vector<2x8x8xf32>
    %80 = arith.mulf %78, %79 : vector<2x8x8xf32>
    %cst_51 = arith.constant dense<0xFF800000> : vector<2x8xf32>
    %81 = vector.multi_reduction <maximumf>, %80, %cst_51 [2] : vector<2x8x8xf32> to vector<2x8xf32>
    %82 = vector.shape_cast %81 : vector<2x8xf32> to vector<2x8x1xf32>
    %83 = vector.broadcast %82 : vector<2x8x1xf32> to vector<2x8x8xf32>
    %84 = arith.subf %80, %83 : vector<2x8x8xf32>
    %85 = math.exp %84 : vector<2x8x8xf32>
    %cst_52 = arith.constant dense<0.000000e+00> : vector<2x8xf32>
    %86 = vector.multi_reduction <add>, %85, %cst_52 [2] : vector<2x8x8xf32> to vector<2x8xf32>
    %87 = vector.shape_cast %86 : vector<2x8xf32> to vector<2x8x1xf32>
    %88 = tpu.reciprocal %87 {approx = true} : vector<2x8x1xf32> -> vector<2x8x1xf32>
    %89 = vector.broadcast %88 : vector<2x8x1xf32> to vector<2x8x8xf32>
    %90 = arith.mulf %85, %89 : vector<2x8x8xf32>
    "tpu.trace_start"() <{level = 10 : i32, message = "bqk,bke->bqe"}> : () -> ()
    %cst_53 = arith.constant dense<0.000000e+00> : vector<2x8x8xf32>
    %91 = tpu.matmul %90, %77, %cst_53 {dimension_numbers = #tpu.dot_dimension_numbers<[2], [1], [1], [2], [0, 0, 0, 1, 1, 2], [0], [0]>} : vector<2x8x8xf32>, vector<2x8x8xf32>, vector<2x8x8xf32> -> vector<2x8x8xf32>
    "tpu.trace_stop"() : () -> ()
    %92 = vector.extract_strided_slice %40 {offsets = [0, 0, 24], sizes = [2, 8, 8], strides = [1, 1, 1]} : vector<2x8x96xf32> to vector<2x8x8xf32>
    %93 = vector.extract_strided_slice %40 {offsets = [0, 0, 56], sizes = [2, 8, 8], strides = [1, 1, 1]} : vector<2x8x96xf32> to vector<2x8x8xf32>
    %94 = vector.extract_strided_slice %40 {offsets = [0, 0, 88], sizes = [2, 8, 8], strides = [1, 1, 1]} : vector<2x8x96xf32> to vector<2x8x8xf32>
    "tpu.trace_start"() <{level = 10 : i32, message = "bqe,bke->bqk"}> : () -> ()
    %cst_54 = arith.constant dense<0.000000e+00> : vector<2x8x8xf32>
    %95 = tpu.matmul %92, %93, %cst_54 {dimension_numbers = #tpu.dot_dimension_numbers<[2], [2], [1], [1], [0, 0, 0, 1, 1, 1], [0], [0]>} : vector<2x8x8xf32>, vector<2x8x8xf32>, vector<2x8x8xf32> -> vector<2x8x8xf32>
    "tpu.trace_stop"() : () -> ()
    %cst_55 = arith.constant 0.353553385 : f32
    %96 = vector.broadcast %cst_55 : f32 to vector<2x8x8xf32>
    %97 = arith.mulf %95, %96 : vector<2x8x8xf32>
    %cst_56 = arith.constant dense<0xFF800000> : vector<2x8xf32>
    %98 = vector.multi_reduction <maximumf>, %97, %cst_56 [2] : vector<2x8x8xf32> to vector<2x8xf32>
    %99 = vector.shape_cast %98 : vector<2x8xf32> to vector<2x8x1xf32>
    %100 = vector.broadcast %99 : vector<2x8x1xf32> to vector<2x8x8xf32>
    %101 = arith.subf %97, %100 : vector<2x8x8xf32>
    %102 = math.exp %101 : vector<2x8x8xf32>
    %cst_57 = arith.constant dense<0.000000e+00> : vector<2x8xf32>
    %103 = vector.multi_reduction <add>, %102, %cst_57 [2] : vector<2x8x8xf32> to vector<2x8xf32>
    %104 = vector.shape_cast %103 : vector<2x8xf32> to vector<2x8x1xf32>
    %105 = tpu.reciprocal %104 {approx = true} : vector<2x8x1xf32> -> vector<2x8x1xf32>
    %106 = vector.broadcast %105 : vector<2x8x1xf32> to vector<2x8x8xf32>
    %107 = arith.mulf %102, %106 : vector<2x8x8xf32>
    "tpu.trace_start"() <{level = 10 : i32, message = "bqk,bke->bqe"}> : () -> ()
    %cst_58 = arith.constant dense<0.000000e+00> : vector<2x8x8xf32>
    %108 = tpu.matmul %107, %94, %cst_58 {dimension_numbers = #tpu.dot_dimension_numbers<[2], [1], [1], [2], [0, 0, 0, 1, 1, 2], [0], [0]>} : vector<2x8x8xf32>, vector<2x8x8xf32>, vector<2x8x8xf32> -> vector<2x8x8xf32>
    "tpu.trace_stop"() : () -> ()
    %109 = tpu.concatenate %57, %74, %91, %108 in 2 : vector<2x8x8xf32>, vector<2x8x8xf32>, vector<2x8x8xf32>, vector<2x8x8xf32> -> vector<2x8x32xf32>
    %110 = vector.shape_cast %109 : vector<2x8x32xf32> to vector<16x32xf32>
    %c0_59 = arith.constant 0 : index
    %c0_60 = arith.constant 0 : index
    %c0_61 = arith.constant 0 : index
    %111 = vector.load %arg15[%c0_59, %c0_60, %c0_61] : memref<2x32x32xf32, #tpu.memory_space<vmem>>, vector<1x32x32xf32>
    %112 = vector.shape_cast %111 : vector<1x32x32xf32> to vector<32x32xf32>
    %cst_62 = arith.constant dense<0.000000e+00> : vector<16x32xf32>
    %113 = tpu.matmul %110, %112, %cst_62 {dimension_numbers = #tpu.dot_dimension_numbers<[1], [0], [0], [1], [0, 0, 1, 1], [], []>} : vector<16x32xf32>, vector<32x32xf32>, vector<16x32xf32> -> vector<16x32xf32>
    %c0_63 = arith.constant 0 : index
    %c0_64 = arith.constant 0 : index
    %c0_65 = arith.constant 0 : index
    %114 = vector.load %arg16[%c0_63, %c0_64, %c0_65] : memref<2x1x32xf32, #tpu.memory_space<vmem>>, vector<1x1x32xf32>
    %115 = vector.shape_cast %114 : vector<1x1x32xf32> to vector<1x32xf32>
    %116 = vector.broadcast %115 : vector<1x32xf32> to vector<16x32xf32>
    %117 = arith.addf %113, %116 : vector<16x32xf32>
    %118 = arith.addf %32, %117 : vector<16x32xf32>
    %cst_66 = arith.constant dense<0.000000e+00> : vector<16xf32>
    %119 = vector.multi_reduction <add>, %118, %cst_66 [1] : vector<16x32xf32> to vector<16xf32>
    %120 = vector.shape_cast %119 : vector<16xf32> to vector<16x1xf32>
    %cst_67 = arith.constant 3.200000e+01 : f32
    %121 = vector.broadcast %cst_67 : f32 to vector<16x1xf32>
    %122 = arith.divf %120, %121 : vector<16x1xf32>
    %123 = vector.broadcast %122 : vector<16x1xf32> to vector<16x32xf32>
    %124 = arith.subf %118, %123 : vector<16x32xf32>
    %125 = arith.mulf %124, %124 : vector<16x32xf32>
    %cst_68 = arith.constant dense<0.000000e+00> : vector<16xf32>
    %126 = vector.multi_reduction <add>, %125, %cst_68 [1] : vector<16x32xf32> to vector<16xf32>
    %127 = vector.shape_cast %126 : vector<16xf32> to vector<16x1xf32>
    %cst_69 = arith.constant 3.200000e+01 : f32
    %128 = vector.broadcast %cst_69 : f32 to vector<16x1xf32>
    %129 = arith.divf %127, %128 : vector<16x1xf32>
    %130 = vector.broadcast %122 : vector<16x1xf32> to vector<16x32xf32>
    %131 = arith.subf %118, %130 : vector<16x32xf32>
    %cst_70 = arith.constant 9.99999974E-6 : f32
    %132 = vector.broadcast %cst_70 : f32 to vector<16x1xf32>
    %133 = arith.addf %129, %132 : vector<16x1xf32>
    %134 = math.rsqrt %133 : vector<16x1xf32>
    %135 = vector.broadcast %134 : vector<16x1xf32> to vector<16x32xf32>
    %136 = arith.mulf %131, %135 : vector<16x32xf32>
    %c0_71 = arith.constant 0 : index
    %c0_72 = arith.constant 0 : index
    %c0_73 = arith.constant 0 : index
    %137 = vector.load %arg21[%c0_71, %c0_72, %c0_73] : memref<2x1x32xf32, #tpu.memory_space<vmem>>, vector<1x1x32xf32>
    %138 = vector.shape_cast %137 : vector<1x1x32xf32> to vector<1x32xf32>
    %139 = vector.broadcast %138 : vector<1x32xf32> to vector<16x32xf32>
    %140 = arith.mulf %136, %139 : vector<16x32xf32>
    %c0_74 = arith.constant 0 : index
    %c0_75 = arith.constant 0 : index
    %c0_76 = arith.constant 0 : index
    %141 = vector.load %arg22[%c0_74, %c0_75, %c0_76] : memref<2x1x32xf32, #tpu.memory_space<vmem>>, vector<1x1x32xf32>
    %142 = vector.shape_cast %141 : vector<1x1x32xf32> to vector<1x32xf32>
    %143 = vector.broadcast %142 : vector<1x32xf32> to vector<16x32xf32>
    %144 = arith.addf %140, %143 : vector<16x32xf32>
    %c0_77 = arith.constant 0 : index
    %c0_78 = arith.constant 0 : index
    %c0_79 = arith.constant 0 : index
    %145 = vector.load %arg17[%c0_77, %c0_78, %c0_79] : memref<2x32x64xf32, #tpu.memory_space<vmem>>, vector<1x32x64xf32>
    %146 = vector.shape_cast %145 : vector<1x32x64xf32> to vector<32x64xf32>
    %cst_80 = arith.constant dense<0.000000e+00> : vector<16x64xf32>
    %147 = tpu.matmul %144, %146, %cst_80 {dimension_numbers = #tpu.dot_dimension_numbers<[1], [0], [0], [1], [0, 0, 1, 1], [], []>} : vector<16x32xf32>, vector<32x64xf32>, vector<16x64xf32> -> vector<16x64xf32>
    %c0_81 = arith.constant 0 : index
    %c0_82 = arith.constant 0 : index
    %c0_83 = arith.constant 0 : index
    %148 = vector.load %arg18[%c0_81, %c0_82, %c0_83] : memref<2x1x64xf32, #tpu.memory_space<vmem>>, vector<1x1x64xf32>
    %149 = vector.shape_cast %148 : vector<1x1x64xf32> to vector<1x64xf32>
    %150 = vector.broadcast %149 : vector<1x64xf32> to vector<16x64xf32>
    %151 = arith.addf %147, %150 : vector<16x64xf32>
    %cst_84 = arith.constant 0.000000e+00 : f32
    %152 = vector.broadcast %cst_84 : f32 to vector<16x64xf32>
    %153 = arith.maximumf %151, %152 : vector<16x64xf32>
    %c0_85 = arith.constant 0 : index
    %c0_86 = arith.constant 0 : index
    %c0_87 = arith.constant 0 : index
    %154 = vector.load %arg19[%c0_85, %c0_86, %c0_87] : memref<2x64x32xf32, #tpu.memory_space<vmem>>, vector<1x64x32xf32>
    %155 = vector.shape_cast %154 : vector<1x64x32xf32> to vector<64x32xf32>
    %cst_88 = arith.constant dense<0.000000e+00> : vector<16x32xf32>
    %156 = tpu.matmul %153, %155, %cst_88 {dimension_numbers = #tpu.dot_dimension_numbers<[1], [0], [0], [1], [0, 0, 1, 1], [], []>} : vector<16x64xf32>, vector<64x32xf32>, vector<16x32xf32> -> vector<16x32xf32>
    %c0_89 = arith.constant 0 : index
    %c0_90 = arith.constant 0 : index
    %c0_91 = arith.constant 0 : index
    %157 = vector.load %arg20[%c0_89, %c0_90, %c0_91] : memref<2x1x32xf32, #tpu.memory_space<vmem>>, vector<1x1x32xf32>
    %158 = vector.shape_cast %157 : vector<1x1x32xf32> to vector<1x32xf32>
    %159 = vector.broadcast %158 : vector<1x32xf32> to vector<16x32xf32>
    %160 = arith.addf %156, %159 : vector<16x32xf32>
    %161 = arith.addf %144, %160 : vector<16x32xf32>
    %cst_92 = arith.constant dense<0.000000e+00> : vector<16xf32>
    %162 = vector.multi_reduction <add>, %161, %cst_92 [1] : vector<16x32xf32> to vector<16xf32>
    %163 = vector.shape_cast %162 : vector<16xf32> to vector<16x1xf32>
    %cst_93 = arith.constant 3.200000e+01 : f32
    %164 = vector.broadcast %cst_93 : f32 to vector<16x1xf32>
    %165 = arith.divf %163, %164 : vector<16x1xf32>
    %166 = vector.broadcast %165 : vector<16x1xf32> to vector<16x32xf32>
    %167 = arith.subf %161, %166 : vector<16x32xf32>
    %168 = arith.mulf %167, %167 : vector<16x32xf32>
    %cst_94 = arith.constant dense<0.000000e+00> : vector<16xf32>
    %169 = vector.multi_reduction <add>, %168, %cst_94 [1] : vector<16x32xf32> to vector<16xf32>
    %170 = vector.shape_cast %169 : vector<16xf32> to vector<16x1xf32>
    %cst_95 = arith.constant 3.200000e+01 : f32
    %171 = vector.broadcast %cst_95 : f32 to vector<16x1xf32>
    %172 = arith.divf %170, %171 : vector<16x1xf32>
    %173 = vector.broadcast %165 : vector<16x1xf32> to vector<16x32xf32>
    %174 = arith.subf %161, %173 : vector<16x32xf32>
    %cst_96 = arith.constant 9.99999974E-6 : f32
    %175 = vector.broadcast %cst_96 : f32 to vector<16x1xf32>
    %176 = arith.addf %172, %175 : vector<16x1xf32>
    %177 = math.rsqrt %176 : vector<16x1xf32>
    %178 = vector.broadcast %177 : vector<16x1xf32> to vector<16x32xf32>
    %179 = arith.mulf %174, %178 : vector<16x32xf32>
    %c0_97 = arith.constant 0 : index
    %c0_98 = arith.constant 0 : index
    %c0_99 = arith.constant 0 : index
    %180 = vector.load %arg23[%c0_97, %c0_98, %c0_99] : memref<2x1x32xf32, #tpu.memory_space<vmem>>, vector<1x1x32xf32>
    %181 = vector.shape_cast %180 : vector<1x1x32xf32> to vector<1x32xf32>
    %182 = vector.broadcast %181 : vector<1x32xf32> to vector<16x32xf32>
    %183 = arith.mulf %179, %182 : vector<16x32xf32>
    %c0_100 = arith.constant 0 : index
    %c0_101 = arith.constant 0 : index
    %c0_102 = arith.constant 0 : index
    %184 = vector.load %arg24[%c0_100, %c0_101, %c0_102] : memref<2x1x32xf32, #tpu.memory_space<vmem>>, vector<1x1x32xf32>
    %185 = vector.shape_cast %184 : vector<1x1x32xf32> to vector<1x32xf32>
    %186 = vector.broadcast %185 : vector<1x32xf32> to vector<16x32xf32>
    %187 = arith.addf %183, %186 : vector<16x32xf32>
    %c1 = arith.constant 1 : index
    %c0_103 = arith.constant 0 : index
    %c0_104 = arith.constant 0 : index
    %188 = vector.load %arg13[%c1, %c0_103, %c0_104] : memref<2x32x96xf32, #tpu.memory_space<vmem>>, vector<1x32x96xf32>
    %189 = vector.shape_cast %188 : vector<1x32x96xf32> to vector<32x96xf32>
    %cst_105 = arith.constant dense<0.000000e+00> : vector<16x96xf32>
    %190 = tpu.matmul %187, %189, %cst_105 {dimension_numbers = #tpu.dot_dimension_numbers<[1], [0], [0], [1], [0, 0, 1, 1], [], []>} : vector<16x32xf32>, vector<32x96xf32>, vector<16x96xf32> -> vector<16x96xf32>
    %c1_106 = arith.constant 1 : index
    %c0_107 = arith.constant 0 : index
    %c0_108 = arith.constant 0 : index
    %191 = vector.load %arg14[%c1_106, %c0_107, %c0_108] : memref<2x1x96xf32, #tpu.memory_space<vmem>>, vector<1x1x96xf32>
    %192 = vector.shape_cast %191 : vector<1x1x96xf32> to vector<1x96xf32>
    %193 = vector.broadcast %192 : vector<1x96xf32> to vector<16x96xf32>
    %194 = arith.addf %190, %193 : vector<16x96xf32>
    %195 = vector.shape_cast %194 : vector<16x96xf32> to vector<2x8x96xf32>
    %196 = vector.extract_strided_slice %195 {offsets = [0, 0, 0], sizes = [2, 8, 8], strides = [1, 1, 1]} : vector<2x8x96xf32> to vector<2x8x8xf32>
    %197 = vector.extract_strided_slice %195 {offsets = [0, 0, 32], sizes = [2, 8, 8], strides = [1, 1, 1]} : vector<2x8x96xf32> to vector<2x8x8xf32>
    %198 = vector.extract_strided_slice %195 {offsets = [0, 0, 64], sizes = [2, 8, 8], strides = [1, 1, 1]} : vector<2x8x96xf32> to vector<2x8x8xf32>
    "tpu.trace_start"() <{level = 10 : i32, message = "bqe,bke->bqk"}> : () -> ()
    %cst_109 = arith.constant dense<0.000000e+00> : vector<2x8x8xf32>
    %199 = tpu.matmul %196, %197, %cst_109 {dimension_numbers = #tpu.dot_dimension_numbers<[2], [2], [1], [1], [0, 0, 0, 1, 1, 1], [0], [0]>} : vector<2x8x8xf32>, vector<2x8x8xf32>, vector<2x8x8xf32> -> vector<2x8x8xf32>
    "tpu.trace_stop"() : () -> ()
    %cst_110 = arith.constant 0.353553385 : f32
    %200 = vector.broadcast %cst_110 : f32 to vector<2x8x8xf32>
    %201 = arith.mulf %199, %200 : vector<2x8x8xf32>
    %cst_111 = arith.constant dense<0xFF800000> : vector<2x8xf32>
    %202 = vector.multi_reduction <maximumf>, %201, %cst_111 [2] : vector<2x8x8xf32> to vector<2x8xf32>
    %203 = vector.shape_cast %202 : vector<2x8xf32> to vector<2x8x1xf32>
    %204 = vector.broadcast %203 : vector<2x8x1xf32> to vector<2x8x8xf32>
    %205 = arith.subf %201, %204 : vector<2x8x8xf32>
    %206 = math.exp %205 : vector<2x8x8xf32>
    %cst_112 = arith.constant dense<0.000000e+00> : vector<2x8xf32>
    %207 = vector.multi_reduction <add>, %206, %cst_112 [2] : vector<2x8x8xf32> to vector<2x8xf32>
    %208 = vector.shape_cast %207 : vector<2x8xf32> to vector<2x8x1xf32>
    %209 = tpu.reciprocal %208 {approx = true} : vector<2x8x1xf32> -> vector<2x8x1xf32>
    %210 = vector.broadcast %209 : vector<2x8x1xf32> to vector<2x8x8xf32>
    %211 = arith.mulf %206, %210 : vector<2x8x8xf32>
    "tpu.trace_start"() <{level = 10 : i32, message = "bqk,bke->bqe"}> : () -> ()
    %cst_113 = arith.constant dense<0.000000e+00> : vector<2x8x8xf32>
    %212 = tpu.matmul %211, %198, %cst_113 {dimension_numbers = #tpu.dot_dimension_numbers<[2], [1], [1], [2], [0, 0, 0, 1, 1, 2], [0], [0]>} : vector<2x8x8xf32>, vector<2x8x8xf32>, vector<2x8x8xf32> -> vector<2x8x8xf32>
    "tpu.trace_stop"() : () -> ()
    %213 = vector.extract_strided_slice %195 {offsets = [0, 0, 8], sizes = [2, 8, 8], strides = [1, 1, 1]} : vector<2x8x96xf32> to vector<2x8x8xf32>
    %214 = vector.extract_strided_slice %195 {offsets = [0, 0, 40], sizes = [2, 8, 8], strides = [1, 1, 1]} : vector<2x8x96xf32> to vector<2x8x8xf32>
    %215 = vector.extract_strided_slice %195 {offsets = [0, 0, 72], sizes = [2, 8, 8], strides = [1, 1, 1]} : vector<2x8x96xf32> to vector<2x8x8xf32>
    "tpu.trace_start"() <{level = 10 : i32, message = "bqe,bke->bqk"}> : () -> ()
    %cst_114 = arith.constant dense<0.000000e+00> : vector<2x8x8xf32>
    %216 = tpu.matmul %213, %214, %cst_114 {dimension_numbers = #tpu.dot_dimension_numbers<[2], [2], [1], [1], [0, 0, 0, 1, 1, 1], [0], [0]>} : vector<2x8x8xf32>, vector<2x8x8xf32>, vector<2x8x8xf32> -> vector<2x8x8xf32>
    "tpu.trace_stop"() : () -> ()
    %cst_115 = arith.constant 0.353553385 : f32
    %217 = vector.broadcast %cst_115 : f32 to vector<2x8x8xf32>
    %218 = arith.mulf %216, %217 : vector<2x8x8xf32>
    %cst_116 = arith.constant dense<0xFF800000> : vector<2x8xf32>
    %219 = vector.multi_reduction <maximumf>, %218, %cst_116 [2] : vector<2x8x8xf32> to vector<2x8xf32>
    %220 = vector.shape_cast %219 : vector<2x8xf32> to vector<2x8x1xf32>
    %221 = vector.broadcast %220 : vector<2x8x1xf32> to vector<2x8x8xf32>
    %222 = arith.subf %218, %221 : vector<2x8x8xf32>
    %223 = math.exp %222 : vector<2x8x8xf32>
    %cst_117 = arith.constant dense<0.000000e+00> : vector<2x8xf32>
    %224 = vector.multi_reduction <add>, %223, %cst_117 [2] : vector<2x8x8xf32> to vector<2x8xf32>
    %225 = vector.shape_cast %224 : vector<2x8xf32> to vector<2x8x1xf32>
    %226 = tpu.reciprocal %225 {approx = true} : vector<2x8x1xf32> -> vector<2x8x1xf32>
    %227 = vector.broadcast %226 : vector<2x8x1xf32> to vector<2x8x8xf32>
    %228 = arith.mulf %223, %227 : vector<2x8x8xf32>
    "tpu.trace_start"() <{level = 10 : i32, message = "bqk,bke->bqe"}> : () -> ()
    %cst_118 = arith.constant dense<0.000000e+00> : vector<2x8x8xf32>
    %229 = tpu.matmul %228, %215, %cst_118 {dimension_numbers = #tpu.dot_dimension_numbers<[2], [1], [1], [2], [0, 0, 0, 1, 1, 2], [0], [0]>} : vector<2x8x8xf32>, vector<2x8x8xf32>, vector<2x8x8xf32> -> vector<2x8x8xf32>
    "tpu.trace_stop"() : () -> ()
    %230 = vector.extract_strided_slice %195 {offsets = [0, 0, 16], sizes = [2, 8, 8], strides = [1, 1, 1]} : vector<2x8x96xf32> to vector<2x8x8xf32>
    %231 = vector.extract_strided_slice %195 {offsets = [0, 0, 48], sizes = [2, 8, 8], strides = [1, 1, 1]} : vector<2x8x96xf32> to vector<2x8x8xf32>
    %232 = vector.extract_strided_slice %195 {offsets = [0, 0, 80], sizes = [2, 8, 8], strides = [1, 1, 1]} : vector<2x8x96xf32> to vector<2x8x8xf32>
    "tpu.trace_start"() <{level = 10 : i32, message = "bqe,bke->bqk"}> : () -> ()
    %cst_119 = arith.constant dense<0.000000e+00> : vector<2x8x8xf32>
    %233 = tpu.matmul %230, %231, %cst_119 {dimension_numbers = #tpu.dot_dimension_numbers<[2], [2], [1], [1], [0, 0, 0, 1, 1, 1], [0], [0]>} : vector<2x8x8xf32>, vector<2x8x8xf32>, vector<2x8x8xf32> -> vector<2x8x8xf32>
    "tpu.trace_stop"() : () -> ()
    %cst_120 = arith.constant 0.353553385 : f32
    %234 = vector.broadcast %cst_120 : f32 to vector<2x8x8xf32>
    %235 = arith.mulf %233, %234 : vector<2x8x8xf32>
    %cst_121 = arith.constant dense<0xFF800000> : vector<2x8xf32>
    %236 = vector.multi_reduction <maximumf>, %235, %cst_121 [2] : vector<2x8x8xf32> to vector<2x8xf32>
    %237 = vector.shape_cast %236 : vector<2x8xf32> to vector<2x8x1xf32>
    %238 = vector.broadcast %237 : vector<2x8x1xf32> to vector<2x8x8xf32>
    %239 = arith.subf %235, %238 : vector<2x8x8xf32>
    %240 = math.exp %239 : vector<2x8x8xf32>
    %cst_122 = arith.constant dense<0.000000e+00> : vector<2x8xf32>
    %241 = vector.multi_reduction <add>, %240, %cst_122 [2] : vector<2x8x8xf32> to vector<2x8xf32>
    %242 = vector.shape_cast %241 : vector<2x8xf32> to vector<2x8x1xf32>
    %243 = tpu.reciprocal %242 {approx = true} : vector<2x8x1xf32> -> vector<2x8x1xf32>
    %244 = vector.broadcast %243 : vector<2x8x1xf32> to vector<2x8x8xf32>
    %245 = arith.mulf %240, %244 : vector<2x8x8xf32>
    "tpu.trace_start"() <{level = 10 : i32, message = "bqk,bke->bqe"}> : () -> ()
    %cst_123 = arith.constant dense<0.000000e+00> : vector<2x8x8xf32>
    %246 = tpu.matmul %245, %232, %cst_123 {dimension_numbers = #tpu.dot_dimension_numbers<[2], [1], [1], [2], [0, 0, 0, 1, 1, 2], [0], [0]>} : vector<2x8x8xf32>, vector<2x8x8xf32>, vector<2x8x8xf32> -> vector<2x8x8xf32>
    "tpu.trace_stop"() : () -> ()
    %247 = vector.extract_strided_slice %195 {offsets = [0, 0, 24], sizes = [2, 8, 8], strides = [1, 1, 1]} : vector<2x8x96xf32> to vector<2x8x8xf32>
    %248 = vector.extract_strided_slice %195 {offsets = [0, 0, 56], sizes = [2, 8, 8], strides = [1, 1, 1]} : vector<2x8x96xf32> to vector<2x8x8xf32>
    %249 = vector.extract_strided_slice %195 {offsets = [0, 0, 88], sizes = [2, 8, 8], strides = [1, 1, 1]} : vector<2x8x96xf32> to vector<2x8x8xf32>
    "tpu.trace_start"() <{level = 10 : i32, message = "bqe,bke->bqk"}> : () -> ()
    %cst_124 = arith.constant dense<0.000000e+00> : vector<2x8x8xf32>
    %250 = tpu.matmul %247, %248, %cst_124 {dimension_numbers = #tpu.dot_dimension_numbers<[2], [2], [1], [1], [0, 0, 0, 1, 1, 1], [0], [0]>} : vector<2x8x8xf32>, vector<2x8x8xf32>, vector<2x8x8xf32> -> vector<2x8x8xf32>
    "tpu.trace_stop"() : () -> ()
    %cst_125 = arith.constant 0.353553385 : f32
    %251 = vector.broadcast %cst_125 : f32 to vector<2x8x8xf32>
    %252 = arith.mulf %250, %251 : vector<2x8x8xf32>
    %cst_126 = arith.constant dense<0xFF800000> : vector<2x8xf32>
    %253 = vector.multi_reduction <maximumf>, %252, %cst_126 [2] : vector<2x8x8xf32> to vector<2x8xf32>
    %254 = vector.shape_cast %253 : vector<2x8xf32> to vector<2x8x1xf32>
    %255 = vector.broadcast %254 : vector<2x8x1xf32> to vector<2x8x8xf32>
    %256 = arith.subf %252, %255 : vector<2x8x8xf32>
    %257 = math.exp %256 : vector<2x8x8xf32>
    %cst_127 = arith.constant dense<0.000000e+00> : vector<2x8xf32>
    %258 = vector.multi_reduction <add>, %257, %cst_127 [2] : vector<2x8x8xf32> to vector<2x8xf32>
    %259 = vector.shape_cast %258 : vector<2x8xf32> to vector<2x8x1xf32>
    %260 = tpu.reciprocal %259 {approx = true} : vector<2x8x1xf32> -> vector<2x8x1xf32>
    %261 = vector.broadcast %260 : vector<2x8x1xf32> to vector<2x8x8xf32>
    %262 = arith.mulf %257, %261 : vector<2x8x8xf32>
    "tpu.trace_start"() <{level = 10 : i32, message = "bqk,bke->bqe"}> : () -> ()
    %cst_128 = arith.constant dense<0.000000e+00> : vector<2x8x8xf32>
    %263 = tpu.matmul %262, %249, %cst_128 {dimension_numbers = #tpu.dot_dimension_numbers<[2], [1], [1], [2], [0, 0, 0, 1, 1, 2], [0], [0]>} : vector<2x8x8xf32>, vector<2x8x8xf32>, vector<2x8x8xf32> -> vector<2x8x8xf32>
    "tpu.trace_stop"() : () -> ()
    %264 = tpu.concatenate %212, %229, %246, %263 in 2 : vector<2x8x8xf32>, vector<2x8x8xf32>, vector<2x8x8xf32>, vector<2x8x8xf32> -> vector<2x8x32xf32>
    %265 = vector.shape_cast %264 : vector<2x8x32xf32> to vector<16x32xf32>
    %c1_129 = arith.constant 1 : index
    %c0_130 = arith.constant 0 : index
    %c0_131 = arith.constant 0 : index
    %266 = vector.load %arg15[%c1_129, %c0_130, %c0_131] : memref<2x32x32xf32, #tpu.memory_space<vmem>>, vector<1x32x32xf32>
    %267 = vector.shape_cast %266 : vector<1x32x32xf32> to vector<32x32xf32>
    %cst_132 = arith.constant dense<0.000000e+00> : vector<16x32xf32>
    %268 = tpu.matmul %265, %267, %cst_132 {dimension_numbers = #tpu.dot_dimension_numbers<[1], [0], [0], [1], [0, 0, 1, 1], [], []>} : vector<16x32xf32>, vector<32x32xf32>, vector<16x32xf32> -> vector<16x32xf32>
    %c1_133 = arith.constant 1 : index
    %c0_134 = arith.constant 0 : index
    %c0_135 = arith.constant 0 : index
    %269 = vector.load %arg16[%c1_133, %c0_134, %c0_135] : memref<2x1x32xf32, #tpu.memory_space<vmem>>, vector<1x1x32xf32>
    %270 = vector.shape_cast %269 : vector<1x1x32xf32> to vector<1x32xf32>
    %271 = vector.broadcast %270 : vector<1x32xf32> to vector<16x32xf32>
    %272 = arith.addf %268, %271 : vector<16x32xf32>
    %273 = arith.addf %187, %272 : vector<16x32xf32>
    %cst_136 = arith.constant dense<0.000000e+00> : vector<16xf32>
    %274 = vector.multi_reduction <add>, %273, %cst_136 [1] : vector<16x32xf32> to vector<16xf32>
    %275 = vector.shape_cast %274 : vector<16xf32> to vector<16x1xf32>
    %cst_137 = arith.constant 3.200000e+01 : f32
    %276 = vector.broadcast %cst_137 : f32 to vector<16x1xf32>
    %277 = arith.divf %275, %276 : vector<16x1xf32>
    %278 = vector.broadcast %277 : vector<16x1xf32> to vector<16x32xf32>
    %279 = arith.subf %273, %278 : vector<16x32xf32>
    %280 = arith.mulf %279, %279 : vector<16x32xf32>
    %cst_138 = arith.constant dense<0.000000e+00> : vector<16xf32>
    %281 = vector.multi_reduction <add>, %280, %cst_138 [1] : vector<16x32xf32> to vector<16xf32>
    %282 = vector.shape_cast %281 : vector<16xf32> to vector<16x1xf32>
    %cst_139 = arith.constant 3.200000e+01 : f32
    %283 = vector.broadcast %cst_139 : f32 to vector<16x1xf32>
    %284 = arith.divf %282, %283 : vector<16x1xf32>
    %285 = vector.broadcast %277 : vector<16x1xf32> to vector<16x32xf32>
    %286 = arith.subf %273, %285 : vector<16x32xf32>
    %cst_140 = arith.constant 9.99999974E-6 : f32
    %287 = vector.broadcast %cst_140 : f32 to vector<16x1xf32>
    %288 = arith.addf %284, %287 : vector<16x1xf32>
    %289 = math.rsqrt %288 : vector<16x1xf32>
    %290 = vector.broadcast %289 : vector<16x1xf32> to vector<16x32xf32>
    %291 = arith.mulf %286, %290 : vector<16x32xf32>
    %c1_141 = arith.constant 1 : index
    %c0_142 = arith.constant 0 : index
    %c0_143 = arith.constant 0 : index
    %292 = vector.load %arg21[%c1_141, %c0_142, %c0_143] : memref<2x1x32xf32, #tpu.memory_space<vmem>>, vector<1x1x32xf32>
    %293 = vector.shape_cast %292 : vector<1x1x32xf32> to vector<1x32xf32>
    %294 = vector.broadcast %293 : vector<1x32xf32> to vector<16x32xf32>
    %295 = arith.mulf %291, %294 : vector<16x32xf32>
    %c1_144 = arith.constant 1 : index
    %c0_145 = arith.constant 0 : index
    %c0_146 = arith.constant 0 : index
    %296 = vector.load %arg22[%c1_144, %c0_145, %c0_146] : memref<2x1x32xf32, #tpu.memory_space<vmem>>, vector<1x1x32xf32>
    %297 = vector.shape_cast %296 : vector<1x1x32xf32> to vector<1x32xf32>
    %298 = vector.broadcast %297 : vector<1x32xf32> to vector<16x32xf32>
    %299 = arith.addf %295, %298 : vector<16x32xf32>
    %c1_147 = arith.constant 1 : index
    %c0_148 = arith.constant 0 : index
    %c0_149 = arith.constant 0 : index
    %300 = vector.load %arg17[%c1_147, %c0_148, %c0_149] : memref<2x32x64xf32, #tpu.memory_space<vmem>>, vector<1x32x64xf32>
    %301 = vector.shape_cast %300 : vector<1x32x64xf32> to vector<32x64xf32>
    %cst_150 = arith.constant dense<0.000000e+00> : vector<16x64xf32>
    %302 = tpu.matmul %299, %301, %cst_150 {dimension_numbers = #tpu.dot_dimension_numbers<[1], [0], [0], [1], [0, 0, 1, 1], [], []>} : vector<16x32xf32>, vector<32x64xf32>, vector<16x64xf32> -> vector<16x64xf32>
    %c1_151 = arith.constant 1 : index
    %c0_152 = arith.constant 0 : index
    %c0_153 = arith.constant 0 : index
    %303 = vector.load %arg18[%c1_151, %c0_152, %c0_153] : memref<2x1x64xf32, #tpu.memory_space<vmem>>, vector<1x1x64xf32>
    %304 = vector.shape_cast %303 : vector<1x1x64xf32> to vector<1x64xf32>
    %305 = vector.broadcast %304 : vector<1x64xf32> to vector<16x64xf32>
    %306 = arith.addf %302, %305 : vector<16x64xf32>
    %cst_154 = arith.constant 0.000000e+00 : f32
    %307 = vector.broadcast %cst_154 : f32 to vector<16x64xf32>
    %308 = arith.maximumf %306, %307 : vector<16x64xf32>
    %c1_155 = arith.constant 1 : index
    %c0_156 = arith.constant 0 : index
    %c0_157 = arith.constant 0 : index
    %309 = vector.load %arg19[%c1_155, %c0_156, %c0_157] : memref<2x64x32xf32, #tpu.memory_space<vmem>>, vector<1x64x32xf32>
    %310 = vector.shape_cast %309 : vector<1x64x32xf32> to vector<64x32xf32>
    %cst_158 = arith.constant dense<0.000000e+00> : vector<16x32xf32>
    %311 = tpu.matmul %308, %310, %cst_158 {dimension_numbers = #tpu.dot_dimension_numbers<[1], [0], [0], [1], [0, 0, 1, 1], [], []>} : vector<16x64xf32>, vector<64x32xf32>, vector<16x32xf32> -> vector<16x32xf32>
    %c1_159 = arith.constant 1 : index
    %c0_160 = arith.constant 0 : index
    %c0_161 = arith.constant 0 : index
    %312 = vector.load %arg20[%c1_159, %c0_160, %c0_161] : memref<2x1x32xf32, #tpu.memory_space<vmem>>, vector<1x1x32xf32>
    %313 = vector.shape_cast %312 : vector<1x1x32xf32> to vector<1x32xf32>
    %314 = vector.broadcast %313 : vector<1x32xf32> to vector<16x32xf32>
    %315 = arith.addf %311, %314 : vector<16x32xf32>
    %316 = arith.addf %299, %315 : vector<16x32xf32>
    %cst_162 = arith.constant dense<0.000000e+00> : vector<16xf32>
    %317 = vector.multi_reduction <add>, %316, %cst_162 [1] : vector<16x32xf32> to vector<16xf32>
    %318 = vector.shape_cast %317 : vector<16xf32> to vector<16x1xf32>
    %cst_163 = arith.constant 3.200000e+01 : f32
    %319 = vector.broadcast %cst_163 : f32 to vector<16x1xf32>
    %320 = arith.divf %318, %319 : vector<16x1xf32>
    %321 = vector.broadcast %320 : vector<16x1xf32> to vector<16x32xf32>
    %322 = arith.subf %316, %321 : vector<16x32xf32>
    %323 = arith.mulf %322, %322 : vector<16x32xf32>
    %cst_164 = arith.constant dense<0.000000e+00> : vector<16xf32>
    %324 = vector.multi_reduction <add>, %323, %cst_164 [1] : vector<16x32xf32> to vector<16xf32>
    %325 = vector.shape_cast %324 : vector<16xf32> to vector<16x1xf32>
    %cst_165 = arith.constant 3.200000e+01 : f32
    %326 = vector.broadcast %cst_165 : f32 to vector<16x1xf32>
    %327 = arith.divf %325, %326 : vector<16x1xf32>
    %328 = vector.broadcast %320 : vector<16x1xf32> to vector<16x32xf32>
    %329 = arith.subf %316, %328 : vector<16x32xf32>
    %cst_166 = arith.constant 9.99999974E-6 : f32
    %330 = vector.broadcast %cst_166 : f32 to vector<16x1xf32>
    %331 = arith.addf %327, %330 : vector<16x1xf32>
    %332 = math.rsqrt %331 : vector<16x1xf32>
    %333 = vector.broadcast %332 : vector<16x1xf32> to vector<16x32xf32>
    %334 = arith.mulf %329, %333 : vector<16x32xf32>
    %c1_167 = arith.constant 1 : index
    %c0_168 = arith.constant 0 : index
    %c0_169 = arith.constant 0 : index
    %335 = vector.load %arg23[%c1_167, %c0_168, %c0_169] : memref<2x1x32xf32, #tpu.memory_space<vmem>>, vector<1x1x32xf32>
    %336 = vector.shape_cast %335 : vector<1x1x32xf32> to vector<1x32xf32>
    %337 = vector.broadcast %336 : vector<1x32xf32> to vector<16x32xf32>
    %338 = arith.mulf %334, %337 : vector<16x32xf32>
    %c1_170 = arith.constant 1 : index
    %c0_171 = arith.constant 0 : index
    %c0_172 = arith.constant 0 : index
    %339 = vector.load %arg24[%c1_170, %c0_171, %c0_172] : memref<2x1x32xf32, #tpu.memory_space<vmem>>, vector<1x1x32xf32>
    %340 = vector.shape_cast %339 : vector<1x1x32xf32> to vector<1x32xf32>
    %341 = vector.broadcast %340 : vector<1x32xf32> to vector<16x32xf32>
    %342 = arith.addf %338, %341 : vector<16x32xf32>
    %343 = vector.shape_cast %342 : vector<16x32xf32> to vector<2x8x32xf32>
    %cst_173 = arith.constant dense<0.000000e+00> : vector<2x32xf32>
    %344 = vector.multi_reduction <add>, %343, %cst_173 [1] : vector<2x8x32xf32> to vector<2x32xf32>
    %cst_174 = arith.constant 8.000000e+00 : f32
    %345 = vector.broadcast %cst_174 : f32 to vector<2x32xf32>
    %346 = arith.divf %344, %345 : vector<2x32xf32>
    %c0_175 = arith.constant 0 : index
    %c0_176 = arith.constant 0 : index
    %347 = vector.load %arg25[%c0_175, %c0_176] : memref<32x2xf32, #tpu.memory_space<vmem>>, vector<32x2xf32>
    %cst_177 = arith.constant dense<0.000000e+00> : vector<2x2xf32>
    %348 = tpu.matmul %346, %347, %cst_177 {dimension_numbers = #tpu.dot_dimension_numbers<[1], [0], [0], [1], [0, 0, 1, 1], [], []>} : vector<2x32xf32>, vector<32x2xf32>, vector<2x2xf32> -> vector<2x2xf32>
    %c0_178 = arith.constant 0 : index
    %c0_179 = arith.constant 0 : index
    %349 = vector.load %arg26[%c0_178, %c0_179] : memref<1x2xf32, #tpu.memory_space<vmem>>, vector<1x2xf32>
    %350 = vector.broadcast %349 : vector<1x2xf32> to vector<2x2xf32>
    %351 = arith.addf %348, %350 : vector<2x2xf32>
    %c0_180 = arith.constant 0 : index
    %c0_181 = arith.constant 0 : index
    %352 = vector.load %arg27[%c0_180, %c0_181] : memref<2x2xf32, #tpu.memory_space<vmem>>, vector<2x2xf32>
    tpu.vector_store %arg27[%c0_180, %c0_181], %351 {strides = array<i32>} : memref<2x2xf32, #tpu.memory_space<vmem>>, vector<2x2xf32>,
    return
  }
  func.func @transform_0(%arg0: i32) -> (i32, i32) {
    %c0_i32 = arith.constant 0 : i32
    %c0_i32_0 = arith.constant 0 : i32
    return %arg0, %c0_i32 : i32, i32
  }
  func.func @transform_1(%arg0: i32) -> (i32, i32) {
    %c0_i32 = arith.constant 0 : i32
    %c0_i32_0 = arith.constant 0 : i32
    %c0_i32_1 = arith.constant 0 : i32
    return %c0_i32, %c0_i32_0 : i32, i32
  }
  func.func @transform_2(%arg0: i32) -> (i32, i32) {
    %c0_i32 = arith.constant 0 : i32
    %c0_i32_0 = arith.constant 0 : i32
    %c0_i32_1 = arith.constant 0 : i32
    return %c0_i32, %c0_i32_0 : i32, i32
  }
  func.func @transform_3(%arg0: i32) -> (i32, i32) {
    %c0_i32 = arith.constant 0 : i32
    %c0_i32_0 = arith.constant 0 : i32
    %c0_i32_1 = arith.constant 0 : i32
    return %c0_i32, %c0_i32_0 : i32, i32
  }
  func.func @transform_4(%arg0: i32) -> (i32, i32) {
    %c0_i32 = arith.constant 0 : i32
    %c0_i32_0 = arith.constant 0 : i32
    %c0_i32_1 = arith.constant 0 : i32
    return %c0_i32, %c0_i32_0 : i32, i32
  }
  func.func @transform_5(%arg0: i32) -> (i32, i32) {
    %c0_i32 = arith.constant 0 : i32
    %c0_i32_0 = arith.constant 0 : i32
    %c0_i32_1 = arith.constant 0 : i32
    return %c0_i32, %c0_i32_0 : i32, i32
  }
  func.func @transform_6(%arg0: i32) -> (i32, i32) {
    %c0_i32 = arith.constant 0 : i32
    %c0_i32_0 = arith.constant 0 : i32
    %c0_i32_1 = arith.constant 0 : i32
    return %c0_i32, %c0_i32_0 : i32, i32
  }
  func.func @transform_7(%arg0: i32) -> (i32, i32) {
    %c0_i32 = arith.constant 0 : i32
    %c0_i32_0 = arith.constant 0 : i32
    %c0_i32_1 = arith.constant 0 : i32
    return %c0_i32, %c0_i32_0 : i32, i32
  }
  func.func @transform_8(%arg0: i32) -> (i32, i32) {
    %c0_i32 = arith.constant 0 : i32
    %c0_i32_0 = arith.constant 0 : i32
    %c0_i32_1 = arith.constant 0 : i32
    return %c0_i32, %c0_i32_0 : i32, i32
  }
  func.func @transform_9(%arg0: i32) -> (i32, i32) {
    %c0_i32 = arith.constant 0 : i32
    %c0_i32_0 = arith.constant 0 : i32
    %c0_i32_1 = arith.constant 0 : i32
    return %c0_i32, %c0_i32_0 : i32, i32
  }
  func.func @transform_10(%arg0: i32) -> (i32, i32) {
    %c0_i32 = arith.constant 0 : i32
    %c0_i32_0 = arith.constant 0 : i32
    %c0_i32_1 = arith.constant 0 : i32
    return %c0_i32, %c0_i32_0 : i32, i32
  }
  func.func @transform_11(%arg0: i32) -> (i32, i32) {
    %c0_i32 = arith.constant 0 : i32
    %c0_i32_0 = arith.constant 0 : i32
    %c0_i32_1 = arith.constant 0 : i32
    return %c0_i32, %c0_i32_0 : i32, i32
  }
  func.func @transform_12(%arg0: i32) -> (i32, i32, i32) {
    %c0_i32 = arith.constant 0 : i32
    %c0_i32_0 = arith.constant 0 : i32
    %c0_i32_1 = arith.constant 0 : i32
    %c0_i32_2 = arith.constant 0 : i32
    return %c0_i32, %c0_i32_0, %c0_i32_1 : i32, i32, i32
  }
  func.func @transform_13(%arg0: i32) -> (i32, i32, i32) {
    %c0_i32 = arith.constant 0 : i32
    %c0_i32_0 = arith.constant 0 : i32
    %c0_i32_1 = arith.constant 0 : i32
    %c0_i32_2 = arith.constant 0 : i32
    return %c0_i32, %c0_i32_0, %c0_i32_1 : i32, i32, i32
  }
  func.func @transform_14(%arg0: i32) -> (i32, i32, i32) {
    %c0_i32 = arith.constant 0 : i32
    %c0_i32_0 = arith.constant 0 : i32
    %c0_i32_1 = arith.constant 0 : i32
    %c0_i32_2 = arith.constant 0 : i32
    return %c0_i32, %c0_i32_0, %c0_i32_1 : i32, i32, i32
  }
  func.func @transform_15(%arg0: i32) -> (i32, i32, i32) {
    %c0_i32 = arith.constant 0 : i32
    %c0_i32_0 = arith.constant 0 : i32
    %c0_i32_1 = arith.constant 0 : i32
    %c0_i32_2 = arith.constant 0 : i32
    return %c0_i32, %c0_i32_0, %c0_i32_1 : i32, i32, i32
  }
  func.func @transform_16(%arg0: i32) -> (i32, i32, i32) {
    %c0_i32 = arith.constant 0 : i32
    %c0_i32_0 = arith.constant 0 : i32
    %c0_i32_1 = arith.constant 0 : i32
    %c0_i32_2 = arith.constant 0 : i32
    return %c0_i32, %c0_i32_0, %c0_i32_1 : i32, i32, i32
  }
  func.func @transform_17(%arg0: i32) -> (i32, i32, i32) {
    %c0_i32 = arith.constant 0 : i32
    %c0_i32_0 = arith.constant 0 : i32
    %c0_i32_1 = arith.constant 0 : i32
    %c0_i32_2 = arith.constant 0 : i32
    return %c0_i32, %c0_i32_0, %c0_i32_1 : i32, i32, i32
  }
  func.func @transform_18(%arg0: i32) -> (i32, i32, i32) {
    %c0_i32 = arith.constant 0 : i32
    %c0_i32_0 = arith.constant 0 : i32
    %c0_i32_1 = arith.constant 0 : i32
    %c0_i32_2 = arith.constant 0 : i32
    return %c0_i32, %c0_i32_0, %c0_i32_1 : i32, i32, i32
  }
  func.func @transform_19(%arg0: i32) -> (i32, i32, i32) {
    %c0_i32 = arith.constant 0 : i32
    %c0_i32_0 = arith.constant 0 : i32
    %c0_i32_1 = arith.constant 0 : i32
    %c0_i32_2 = arith.constant 0 : i32
    return %c0_i32, %c0_i32_0, %c0_i32_1 : i32, i32, i32
  }
  func.func @transform_20(%arg0: i32) -> (i32, i32, i32) {
    %c0_i32 = arith.constant 0 : i32
    %c0_i32_0 = arith.constant 0 : i32
    %c0_i32_1 = arith.constant 0 : i32
    %c0_i32_2 = arith.constant 0 : i32
    return %c0_i32, %c0_i32_0, %c0_i32_1 : i32, i32, i32
  }
  func.func @transform_21(%arg0: i32) -> (i32, i32, i32) {
    %c0_i32 = arith.constant 0 : i32
    %c0_i32_0 = arith.constant 0 : i32
    %c0_i32_1 = arith.constant 0 : i32
    %c0_i32_2 = arith.constant 0 : i32
    return %c0_i32, %c0_i32_0, %c0_i32_1 : i32, i32, i32
  }
  func.func @transform_22(%arg0: i32) -> (i32, i32, i32) {
    %c0_i32 = arith.constant 0 : i32
    %c0_i32_0 = arith.constant 0 : i32
    %c0_i32_1 = arith.constant 0 : i32
    %c0_i32_2 = arith.constant 0 : i32
    return %c0_i32, %c0_i32_0, %c0_i32_1 : i32, i32, i32
  }
  func.func @transform_23(%arg0: i32) -> (i32, i32, i32) {
    %c0_i32 = arith.constant 0 : i32
    %c0_i32_0 = arith.constant 0 : i32
    %c0_i32_1 = arith.constant 0 : i32
    %c0_i32_2 = arith.constant 0 : i32
    return %c0_i32, %c0_i32_0, %c0_i32_1 : i32, i32, i32
  }
  func.func @transform_24(%arg0: i32) -> (i32, i32) {
    %c0_i32 = arith.constant 0 : i32
    %c0_i32_0 = arith.constant 0 : i32
    %c0_i32_1 = arith.constant 0 : i32
    return %c0_i32, %c0_i32_0 : i32, i32
  }
  func.func @transform_25(%arg0: i32) -> (i32, i32) {
    %c0_i32 = arith.constant 0 : i32
    %c0_i32_0 = arith.constant 0 : i32
    %c0_i32_1 = arith.constant 0 : i32
    return %c0_i32, %c0_i32_0 : i32, i32
  }
  func.func @transform_26(%arg0: i32) -> (i32, i32) {
    %c0_i32 = arith.constant 0 : i32
    %c0_i32_0 = arith.constant 0 : i32
    return %arg0, %c0_i32 : i32, i32
  }
}

</mosaic_0001>

<llo_original>
// kernel: tpu_custom_call.1
$region0: #{tpu_custom_call.1}
  #allocation0 [shape = 'u32[]', space=smem, size = 0x4, offset = 0x4, fixed_abs, tag = 'smem constant byte address 0x4 - core index']
  #allocation1 [shape = 'u32[144,128]{1,0:T(1,128)}', space=vmem, size = 0x12000, scoped, tag = 'internal scratch']
  %s0 = inlined_call_operand.vmem [shape: f32[384,3], index: 0, kind: input, shape index: {}]
  %s1 = inlined_call_operand.hbm [shape: f32[384,384], index: 1, kind: input, shape index: {}]
  %s2 = inlined_call_operand.vmem [shape: f32[16,384], index: 2, kind: input, shape index: {}]
  %s3 = inlined_call_operand.vmem [shape: f32[3,16], index: 3, kind: input, shape index: {}]
  %s4 = inlined_call_operand.vmem [shape: f32[1,16], index: 4, kind: input, shape index: {}]
  %s5 = inlined_call_operand.vmem [shape: f32[16,16], index: 5, kind: input, shape index: {}]
  %s6 = inlined_call_operand.vmem [shape: f32[1,16], index: 6, kind: input, shape index: {}]
  %s7 = inlined_call_operand.vmem [shape: f32[16,32], index: 7, kind: input, shape index: {}]
  %s8 = inlined_call_operand.vmem [shape: f32[1,32], index: 8, kind: input, shape index: {}]
  %s9 = inlined_call_operand.vmem [shape: f32[32,32], index: 9, kind: input, shape index: {}]
  %s10 = inlined_call_operand.vmem [shape: f32[1,32], index: 10, kind: input, shape index: {}]
  %s11 = inlined_call_operand.vmem [shape: f32[16,32], index: 11, kind: input, shape index: {}]
  %s12 = inlined_call_operand.vmem [shape: f32[2,32,96], index: 12, kind: input, shape index: {}]
  %s13 = inlined_call_operand.vmem [shape: f32[2,1,96], index: 13, kind: input, shape index: {}]
  %s14 = inlined_call_operand.vmem [shape: f32[2,32,32], index: 14, kind: input, shape index: {}]
  %s15 = inlined_call_operand.vmem [shape: f32[2,1,32], index: 15, kind: input, shape index: {}]
  %s16 = inlined_call_operand.vmem [shape: f32[2,32,64], index: 16, kind: input, shape index: {}]
  %s17 = inlined_call_operand.vmem [shape: f32[2,1,64], index: 17, kind: input, shape index: {}]
  %s18 = inlined_call_operand.vmem [shape: f32[2,64,32], index: 18, kind: input, shape index: {}]
  %s19 = inlined_call_operand.vmem [shape: f32[2,1,32], index: 19, kind: input, shape index: {}]
  %s20 = inlined_call_operand.vmem [shape: f32[2,1,32], index: 20, kind: input, shape index: {}]
  %s21 = inlined_call_operand.vmem [shape: f32[2,1,32], index: 21, kind: input, shape index: {}]
  %s22 = inlined_call_operand.vmem [shape: f32[2,1,32], index: 22, kind: input, shape index: {}]
  %s23 = inlined_call_operand.vmem [shape: f32[2,1,32], index: 23, kind: input, shape index: {}]
  %s24 = inlined_call_operand.vmem [shape: f32[32,2], index: 24, kind: input, shape index: {}]
  %s25 = inlined_call_operand.vmem [shape: f32[1,2], index: 25, kind: input, shape index: {}]
  %s26 = inlined_call_operand.hbm [shape: f32[2,2], index: 26, kind: output, shape index: {}]
  %s27 = sld [smem:[#allocation0]]
  $region118: #{tpu_custom_call.1} parent=0
    _
  %s29 = ssub.s32 1, %s27
  %s30 = scalar_select 0, %s29, %s27
  $region1: #{tpu_custom_call.1} parent=0
    #allocation2 [shape = 'u8[589824]{0}', space=vmem, size = 0x90000, scoped, tag = 'input window, operand 1, single buffered']
    #allocation3 [shape = 's32[1]{0}', space=sflag, size = 0x4, scoped, tag = 'scoped memory for tpu_custom_call.1']
    #allocation4 [shape = 's32[1]{0}', space=sflag, size = 0x4, scoped, tag = 'scoped memory for tpu_custom_call.1']
    #allocation5 [shape = 'u8[1024]{0}', space=vmem, size = 0x400, scoped, tag = 'output window, operand 0, single buffered']
    %31 = vsyncpa [#allocation3], 0
    %32 = vsyncpa [#allocation4], 0
    // Predicated region
    $region2: #{tpu_custom_call.1} parent=1 // pred_check
      _
    $region3: #{tpu_custom_call.1} parent=1 // pred_check_branch
      %34 = sbr.rel (0) target = $region5
    $region4: #{tpu_custom_call.1} parent=1 // pred_region
      _
    $region5: #{tpu_custom_call.1} parent=1 // pred_fallthru
      _
    // Predicated region
    $region6: #{tpu_custom_call.1} parent=1 // pred_check
      _
    $region7: #{tpu_custom_call.1} parent=1 // pred_check_branch
      %36 = sbr.rel (0) target = $region9
    $region8: #{tpu_custom_call.1} parent=1 // pred_region
      %s38 = ssub.s32 18432, 18432
      %39 = vsyncadd [#allocation3], %s38
      %s40 = sshll.u32 [#allocation2], 4
      %s41 = int_to_ptr.vmem [resolvable:$true] %s40
      %46 = dma.hbm_to_vmem [thread:$0]  %s1, 18432, %s41, [#allocation3], 384, 384, 24
    $region9: #{tpu_custom_call.1} parent=1 // pred_fallthru
      _
    // Predicated region
    $region10: #{tpu_custom_call.1} parent=1 // pred_check
      _
    $region11: #{tpu_custom_call.1} parent=1 // pred_check_branch
      %48 = sbr.rel (0) target = $region13
    $region12: #{tpu_custom_call.1} parent=1 // pred_region
      _
    $region13: #{tpu_custom_call.1} parent=1 // pred_fallthru
      _
    // Predicated region
    $region14: #{tpu_custom_call.1} parent=1 // pred_check
      _
    $region15: #{tpu_custom_call.1} parent=1 // pred_check_branch
      %50 = sbr.rel (0) target = $region17
    $region16: #{tpu_custom_call.1} parent=1 // pred_region
      _
    $region17: #{tpu_custom_call.1} parent=1 // pred_fallthru
      _
    // Predicated region
    $region18: #{tpu_custom_call.1} parent=1 // pred_check
      _
    $region19: #{tpu_custom_call.1} parent=1 // pred_check_branch
      %52 = sbr.rel (0) target = $region21
    $region20: #{tpu_custom_call.1} parent=1 // pred_region
      _
    $region21: #{tpu_custom_call.1} parent=1 // pred_fallthru
      _
    // Predicated region
    $region22: #{tpu_custom_call.1} parent=1 // pred_check
      _
    $region23: #{tpu_custom_call.1} parent=1 // pred_check_branch
      %54 = sbr.rel (0) target = $region25
    $region24: #{tpu_custom_call.1} parent=1 // pred_region
      _
    $region25: #{tpu_custom_call.1} parent=1 // pred_fallthru
      _
    // Predicated region
    $region26: #{tpu_custom_call.1} parent=1 // pred_check
      _
    $region27: #{tpu_custom_call.1} parent=1 // pred_check_branch
      %56 = sbr.rel (0) target = $region29
    $region28: #{tpu_custom_call.1} parent=1 // pred_region
      _
    $region29: #{tpu_custom_call.1} parent=1 // pred_fallthru
      _
    // Predicated region
    $region30: #{tpu_custom_call.1} parent=1 // pred_check
      _
    $region31: #{tpu_custom_call.1} parent=1 // pred_check_branch
      %58 = sbr.rel (0) target = $region33
    $region32: #{tpu_custom_call.1} parent=1 // pred_region
      _
    $region33: #{tpu_custom_call.1} parent=1 // pred_fallthru
      _
    // Predicated region
    $region34: #{tpu_custom_call.1} parent=1 // pred_check
      _
    $region35: #{tpu_custom_call.1} parent=1 // pred_check_branch
      %60 = sbr.rel (0) target = $region37
    $region36: #{tpu_custom_call.1} parent=1 // pred_region
      _
    $region37: #{tpu_custom_call.1} parent=1 // pred_fallthru
      _
    // Predicated region
    $region38: #{tpu_custom_call.1} parent=1 // pred_check
      _
    $region39: #{tpu_custom_call.1} parent=1 // pred_check_branch
      %62 = sbr.rel (0) target = $region41
    $region40: #{tpu_custom_call.1} parent=1 // pred_region
      _
    $region41: #{tpu_custom_call.1} parent=1 // pred_fallthru
      _
    // Predicated region
    $region42: #{tpu_custom_call.1} parent=1 // pred_check
      _
    $region43: #{tpu_custom_call.1} parent=1 // pred_check_branch
      %64 = sbr.rel (0) target = $region45
    $region44: #{tpu_custom_call.1} parent=1 // pred_region
      _
    $region45: #{tpu_custom_call.1} parent=1 // pred_fallthru
      _
    // Predicated region
    $region46: #{tpu_custom_call.1} parent=1 // pred_check
      _
    $region47: #{tpu_custom_call.1} parent=1 // pred_check_branch
      %66 = sbr.rel (0) target = $region49
    $region48: #{tpu_custom_call.1} parent=1 // pred_region
      _
    $region49: #{tpu_custom_call.1} parent=1 // pred_fallthru
      _
    // Predicated region
    $region50: #{tpu_custom_call.1} parent=1 // pred_check
      _
    $region51: #{tpu_custom_call.1} parent=1 // pred_check_branch
      %68 = sbr.rel (0) target = $region53
    $region52: #{tpu_custom_call.1} parent=1 // pred_region
      _
    $region53: #{tpu_custom_call.1} parent=1 // pred_fallthru
      _
    // Predicated region
    $region54: #{tpu_custom_call.1} parent=1 // pred_check
      _
    $region55: #{tpu_custom_call.1} parent=1 // pred_check_branch
      %70 = sbr.rel (0) target = $region57
    $region56: #{tpu_custom_call.1} parent=1 // pred_region
      _
    $region57: #{tpu_custom_call.1} parent=1 // pred_fallthru
      _
    // Predicated region
    $region58: #{tpu_custom_call.1} parent=1 // pred_check
      _
    $region59: #{tpu_custom_call.1} parent=1 // pred_check_branch
      %72 = sbr.rel (0) target = $region61
    $region60: #{tpu_custom_call.1} parent=1 // pred_region
      _
    $region61: #{tpu_custom_call.1} parent=1 // pred_fallthru
      _
    // Predicated region
    $region62: #{tpu_custom_call.1} parent=1 // pred_check
      _
    $region63: #{tpu_custom_call.1} parent=1 // pred_check_branch
      %74 = sbr.rel (0) target = $region65
    $region64: #{tpu_custom_call.1} parent=1 // pred_region
      _
    $region65: #{tpu_custom_call.1} parent=1 // pred_fallthru
      _
    // Predicated region
    $region66: #{tpu_custom_call.1} parent=1 // pred_check
      _
    $region67: #{tpu_custom_call.1} parent=1 // pred_check_branch
      %76 = sbr.rel (0) target = $region69
    $region68: #{tpu_custom_call.1} parent=1 // pred_region
      _
    $region69: #{tpu_custom_call.1} parent=1 // pred_fallthru
      _
    // Predicated region
    $region70: #{tpu_custom_call.1} parent=1 // pred_check
      _
    $region71: #{tpu_custom_call.1} parent=1 // pred_check_branch
      %78 = sbr.rel (0) target = $region73
    $region72: #{tpu_custom_call.1} parent=1 // pred_region
      _
    $region73: #{tpu_custom_call.1} parent=1 // pred_fallthru
      _
    // Predicated region
    $region74: #{tpu_custom_call.1} parent=1 // pred_check
      _
    $region75: #{tpu_custom_call.1} parent=1 // pred_check_branch
      %80 = sbr.rel (0) target = $region77
    $region76: #{tpu_custom_call.1} parent=1 // pred_region
      _
    $region77: #{tpu_custom_call.1} parent=1 // pred_fallthru
      _
    // Predicated region
    $region78: #{tpu_custom_call.1} parent=1 // pred_check
      _
    $region79: #{tpu_custom_call.1} parent=1 // pred_check_branch
      %82 = sbr.rel (0) target = $region81
    $region80: #{tpu_custom_call.1} parent=1 // pred_region
      _
    $region81: #{tpu_custom_call.1} parent=1 // pred_fallthru
      _
    // Predicated region
    $region82: #{tpu_custom_call.1} parent=1 // pred_check
      _
    $region83: #{tpu_custom_call.1} parent=1 // pred_check_branch
      %84 = sbr.rel (0) target = $region85
    $region84: #{tpu_custom_call.1} parent=1 // pred_region
      _
    $region85: #{tpu_custom_call.1} parent=1 // pred_fallthru
      _
    // Predicated region
    $region86: #{tpu_custom_call.1} parent=1 // pred_check
      _
    $region87: #{tpu_custom_call.1} parent=1 // pred_check_branch
      %86 = sbr.rel (0) target = $region89
    $region88: #{tpu_custom_call.1} parent=1 // pred_region
      _
    $region89: #{tpu_custom_call.1} parent=1 // pred_fallthru
      _
    // Predicated region
    $region90: #{tpu_custom_call.1} parent=1 // pred_check
      _
    $region91: #{tpu_custom_call.1} parent=1 // pred_check_branch
      %88 = sbr.rel (0) target = $region93
    $region92: #{tpu_custom_call.1} parent=1 // pred_region
      _
    $region93: #{tpu_custom_call.1} parent=1 // pred_fallthru
      _
    // Predicated region
    $region94: #{tpu_custom_call.1} parent=1 // pred_check
      _
    $region95: #{tpu_custom_call.1} parent=1 // pred_check_branch
      %90 = sbr.rel (0) target = $region97
    $region96: #{tpu_custom_call.1} parent=1 // pred_region
      _
    $region97: #{tpu_custom_call.1} parent=1 // pred_fallthru
      _
    // Predicated region
    $region98: #{tpu_custom_call.1} parent=1 // pred_check
      _
    $region99: #{tpu_custom_call.1} parent=1 // pred_check_branch
      %92 = sbr.rel (0) target = $region101
    $region100: #{tpu_custom_call.1} parent=1 // pred_region
      _
    $region101: #{tpu_custom_call.1} parent=1 // pred_fallthru
      _
    // Predicated region
    $region102: #{tpu_custom_call.1} parent=1 // pred_check
      _
    $region103: #{tpu_custom_call.1} parent=1 // pred_check_branch
      %94 = sbr.rel (0) target = $region105
    $region104: #{tpu_custom_call.1} parent=1 // pred_region
      _
    $region105: #{tpu_custom_call.1} parent=1 // pred_fallthru
      _
    // Predicated region
    $region106: #{tpu_custom_call.1} parent=1 // pred_check
      _
    $region107: #{tpu_custom_call.1} parent=1 // pred_check_branch
      %96 = sbr.rel (0) target = $region109
    $region108: #{tpu_custom_call.1} parent=1 // pred_region
      %97 = dma.done [#allocation3], 18432
    $region109: #{tpu_custom_call.1} parent=1 // pred_fallthru
      _
    %v98 = vld [vmem:[%s0] sm:$0xff]
    %v99 = vld [vmem:[%s0 + $0x8] sm:$0xff]
    %v100 = vld [vmem:[%s0 + $0x10] sm:$0xff]
    %v101 = vld [vmem:[%s0 + $0x18] sm:$0xff]
    %v102 = vld [vmem:[%s0 + $0x20] sm:$0xff]
    %v103 = vld [vmem:[%s0 + $0x28] sm:$0xff]
    %v104 = vld [vmem:[%s0 + $0x30] sm:$0xff]
    %v105 = vld [vmem:[%s0 + $0x38] sm:$0xff]
    %v106 = vld [vmem:[%s0 + $0x40] sm:$0xff]
    %v107 = vld [vmem:[%s0 + $0x48] sm:$0xff]
    %v108 = vld [vmem:[%s0 + $0x50] sm:$0xff]
    %v109 = vld [vmem:[%s0 + $0x58] sm:$0xff]
    %v110 = vld [vmem:[%s0 + $0x60] sm:$0xff]
    %v111 = vld [vmem:[%s0 + $0x68] sm:$0xff]
    %v112 = vld [vmem:[%s0 + $0x70] sm:$0xff]
    %v113 = vld [vmem:[%s0 + $0x78] sm:$0xff]
    %v114 = vld [vmem:[%s0 + $0x80] sm:$0xff]
    %v115 = vld [vmem:[%s0 + $0x88] sm:$0xff]
    %v116 = vld [vmem:[%s0 + $0x90] sm:$0xff]
    %v117 = vld [vmem:[%s0 + $0x98] sm:$0xff]
    %v118 = vld [vmem:[%s0 + $0xa0] sm:$0xff]
    %v119 = vld [vmem:[%s0 + $0xa8] sm:$0xff]
    %v120 = vld [vmem:[%s0 + $0xb0] sm:$0xff]
    %v121 = vld [vmem:[%s0 + $0xb8] sm:$0xff]
    %v122 = vld [vmem:[%s0 + $0xc0] sm:$0xff]
    %v123 = vld [vmem:[%s0 + $0xc8] sm:$0xff]
    %v124 = vld [vmem:[%s0 + $0xd0] sm:$0xff]
    %v125 = vld [vmem:[%s0 + $0xd8] sm:$0xff]
    %v126 = vld [vmem:[%s0 + $0xe0] sm:$0xff]
    %v127 = vld [vmem:[%s0 + $0xe8] sm:$0xff]
    %v128 = vld [vmem:[%s0 + $0xf0] sm:$0xff]
    %v129 = vld [vmem:[%s0 + $0xf8] sm:$0xff]
    %v130 = vld [vmem:[%s0 + $0x100] sm:$0xff]
    %v131 = vld [vmem:[%s0 + $0x108] sm:$0xff]
    %v132 = vld [vmem:[%s0 + $0x110] sm:$0xff]
    %v133 = vld [vmem:[%s0 + $0x118] sm:$0xff]
    %v134 = vld [vmem:[%s0 + $0x120] sm:$0xff]
    %v135 = vld [vmem:[%s0 + $0x128] sm:$0xff]
    %v136 = vld [vmem:[%s0 + $0x130] sm:$0xff]
    %v137 = vld [vmem:[%s0 + $0x138] sm:$0xff]
    %v138 = vld [vmem:[%s0 + $0x140] sm:$0xff]
    %v139 = vld [vmem:[%s0 + $0x148] sm:$0xff]
    %v140 = vld [vmem:[%s0 + $0x150] sm:$0xff]
    %v141 = vld [vmem:[%s0 + $0x158] sm:$0xff]
    %v142 = vld [vmem:[%s0 + $0x160] sm:$0xff]
    %v143 = vld [vmem:[%s0 + $0x168] sm:$0xff]
    %v144 = vld [vmem:[%s0 + $0x170] sm:$0xff]
    %v145 = vld [vmem:[%s0 + $0x178] sm:$0xff]
    %v146 = vld [vmem:[#allocation2] sm:$0xff]
    %v147 = vld [vmem:[#allocation2 + $0x8] sm:$0xff]
    %v148 = vld [vmem:[#allocation2 + $0x10] sm:$0xff]
    %v149 = vld [vmem:[#allocation2 + $0x18] sm:$0xff]
    %v150 = vld [vmem:[#allocation2 + $0x20] sm:$0xff]
    %v151 = vld [vmem:[#allocation2 + $0x28] sm:$0xff]
    %v152 = vld [vmem:[#allocation2 + $0x30] sm:$0xff]
    %v153 = vld [vmem:[#allocation2 + $0x38] sm:$0xff]
    %v154 = vld [vmem:[#allocation2 + $0x40] sm:$0xff]
    %v155 = vld [vmem:[#allocation2 + $0x48] sm:$0xff]
    %v156 = vld [vmem:[#allocation2 + $0x50] sm:$0xff]
    %v157 = vld [vmem:[#allocation2 + $0x58] sm:$0xff]
    %v158 = vld [vmem:[#allocation2 + $0x60] sm:$0xff]
    %v159 = vld [vmem:[#allocation2 + $0x68] sm:$0xff]
    %v160 = vld [vmem:[#allocation2 + $0x70] sm:$0xff]
    %v161 = vld [vmem:[#allocation2 + $0x78] sm:$0xff]
    %v162 = vld [vmem:[#allocation2 + $0x80] sm:$0xff]
    %v163 = vld [vmem:[#allocation2 + $0x88] sm:$0xff]
    %v164 = vld [vmem:[#allocation2 + $0x90] sm:$0xff]
    %v165 = vld [vmem:[#allocation2 + $0x98] sm:$0xff]
    %v166 = vld [vmem:[#allocation2 + $0xa0] sm:$0xff]
    %v167 = vld [vmem:[#allocation2 + $0xa8] sm:$0xff]
    %v168 = vld [vmem:[#allocation2 + $0xb0] sm:$0xff]
    %v169 = vld [vmem:[#allocation2 + $0xb8] sm:$0xff]
    %v170 = vld [vmem:[#allocation2 + $0xc0] sm:$0xff]
    %v171 = vld [vmem:[#allocation2 + $0xc8] sm:$0xff]
    %v172 = vld [vmem:[#allocation2 + $0xd0] sm:$0xff]
    %v173 = vld [vmem:[#allocation2 + $0xd8] sm:$0xff]
    %v174 = vld [vmem:[#allocation2 + $0xe0] sm:$0xff]
    %v175 = vld [vmem:[#allocation2 + $0xe8] sm:$0xff]
    %v176 = vld [vmem:[#allocation2 + $0xf0] sm:$0xff]
    %v177 = vld [vmem:[#allocation2 + $0xf8] sm:$0xff]
    %v178 = vld [vmem:[#allocation2 + $0x100] sm:$0xff]
    %v179 = vld [vmem:[#allocation2 + $0x108] sm:$0xff]
    %v180 = vld [vmem:[#allocation2 + $0x110] sm:$0xff]
    %v181 = vld [vmem:[#allocation2 + $0x118] sm:$0xff]
    %v182 = vld [vmem:[#allocation2 + $0x120] sm:$0xff]
    %v183 = vld [vmem:[#allocation2 + $0x128] sm:$0xff]
    %v184 = vld [vmem:[#allocation2 + $0x130] sm:$0xff]
    %v185 = vld [vmem:[#allocation2 + $0x138] sm:$0xff]
    %v186 = vld [vmem:[#allocation2 + $0x140] sm:$0xff]
    %v187 = vld [vmem:[#allocation2 + $0x148] sm:$0xff]
    %v188 = vld [vmem:[#allocation2 + $0x150] sm:$0xff]
    %v189 = vld [vmem:[#allocation2 + $0x158] sm:$0xff]
    %v190 = vld [vmem:[#allocation2 + $0x160] sm:$0xff]
    %v191 = vld [vmem:[#allocation2 + $0x168] sm:$0xff]
    %v192 = vld [vmem:[#allocation2 + $0x170] sm:$0xff]
    %v193 = vld [vmem:[#allocation2 + $0x178] sm:$0xff]
    %v194 = vld [vmem:[#allocation2 + $0x180] sm:$0xff]
    %v195 = vld [vmem:[#allocation2 + $0x188] sm:$0xff]
    %v196 = vld [vmem:[#allocation2 + $0x190] sm:$0xff]
    %v197 = vld [vmem:[#allocation2 + $0x198] sm:$0xff]
    %v198 = vld [vmem:[#allocation2 + $0x1a0] sm:$0xff]
    %v199 = vld [vmem:[#allocation2 + $0x1a8] sm:$0xff]
    %v200 = vld [vmem:[#allocation2 + $0x1b0] sm:$0xff]
    %v201 = vld [vmem:[#allocation2 + $0x1b8] sm:$0xff]
    %v202 = vld [vmem:[#allocation2 + $0x1c0] sm:$0xff]
    %v203 = vld [vmem:[#allocation2 + $0x1c8] sm:$0xff]
    %v204 = vld [vmem:[#allocation2 + $0x1d0] sm:$0xff]
    %v205 = vld [vmem:[#allocation2 + $0x1d8] sm:$0xff]
    %v206 = vld [vmem:[#allocation2 + $0x1e0] sm:$0xff]
    %v207 = vld [vmem:[#allocation2 + $0x1e8] sm:$0xff]
    %v208 = vld [vmem:[#allocation2 + $0x1f0] sm:$0xff]
    %v209 = vld [vmem:[#allocation2 + $0x1f8] sm:$0xff]
    %v210 = vld [vmem:[#allocation2 + $0x200] sm:$0xff]
    %v211 = vld [vmem:[#allocation2 + $0x208] sm:$0xff]
    %v212 = vld [vmem:[#allocation2 + $0x210] sm:$0xff]
    %v213 = vld [vmem:[#allocation2 + $0x218] sm:$0xff]
    %v214 = vld [vmem:[#allocation2 + $0x220] sm:$0xff]
    %v215 = vld [vmem:[#allocation2 + $0x228] sm:$0xff]
    %v216 = vld [vmem:[#allocation2 + $0x230] sm:$0xff]
    %v217 = vld [vmem:[#allocation2 + $0x238] sm:$0xff]
    %v218 = vld [vmem:[#allocation2 + $0x240] sm:$0xff]
    %v219 = vld [vmem:[#allocation2 + $0x248] sm:$0xff]
    %v220 = vld [vmem:[#allocation2 + $0x250] sm:$0xff]
    %v221 = vld [vmem:[#allocation2 + $0x258] sm:$0xff]
    %v222 = vld [vmem:[#allocation2 + $0x260] sm:$0xff]
    %v223 = vld [vmem:[#allocation2 + $0x268] sm:$0xff]
    %v224 = vld [vmem:[#allocation2 + $0x270] sm:$0xff]
    %v225 = vld [vmem:[#allocation2 + $0x278] sm:$0xff]
    %v226 = vld [vmem:[#allocation2 + $0x280] sm:$0xff]
    %v227 = vld [vmem:[#allocation2 + $0x288] sm:$0xff]
    %v228 = vld [vmem:[#allocation2 + $0x290] sm:$0xff]
    %v229 = vld [vmem:[#allocation2 + $0x298] sm:$0xff]
    %v230 = vld [vmem:[#allocation2 + $0x2a0] sm:$0xff]
    %v231 = vld [vmem:[#allocation2 + $0x2a8] sm:$0xff]
    %v232 = vld [vmem:[#allocation2 + $0x2b0] sm:$0xff]
    %v233 = vld [vmem:[#allocation2 + $0x2b8] sm:$0xff]
    %v234 = vld [vmem:[#allocation2 + $0x2c0] sm:$0xff]
    %v235 = vld [vmem:[#allocation2 + $0x2c8] sm:$0xff]
    %v236 = vld [vmem:[#allocation2 + $0x2d0] sm:$0xff]
    %v237 = vld [vmem:[#allocation2 + $0x2d8] sm:$0xff]
    %v238 = vld [vmem:[#allocation2 + $0x2e0] sm:$0xff]
    %v239 = vld [vmem:[#allocation2 + $0x2e8] sm:$0xff]
    %v240 = vld [vmem:[#allocation2 + $0x2f0] sm:$0xff]
    %v241 = vld [vmem:[#allocation2 + $0x2f8] sm:$0xff]
    %v242 = vld [vmem:[#allocation2 + $0x300] sm:$0xff]
    %v243 = vld [vmem:[#allocation2 + $0x308] sm:$0xff]
    %v244 = vld [vmem:[#allocation2 + $0x310] sm:$0xff]
    %v245 = vld [vmem:[#allocation2 + $0x318] sm:$0xff]
    %v246 = vld [vmem:[#allocation2 + $0x320] sm:$0xff]
    %v247 = vld [vmem:[#allocation2 + $0x328] sm:$0xff]
    %v248 = vld [vmem:[#allocation2 + $0x330] sm:$0xff]
    %v249 = vld [vmem:[#allocation2 + $0x338] sm:$0xff]
    %v250 = vld [vmem:[#allocation2 + $0x340] sm:$0xff]
    %v251 = vld [vmem:[#allocation2 + $0x348] sm:$0xff]
    %v252 = vld [vmem:[#allocation2 + $0x350] sm:$0xff]
    %v253 = vld [vmem:[#allocation2 + $0x358] sm:$0xff]
    %v254 = vld [vmem:[#allocation2 + $0x360] sm:$0xff]
    %v255 = vld [vmem:[#allocation2 + $0x368] sm:$0xff]
    %v256 = vld [vmem:[#allocation2 + $0x370] sm:$0xff]
    %v257 = vld [vmem:[#allocation2 + $0x378] sm:$0xff]
    %v258 = vld [vmem:[#allocation2 + $0x380] sm:$0xff]
    %v259 = vld [vmem:[#allocation2 + $0x388] sm:$0xff]
    %v260 = vld [vmem:[#allocation2 + $0x390] sm:$0xff]
    %v261 = vld [vmem:[#allocation2 + $0x398] sm:$0xff]
    %v262 = vld [vmem:[#allocation2 + $0x3a0] sm:$0xff]
    %v263 = vld [vmem:[#allocation2 + $0x3a8] sm:$0xff]
    %v264 = vld [vmem:[#allocation2 + $0x3b0] sm:$0xff]
    %v265 = vld [vmem:[#allocation2 + $0x3b8] sm:$0xff]
    %v266 = vld [vmem:[#allocation2 + $0x3c0] sm:$0xff]
    %v267 = vld [vmem:[#allocation2 + $0x3c8] sm:$0xff]
    %v268 = vld [vmem:[#allocation2 + $0x3d0] sm:$0xff]
    %v269 = vld [vmem:[#allocation2 + $0x3d8] sm:$0xff]
    %v270 = vld [vmem:[#allocation2 + $0x3e0] sm:$0xff]
    %v271 = vld [vmem:[#allocation2 + $0x3e8] sm:$0xff]
    %v272 = vld [vmem:[#allocation2 + $0x3f0] sm:$0xff]
    %v273 = vld [vmem:[#allocation2 + $0x3f8] sm:$0xff]
    %v274 = vld [vmem:[#allocation2 + $0x400] sm:$0xff]
    %v275 = vld [vmem:[#allocation2 + $0x408] sm:$0xff]
    %v276 = vld [vmem:[#allocation2 + $0x410] sm:$0xff]
    %v277 = vld [vmem:[#allocation2 + $0x418] sm:$0xff]
    %v278 = vld [vmem:[#allocation2 + $0x420] sm:$0xff]
    %v279 = vld [vmem:[#allocation2 + $0x428] sm:$0xff]
    %v280 = vld [vmem:[#allocation2 + $0x430] sm:$0xff]
    %v281 = vld [vmem:[#allocation2 + $0x438] sm:$0xff]
    %v282 = vld [vmem:[#allocation2 + $0x440] sm:$0xff]
    %v283 = vld [vmem:[#allocation2 + $0x448] sm:$0xff]
    %v284 = vld [vmem:[#allocation2 + $0x450] sm:$0xff]
    %v285 = vld [vmem:[#allocation2 + $0x458] sm:$0xff]
    %v286 = vld [vmem:[#allocation2 + $0x460] sm:$0xff]
    %v287 = vld [vmem:[#allocation2 + $0x468] sm:$0xff]
    %v288 = vld [vmem:[#allocation2 + $0x470] sm:$0xff]
    %v289 = vld [vmem:[#allocation2 + $0x478] sm:$0xff]
    %v290 = vld [vmem:[%s3] sm:$0x7]
    %vm291 = vcmask 23552
    %v293 = vsel %vm291, %v98, 0
    %v296 = vsel %vm291, %v99, 0
    %v299 = vsel %vm291, %v100, 0
    %v302 = vsel %vm291, %v101, 0
    %v305 = vsel %vm291, %v102, 0
    %v308 = vsel %vm291, %v103, 0
    %v311 = vsel %vm291, %v104, 0
    %v314 = vsel %vm291, %v105, 0
    %v317 = vsel %vm291, %v106, 0
    %v320 = vsel %vm291, %v107, 0
    %v323 = vsel %vm291, %v108, 0
    %v326 = vsel %vm291, %v109, 0
    %v329 = vsel %vm291, %v110, 0
    %v332 = vsel %vm291, %v111, 0
    %v335 = vsel %vm291, %v112, 0
    %v338 = vsel %vm291, %v113, 0
    %v341 = vsel %vm291, %v114, 0
    %v344 = vsel %vm291, %v115, 0
    %v347 = vsel %vm291, %v116, 0
    %v350 = vsel %vm291, %v117, 0
    %v353 = vsel %vm291, %v118, 0
    %v356 = vsel %vm291, %v119, 0
    %v359 = vsel %vm291, %v120, 0
    %v362 = vsel %vm291, %v121, 0
    %v365 = vsel %vm291, %v122, 0
    %v368 = vsel %vm291, %v123, 0
    %v371 = vsel %vm291, %v124, 0
    %v374 = vsel %vm291, %v125, 0
    %v377 = vsel %vm291, %v126, 0
    %v380 = vsel %vm291, %v127, 0
    %v383 = vsel %vm291, %v128, 0
    %v386 = vsel %vm291, %v129, 0
    %v389 = vsel %vm291, %v130, 0
    %v392 = vsel %vm291, %v131, 0
    %v395 = vsel %vm291, %v132, 0
    %v398 = vsel %vm291, %v133, 0
    %v401 = vsel %vm291, %v134, 0
    %v404 = vsel %vm291, %v135, 0
    %v407 = vsel %vm291, %v136, 0
    %v410 = vsel %vm291, %v137, 0
    %v413 = vsel %vm291, %v138, 0
    %v416 = vsel %vm291, %v139, 0
    %v419 = vsel %vm291, %v140, 0
    %v422 = vsel %vm291, %v141, 0
    %v425 = vsel %vm291, %v142, 0
    %v428 = vsel %vm291, %v143, 0
    %v431 = vsel %vm291, %v144, 0
    %v434 = vsel %vm291, %v145, 0
    %vm436 = vcmask 1042432
    %v438 = vsel %vm436, %v290, 0
    %440 = vmatprep.subr.mxu0 0.0
    %441 = vmatpush1.msra.mxu0 0.0
    %442 = vmatprep.subr.mxu0 0.0
    %443 = vmatpush1.msra.mxu0 0.0
    %444 = vmatprep.subr.mxu0 0.0
    %445 = vmatpush1.msra.mxu0 0.0
    %446 = vmatprep.subr.mxu0 0.0
    %447 = vmatpush1.msra.mxu0 0.0
    %448 = vmatprep.subr.mxu0 0.0
    %449 = vmatpush1.msra.mxu0 0.0
    %450 = vmatprep.subr.mxu0 0.0
    %451 = vmatpush1.msra.mxu0 0.0
    %452 = vmatprep.subr.mxu0 0.0
    %453 = vmatpush1.msra.mxu0 0.0
    %454 = vmatprep.subr.mxu0 0.0
    %455 = vmatpush1.msra.mxu0 0.0
    %456 = vmatprep.subr.mxu0 0.0
    %457 = vmatpush1.msra.mxu0 0.0
    %458 = vmatprep.subr.mxu0 0.0
    %459 = vmatpush1.msra.mxu0 0.0
    %460 = vmatprep.subr.mxu0 0.0
    %461 = vmatpush1.msra.mxu0 0.0
    %462 = vmatprep.subr.mxu0 0.0
    %463 = vmatpush1.msra.mxu0 0.0
    %464 = vmatprep.subr.mxu0 0.0
    %465 = vmatpush1.msra.mxu0 0.0
    %466 = vmatprep.subr.mxu0 0.0
    %467 = vmatpush1.msra.mxu0 0.0
    %468 = vmatprep.subr.mxu0 0.0
    %469 = vmatpush1.msra.mxu0 0.0
    %470 = vmatprep.subr.mxu0 0.0
    %471 = vmatpush1.msra.mxu0 %v438
    %472 = vmatprep.subr.mxu0 0.0
    %473 = vmatpush2.msra.mxu0 0.0
    %474 = vmatprep.subr.mxu0 0.0
    %475 = vmatpush2.msra.mxu0 0.0
    %476 = vmatprep.subr.mxu0 0.0
    %477 = vmatpush2.msra.mxu0 0.0
    %478 = vmatprep.subr.mxu0 0.0
    %479 = vmatpush2.msra.mxu0 0.0
    %480 = vmatprep.subr.mxu0 0.0
    %481 = vmatpush2.msra.mxu0 0.0
    %482 = vmatprep.subr.mxu0 0.0
    %483 = vmatpush2.msra.mxu0 0.0
    %484 = vmatprep.subr.mxu0 0.0
    %485 = vmatpush2.msra.mxu0 0.0
    %486 = vmatprep.subr.mxu0 0.0
    %487 = vmatpush2.msra.mxu0 0.0
    %488 = vmatprep.subr.mxu0 0.0
    %489 = vmatpush2.msra.mxu0 0.0
    %490 = vmatprep.subr.mxu0 0.0
    %491 = vmatpush2.msra.mxu0 0.0
    %492 = vmatprep.subr.mxu0 0.0
    %493 = vmatpush2.msra.mxu0 0.0
    %494 = vmatprep.subr.mxu0 0.0
    %495 = vmatpush2.msra.mxu0 0.0
    %496 = vmatprep.subr.mxu0 0.0
    %497 = vmatpush2.msra.mxu0 0.0
    %498 = vmatprep.subr.mxu0 0.0
    %499 = vmatpush2.msra.mxu0 0.0
    %500 = vmatprep.subr.mxu0 0.0
    %501 = vmatpush2.msra.mxu0 0.0
    %502 = vmatprep.subr.mxu0 0.0
    %503 = vmatpush2.msra.mxu0 0.0
    %504 = vmatprep.mubr.f32.mxu0 0.0
    %505 = vmatmul.mubr.f32.gmra.mxu0 %v293
    %v506 = vpop.f32.mrf.mxu0
    %v507 = vadd.f32 0.0, %v506
    %v508 = vpop.f32.mrf.mxu0
    %509 = vmatprep.mubr.f32.mxu0 0.0
    %510 = vmatmul.mubr.f32.gmra.mxu0 %v296
    %v511 = vpop.f32.mrf.mxu0
    %v512 = vadd.f32 0.0, %v511
    %v513 = vpop.f32.mrf.mxu0
    %514 = vmatprep.mubr.f32.mxu0 0.0
    %515 = vmatmul.mubr.f32.gmra.mxu0 %v299
    %v516 = vpop.f32.mrf.mxu0
    %v517 = vadd.f32 0.0, %v516
    %v518 = vpop.f32.mrf.mxu0
    %519 = vmatprep.mubr.f32.mxu0 0.0
    %520 = vmatmul.mubr.f32.gmra.mxu0 %v302
    %v521 = vpop.f32.mrf.mxu0
    %v522 = vadd.f32 0.0, %v521
    %v523 = vpop.f32.mrf.mxu0
    %524 = vmatprep.mubr.f32.mxu0 0.0
    %525 = vmatmul.mubr.f32.gmra.mxu0 %v305
    %v526 = vpop.f32.mrf.mxu0
    %v527 = vadd.f32 0.0, %v526
    %v528 = vpop.f32.mrf.mxu0
    %529 = vmatprep.mubr.f32.mxu0 0.0
    %530 = vmatmul.mubr.f32.gmra.mxu0 %v308
    %v531 = vpop.f32.mrf.mxu0
    %v532 = vadd.f32 0.0, %v531
    %v533 = vpop.f32.mrf.mxu0
    %534 = vmatprep.mubr.f32.mxu0 0.0
    %535 = vmatmul.mubr.f32.gmra.mxu0 %v311
    %v536 = vpop.f32.mrf.mxu0
    %v537 = vadd.f32 0.0, %v536
    %v538 = vpop.f32.mrf.mxu0
    %539 = vmatprep.mubr.f32.mxu0 0.0
    %540 = vmatmul.mubr.f32.gmra.mxu0 %v314
    %v541 = vpop.f32.mrf.mxu0
    %v542 = vadd.f32 0.0, %v541
    %v543 = vpop.f32.mrf.mxu0
    %544 = vmatprep.mubr.f32.mxu0 0.0
    %545 = vmatmul.mubr.f32.gmra.mxu0 %v317
    %v546 = vpop.f32.mrf.mxu0
    %v547 = vadd.f32 0.0, %v546
    %v548 = vpop.f32.mrf.mxu0
    %549 = vmatprep.mubr.f32.mxu0 0.0
    %550 = vmatmul.mubr.f32.gmra.mxu0 %v320
    %v551 = vpop.f32.mrf.mxu0
    %v552 = vadd.f32 0.0, %v551
    %v553 = vpop.f32.mrf.mxu0
    %554 = vmatprep.mubr.f32.mxu0 0.0
    %555 = vmatmul.mubr.f32.gmra.mxu0 %v323
    %v556 = vpop.f32.mrf.mxu0
    %v557 = vadd.f32 0.0, %v556
    %v558 = vpop.f32.mrf.mxu0
    %559 = vmatprep.mubr.f32.mxu0 0.0
    %560 = vmatmul.mubr.f32.gmra.mxu0 %v326
    %v561 = vpop.f32.mrf.mxu0
    %v562 = vadd.f32 0.0, %v561
    %v563 = vpop.f32.mrf.mxu0
    %564 = vmatprep.mubr.f32.mxu0 0.0
    %565 = vmatmul.mubr.f32.gmra.mxu0 %v329
    %v566 = vpop.f32.mrf.mxu0
    %v567 = vadd.f32 0.0, %v566
    %v568 = vpop.f32.mrf.mxu0
    %569 = vmatprep.mubr.f32.mxu0 0.0
    %570 = vmatmul.mubr.f32.gmra.mxu0 %v332
    %v571 = vpop.f32.mrf.mxu0
    %v572 = vadd.f32 0.0, %v571
    %v573 = vpop.f32.mrf.mxu0
    %574 = vmatprep.mubr.f32.mxu0 0.0
    %575 = vmatmul.mubr.f32.gmra.mxu0 %v335
    %v576 = vpop.f32.mrf.mxu0
    %v577 = vadd.f32 0.0, %v576
    %v578 = vpop.f32.mrf.mxu0
    %579 = vmatprep.mubr.f32.mxu0 0.0
    %580 = vmatmul.mubr.f32.gmra.mxu0 %v338
    %v581 = vpop.f32.mrf.mxu0
    %v582 = vadd.f32 0.0, %v581
    %v583 = vpop.f32.mrf.mxu0
    %584 = vmatprep.mubr.f32.mxu0 0.0
    %585 = vmatmul.mubr.f32.gmra.mxu0 %v341
    %v586 = vpop.f32.mrf.mxu0
    %v587 = vadd.f32 0.0, %v586
    %v588 = vpop.f32.mrf.mxu0
    %589 = vmatprep.mubr.f32.mxu0 0.0
    %590 = vmatmul.mubr.f32.gmra.mxu0 %v344
    %v591 = vpop.f32.mrf.mxu0
    %v592 = vadd.f32 0.0, %v591
    %v593 = vpop.f32.mrf.mxu0
    %594 = vmatprep.mubr.f32.mxu0 0.0
    %595 = vmatmul.mubr.f32.gmra.mxu0 %v347
    %v596 = vpop.f32.mrf.mxu0
    %v597 = vadd.f32 0.0, %v596
    %v598 = vpop.f32.mrf.mxu0
    %599 = vmatprep.mubr.f32.mxu0 0.0
    %600 = vmatmul.mubr.f32.gmra.mxu0 %v350
    %v601 = vpop.f32.mrf.mxu0
    %v602 = vadd.f32 0.0, %v601
    %v603 = vpop.f32.mrf.mxu0
    %604 = vmatprep.mubr.f32.mxu0 0.0
    %605 = vmatmul.mubr.f32.gmra.mxu0 %v353
    %v606 = vpop.f32.mrf.mxu0
    %v607 = vadd.f32 0.0, %v606
    %v608 = vpop.f32.mrf.mxu0
    %609 = vmatprep.mubr.f32.mxu0 0.0
    %610 = vmatmul.mubr.f32.gmra.mxu0 %v356
    %v611 = vpop.f32.mrf.mxu0
    %v612 = vadd.f32 0.0, %v611
    %v613 = vpop.f32.mrf.mxu0
    %614 = vmatprep.mubr.f32.mxu0 0.0
    %615 = vmatmul.mubr.f32.gmra.mxu0 %v359
    %v616 = vpop.f32.mrf.mxu0
    %v617 = vadd.f32 0.0, %v616
    %v618 = vpop.f32.mrf.mxu0
    %619 = vmatprep.mubr.f32.mxu0 0.0
    %620 = vmatmul.mubr.f32.gmra.mxu0 %v362
    %v621 = vpop.f32.mrf.mxu0
    %v622 = vadd.f32 0.0, %v621
    %v623 = vpop.f32.mrf.mxu0
    %624 = vmatprep.mubr.f32.mxu0 0.0
    %625 = vmatmul.mubr.f32.gmra.mxu0 %v365
    %v626 = vpop.f32.mrf.mxu0
    %v627 = vadd.f32 0.0, %v626
    %v628 = vpop.f32.mrf.mxu0
    %629 = vmatprep.mubr.f32.mxu0 0.0
    %630 = vmatmul.mubr.f32.gmra.mxu0 %v368
    %v631 = vpop.f32.mrf.mxu0
    %v632 = vadd.f32 0.0, %v631
    %v633 = vpop.f32.mrf.mxu0
    %634 = vmatprep.mubr.f32.mxu0 0.0
    %635 = vmatmul.mubr.f32.gmra.mxu0 %v371
    %v636 = vpop.f32.mrf.mxu0
    %v637 = vadd.f32 0.0, %v636
    %v638 = vpop.f32.mrf.mxu0
    %639 = vmatprep.mubr.f32.mxu0 0.0
    %640 = vmatmul.mubr.f32.gmra.mxu0 %v374
    %v641 = vpop.f32.mrf.mxu0
    %v642 = vadd.f32 0.0, %v641
    %v643 = vpop.f32.mrf.mxu0
    %644 = vmatprep.mubr.f32.mxu0 0.0
    %645 = vmatmul.mubr.f32.gmra.mxu0 %v377
    %v646 = vpop.f32.mrf.mxu0
    %v647 = vadd.f32 0.0, %v646
    %v648 = vpop.f32.mrf.mxu0
    %649 = vmatprep.mubr.f32.mxu0 0.0
    %650 = vmatmul.mubr.f32.gmra.mxu0 %v380
    %v651 = vpop.f32.mrf.mxu0
    %v652 = vadd.f32 0.0, %v651
    %v653 = vpop.f32.mrf.mxu0
    %654 = vmatprep.mubr.f32.mxu0 0.0
    %655 = vmatmul.mubr.f32.gmra.mxu0 %v383
    %v656 = vpop.f32.mrf.mxu0
    %v657 = vadd.f32 0.0, %v656
    %v658 = vpop.f32.mrf.mxu0
    %659 = vmatprep.mubr.f32.mxu0 0.0
    %660 = vmatmul.mubr.f32.gmra.mxu0 %v386
    %v661 = vpop.f32.mrf.mxu0
    %v662 = vadd.f32 0.0, %v661
    %v663 = vpop.f32.mrf.mxu0
    %664 = vmatprep.mubr.f32.mxu0 0.0
    %665 = vmatmul.mubr.f32.gmra.mxu0 %v389
    %v666 = vpop.f32.mrf.mxu0
    %v667 = vadd.f32 0.0, %v666
    %v668 = vpop.f32.mrf.mxu0
    %669 = vmatprep.mubr.f32.mxu0 0.0
    %670 = vmatmul.mubr.f32.gmra.mxu0 %v392
    %v671 = vpop.f32.mrf.mxu0
    %v672 = vadd.f32 0.0, %v671
    %v673 = vpop.f32.mrf.mxu0
    %674 = vmatprep.mubr.f32.mxu0 0.0
    %675 = vmatmul.mubr.f32.gmra.mxu0 %v395
    %v676 = vpop.f32.mrf.mxu0
    %v677 = vadd.f32 0.0, %v676
    %v678 = vpop.f32.mrf.mxu0
    %679 = vmatprep.mubr.f32.mxu0 0.0
    %680 = vmatmul.mubr.f32.gmra.mxu0 %v398
    %v681 = vpop.f32.mrf.mxu0
    %v682 = vadd.f32 0.0, %v681
    %v683 = vpop.f32.mrf.mxu0
    %684 = vmatprep.mubr.f32.mxu0 0.0
    %685 = vmatmul.mubr.f32.gmra.mxu0 %v401
    %v686 = vpop.f32.mrf.mxu0
    %v687 = vadd.f32 0.0, %v686
    %v688 = vpop.f32.mrf.mxu0
    %689 = vmatprep.mubr.f32.mxu0 0.0
    %690 = vmatmul.mubr.f32.gmra.mxu0 %v404
    %v691 = vpop.f32.mrf.mxu0
    %v692 = vadd.f32 0.0, %v691
    %v693 = vpop.f32.mrf.mxu0
    %694 = vmatprep.mubr.f32.mxu0 0.0
    %695 = vmatmul.mubr.f32.gmra.mxu0 %v407
    %v696 = vpop.f32.mrf.mxu0
    %v697 = vadd.f32 0.0, %v696
    %v698 = vpop.f32.mrf.mxu0
    %699 = vmatprep.mubr.f32.mxu0 0.0
    %700 = vmatmul.mubr.f32.gmra.mxu0 %v410
    %v701 = vpop.f32.mrf.mxu0
    %v702 = vadd.f32 0.0, %v701
    %v703 = vpop.f32.mrf.mxu0
    %704 = vmatprep.mubr.f32.mxu0 0.0
    %705 = vmatmul.mubr.f32.gmra.mxu0 %v413
    %v706 = vpop.f32.mrf.mxu0
    %v707 = vadd.f32 0.0, %v706
    %v708 = vpop.f32.mrf.mxu0
    %709 = vmatprep.mubr.f32.mxu0 0.0
    %710 = vmatmul.mubr.f32.gmra.mxu0 %v416
    %v711 = vpop.f32.mrf.mxu0
    %v712 = vadd.f32 0.0, %v711
    %v713 = vpop.f32.mrf.mxu0
    %714 = vmatprep.mubr.f32.mxu0 0.0
    %715 = vmatmul.mubr.f32.gmra.mxu0 %v419
    %v716 = vpop.f32.mrf.mxu0
    %v717 = vadd.f32 0.0, %v716
    %v718 = vpop.f32.mrf.mxu0
    %719 = vmatprep.mubr.f32.mxu0 0.0
    %720 = vmatmul.mubr.f32.gmra.mxu0 %v422
    %v721 = vpop.f32.mrf.mxu0
    %v722 = vadd.f32 0.0, %v721
    %v723 = vpop.f32.mrf.mxu0
    %724 = vmatprep.mubr.f32.mxu0 0.0
    %725 = vmatmul.mubr.f32.gmra.mxu0 %v425
    %v726 = vpop.f32.mrf.mxu0
    %v727 = vadd.f32 0.0, %v726
    %v728 = vpop.f32.mrf.mxu0
    %729 = vmatprep.mubr.f32.mxu0 0.0
    %730 = vmatmul.mubr.f32.gmra.mxu0 %v428
    %v731 = vpop.f32.mrf.mxu0
    %v732 = vadd.f32 0.0, %v731
    %v733 = vpop.f32.mrf.mxu0
    %734 = vmatprep.mubr.f32.mxu0 0.0
    %735 = vmatmul.mubr.f32.gmra.mxu0 %v431
    %v736 = vpop.f32.mrf.mxu0
    %v737 = vadd.f32 0.0, %v736
    %v738 = vpop.f32.mrf.mxu0
    %739 = vmatprep.mubr.f32.mxu0 0.0
    %740 = vmatmul.mubr.f32.gmra.mxu0 %v434
    %v741 = vpop.f32.mrf.mxu0
    %v742 = vadd.f32 0.0, %v741
    %v743 = vpop.f32.mrf.mxu0
    %744 = vdwg.mxu0
    %v745 = vld [vmem:[%s4] sm:$0x1]
    %v747 = vlaneseq
    %v748 = vshrl.u32 %v747, 7
    %v749 = vsub.s32 0, %v748
    %v750 = vrot.slane %v745, %v749
    %752 = vmatprep.subr.mxu0 0.0
    %753 = vmatpush1.msra.mxu0 %v582
    %754 = vmatprep.subr.mxu0 0.0
    %755 = vmatpush1.msra.mxu0 %v577
    %756 = vmatprep.subr.mxu0 0.0
    %757 = vmatpush1.msra.mxu0 %v572
    %758 = vmatprep.subr.mxu0 0.0
    %759 = vmatpush1.msra.mxu0 %v567
    %760 = vmatprep.subr.mxu0 0.0
    %761 = vmatpush1.msra.mxu0 %v562
    %762 = vmatprep.subr.mxu0 0.0
    %763 = vmatpush1.msra.mxu0 %v557
    %764 = vmatprep.subr.mxu0 0.0
    %765 = vmatpush1.msra.mxu0 %v552
    %766 = vmatprep.subr.mxu0 0.0
    %767 = vmatpush1.msra.mxu0 %v547
    %768 = vmatprep.subr.mxu0 0.0
    %769 = vmatpush1.msra.mxu0 %v542
    %770 = vmatprep.subr.mxu0 0.0
    %771 = vmatpush1.msra.mxu0 %v537
    %772 = vmatprep.subr.mxu0 0.0
    %773 = vmatpush1.msra.mxu0 %v532
    %774 = vmatprep.subr.mxu0 0.0
    %775 = vmatpush1.msra.mxu0 %v527
    %776 = vmatprep.subr.mxu0 0.0
    %777 = vmatpush1.msra.mxu0 %v522
    %778 = vmatprep.subr.mxu0 0.0
    %779 = vmatpush1.msra.mxu0 %v517
    %780 = vmatprep.subr.mxu0 0.0
    %781 = vmatpush1.msra.mxu0 %v512
    %782 = vmatprep.subr.mxu0 0.0
    %783 = vmatpush1.msra.mxu0 %v507
    %784 = vmatprep.subr.mxu0 0.0
    %785 = vmatpush2.msra.mxu0 %v662
    %786 = vmatprep.subr.mxu0 0.0
    %787 = vmatpush2.msra.mxu0 %v657
    %788 = vmatprep.subr.mxu0 0.0
    %789 = vmatpush2.msra.mxu0 %v652
    %790 = vmatprep.subr.mxu0 0.0
    %791 = vmatpush2.msra.mxu0 %v647
    %792 = vmatprep.subr.mxu0 0.0
    %793 = vmatpush2.msra.mxu0 %v642
    %794 = vmatprep.subr.mxu0 0.0
    %795 = vmatpush2.msra.mxu0 %v637
    %796 = vmatprep.subr.mxu0 0.0
    %797 = vmatpush2.msra.mxu0 %v632
    %798 = vmatprep.subr.mxu0 0.0
    %799 = vmatpush2.msra.mxu0 %v627
    %800 = vmatprep.subr.mxu0 0.0
    %801 = vmatpush2.msra.mxu0 %v622
    %802 = vmatprep.subr.mxu0 0.0
    %803 = vmatpush2.msra.mxu0 %v617
    %804 = vmatprep.subr.mxu0 0.0
    %805 = vmatpush2.msra.mxu0 %v612
    %806 = vmatprep.subr.mxu0 0.0
    %807 = vmatpush2.msra.mxu0 %v607
    %808 = vmatprep.subr.mxu0 0.0
    %809 = vmatpush2.msra.mxu0 %v602
    %810 = vmatprep.subr.mxu0 0.0
    %811 = vmatpush2.msra.mxu0 %v597
    %812 = vmatprep.subr.mxu0 0.0
    %813 = vmatpush2.msra.mxu0 %v592
    %814 = vmatprep.subr.mxu0 0.0
    %815 = vmatpush2.msra.mxu0 %v587
    %816 = vmatprep.mubr.f32.mxu0 %v147
    %817 = vmatmul.mubr.f32.gmra.mxu0 %v146
    %v818 = vpop.f32.mrf.mxu0
    %v819 = vadd.f32 %v750, %v818
    %v820 = vpop.f32.mrf.mxu0
    %821 = vmatprep.mubr.f32.mxu0 %v150
    %822 = vmatmul.mubr.f32.gmra.mxu0 %v149
    %v823 = vpop.f32.mrf.mxu0
    %v824 = vadd.f32 %v750, %v823
    %v825 = vpop.f32.mrf.mxu0
    %826 = vmatprep.mubr.f32.mxu0 %v153
    %827 = vmatmul.mubr.f32.gmra.mxu0 %v152
    %v828 = vpop.f32.mrf.mxu0
    %v829 = vadd.f32 %v750, %v828
    %v830 = vpop.f32.mrf.mxu0
    %831 = vmatprep.mubr.f32.mxu0 %v156
    %832 = vmatmul.mubr.f32.gmra.mxu0 %v155
    %v833 = vpop.f32.mrf.mxu0
    %v834 = vadd.f32 %v750, %v833
    %v835 = vpop.f32.mrf.mxu0
    %836 = vmatprep.mubr.f32.mxu0 %v159
    %837 = vmatmul.mubr.f32.gmra.mxu0 %v158
    %v838 = vpop.f32.mrf.mxu0
    %v839 = vadd.f32 %v750, %v838
    %v840 = vpop.f32.mrf.mxu0
    %841 = vmatprep.mubr.f32.mxu0 %v162
    %842 = vmatmul.mubr.f32.gmra.mxu0 %v161
    %v843 = vpop.f32.mrf.mxu0
    %v844 = vadd.f32 %v750, %v843
    %v845 = vpop.f32.mrf.mxu0
    %846 = vmatprep.mubr.f32.mxu0 %v165
    %847 = vmatmul.mubr.f32.gmra.mxu0 %v164
    %v848 = vpop.f32.mrf.mxu0
    %v849 = vadd.f32 %v750, %v848
    %v850 = vpop.f32.mrf.mxu0
    %851 = vmatprep.mubr.f32.mxu0 %v168
    %852 = vmatmul.mubr.f32.gmra.mxu0 %v167
    %v853 = vpop.f32.mrf.mxu0
    %v854 = vadd.f32 %v750, %v853
    %v855 = vpop.f32.mrf.mxu0
    %856 = vmatprep.mubr.f32.mxu0 %v171
    %857 = vmatmul.mubr.f32.gmra.mxu0 %v170
    %v858 = vpop.f32.mrf.mxu0
    %v859 = vadd.f32 %v750, %v858
    %v860 = vpop.f32.mrf.mxu0
    %861 = vmatprep.mubr.f32.mxu0 %v174
    %862 = vmatmul.mubr.f32.gmra.mxu0 %v173
    %v863 = vpop.f32.mrf.mxu0
    %v864 = vadd.f32 %v750, %v863
    %v865 = vpop.f32.mrf.mxu0
    %866 = vmatprep.mubr.f32.mxu0 %v177
    %867 = vmatmul.mubr.f32.gmra.mxu0 %v176
    %v868 = vpop.f32.mrf.mxu0
    %v869 = vadd.f32 %v750, %v868
    %v870 = vpop.f32.mrf.mxu0
    %871 = vmatprep.mubr.f32.mxu0 %v180
    %872 = vmatmul.mubr.f32.gmra.mxu0 %v179
    %v873 = vpop.f32.mrf.mxu0
    %v874 = vadd.f32 %v750, %v873
    %v875 = vpop.f32.mrf.mxu0
    %876 = vmatprep.mubr.f32.mxu0 %v183
    %877 = vmatmul.mubr.f32.gmra.mxu0 %v182
    %v878 = vpop.f32.mrf.mxu0
    %v879 = vadd.f32 %v750, %v878
    %v880 = vpop.f32.mrf.mxu0
    %881 = vmatprep.mubr.f32.mxu0 %v186
    %882 = vmatmul.mubr.f32.gmra.mxu0 %v185
    %v883 = vpop.f32.mrf.mxu0
    %v884 = vadd.f32 %v750, %v883
    %v885 = vpop.f32.mrf.mxu0
    %886 = vmatprep.mubr.f32.mxu0 %v189
    %887 = vmatmul.mubr.f32.gmra.mxu0 %v188
    %v888 = vpop.f32.mrf.mxu0
    %v889 = vadd.f32 %v750, %v888
    %v890 = vpop.f32.mrf.mxu0
    %891 = vmatprep.mubr.f32.mxu0 %v192
    %892 = vmatmul.mubr.f32.gmra.mxu0 %v191
    %v893 = vpop.f32.mrf.mxu0
    %v894 = vadd.f32 %v750, %v893
    %v895 = vpop.f32.mrf.mxu0
    %896 = vmatprep.mubr.f32.mxu0 %v195
    %897 = vmatmul.mubr.f32.gmra.mxu0 %v194
    %v898 = vpop.f32.mrf.mxu0
    %v899 = vadd.f32 %v750, %v898
    %v900 = vpop.f32.mrf.mxu0
    %901 = vmatprep.mubr.f32.mxu0 %v198
    %902 = vmatmul.mubr.f32.gmra.mxu0 %v197
    %v903 = vpop.f32.mrf.mxu0
    %v904 = vadd.f32 %v750, %v903
    %v905 = vpop.f32.mrf.mxu0
    %906 = vmatprep.mubr.f32.mxu0 %v201
    %907 = vmatmul.mubr.f32.gmra.mxu0 %v200
    %v908 = vpop.f32.mrf.mxu0
    %v909 = vadd.f32 %v750, %v908
    %v910 = vpop.f32.mrf.mxu0
    %911 = vmatprep.mubr.f32.mxu0 %v204
    %912 = vmatmul.mubr.f32.gmra.mxu0 %v203
    %v913 = vpop.f32.mrf.mxu0
    %v914 = vadd.f32 %v750, %v913
    %v915 = vpop.f32.mrf.mxu0
    %916 = vmatprep.mubr.f32.mxu0 %v207
    %917 = vmatmul.mubr.f32.gmra.mxu0 %v206
    %v918 = vpop.f32.mrf.mxu0
    %v919 = vadd.f32 %v750, %v918
    %v920 = vpop.f32.mrf.mxu0
    %921 = vmatprep.mubr.f32.mxu0 %v210
    %922 = vmatmul.mubr.f32.gmra.mxu0 %v209
    %v923 = vpop.f32.mrf.mxu0
    %v924 = vadd.f32 %v750, %v923
    %v925 = vpop.f32.mrf.mxu0
    %926 = vmatprep.mubr.f32.mxu0 %v213
    %927 = vmatmul.mubr.f32.gmra.mxu0 %v212
    %v928 = vpop.f32.mrf.mxu0
    %v929 = vadd.f32 %v750, %v928
    %v930 = vpop.f32.mrf.mxu0
    %931 = vmatprep.mubr.f32.mxu0 %v216
    %932 = vmatmul.mubr.f32.gmra.mxu0 %v215
    %v933 = vpop.f32.mrf.mxu0
    %v934 = vadd.f32 %v750, %v933
    %v935 = vpop.f32.mrf.mxu0
    %936 = vmatprep.mubr.f32.mxu0 %v219
    %937 = vmatmul.mubr.f32.gmra.mxu0 %v218
    %v938 = vpop.f32.mrf.mxu0
    %v939 = vadd.f32 %v750, %v938
    %v940 = vpop.f32.mrf.mxu0
    %941 = vmatprep.mubr.f32.mxu0 %v222
    %942 = vmatmul.mubr.f32.gmra.mxu0 %v221
    %v943 = vpop.f32.mrf.mxu0
    %v944 = vadd.f32 %v750, %v943
    %v945 = vpop.f32.mrf.mxu0
    %946 = vmatprep.mubr.f32.mxu0 %v225
    %947 = vmatmul.mubr.f32.gmra.mxu0 %v224
    %v948 = vpop.f32.mrf.mxu0
    %v949 = vadd.f32 %v750, %v948
    %v950 = vpop.f32.mrf.mxu0
    %951 = vmatprep.mubr.f32.mxu0 %v228
    %952 = vmatmul.mubr.f32.gmra.mxu0 %v227
    %v953 = vpop.f32.mrf.mxu0
    %v954 = vadd.f32 %v750, %v953
    %v955 = vpop.f32.mrf.mxu0
    %956 = vmatprep.mubr.f32.mxu0 %v231
    %957 = vmatmul.mubr.f32.gmra.mxu0 %v230
    %v958 = vpop.f32.mrf.mxu0
    %v959 = vadd.f32 %v750, %v958
    %v960 = vpop.f32.mrf.mxu0
    %961 = vmatprep.mubr.f32.mxu0 %v234
    %962 = vmatmul.mubr.f32.gmra.mxu0 %v233
    %v963 = vpop.f32.mrf.mxu0
    %v964 = vadd.f32 %v750, %v963
    %v965 = vpop.f32.mrf.mxu0
    %966 = vmatprep.mubr.f32.mxu0 %v237
    %967 = vmatmul.mubr.f32.gmra.mxu0 %v236
    %v968 = vpop.f32.mrf.mxu0
    %v969 = vadd.f32 %v750, %v968
    %v970 = vpop.f32.mrf.mxu0
    %971 = vmatprep.mubr.f32.mxu0 %v240
    %972 = vmatmul.mubr.f32.gmra.mxu0 %v239
    %v973 = vpop.f32.mrf.mxu0
    %v974 = vadd.f32 %v750, %v973
    %v975 = vpop.f32.mrf.mxu0
    %976 = vmatprep.mubr.f32.mxu0 %v243
    %977 = vmatmul.mubr.f32.gmra.mxu0 %v242
    %v978 = vpop.f32.mrf.mxu0
    %v979 = vadd.f32 %v750, %v978
    %v980 = vpop.f32.mrf.mxu0
    %981 = vmatprep.mubr.f32.mxu0 %v246
    %982 = vmatmul.mubr.f32.gmra.mxu0 %v245
    %v983 = vpop.f32.mrf.mxu0
    %v984 = vadd.f32 %v750, %v983
    %v985 = vpop.f32.mrf.mxu0
    %986 = vmatprep.mubr.f32.mxu0 %v249
    %987 = vmatmul.mubr.f32.gmra.mxu0 %v248
    %v988 = vpop.f32.mrf.mxu0
    %v989 = vadd.f32 %v750, %v988
    %v990 = vpop.f32.mrf.mxu0
    %991 = vmatprep.mubr.f32.mxu0 %v252
    %992 = vmatmul.mubr.f32.gmra.mxu0 %v251
    %v993 = vpop.f32.mrf.mxu0
    %v994 = vadd.f32 %v750, %v993
    %v995 = vpop.f32.mrf.mxu0
    %996 = vmatprep.mubr.f32.mxu0 %v255
    %997 = vmatmul.mubr.f32.gmra.mxu0 %v254
    %v998 = vpop.f32.mrf.mxu0
    %v999 = vadd.f32 %v750, %v998
    %v1000 = vpop.f32.mrf.mxu0
    %1001 = vmatprep.mubr.f32.mxu0 %v258
    %1002 = vmatmul.mubr.f32.gmra.mxu0 %v257
    %v1003 = vpop.f32.mrf.mxu0
    %v1004 = vadd.f32 %v750, %v1003
    %v1005 = vpop.f32.mrf.mxu0
    %1006 = vmatprep.mubr.f32.mxu0 %v261
    %1007 = vmatmul.mubr.f32.gmra.mxu0 %v260
    %v1008 = vpop.f32.mrf.mxu0
    %v1009 = vadd.f32 %v750, %v1008
    %v1010 = vpop.f32.mrf.mxu0
    %1011 = vmatprep.mubr.f32.mxu0 %v264
    %1012 = vmatmul.mubr.f32.gmra.mxu0 %v263
    %v1013 = vpop.f32.mrf.mxu0
    %v1014 = vadd.f32 %v750, %v1013
    %v1015 = vpop.f32.mrf.mxu0
    %1016 = vmatprep.mubr.f32.mxu0 %v267
    %1017 = vmatmul.mubr.f32.gmra.mxu0 %v266
    %v1018 = vpop.f32.mrf.mxu0
    %v1019 = vadd.f32 %v750, %v1018
    %v1020 = vpop.f32.mrf.mxu0
    %1021 = vmatprep.mubr.f32.mxu0 %v270
    %1022 = vmatmul.mubr.f32.gmra.mxu0 %v269
    %v1023 = vpop.f32.mrf.mxu0
    %v1024 = vadd.f32 %v750, %v1023
    %v1025 = vpop.f32.mrf.mxu0
    %1026 = vmatprep.mubr.f32.mxu0 %v273
    %1027 = vmatmul.mubr.f32.gmra.mxu0 %v272
    %v1028 = vpop.f32.mrf.mxu0
    %v1029 = vadd.f32 %v750, %v1028
    %v1030 = vpop.f32.mrf.mxu0
    %1031 = vmatprep.mubr.f32.mxu0 %v276
    %1032 = vmatmul.mubr.f32.gmra.mxu0 %v275
    %v1033 = vpop.f32.mrf.mxu0
    %v1034 = vadd.f32 %v750, %v1033
    %v1035 = vpop.f32.mrf.mxu0
    %1036 = vmatprep.mubr.f32.mxu0 %v279
    %1037 = vmatmul.mubr.f32.gmra.mxu0 %v278
    %v1038 = vpop.f32.mrf.mxu0
    %v1039 = vadd.f32 %v750, %v1038
    %v1040 = vpop.f32.mrf.mxu0
    %1041 = vmatprep.mubr.f32.mxu0 %v282
    %1042 = vmatmul.mubr.f32.gmra.mxu0 %v281
    %v1043 = vpop.f32.mrf.mxu0
    %v1044 = vadd.f32 %v750, %v1043
    %v1045 = vpop.f32.mrf.mxu0
    %1046 = vmatprep.mubr.f32.mxu0 %v285
    %1047 = vmatmul.mubr.f32.gmra.mxu0 %v284
    %v1048 = vpop.f32.mrf.mxu0
    %v1049 = vadd.f32 %v750, %v1048
    %v1050 = vpop.f32.mrf.mxu0
    %1051 = vmatprep.mubr.f32.mxu0 %v288
    %1052 = vmatmul.mubr.f32.gmra.mxu0 %v287
    %v1053 = vpop.f32.mrf.mxu0
    %v1054 = vadd.f32 %v750, %v1053
    %v1055 = vpop.f32.mrf.mxu0
    %1056 = vdwg.mxu0
    %1057 = vmatprep.subr.mxu0 0.0
    %1058 = vmatpush1.msra.mxu0 %v742
    %1059 = vmatprep.subr.mxu0 0.0
    %1060 = vmatpush1.msra.mxu0 %v737
    %1061 = vmatprep.subr.mxu0 0.0
    %1062 = vmatpush1.msra.mxu0 %v732
    %1063 = vmatprep.subr.mxu0 0.0
    %1064 = vmatpush1.msra.mxu0 %v727
    %1065 = vmatprep.subr.mxu0 0.0
    %1066 = vmatpush1.msra.mxu0 %v722
    %1067 = vmatprep.subr.mxu0 0.0
    %1068 = vmatpush1.msra.mxu0 %v717
    %1069 = vmatprep.subr.mxu0 0.0
    %1070 = vmatpush1.msra.mxu0 %v712
    %1071 = vmatprep.subr.mxu0 0.0
    %1072 = vmatpush1.msra.mxu0 %v707
    %1073 = vmatprep.subr.mxu0 0.0
    %1074 = vmatpush1.msra.mxu0 %v702
    %1075 = vmatprep.subr.mxu0 0.0
    %1076 = vmatpush1.msra.mxu0 %v697
    %1077 = vmatprep.subr.mxu0 0.0
    %1078 = vmatpush1.msra.mxu0 %v692
    %1079 = vmatprep.subr.mxu0 0.0
    %1080 = vmatpush1.msra.mxu0 %v687
    %1081 = vmatprep.subr.mxu0 0.0
    %1082 = vmatpush1.msra.mxu0 %v682
    %1083 = vmatprep.subr.mxu0 0.0
    %1084 = vmatpush1.msra.mxu0 %v677
    %1085 = vmatprep.subr.mxu0 0.0
    %1086 = vmatpush1.msra.mxu0 %v672
    %1087 = vmatprep.subr.mxu0 0.0
    %1088 = vmatpush1.msra.mxu0 %v667
    %1089 = vmatprep.subr.mxu0 0.0
    %1090 = vmatpush2.msra.mxu0 0.0
    %1091 = vmatprep.subr.mxu0 0.0
    %1092 = vmatpush2.msra.mxu0 0.0
    %1093 = vmatprep.subr.mxu0 0.0
    %1094 = vmatpush2.msra.mxu0 0.0
    %1095 = vmatprep.subr.mxu0 0.0
    %1096 = vmatpush2.msra.mxu0 0.0
    %1097 = vmatprep.subr.mxu0 0.0
    %1098 = vmatpush2.msra.mxu0 0.0
    %1099 = vmatprep.subr.mxu0 0.0
    %1100 = vmatpush2.msra.mxu0 0.0
    %1101 = vmatprep.subr.mxu0 0.0
    %1102 = vmatpush2.msra.mxu0 0.0
    %1103 = vmatprep.subr.mxu0 0.0
    %1104 = vmatpush2.msra.mxu0 0.0
    %1105 = vmatprep.subr.mxu0 0.0
    %1106 = vmatpush2.msra.mxu0 0.0
    %1107 = vmatprep.subr.mxu0 0.0
    %1108 = vmatpush2.msra.mxu0 0.0
    %1109 = vmatprep.subr.mxu0 0.0
    %1110 = vmatpush2.msra.mxu0 0.0
    %1111 = vmatprep.subr.mxu0 0.0
    %1112 = vmatpush2.msra.mxu0 0.0
    %1113 = vmatprep.subr.mxu0 0.0
    %1114 = vmatpush2.msra.mxu0 0.0
    %1115 = vmatprep.subr.mxu0 0.0
    %1116 = vmatpush2.msra.mxu0 0.0
    %1117 = vmatprep.subr.mxu0 0.0
    %1118 = vmatpush2.msra.mxu0 0.0
    %1119 = vmatprep.subr.mxu0 0.0
    %1120 = vmatpush2.msra.mxu0 0.0
    %1121 = vmatprep.mubr.f32.mxu0 0.0
    %1122 = vmatmul.mubr.f32.gmra.mxu0 %v148
    %v1123 = vpop.f32.mrf.mxu0
    %v1124 = vadd.f32 %v819, %v1123
    %v1125 = vpop.f32.mrf.mxu0
    %1126 = vmatprep.mubr.f32.mxu0 0.0
    %1127 = vmatmul.mubr.f32.gmra.mxu0 %v151
    %v1128 = vpop.f32.mrf.mxu0
    %v1129 = vadd.f32 %v824, %v1128
    %v1130 = vpop.f32.mrf.mxu0
    %1131 = vmatprep.mubr.f32.mxu0 0.0
    %1132 = vmatmul.mubr.f32.gmra.mxu0 %v154
    %v1133 = vpop.f32.mrf.mxu0
    %v1134 = vadd.f32 %v829, %v1133
    %v1135 = vpop.f32.mrf.mxu0
    %1136 = vmatprep.mubr.f32.mxu0 0.0
    %1137 = vmatmul.mubr.f32.gmra.mxu0 %v157
    %v1138 = vpop.f32.mrf.mxu0
    %v1139 = vadd.f32 %v834, %v1138
    %v1140 = vpop.f32.mrf.mxu0
    %1141 = vmatprep.mubr.f32.mxu0 0.0
    %1142 = vmatmul.mubr.f32.gmra.mxu0 %v160
    %v1143 = vpop.f32.mrf.mxu0
    %v1144 = vadd.f32 %v839, %v1143
    %v1145 = vpop.f32.mrf.mxu0
    %1146 = vmatprep.mubr.f32.mxu0 0.0
    %1147 = vmatmul.mubr.f32.gmra.mxu0 %v163
    %v1148 = vpop.f32.mrf.mxu0
    %v1149 = vadd.f32 %v844, %v1148
    %v1150 = vpop.f32.mrf.mxu0
    %1151 = vmatprep.mubr.f32.mxu0 0.0
    %1152 = vmatmul.mubr.f32.gmra.mxu0 %v166
    %v1153 = vpop.f32.mrf.mxu0
    %v1154 = vadd.f32 %v849, %v1153
    %v1155 = vpop.f32.mrf.mxu0
    %1156 = vmatprep.mubr.f32.mxu0 0.0
    %1157 = vmatmul.mubr.f32.gmra.mxu0 %v169
    %v1158 = vpop.f32.mrf.mxu0
    %v1159 = vadd.f32 %v854, %v1158
    %v1160 = vpop.f32.mrf.mxu0
    %1161 = vmatprep.mubr.f32.mxu0 0.0
    %1162 = vmatmul.mubr.f32.gmra.mxu0 %v172
    %v1163 = vpop.f32.mrf.mxu0
    %v1164 = vadd.f32 %v859, %v1163
    %v1165 = vpop.f32.mrf.mxu0
    %1166 = vmatprep.mubr.f32.mxu0 0.0
    %1167 = vmatmul.mubr.f32.gmra.mxu0 %v175
    %v1168 = vpop.f32.mrf.mxu0
    %v1169 = vadd.f32 %v864, %v1168
    %v1170 = vpop.f32.mrf.mxu0
    %1171 = vmatprep.mubr.f32.mxu0 0.0
    %1172 = vmatmul.mubr.f32.gmra.mxu0 %v178
    %v1173 = vpop.f32.mrf.mxu0
    %v1174 = vadd.f32 %v869, %v1173
    %v1175 = vpop.f32.mrf.mxu0
    %1176 = vmatprep.mubr.f32.mxu0 0.0
    %1177 = vmatmul.mubr.f32.gmra.mxu0 %v181
    %v1178 = vpop.f32.mrf.mxu0
    %v1179 = vadd.f32 %v874, %v1178
    %v1180 = vpop.f32.mrf.mxu0
    %1181 = vmatprep.mubr.f32.mxu0 0.0
    %1182 = vmatmul.mubr.f32.gmra.mxu0 %v184
    %v1183 = vpop.f32.mrf.mxu0
    %v1184 = vadd.f32 %v879, %v1183
    %v1185 = vpop.f32.mrf.mxu0
    %1186 = vmatprep.mubr.f32.mxu0 0.0
    %1187 = vmatmul.mubr.f32.gmra.mxu0 %v187
    %v1188 = vpop.f32.mrf.mxu0
    %v1189 = vadd.f32 %v884, %v1188
    %v1190 = vpop.f32.mrf.mxu0
    %1191 = vmatprep.mubr.f32.mxu0 0.0
    %1192 = vmatmul.mubr.f32.gmra.mxu0 %v190
    %v1193 = vpop.f32.mrf.mxu0
    %v1194 = vadd.f32 %v889, %v1193
    %v1195 = vpop.f32.mrf.mxu0
    %1196 = vmatprep.mubr.f32.mxu0 0.0
    %1197 = vmatmul.mubr.f32.gmra.mxu0 %v193
    %v1198 = vpop.f32.mrf.mxu0
    %v1199 = vadd.f32 %v894, %v1198
    %v1200 = vpop.f32.mrf.mxu0
    %1201 = vmatprep.mubr.f32.mxu0 0.0
    %1202 = vmatmul.mubr.f32.gmra.mxu0 %v196
    %v1203 = vpop.f32.mrf.mxu0
    %v1204 = vadd.f32 %v899, %v1203
    %v1205 = vpop.f32.mrf.mxu0
    %1206 = vmatprep.mubr.f32.mxu0 0.0
    %1207 = vmatmul.mubr.f32.gmra.mxu0 %v199
    %v1208 = vpop.f32.mrf.mxu0
    %v1209 = vadd.f32 %v904, %v1208
    %v1210 = vpop.f32.mrf.mxu0
    %1211 = vmatprep.mubr.f32.mxu0 0.0
    %1212 = vmatmul.mubr.f32.gmra.mxu0 %v202
    %v1213 = vpop.f32.mrf.mxu0
    %v1214 = vadd.f32 %v909, %v1213
    %v1215 = vpop.f32.mrf.mxu0
    %1216 = vmatprep.mubr.f32.mxu0 0.0
    %1217 = vmatmul.mubr.f32.gmra.mxu0 %v205
    %v1218 = vpop.f32.mrf.mxu0
    %v1219 = vadd.f32 %v914, %v1218
    %v1220 = vpop.f32.mrf.mxu0
    %1221 = vmatprep.mubr.f32.mxu0 0.0
    %1222 = vmatmul.mubr.f32.gmra.mxu0 %v208
    %v1223 = vpop.f32.mrf.mxu0
    %v1224 = vadd.f32 %v919, %v1223
    %v1225 = vpop.f32.mrf.mxu0
    %1226 = vmatprep.mubr.f32.mxu0 0.0
    %1227 = vmatmul.mubr.f32.gmra.mxu0 %v211
    %v1228 = vpop.f32.mrf.mxu0
    %v1229 = vadd.f32 %v924, %v1228
    %v1230 = vpop.f32.mrf.mxu0
    %1231 = vmatprep.mubr.f32.mxu0 0.0
    %1232 = vmatmul.mubr.f32.gmra.mxu0 %v214
    %v1233 = vpop.f32.mrf.mxu0
    %v1234 = vadd.f32 %v929, %v1233
    %v1235 = vpop.f32.mrf.mxu0
    %1236 = vmatprep.mubr.f32.mxu0 0.0
    %1237 = vmatmul.mubr.f32.gmra.mxu0 %v217
    %v1238 = vpop.f32.mrf.mxu0
    %v1239 = vadd.f32 %v934, %v1238
    %v1240 = vpop.f32.mrf.mxu0
    %1241 = vmatprep.mubr.f32.mxu0 0.0
    %1242 = vmatmul.mubr.f32.gmra.mxu0 %v220
    %v1243 = vpop.f32.mrf.mxu0
    %v1244 = vadd.f32 %v939, %v1243
    %v1245 = vpop.f32.mrf.mxu0
    %1246 = vmatprep.mubr.f32.mxu0 0.0
    %1247 = vmatmul.mubr.f32.gmra.mxu0 %v223
    %v1248 = vpop.f32.mrf.mxu0
    %v1249 = vadd.f32 %v944, %v1248
    %v1250 = vpop.f32.mrf.mxu0
    %1251 = vmatprep.mubr.f32.mxu0 0.0
    %1252 = vmatmul.mubr.f32.gmra.mxu0 %v226
    %v1253 = vpop.f32.mrf.mxu0
    %v1254 = vadd.f32 %v949, %v1253
    %v1255 = vpop.f32.mrf.mxu0
    %1256 = vmatprep.mubr.f32.mxu0 0.0
    %1257 = vmatmul.mubr.f32.gmra.mxu0 %v229
    %v1258 = vpop.f32.mrf.mxu0
    %v1259 = vadd.f32 %v954, %v1258
    %v1260 = vpop.f32.mrf.mxu0
    %1261 = vmatprep.mubr.f32.mxu0 0.0
    %1262 = vmatmul.mubr.f32.gmra.mxu0 %v232
    %v1263 = vpop.f32.mrf.mxu0
    %v1264 = vadd.f32 %v959, %v1263
    %v1265 = vpop.f32.mrf.mxu0
    %1266 = vmatprep.mubr.f32.mxu0 0.0
    %1267 = vmatmul.mubr.f32.gmra.mxu0 %v235
    %v1268 = vpop.f32.mrf.mxu0
    %v1269 = vadd.f32 %v964, %v1268
    %v1270 = vpop.f32.mrf.mxu0
    %1271 = vmatprep.mubr.f32.mxu0 0.0
    %1272 = vmatmul.mubr.f32.gmra.mxu0 %v238
    %v1273 = vpop.f32.mrf.mxu0
    %v1274 = vadd.f32 %v969, %v1273
    %v1275 = vpop.f32.mrf.mxu0
    %1276 = vmatprep.mubr.f32.mxu0 0.0
    %1277 = vmatmul.mubr.f32.gmra.mxu0 %v241
    %v1278 = vpop.f32.mrf.mxu0
    %v1279 = vadd.f32 %v974, %v1278
    %v1280 = vpop.f32.mrf.mxu0
    %1281 = vmatprep.mubr.f32.mxu0 0.0
    %1282 = vmatmul.mubr.f32.gmra.mxu0 %v244
    %v1283 = vpop.f32.mrf.mxu0
    %v1284 = vadd.f32 %v979, %v1283
    %v1285 = vpop.f32.mrf.mxu0
    %1286 = vmatprep.mubr.f32.mxu0 0.0
    %1287 = vmatmul.mubr.f32.gmra.mxu0 %v247
    %v1288 = vpop.f32.mrf.mxu0
    %v1289 = vadd.f32 %v984, %v1288
    %v1290 = vpop.f32.mrf.mxu0
    %1291 = vmatprep.mubr.f32.mxu0 0.0
    %1292 = vmatmul.mubr.f32.gmra.mxu0 %v250
    %v1293 = vpop.f32.mrf.mxu0
    %v1294 = vadd.f32 %v989, %v1293
    %v1295 = vpop.f32.mrf.mxu0
    %1296 = vmatprep.mubr.f32.mxu0 0.0
    %1297 = vmatmul.mubr.f32.gmra.mxu0 %v253
    %v1298 = vpop.f32.mrf.mxu0
    %v1299 = vadd.f32 %v994, %v1298
    %v1300 = vpop.f32.mrf.mxu0
    %1301 = vmatprep.mubr.f32.mxu0 0.0
    %1302 = vmatmul.mubr.f32.gmra.mxu0 %v256
    %v1303 = vpop.f32.mrf.mxu0
    %v1304 = vadd.f32 %v999, %v1303
    %v1305 = vpop.f32.mrf.mxu0
    %1306 = vmatprep.mubr.f32.mxu0 0.0
    %1307 = vmatmul.mubr.f32.gmra.mxu0 %v259
    %v1308 = vpop.f32.mrf.mxu0
    %v1309 = vadd.f32 %v1004, %v1308
    %v1310 = vpop.f32.mrf.mxu0
    %1311 = vmatprep.mubr.f32.mxu0 0.0
    %1312 = vmatmul.mubr.f32.gmra.mxu0 %v262
    %v1313 = vpop.f32.mrf.mxu0
    %v1314 = vadd.f32 %v1009, %v1313
    %v1315 = vpop.f32.mrf.mxu0
    %1316 = vmatprep.mubr.f32.mxu0 0.0
    %1317 = vmatmul.mubr.f32.gmra.mxu0 %v265
    %v1318 = vpop.f32.mrf.mxu0
    %v1319 = vadd.f32 %v1014, %v1318
    %v1320 = vpop.f32.mrf.mxu0
    %1321 = vmatprep.mubr.f32.mxu0 0.0
    %1322 = vmatmul.mubr.f32.gmra.mxu0 %v268
    %v1323 = vpop.f32.mrf.mxu0
    %v1324 = vadd.f32 %v1019, %v1323
    %v1325 = vpop.f32.mrf.mxu0
    %1326 = vmatprep.mubr.f32.mxu0 0.0
    %1327 = vmatmul.mubr.f32.gmra.mxu0 %v271
    %v1328 = vpop.f32.mrf.mxu0
    %v1329 = vadd.f32 %v1024, %v1328
    %v1330 = vpop.f32.mrf.mxu0
    %1331 = vmatprep.mubr.f32.mxu0 0.0
    %1332 = vmatmul.mubr.f32.gmra.mxu0 %v274
    %v1333 = vpop.f32.mrf.mxu0
    %v1334 = vadd.f32 %v1029, %v1333
    %v1335 = vpop.f32.mrf.mxu0
    %1336 = vmatprep.mubr.f32.mxu0 0.0
    %1337 = vmatmul.mubr.f32.gmra.mxu0 %v277
    %v1338 = vpop.f32.mrf.mxu0
    %v1339 = vadd.f32 %v1034, %v1338
    %v1340 = vpop.f32.mrf.mxu0
    %1341 = vmatprep.mubr.f32.mxu0 0.0
    %1342 = vmatmul.mubr.f32.gmra.mxu0 %v280
    %v1343 = vpop.f32.mrf.mxu0
    %v1344 = vadd.f32 %v1039, %v1343
    %v1345 = vpop.f32.mrf.mxu0
    %1346 = vmatprep.mubr.f32.mxu0 0.0
    %1347 = vmatmul.mubr.f32.gmra.mxu0 %v283
    %v1348 = vpop.f32.mrf.mxu0
    %v1349 = vadd.f32 %v1044, %v1348
    %v1350 = vpop.f32.mrf.mxu0
    %1351 = vmatprep.mubr.f32.mxu0 0.0
    %1352 = vmatmul.mubr.f32.gmra.mxu0 %v286
    %v1353 = vpop.f32.mrf.mxu0
    %v1354 = vadd.f32 %v1049, %v1353
    %v1355 = vpop.f32.mrf.mxu0
    %1356 = vmatprep.mubr.f32.mxu0 0.0
    %1357 = vmatmul.mubr.f32.gmra.mxu0 %v289
    %v1358 = vpop.f32.mrf.mxu0
    %v1359 = vadd.f32 %v1054, %v1358
    %v1360 = vpop.f32.mrf.mxu0
    %1361 = vdwg.mxu0
    %v1362 = vmax.f32 %v1124, 0.0
    %v1363 = vmax.f32 %v1129, 0.0
    %v1364 = vmax.f32 %v1134, 0.0
    %v1365 = vmax.f32 %v1139, 0.0
    %v1366 = vmax.f32 %v1144, 0.0
    %v1367 = vmax.f32 %v1149, 0.0
    %v1368 = vmax.f32 %v1154, 0.0
    %v1369 = vmax.f32 %v1159, 0.0
    %v1370 = vmax.f32 %v1164, 0.0
    %v1371 = vmax.f32 %v1169, 0.0
    %v1372 = vmax.f32 %v1174, 0.0
    %v1373 = vmax.f32 %v1179, 0.0
    %v1374 = vmax.f32 %v1184, 0.0
    %v1375 = vmax.f32 %v1189, 0.0
    %v1376 = vmax.f32 %v1194, 0.0
    %v1377 = vmax.f32 %v1199, 0.0
    %v1378 = vmax.f32 %v1204, 0.0
    %v1379 = vmax.f32 %v1209, 0.0
    %v1380 = vmax.f32 %v1214, 0.0
    %v1381 = vmax.f32 %v1219, 0.0
    %v1382 = vmax.f32 %v1224, 0.0
    %v1383 = vmax.f32 %v1229, 0.0
    %v1384 = vmax.f32 %v1234, 0.0
    %v1385 = vmax.f32 %v1239, 0.0
    %v1386 = vmax.f32 %v1244, 0.0
    %v1387 = vmax.f32 %v1249, 0.0
    %v1388 = vmax.f32 %v1254, 0.0
    %v1389 = vmax.f32 %v1259, 0.0
    %v1390 = vmax.f32 %v1264, 0.0
    %v1391 = vmax.f32 %v1269, 0.0
    %v1392 = vmax.f32 %v1274, 0.0
    %v1393 = vmax.f32 %v1279, 0.0
    %v1394 = vmax.f32 %v1284, 0.0
    %v1395 = vmax.f32 %v1289, 0.0
    %v1396 = vmax.f32 %v1294, 0.0
    %v1397 = vmax.f32 %v1299, 0.0
    %v1398 = vmax.f32 %v1304, 0.0
    %v1399 = vmax.f32 %v1309, 0.0
    %v1400 = vmax.f32 %v1314, 0.0
    %v1401 = vmax.f32 %v1319, 0.0
    %v1402 = vmax.f32 %v1324, 0.0
    %v1403 = vmax.f32 %v1329, 0.0
    %v1404 = vmax.f32 %v1334, 0.0
    %v1405 = vmax.f32 %v1339, 0.0
    %v1406 = vmax.f32 %v1344, 0.0
    %v1407 = vmax.f32 %v1349, 0.0
    %v1408 = vmax.f32 %v1354, 0.0
    %v1409 = vmax.f32 %v1359, 0.0
    %v1410 = vld [vmem:[%s5] sm:$0xff]
    %v1411 = vld [vmem:[%s5 + $0x8] sm:$0xff]
    %vm1412 = vcmask 130048
    %v1414 = vsel %vm1412, %v1362, 0
    %v1417 = vsel %vm1412, %v1363, 0
    %v1420 = vsel %vm1412, %v1364, 0
    %v1423 = vsel %vm1412, %v1365, 0
    %v1426 = vsel %vm1412, %v1366, 0
    %v1429 = vsel %vm1412, %v1367, 0
    %v1432 = vsel %vm1412, %v1368, 0
    %v1435 = vsel %vm1412, %v1369, 0
    %v1438 = vsel %vm1412, %v1370, 0
    %v1441 = vsel %vm1412, %v1371, 0
    %v1444 = vsel %vm1412, %v1372, 0
    %v1447 = vsel %vm1412, %v1373, 0
    %v1450 = vsel %vm1412, %v1374, 0
    %v1453 = vsel %vm1412, %v1375, 0
    %v1456 = vsel %vm1412, %v1376, 0
    %v1459 = vsel %vm1412, %v1377, 0
    %v1462 = vsel %vm1412, %v1378, 0
    %v1465 = vsel %vm1412, %v1379, 0
    %v1468 = vsel %vm1412, %v1380, 0
    %v1471 = vsel %vm1412, %v1381, 0
    %v1474 = vsel %vm1412, %v1382, 0
    %v1477 = vsel %vm1412, %v1383, 0
    %v1480 = vsel %vm1412, %v1384, 0
    %v1483 = vsel %vm1412, %v1385, 0
    %v1486 = vsel %vm1412, %v1386, 0
    %v1489 = vsel %vm1412, %v1387, 0
    %v1492 = vsel %vm1412, %v1388, 0
    %v1495 = vsel %vm1412, %v1389, 0
    %v1498 = vsel %vm1412, %v1390, 0
    %v1501 = vsel %vm1412, %v1391, 0
    %v1504 = vsel %vm1412, %v1392, 0
    %v1507 = vsel %vm1412, %v1393, 0
    %v1510 = vsel %vm1412, %v1394, 0
    %v1513 = vsel %vm1412, %v1395, 0
    %v1516 = vsel %vm1412, %v1396, 0
    %v1519 = vsel %vm1412, %v1397, 0
    %v1522 = vsel %vm1412, %v1398, 0
    %v1525 = vsel %vm1412, %v1399, 0
    %v1528 = vsel %vm1412, %v1400, 0
    %v1531 = vsel %vm1412, %v1401, 0
    %v1534 = vsel %vm1412, %v1402, 0
    %v1537 = vsel %vm1412, %v1403, 0
    %v1540 = vsel %vm1412, %v1404, 0
    %v1543 = vsel %vm1412, %v1405, 0
    %v1546 = vsel %vm1412, %v1406, 0
    %v1549 = vsel %vm1412, %v1407, 0
    %v1552 = vsel %vm1412, %v1408, 0
    %v1555 = vsel %vm1412, %v1409, 0
    %1557 = vmatprep.subr.mxu0 0.0
    %1558 = vmatpush1.msra.mxu0 0.0
    %1559 = vmatprep.subr.mxu0 0.0
    %1560 = vmatpush1.msra.mxu0 0.0
    %1561 = vmatprep.subr.mxu0 0.0
    %1562 = vmatpush1.msra.mxu0 0.0
    %1563 = vmatprep.subr.mxu0 0.0
    %1564 = vmatpush1.msra.mxu0 0.0
    %1565 = vmatprep.subr.mxu0 0.0
    %1566 = vmatpush1.msra.mxu0 0.0
    %1567 = vmatprep.subr.mxu0 0.0
    %1568 = vmatpush1.msra.mxu0 0.0
    %1569 = vmatprep.subr.mxu0 0.0
    %1570 = vmatpush1.msra.mxu0 0.0
    %1571 = vmatprep.subr.mxu0 0.0
    %1572 = vmatpush1.msra.mxu0 0.0
    %1573 = vmatprep.subr.mxu0 0.0
    %1574 = vmatpush1.msra.mxu0 0.0
    %1575 = vmatprep.subr.mxu0 0.0
    %1576 = vmatpush1.msra.mxu0 0.0
    %1577 = vmatprep.subr.mxu0 0.0
    %1578 = vmatpush1.msra.mxu0 0.0
    %1579 = vmatprep.subr.mxu0 0.0
    %1580 = vmatpush1.msra.mxu0 0.0
    %1581 = vmatprep.subr.mxu0 0.0
    %1582 = vmatpush1.msra.mxu0 0.0
    %1583 = vmatprep.subr.mxu0 0.0
    %1584 = vmatpush1.msra.mxu0 0.0
    %1585 = vmatprep.subr.mxu0 0.0
    %1586 = vmatpush1.msra.mxu0 %v1411
    %1587 = vmatprep.subr.mxu0 0.0
    %1588 = vmatpush1.msra.mxu0 %v1410
    %1589 = vmatprep.subr.mxu0 0.0
    %1590 = vmatpush2.msra.mxu0 0.0
    %1591 = vmatprep.subr.mxu0 0.0
    %1592 = vmatpush2.msra.mxu0 0.0
    %1593 = vmatprep.subr.mxu0 0.0
    %1594 = vmatpush2.msra.mxu0 0.0
    %1595 = vmatprep.subr.mxu0 0.0
    %1596 = vmatpush2.msra.mxu0 0.0
    %1597 = vmatprep.subr.mxu0 0.0
    %1598 = vmatpush2.msra.mxu0 0.0
    %1599 = vmatprep.subr.mxu0 0.0
    %1600 = vmatpush2.msra.mxu0 0.0
    %1601 = vmatprep.subr.mxu0 0.0
    %1602 = vmatpush2.msra.mxu0 0.0
    %1603 = vmatprep.subr.mxu0 0.0
    %1604 = vmatpush2.msra.mxu0 0.0
    %1605 = vmatprep.subr.mxu0 0.0
    %1606 = vmatpush2.msra.mxu0 0.0
    %1607 = vmatprep.subr.mxu0 0.0
    %1608 = vmatpush2.msra.mxu0 0.0
    %1609 = vmatprep.subr.mxu0 0.0
    %1610 = vmatpush2.msra.mxu0 0.0
    %1611 = vmatprep.subr.mxu0 0.0
    %1612 = vmatpush2.msra.mxu0 0.0
    %1613 = vmatprep.subr.mxu0 0.0
    %1614 = vmatpush2.msra.mxu0 0.0
    %1615 = vmatprep.subr.mxu0 0.0
    %1616 = vmatpush2.msra.mxu0 0.0
    %1617 = vmatprep.subr.mxu0 0.0
    %1618 = vmatpush2.msra.mxu0 0.0
    %1619 = vmatprep.subr.mxu0 0.0
    %1620 = vmatpush2.msra.mxu0 0.0
    %1621 = vmatprep.mubr.f32.mxu0 0.0
    %1622 = vmatmul.mubr.f32.gmra.mxu0 %v1414
    %v1623 = vpop.f32.mrf.mxu0
    %v1624 = vadd.f32 0.0, %v1623
    %v1625 = vpop.f32.mrf.mxu0
    %1626 = vmatprep.mubr.f32.mxu0 0.0
    %1627 = vmatmul.mubr.f32.gmra.mxu0 %v1417
    %v1628 = vpop.f32.mrf.mxu0
    %v1629 = vadd.f32 0.0, %v1628
    %v1630 = vpop.f32.mrf.mxu0
    %1631 = vmatprep.mubr.f32.mxu0 0.0
    %1632 = vmatmul.mubr.f32.gmra.mxu0 %v1420
    %v1633 = vpop.f32.mrf.mxu0
    %v1634 = vadd.f32 0.0, %v1633
    %v1635 = vpop.f32.mrf.mxu0
    %1636 = vmatprep.mubr.f32.mxu0 0.0
    %1637 = vmatmul.mubr.f32.gmra.mxu0 %v1423
    %v1638 = vpop.f32.mrf.mxu0
    %v1639 = vadd.f32 0.0, %v1638
    %v1640 = vpop.f32.mrf.mxu0
    %1641 = vmatprep.mubr.f32.mxu0 0.0
    %1642 = vmatmul.mubr.f32.gmra.mxu0 %v1426
    %v1643 = vpop.f32.mrf.mxu0
    %v1644 = vadd.f32 0.0, %v1643
    %v1645 = vpop.f32.mrf.mxu0
    %1646 = vmatprep.mubr.f32.mxu0 0.0
    %1647 = vmatmul.mubr.f32.gmra.mxu0 %v1429
    %v1648 = vpop.f32.mrf.mxu0
    %v1649 = vadd.f32 0.0, %v1648
    %v1650 = vpop.f32.mrf.mxu0
    %1651 = vmatprep.mubr.f32.mxu0 0.0
    %1652 = vmatmul.mubr.f32.gmra.mxu0 %v1432
    %v1653 = vpop.f32.mrf.mxu0
    %v1654 = vadd.f32 0.0, %v1653
    %v1655 = vpop.f32.mrf.mxu0
    %1656 = vmatprep.mubr.f32.mxu0 0.0
    %1657 = vmatmul.mubr.f32.gmra.mxu0 %v1435
    %v1658 = vpop.f32.mrf.mxu0
    %v1659 = vadd.f32 0.0, %v1658
    %v1660 = vpop.f32.mrf.mxu0
    %1661 = vmatprep.mubr.f32.mxu0 0.0
    %1662 = vmatmul.mubr.f32.gmra.mxu0 %v1438
    %v1663 = vpop.f32.mrf.mxu0
    %v1664 = vadd.f32 0.0, %v1663
    %v1665 = vpop.f32.mrf.mxu0
    %1666 = vmatprep.mubr.f32.mxu0 0.0
    %1667 = vmatmul.mubr.f32.gmra.mxu0 %v1441
    %v1668 = vpop.f32.mrf.mxu0
    %v1669 = vadd.f32 0.0, %v1668
    %v1670 = vpop.f32.mrf.mxu0
    %1671 = vmatprep.mubr.f32.mxu0 0.0
    %1672 = vmatmul.mubr.f32.gmra.mxu0 %v1444
    %v1673 = vpop.f32.mrf.mxu0
    %v1674 = vadd.f32 0.0, %v1673
    %v1675 = vpop.f32.mrf.mxu0
    %1676 = vmatprep.mubr.f32.mxu0 0.0
    %1677 = vmatmul.mubr.f32.gmra.mxu0 %v1447
    %v1678 = vpop.f32.mrf.mxu0
    %v1679 = vadd.f32 0.0, %v1678
    %v1680 = vpop.f32.mrf.mxu0
    %1681 = vmatprep.mubr.f32.mxu0 0.0
    %1682 = vmatmul.mubr.f32.gmra.mxu0 %v1450
    %v1683 = vpop.f32.mrf.mxu0
    %v1684 = vadd.f32 0.0, %v1683
    %v1685 = vpop.f32.mrf.mxu0
    %1686 = vmatprep.mubr.f32.mxu0 0.0
    %1687 = vmatmul.mubr.f32.gmra.mxu0 %v1453
    %v1688 = vpop.f32.mrf.mxu0
    %v1689 = vadd.f32 0.0, %v1688
    %v1690 = vpop.f32.mrf.mxu0
    %1691 = vmatprep.mubr.f32.mxu0 0.0
    %1692 = vmatmul.mubr.f32.gmra.mxu0 %v1456
    %v1693 = vpop.f32.mrf.mxu0
    %v1694 = vadd.f32 0.0, %v1693
    %v1695 = vpop.f32.mrf.mxu0
    %1696 = vmatprep.mubr.f32.mxu0 0.0
    %1697 = vmatmul.mubr.f32.gmra.mxu0 %v1459
    %v1698 = vpop.f32.mrf.mxu0
    %v1699 = vadd.f32 0.0, %v1698
    %v1700 = vpop.f32.mrf.mxu0
    %1701 = vmatprep.mubr.f32.mxu0 0.0
    %1702 = vmatmul.mubr.f32.gmra.mxu0 %v1462
    %v1703 = vpop.f32.mrf.mxu0
    %v1704 = vadd.f32 0.0, %v1703
    %v1705 = vpop.f32.mrf.mxu0
    %1706 = vmatprep.mubr.f32.mxu0 0.0
    %1707 = vmatmul.mubr.f32.gmra.mxu0 %v1465
    %v1708 = vpop.f32.mrf.mxu0
    %v1709 = vadd.f32 0.0, %v1708
    %v1710 = vpop.f32.mrf.mxu0
    %1711 = vmatprep.mubr.f32.mxu0 0.0
    %1712 = vmatmul.mubr.f32.gmra.mxu0 %v1468
    %v1713 = vpop.f32.mrf.mxu0
    %v1714 = vadd.f32 0.0, %v1713
    %v1715 = vpop.f32.mrf.mxu0
    %1716 = vmatprep.mubr.f32.mxu0 0.0
    %1717 = vmatmul.mubr.f32.gmra.mxu0 %v1471
    %v1718 = vpop.f32.mrf.mxu0
    %v1719 = vadd.f32 0.0, %v1718
    %v1720 = vpop.f32.mrf.mxu0
    %1721 = vmatprep.mubr.f32.mxu0 0.0
    %1722 = vmatmul.mubr.f32.gmra.mxu0 %v1474
    %v1723 = vpop.f32.mrf.mxu0
    %v1724 = vadd.f32 0.0, %v1723
    %v1725 = vpop.f32.mrf.mxu0
    %1726 = vmatprep.mubr.f32.mxu0 0.0
    %1727 = vmatmul.mubr.f32.gmra.mxu0 %v1477
    %v1728 = vpop.f32.mrf.mxu0
    %v1729 = vadd.f32 0.0, %v1728
    %v1730 = vpop.f32.mrf.mxu0
    %1731 = vmatprep.mubr.f32.mxu0 0.0
    %1732 = vmatmul.mubr.f32.gmra.mxu0 %v1480
    %v1733 = vpop.f32.mrf.mxu0
    %v1734 = vadd.f32 0.0, %v1733
    %v1735 = vpop.f32.mrf.mxu0
    %1736 = vmatprep.mubr.f32.mxu0 0.0
    %1737 = vmatmul.mubr.f32.gmra.mxu0 %v1483
    %v1738 = vpop.f32.mrf.mxu0
    %v1739 = vadd.f32 0.0, %v1738
    %v1740 = vpop.f32.mrf.mxu0
    %1741 = vmatprep.mubr.f32.mxu0 0.0
    %1742 = vmatmul.mubr.f32.gmra.mxu0 %v1486
    %v1743 = vpop.f32.mrf.mxu0
    %v1744 = vadd.f32 0.0, %v1743
    %v1745 = vpop.f32.mrf.mxu0
    %1746 = vmatprep.mubr.f32.mxu0 0.0
    %1747 = vmatmul.mubr.f32.gmra.mxu0 %v1489
    %v1748 = vpop.f32.mrf.mxu0
    %v1749 = vadd.f32 0.0, %v1748
    %v1750 = vpop.f32.mrf.mxu0
    %1751 = vmatprep.mubr.f32.mxu0 0.0
    %1752 = vmatmul.mubr.f32.gmra.mxu0 %v1492
    %v1753 = vpop.f32.mrf.mxu0
    %v1754 = vadd.f32 0.0, %v1753
    %v1755 = vpop.f32.mrf.mxu0
    %1756 = vmatprep.mubr.f32.mxu0 0.0
    %1757 = vmatmul.mubr.f32.gmra.mxu0 %v1495
    %v1758 = vpop.f32.mrf.mxu0
    %v1759 = vadd.f32 0.0, %v1758
    %v1760 = vpop.f32.mrf.mxu0
    %1761 = vmatprep.mubr.f32.mxu0 0.0
    %1762 = vmatmul.mubr.f32.gmra.mxu0 %v1498
    %v1763 = vpop.f32.mrf.mxu0
    %v1764 = vadd.f32 0.0, %v1763
    %v1765 = vpop.f32.mrf.mxu0
    %1766 = vmatprep.mubr.f32.mxu0 0.0
    %1767 = vmatmul.mubr.f32.gmra.mxu0 %v1501
    %v1768 = vpop.f32.mrf.mxu0
    %v1769 = vadd.f32 0.0, %v1768
    %v1770 = vpop.f32.mrf.mxu0
    %1771 = vmatprep.mubr.f32.mxu0 0.0
    %1772 = vmatmul.mubr.f32.gmra.mxu0 %v1504
    %v1773 = vpop.f32.mrf.mxu0
    %v1774 = vadd.f32 0.0, %v1773
    %v1775 = vpop.f32.mrf.mxu0
    %1776 = vmatprep.mubr.f32.mxu0 0.0
    %1777 = vmatmul.mubr.f32.gmra.mxu0 %v1507
    %v1778 = vpop.f32.mrf.mxu0
    %v1779 = vadd.f32 0.0, %v1778
    %v1780 = vpop.f32.mrf.mxu0
    %1781 = vmatprep.mubr.f32.mxu0 0.0
    %1782 = vmatmul.mubr.f32.gmra.mxu0 %v1510
    %v1783 = vpop.f32.mrf.mxu0
    %v1784 = vadd.f32 0.0, %v1783
    %v1785 = vpop.f32.mrf.mxu0
    %1786 = vmatprep.mubr.f32.mxu0 0.0
    %1787 = vmatmul.mubr.f32.gmra.mxu0 %v1513
    %v1788 = vpop.f32.mrf.mxu0
    %v1789 = vadd.f32 0.0, %v1788
    %v1790 = vpop.f32.mrf.mxu0
    %1791 = vmatprep.mubr.f32.mxu0 0.0
    %1792 = vmatmul.mubr.f32.gmra.mxu0 %v1516
    %v1793 = vpop.f32.mrf.mxu0
    %v1794 = vadd.f32 0.0, %v1793
    %v1795 = vpop.f32.mrf.mxu0
    %1796 = vmatprep.mubr.f32.mxu0 0.0
    %1797 = vmatmul.mubr.f32.gmra.mxu0 %v1519
    %v1798 = vpop.f32.mrf.mxu0
    %v1799 = vadd.f32 0.0, %v1798
    %v1800 = vpop.f32.mrf.mxu0
    %1801 = vmatprep.mubr.f32.mxu0 0.0
    %1802 = vmatmul.mubr.f32.gmra.mxu0 %v1522
    %v1803 = vpop.f32.mrf.mxu0
    %v1804 = vadd.f32 0.0, %v1803
    %v1805 = vpop.f32.mrf.mxu0
    %1806 = vmatprep.mubr.f32.mxu0 0.0
    %1807 = vmatmul.mubr.f32.gmra.mxu0 %v1525
    %v1808 = vpop.f32.mrf.mxu0
    %v1809 = vadd.f32 0.0, %v1808
    %v1810 = vpop.f32.mrf.mxu0
    %1811 = vmatprep.mubr.f32.mxu0 0.0
    %1812 = vmatmul.mubr.f32.gmra.mxu0 %v1528
    %v1813 = vpop.f32.mrf.mxu0
    %v1814 = vadd.f32 0.0, %v1813
    %v1815 = vpop.f32.mrf.mxu0
    %1816 = vmatprep.mubr.f32.mxu0 0.0
    %1817 = vmatmul.mubr.f32.gmra.mxu0 %v1531
    %v1818 = vpop.f32.mrf.mxu0
    %v1819 = vadd.f32 0.0, %v1818
    %v1820 = vpop.f32.mrf.mxu0
    %1821 = vmatprep.mubr.f32.mxu0 0.0
    %1822 = vmatmul.mubr.f32.gmra.mxu0 %v1534
    %v1823 = vpop.f32.mrf.mxu0
    %v1824 = vadd.f32 0.0, %v1823
    %v1825 = vpop.f32.mrf.mxu0
    %1826 = vmatprep.mubr.f32.mxu0 0.0
    %1827 = vmatmul.mubr.f32.gmra.mxu0 %v1537
    %v1828 = vpop.f32.mrf.mxu0
    %v1829 = vadd.f32 0.0, %v1828
    %v1830 = vpop.f32.mrf.mxu0
    %1831 = vmatprep.mubr.f32.mxu0 0.0
    %1832 = vmatmul.mubr.f32.gmra.mxu0 %v1540
    %v1833 = vpop.f32.mrf.mxu0
    %v1834 = vadd.f32 0.0, %v1833
    %v1835 = vpop.f32.mrf.mxu0
    %1836 = vmatprep.mubr.f32.mxu0 0.0
    %1837 = vmatmul.mubr.f32.gmra.mxu0 %v1543
    %v1838 = vpop.f32.mrf.mxu0
    %v1839 = vadd.f32 0.0, %v1838
    %v1840 = vpop.f32.mrf.mxu0
    %1841 = vmatprep.mubr.f32.mxu0 0.0
    %1842 = vmatmul.mubr.f32.gmra.mxu0 %v1546
    %v1843 = vpop.f32.mrf.mxu0
    %v1844 = vadd.f32 0.0, %v1843
    %v1845 = vpop.f32.mrf.mxu0
    %1846 = vmatprep.mubr.f32.mxu0 0.0
    %1847 = vmatmul.mubr.f32.gmra.mxu0 %v1549
    %v1848 = vpop.f32.mrf.mxu0
    %v1849 = vadd.f32 0.0, %v1848
    %v1850 = vpop.f32.mrf.mxu0
    %1851 = vmatprep.mubr.f32.mxu0 0.0
    %1852 = vmatmul.mubr.f32.gmra.mxu0 %v1552
    %v1853 = vpop.f32.mrf.mxu0
    %v1854 = vadd.f32 0.0, %v1853
    %v1855 = vpop.f32.mrf.mxu0
    %1856 = vmatprep.mubr.f32.mxu0 0.0
    %1857 = vmatmul.mubr.f32.gmra.mxu0 %v1555
    %v1858 = vpop.f32.mrf.mxu0
    %v1859 = vadd.f32 0.0, %v1858
    %v1860 = vpop.f32.mrf.mxu0
    %1861 = vdwg.mxu0
    %v1862 = vld [vmem:[%s6] sm:$0x1]
    %v1864 = vlaneseq
    %v1865 = vshrl.u32 %v1864, 7
    %v1866 = vsub.s32 0, %v1865
    %v1867 = vrot.slane %v1862, %v1866
    %1869 = vmatprep.subr.mxu0 0.0
    %1870 = vmatpush1.msra.mxu0 %v1699
    %1871 = vmatprep.subr.mxu0 0.0
    %1872 = vmatpush1.msra.mxu0 %v1694
    %1873 = vmatprep.subr.mxu0 0.0
    %1874 = vmatpush1.msra.mxu0 %v1689
    %1875 = vmatprep.subr.mxu0 0.0
    %1876 = vmatpush1.msra.mxu0 %v1684
    %1877 = vmatprep.subr.mxu0 0.0
    %1878 = vmatpush1.msra.mxu0 %v1679
    %1879 = vmatprep.subr.mxu0 0.0
    %1880 = vmatpush1.msra.mxu0 %v1674
    %1881 = vmatprep.subr.mxu0 0.0
    %1882 = vmatpush1.msra.mxu0 %v1669
    %1883 = vmatprep.subr.mxu0 0.0
    %1884 = vmatpush1.msra.mxu0 %v1664
    %1885 = vmatprep.subr.mxu0 0.0
    %1886 = vmatpush1.msra.mxu0 %v1659
    %1887 = vmatprep.subr.mxu0 0.0
    %1888 = vmatpush1.msra.mxu0 %v1654
    %1889 = vmatprep.subr.mxu0 0.0
    %1890 = vmatpush1.msra.mxu0 %v1649
    %1891 = vmatprep.subr.mxu0 0.0
    %1892 = vmatpush1.msra.mxu0 %v1644
    %1893 = vmatprep.subr.mxu0 0.0
    %1894 = vmatpush1.msra.mxu0 %v1639
    %1895 = vmatprep.subr.mxu0 0.0
    %1896 = vmatpush1.msra.mxu0 %v1634
    %1897 = vmatprep.subr.mxu0 0.0
    %1898 = vmatpush1.msra.mxu0 %v1629
    %1899 = vmatprep.subr.mxu0 0.0
    %1900 = vmatpush1.msra.mxu0 %v1624
    %1901 = vmatprep.subr.mxu0 0.0
    %1902 = vmatpush2.msra.mxu0 %v1779
    %1903 = vmatprep.subr.mxu0 0.0
    %1904 = vmatpush2.msra.mxu0 %v1774
    %1905 = vmatprep.subr.mxu0 0.0
    %1906 = vmatpush2.msra.mxu0 %v1769
    %1907 = vmatprep.subr.mxu0 0.0
    %1908 = vmatpush2.msra.mxu0 %v1764
    %1909 = vmatprep.subr.mxu0 0.0
    %1910 = vmatpush2.msra.mxu0 %v1759
    %1911 = vmatprep.subr.mxu0 0.0
    %1912 = vmatpush2.msra.mxu0 %v1754
    %1913 = vmatprep.subr.mxu0 0.0
    %1914 = vmatpush2.msra.mxu0 %v1749
    %1915 = vmatprep.subr.mxu0 0.0
    %1916 = vmatpush2.msra.mxu0 %v1744
    %1917 = vmatprep.subr.mxu0 0.0
    %1918 = vmatpush2.msra.mxu0 %v1739
    %1919 = vmatprep.subr.mxu0 0.0
    %1920 = vmatpush2.msra.mxu0 %v1734
    %1921 = vmatprep.subr.mxu0 0.0
    %1922 = vmatpush2.msra.mxu0 %v1729
    %1923 = vmatprep.subr.mxu0 0.0
    %1924 = vmatpush2.msra.mxu0 %v1724
    %1925 = vmatprep.subr.mxu0 0.0
    %1926 = vmatpush2.msra.mxu0 %v1719
    %1927 = vmatprep.subr.mxu0 0.0
    %1928 = vmatpush2.msra.mxu0 %v1714
    %1929 = vmatprep.subr.mxu0 0.0
    %1930 = vmatpush2.msra.mxu0 %v1709
    %1931 = vmatprep.subr.mxu0 0.0
    %1932 = vmatpush2.msra.mxu0 %v1704
    %1933 = vmatprep.mubr.f32.mxu0 %v147
    %1934 = vmatmul.mubr.f32.gmra.mxu0 %v146
    %v1935 = vpop.f32.mrf.mxu0
    %v1936 = vadd.f32 %v1867, %v1935
    %v1937 = vpop.f32.mrf.mxu0
    %1938 = vmatprep.mubr.f32.mxu0 %v150
    %1939 = vmatmul.mubr.f32.gmra.mxu0 %v149
    %v1940 = vpop.f32.mrf.mxu0
    %v1941 = vadd.f32 %v1867, %v1940
    %v1942 = vpop.f32.mrf.mxu0
    %1943 = vmatprep.mubr.f32.mxu0 %v153
    %1944 = vmatmul.mubr.f32.gmra.mxu0 %v152
    %v1945 = vpop.f32.mrf.mxu0
    %v1946 = vadd.f32 %v1867, %v1945
    %v1947 = vpop.f32.mrf.mxu0
    %1948 = vmatprep.mubr.f32.mxu0 %v156
    %1949 = vmatmul.mubr.f32.gmra.mxu0 %v155
    %v1950 = vpop.f32.mrf.mxu0
    %v1951 = vadd.f32 %v1867, %v1950
    %v1952 = vpop.f32.mrf.mxu0
    %1953 = vmatprep.mubr.f32.mxu0 %v159
    %1954 = vmatmul.mubr.f32.gmra.mxu0 %v158
    %v1955 = vpop.f32.mrf.mxu0
    %v1956 = vadd.f32 %v1867, %v1955
    %v1957 = vpop.f32.mrf.mxu0
    %1958 = vmatprep.mubr.f32.mxu0 %v162
    %1959 = vmatmul.mubr.f32.gmra.mxu0 %v161
    %v1960 = vpop.f32.mrf.mxu0
    %v1961 = vadd.f32 %v1867, %v1960
    %v1962 = vpop.f32.mrf.mxu0
    %1963 = vmatprep.mubr.f32.mxu0 %v165
    %1964 = vmatmul.mubr.f32.gmra.mxu0 %v164
    %v1965 = vpop.f32.mrf.mxu0
    %v1966 = vadd.f32 %v1867, %v1965
    %v1967 = vpop.f32.mrf.mxu0
    %1968 = vmatprep.mubr.f32.mxu0 %v168
    %1969 = vmatmul.mubr.f32.gmra.mxu0 %v167
    %v1970 = vpop.f32.mrf.mxu0
    %v1971 = vadd.f32 %v1867, %v1970
    %v1972 = vpop.f32.mrf.mxu0
    %1973 = vmatprep.mubr.f32.mxu0 %v171
    %1974 = vmatmul.mubr.f32.gmra.mxu0 %v170
    %v1975 = vpop.f32.mrf.mxu0
    %v1976 = vadd.f32 %v1867, %v1975
    %v1977 = vpop.f32.mrf.mxu0
    %1978 = vmatprep.mubr.f32.mxu0 %v174
    %1979 = vmatmul.mubr.f32.gmra.mxu0 %v173
    %v1980 = vpop.f32.mrf.mxu0
    %v1981 = vadd.f32 %v1867, %v1980
    %v1982 = vpop.f32.mrf.mxu0
    %1983 = vmatprep.mubr.f32.mxu0 %v177
    %1984 = vmatmul.mubr.f32.gmra.mxu0 %v176
    %v1985 = vpop.f32.mrf.mxu0
    %v1986 = vadd.f32 %v1867, %v1985
    %v1987 = vpop.f32.mrf.mxu0
    %1988 = vmatprep.mubr.f32.mxu0 %v180
    %1989 = vmatmul.mubr.f32.gmra.mxu0 %v179
    %v1990 = vpop.f32.mrf.mxu0
    %v1991 = vadd.f32 %v1867, %v1990
    %v1992 = vpop.f32.mrf.mxu0
    %1993 = vmatprep.mubr.f32.mxu0 %v183
    %1994 = vmatmul.mubr.f32.gmra.mxu0 %v182
    %v1995 = vpop.f32.mrf.mxu0
    %v1996 = vadd.f32 %v1867, %v1995
    %v1997 = vpop.f32.mrf.mxu0
    %1998 = vmatprep.mubr.f32.mxu0 %v186
    %1999 = vmatmul.mubr.f32.gmra.mxu0 %v185
    %v2000 = vpop.f32.mrf.mxu0
    %v2001 = vadd.f32 %v1867, %v2000
    %v2002 = vpop.f32.mrf.mxu0
    %2003 = vmatprep.mubr.f32.mxu0 %v189
    %2004 = vmatmul.mubr.f32.gmra.mxu0 %v188
    %v2005 = vpop.f32.mrf.mxu0
    %v2006 = vadd.f32 %v1867, %v2005
    %v2007 = vpop.f32.mrf.mxu0
    %2008 = vmatprep.mubr.f32.mxu0 %v192
    %2009 = vmatmul.mubr.f32.gmra.mxu0 %v191
    %v2010 = vpop.f32.mrf.mxu0
    %v2011 = vadd.f32 %v1867, %v2010
    %v2012 = vpop.f32.mrf.mxu0
    %2013 = vmatprep.mubr.f32.mxu0 %v195
    %2014 = vmatmul.mubr.f32.gmra.mxu0 %v194
    %v2015 = vpop.f32.mrf.mxu0
    %v2016 = vadd.f32 %v1867, %v2015
    %v2017 = vpop.f32.mrf.mxu0
    %2018 = vmatprep.mubr.f32.mxu0 %v198
    %2019 = vmatmul.mubr.f32.gmra.mxu0 %v197
    %v2020 = vpop.f32.mrf.mxu0
    %v2021 = vadd.f32 %v1867, %v2020
    %v2022 = vpop.f32.mrf.mxu0
    %2023 = vmatprep.mubr.f32.mxu0 %v201
    %2024 = vmatmul.mubr.f32.gmra.mxu0 %v200
    %v2025 = vpop.f32.mrf.mxu0
    %v2026 = vadd.f32 %v1867, %v2025
    %v2027 = vpop.f32.mrf.mxu0
    %2028 = vmatprep.mubr.f32.mxu0 %v204
    %2029 = vmatmul.mubr.f32.gmra.mxu0 %v203
    %v2030 = vpop.f32.mrf.mxu0
    %v2031 = vadd.f32 %v1867, %v2030
    %v2032 = vpop.f32.mrf.mxu0
    %2033 = vmatprep.mubr.f32.mxu0 %v207
    %2034 = vmatmul.mubr.f32.gmra.mxu0 %v206
    %v2035 = vpop.f32.mrf.mxu0
    %v2036 = vadd.f32 %v1867, %v2035
    %v2037 = vpop.f32.mrf.mxu0
    %2038 = vmatprep.mubr.f32.mxu0 %v210
    %2039 = vmatmul.mubr.f32.gmra.mxu0 %v209
    %v2040 = vpop.f32.mrf.mxu0
    %v2041 = vadd.f32 %v1867, %v2040
    %v2042 = vpop.f32.mrf.mxu0
    %2043 = vmatprep.mubr.f32.mxu0 %v213
    %2044 = vmatmul.mubr.f32.gmra.mxu0 %v212
    %v2045 = vpop.f32.mrf.mxu0
    %v2046 = vadd.f32 %v1867, %v2045
    %v2047 = vpop.f32.mrf.mxu0
    %2048 = vmatprep.mubr.f32.mxu0 %v216
    %2049 = vmatmul.mubr.f32.gmra.mxu0 %v215
    %v2050 = vpop.f32.mrf.mxu0
    %v2051 = vadd.f32 %v1867, %v2050
    %v2052 = vpop.f32.mrf.mxu0
    %2053 = vmatprep.mubr.f32.mxu0 %v219
    %2054 = vmatmul.mubr.f32.gmra.mxu0 %v218
    %v2055 = vpop.f32.mrf.mxu0
    %v2056 = vadd.f32 %v1867, %v2055
    %v2057 = vpop.f32.mrf.mxu0
    %2058 = vmatprep.mubr.f32.mxu0 %v222
    %2059 = vmatmul.mubr.f32.gmra.mxu0 %v221
    %v2060 = vpop.f32.mrf.mxu0
    %v2061 = vadd.f32 %v1867, %v2060
    %v2062 = vpop.f32.mrf.mxu0
    %2063 = vmatprep.mubr.f32.mxu0 %v225
    %2064 = vmatmul.mubr.f32.gmra.mxu0 %v224
    %v2065 = vpop.f32.mrf.mxu0
    %v2066 = vadd.f32 %v1867, %v2065
    %v2067 = vpop.f32.mrf.mxu0
    %2068 = vmatprep.mubr.f32.mxu0 %v228
    %2069 = vmatmul.mubr.f32.gmra.mxu0 %v227
    %v2070 = vpop.f32.mrf.mxu0
    %v2071 = vadd.f32 %v1867, %v2070
    %v2072 = vpop.f32.mrf.mxu0
    %2073 = vmatprep.mubr.f32.mxu0 %v231
    %2074 = vmatmul.mubr.f32.gmra.mxu0 %v230
    %v2075 = vpop.f32.mrf.mxu0
    %v2076 = vadd.f32 %v1867, %v2075
    %v2077 = vpop.f32.mrf.mxu0
    %2078 = vmatprep.mubr.f32.mxu0 %v234
    %2079 = vmatmul.mubr.f32.gmra.mxu0 %v233
    %v2080 = vpop.f32.mrf.mxu0
    %v2081 = vadd.f32 %v1867, %v2080
    %v2082 = vpop.f32.mrf.mxu0
    %2083 = vmatprep.mubr.f32.mxu0 %v237
    %2084 = vmatmul.mubr.f32.gmra.mxu0 %v236
    %v2085 = vpop.f32.mrf.mxu0
    %v2086 = vadd.f32 %v1867, %v2085
    %v2087 = vpop.f32.mrf.mxu0
    %2088 = vmatprep.mubr.f32.mxu0 %v240
    %2089 = vmatmul.mubr.f32.gmra.mxu0 %v239
    %v2090 = vpop.f32.mrf.mxu0
    %v2091 = vadd.f32 %v1867, %v2090
    %v2092 = vpop.f32.mrf.mxu0
    %2093 = vmatprep.mubr.f32.mxu0 %v243
    %2094 = vmatmul.mubr.f32.gmra.mxu0 %v242
    %v2095 = vpop.f32.mrf.mxu0
    %v2096 = vadd.f32 %v1867, %v2095
    %v2097 = vpop.f32.mrf.mxu0
    %2098 = vmatprep.mubr.f32.mxu0 %v246
    %2099 = vmatmul.mubr.f32.gmra.mxu0 %v245
    %v2100 = vpop.f32.mrf.mxu0
    %v2101 = vadd.f32 %v1867, %v2100
    %v2102 = vpop.f32.mrf.mxu0
    %2103 = vmatprep.mubr.f32.mxu0 %v249
    %2104 = vmatmul.mubr.f32.gmra.mxu0 %v248
    %v2105 = vpop.f32.mrf.mxu0
    %v2106 = vadd.f32 %v1867, %v2105
    %v2107 = vpop.f32.mrf.mxu0
    %2108 = vmatprep.mubr.f32.mxu0 %v252
    %2109 = vmatmul.mubr.f32.gmra.mxu0 %v251
    %v2110 = vpop.f32.mrf.mxu0
    %v2111 = vadd.f32 %v1867, %v2110
    %v2112 = vpop.f32.mrf.mxu0
    %2113 = vmatprep.mubr.f32.mxu0 %v255
    %2114 = vmatmul.mubr.f32.gmra.mxu0 %v254
    %v2115 = vpop.f32.mrf.mxu0
    %v2116 = vadd.f32 %v1867, %v2115
    %v2117 = vpop.f32.mrf.mxu0
    %2118 = vmatprep.mubr.f32.mxu0 %v258
    %2119 = vmatmul.mubr.f32.gmra.mxu0 %v257
    %v2120 = vpop.f32.mrf.mxu0
    %v2121 = vadd.f32 %v1867, %v2120
    %v2122 = vpop.f32.mrf.mxu0
    %2123 = vmatprep.mubr.f32.mxu0 %v261
    %2124 = vmatmul.mubr.f32.gmra.mxu0 %v260
    %v2125 = vpop.f32.mrf.mxu0
    %v2126 = vadd.f32 %v1867, %v2125
    %v2127 = vpop.f32.mrf.mxu0
    %2128 = vmatprep.mubr.f32.mxu0 %v264
    %2129 = vmatmul.mubr.f32.gmra.mxu0 %v263
    %v2130 = vpop.f32.mrf.mxu0
    %v2131 = vadd.f32 %v1867, %v2130
    %v2132 = vpop.f32.mrf.mxu0
    %2133 = vmatprep.mubr.f32.mxu0 %v267
    %2134 = vmatmul.mubr.f32.gmra.mxu0 %v266
    %v2135 = vpop.f32.mrf.mxu0
    %v2136 = vadd.f32 %v1867, %v2135
    %v2137 = vpop.f32.mrf.mxu0
    %2138 = vmatprep.mubr.f32.mxu0 %v270
    %2139 = vmatmul.mubr.f32.gmra.mxu0 %v269
    %v2140 = vpop.f32.mrf.mxu0
    %v2141 = vadd.f32 %v1867, %v2140
    %v2142 = vpop.f32.mrf.mxu0
    %2143 = vmatprep.mubr.f32.mxu0 %v273
    %2144 = vmatmul.mubr.f32.gmra.mxu0 %v272
    %v2145 = vpop.f32.mrf.mxu0
    %v2146 = vadd.f32 %v1867, %v2145
    %v2147 = vpop.f32.mrf.mxu0
    %2148 = vmatprep.mubr.f32.mxu0 %v276
    %2149 = vmatmul.mubr.f32.gmra.mxu0 %v275
    %v2150 = vpop.f32.mrf.mxu0
    %v2151 = vadd.f32 %v1867, %v2150
    %v2152 = vpop.f32.mrf.mxu0
    %2153 = vmatprep.mubr.f32.mxu0 %v279
    %2154 = vmatmul.mubr.f32.gmra.mxu0 %v278
    %v2155 = vpop.f32.mrf.mxu0
    %v2156 = vadd.f32 %v1867, %v2155
    %v2157 = vpop.f32.mrf.mxu0
    %2158 = vmatprep.mubr.f32.mxu0 %v282
    %2159 = vmatmul.mubr.f32.gmra.mxu0 %v281
    %v2160 = vpop.f32.mrf.mxu0
    %v2161 = vadd.f32 %v1867, %v2160
    %v2162 = vpop.f32.mrf.mxu0
    %2163 = vmatprep.mubr.f32.mxu0 %v285
    %2164 = vmatmul.mubr.f32.gmra.mxu0 %v284
    %v2165 = vpop.f32.mrf.mxu0
    %v2166 = vadd.f32 %v1867, %v2165
    %v2167 = vpop.f32.mrf.mxu0
    %2168 = vmatprep.mubr.f32.mxu0 %v288
    %2169 = vmatmul.mubr.f32.gmra.mxu0 %v287
    %v2170 = vpop.f32.mrf.mxu0
    %v2171 = vadd.f32 %v1867, %v2170
    %v2172 = vpop.f32.mrf.mxu0
    %2173 = vdwg.mxu0
    %2174 = vmatprep.subr.mxu0 0.0
    %2175 = vmatpush1.msra.mxu0 %v1859
    %2176 = vmatprep.subr.mxu0 0.0
    %2177 = vmatpush1.msra.mxu0 %v1854
    %2178 = vmatprep.subr.mxu0 0.0
    %2179 = vmatpush1.msra.mxu0 %v1849
    %2180 = vmatprep.subr.mxu0 0.0
    %2181 = vmatpush1.msra.mxu0 %v1844
    %2182 = vmatprep.subr.mxu0 0.0
    %2183 = vmatpush1.msra.mxu0 %v1839
    %2184 = vmatprep.subr.mxu0 0.0
    %2185 = vmatpush1.msra.mxu0 %v1834
    %2186 = vmatprep.subr.mxu0 0.0
    %2187 = vmatpush1.msra.mxu0 %v1829
    %2188 = vmatprep.subr.mxu0 0.0
    %2189 = vmatpush1.msra.mxu0 %v1824
    %2190 = vmatprep.subr.mxu0 0.0
    %2191 = vmatpush1.msra.mxu0 %v1819
    %2192 = vmatprep.subr.mxu0 0.0
    %2193 = vmatpush1.msra.mxu0 %v1814
    %2194 = vmatprep.subr.mxu0 0.0
    %2195 = vmatpush1.msra.mxu0 %v1809
    %2196 = vmatprep.subr.mxu0 0.0
    %2197 = vmatpush1.msra.mxu0 %v1804
    %2198 = vmatprep.subr.mxu0 0.0
    %2199 = vmatpush1.msra.mxu0 %v1799
    %2200 = vmatprep.subr.mxu0 0.0
    %2201 = vmatpush1.msra.mxu0 %v1794
    %2202 = vmatprep.subr.mxu0 0.0
    %2203 = vmatpush1.msra.mxu0 %v1789
    %2204 = vmatprep.subr.mxu0 0.0
    %2205 = vmatpush1.msra.mxu0 %v1784
    %2206 = vmatprep.subr.mxu0 0.0
    %2207 = vmatpush2.msra.mxu0 0.0
    %2208 = vmatprep.subr.mxu0 0.0
    %2209 = vmatpush2.msra.mxu0 0.0
    %2210 = vmatprep.subr.mxu0 0.0
    %2211 = vmatpush2.msra.mxu0 0.0
    %2212 = vmatprep.subr.mxu0 0.0
    %2213 = vmatpush2.msra.mxu0 0.0
    %2214 = vmatprep.subr.mxu0 0.0
    %2215 = vmatpush2.msra.mxu0 0.0
    %2216 = vmatprep.subr.mxu0 0.0
    %2217 = vmatpush2.msra.mxu0 0.0
    %2218 = vmatprep.subr.mxu0 0.0
    %2219 = vmatpush2.msra.mxu0 0.0
    %2220 = vmatprep.subr.mxu0 0.0
    %2221 = vmatpush2.msra.mxu0 0.0
    %2222 = vmatprep.subr.mxu0 0.0
    %2223 = vmatpush2.msra.mxu0 0.0
    %2224 = vmatprep.subr.mxu0 0.0
    %2225 = vmatpush2.msra.mxu0 0.0
    %2226 = vmatprep.subr.mxu0 0.0
    %2227 = vmatpush2.msra.mxu0 0.0
    %2228 = vmatprep.subr.mxu0 0.0
    %2229 = vmatpush2.msra.mxu0 0.0
    %2230 = vmatprep.subr.mxu0 0.0
    %2231 = vmatpush2.msra.mxu0 0.0
    %2232 = vmatprep.subr.mxu0 0.0
    %2233 = vmatpush2.msra.mxu0 0.0
    %2234 = vmatprep.subr.mxu0 0.0
    %2235 = vmatpush2.msra.mxu0 0.0
    %2236 = vmatprep.subr.mxu0 0.0
    %2237 = vmatpush2.msra.mxu0 0.0
    %2238 = vmatprep.mubr.f32.mxu0 0.0
    %2239 = vmatmul.mubr.f32.gmra.mxu0 %v148
    %v2240 = vpop.f32.mrf.mxu0
    %v2241 = vadd.f32 %v1936, %v2240
    %v2242 = vpop.f32.mrf.mxu0
    %2243 = vmatprep.mubr.f32.mxu0 0.0
    %2244 = vmatmul.mubr.f32.gmra.mxu0 %v151
    %v2245 = vpop.f32.mrf.mxu0
    %v2246 = vadd.f32 %v1941, %v2245
    %v2247 = vpop.f32.mrf.mxu0
    %2248 = vmatprep.mubr.f32.mxu0 0.0
    %2249 = vmatmul.mubr.f32.gmra.mxu0 %v154
    %v2250 = vpop.f32.mrf.mxu0
    %v2251 = vadd.f32 %v1946, %v2250
    %v2252 = vpop.f32.mrf.mxu0
    %2253 = vmatprep.mubr.f32.mxu0 0.0
    %2254 = vmatmul.mubr.f32.gmra.mxu0 %v157
    %v2255 = vpop.f32.mrf.mxu0
    %v2256 = vadd.f32 %v1951, %v2255
    %v2257 = vpop.f32.mrf.mxu0
    %2258 = vmatprep.mubr.f32.mxu0 0.0
    %2259 = vmatmul.mubr.f32.gmra.mxu0 %v160
    %v2260 = vpop.f32.mrf.mxu0
    %v2261 = vadd.f32 %v1956, %v2260
    %v2262 = vpop.f32.mrf.mxu0
    %2263 = vmatprep.mubr.f32.mxu0 0.0
    %2264 = vmatmul.mubr.f32.gmra.mxu0 %v163
    %v2265 = vpop.f32.mrf.mxu0
    %v2266 = vadd.f32 %v1961, %v2265
    %v2267 = vpop.f32.mrf.mxu0
    %2268 = vmatprep.mubr.f32.mxu0 0.0
    %2269 = vmatmul.mubr.f32.gmra.mxu0 %v166
    %v2270 = vpop.f32.mrf.mxu0
    %v2271 = vadd.f32 %v1966, %v2270
    %v2272 = vpop.f32.mrf.mxu0
    %2273 = vmatprep.mubr.f32.mxu0 0.0
    %2274 = vmatmul.mubr.f32.gmra.mxu0 %v169
    %v2275 = vpop.f32.mrf.mxu0
    %v2276 = vadd.f32 %v1971, %v2275
    %v2277 = vpop.f32.mrf.mxu0
    %2278 = vmatprep.mubr.f32.mxu0 0.0
    %2279 = vmatmul.mubr.f32.gmra.mxu0 %v172
    %v2280 = vpop.f32.mrf.mxu0
    %v2281 = vadd.f32 %v1976, %v2280
    %v2282 = vpop.f32.mrf.mxu0
    %2283 = vmatprep.mubr.f32.mxu0 0.0
    %2284 = vmatmul.mubr.f32.gmra.mxu0 %v175
    %v2285 = vpop.f32.mrf.mxu0
    %v2286 = vadd.f32 %v1981, %v2285
    %v2287 = vpop.f32.mrf.mxu0
    %2288 = vmatprep.mubr.f32.mxu0 0.0
    %2289 = vmatmul.mubr.f32.gmra.mxu0 %v178
    %v2290 = vpop.f32.mrf.mxu0
    %v2291 = vadd.f32 %v1986, %v2290
    %v2292 = vpop.f32.mrf.mxu0
    %2293 = vmatprep.mubr.f32.mxu0 0.0
    %2294 = vmatmul.mubr.f32.gmra.mxu0 %v181
    %v2295 = vpop.f32.mrf.mxu0
    %v2296 = vadd.f32 %v1991, %v2295
    %v2297 = vpop.f32.mrf.mxu0
    %2298 = vmatprep.mubr.f32.mxu0 0.0
    %2299 = vmatmul.mubr.f32.gmra.mxu0 %v184
    %v2300 = vpop.f32.mrf.mxu0
    %v2301 = vadd.f32 %v1996, %v2300
    %v2302 = vpop.f32.mrf.mxu0
    %2303 = vmatprep.mubr.f32.mxu0 0.0
    %2304 = vmatmul.mubr.f32.gmra.mxu0 %v187
    %v2305 = vpop.f32.mrf.mxu0
    %v2306 = vadd.f32 %v2001, %v2305
    %v2307 = vpop.f32.mrf.mxu0
    %2308 = vmatprep.mubr.f32.mxu0 0.0
    %2309 = vmatmul.mubr.f32.gmra.mxu0 %v190
    %v2310 = vpop.f32.mrf.mxu0
    %v2311 = vadd.f32 %v2006, %v2310
    %v2312 = vpop.f32.mrf.mxu0
    %2313 = vmatprep.mubr.f32.mxu0 0.0
    %2314 = vmatmul.mubr.f32.gmra.mxu0 %v193
    %v2315 = vpop.f32.mrf.mxu0
    %v2316 = vadd.f32 %v2011, %v2315
    %v2317 = vpop.f32.mrf.mxu0
    %2318 = vmatprep.mubr.f32.mxu0 0.0
    %2319 = vmatmul.mubr.f32.gmra.mxu0 %v196
    %v2320 = vpop.f32.mrf.mxu0
    %v2321 = vadd.f32 %v2016, %v2320
    %v2322 = vpop.f32.mrf.mxu0
    %2323 = vmatprep.mubr.f32.mxu0 0.0
    %2324 = vmatmul.mubr.f32.gmra.mxu0 %v199
    %v2325 = vpop.f32.mrf.mxu0
    %v2326 = vadd.f32 %v2021, %v2325
    %v2327 = vpop.f32.mrf.mxu0
    %2328 = vmatprep.mubr.f32.mxu0 0.0
    %2329 = vmatmul.mubr.f32.gmra.mxu0 %v202
    %v2330 = vpop.f32.mrf.mxu0
    %v2331 = vadd.f32 %v2026, %v2330
    %v2332 = vpop.f32.mrf.mxu0
    %2333 = vmatprep.mubr.f32.mxu0 0.0
    %2334 = vmatmul.mubr.f32.gmra.mxu0 %v205
    %v2335 = vpop.f32.mrf.mxu0
    %v2336 = vadd.f32 %v2031, %v2335
    %v2337 = vpop.f32.mrf.mxu0
    %2338 = vmatprep.mubr.f32.mxu0 0.0
    %2339 = vmatmul.mubr.f32.gmra.mxu0 %v208
    %v2340 = vpop.f32.mrf.mxu0
    %v2341 = vadd.f32 %v2036, %v2340
    %v2342 = vpop.f32.mrf.mxu0
    %2343 = vmatprep.mubr.f32.mxu0 0.0
    %2344 = vmatmul.mubr.f32.gmra.mxu0 %v211
    %v2345 = vpop.f32.mrf.mxu0
    %v2346 = vadd.f32 %v2041, %v2345
    %v2347 = vpop.f32.mrf.mxu0
    %2348 = vmatprep.mubr.f32.mxu0 0.0
    %2349 = vmatmul.mubr.f32.gmra.mxu0 %v214
    %v2350 = vpop.f32.mrf.mxu0
    %v2351 = vadd.f32 %v2046, %v2350
    %v2352 = vpop.f32.mrf.mxu0
    %2353 = vmatprep.mubr.f32.mxu0 0.0
    %2354 = vmatmul.mubr.f32.gmra.mxu0 %v217
    %v2355 = vpop.f32.mrf.mxu0
    %v2356 = vadd.f32 %v2051, %v2355
    %v2357 = vpop.f32.mrf.mxu0
    %2358 = vmatprep.mubr.f32.mxu0 0.0
    %2359 = vmatmul.mubr.f32.gmra.mxu0 %v220
    %v2360 = vpop.f32.mrf.mxu0
    %v2361 = vadd.f32 %v2056, %v2360
    %v2362 = vpop.f32.mrf.mxu0
    %2363 = vmatprep.mubr.f32.mxu0 0.0
    %2364 = vmatmul.mubr.f32.gmra.mxu0 %v223
    %v2365 = vpop.f32.mrf.mxu0
    %v2366 = vadd.f32 %v2061, %v2365
    %v2367 = vpop.f32.mrf.mxu0
    %2368 = vmatprep.mubr.f32.mxu0 0.0
    %2369 = vmatmul.mubr.f32.gmra.mxu0 %v226
    %v2370 = vpop.f32.mrf.mxu0
    %v2371 = vadd.f32 %v2066, %v2370
    %v2372 = vpop.f32.mrf.mxu0
    %2373 = vmatprep.mubr.f32.mxu0 0.0
    %2374 = vmatmul.mubr.f32.gmra.mxu0 %v229
    %v2375 = vpop.f32.mrf.mxu0
    %v2376 = vadd.f32 %v2071, %v2375
    %v2377 = vpop.f32.mrf.mxu0
    %2378 = vmatprep.mubr.f32.mxu0 0.0
    %2379 = vmatmul.mubr.f32.gmra.mxu0 %v232
    %v2380 = vpop.f32.mrf.mxu0
    %v2381 = vadd.f32 %v2076, %v2380
    %v2382 = vpop.f32.mrf.mxu0
    %2383 = vmatprep.mubr.f32.mxu0 0.0
    %2384 = vmatmul.mubr.f32.gmra.mxu0 %v235
    %v2385 = vpop.f32.mrf.mxu0
    %v2386 = vadd.f32 %v2081, %v2385
    %v2387 = vpop.f32.mrf.mxu0
    %2388 = vmatprep.mubr.f32.mxu0 0.0
    %2389 = vmatmul.mubr.f32.gmra.mxu0 %v238
    %v2390 = vpop.f32.mrf.mxu0
    %v2391 = vadd.f32 %v2086, %v2390
    %v2392 = vpop.f32.mrf.mxu0
    %2393 = vmatprep.mubr.f32.mxu0 0.0
    %2394 = vmatmul.mubr.f32.gmra.mxu0 %v241
    %v2395 = vpop.f32.mrf.mxu0
    %v2396 = vadd.f32 %v2091, %v2395
    %v2397 = vpop.f32.mrf.mxu0
    %2398 = vmatprep.mubr.f32.mxu0 0.0
    %2399 = vmatmul.mubr.f32.gmra.mxu0 %v244
    %v2400 = vpop.f32.mrf.mxu0
    %v2401 = vadd.f32 %v2096, %v2400
    %v2402 = vpop.f32.mrf.mxu0
    %2403 = vmatprep.mubr.f32.mxu0 0.0
    %2404 = vmatmul.mubr.f32.gmra.mxu0 %v247
    %v2405 = vpop.f32.mrf.mxu0
    %v2406 = vadd.f32 %v2101, %v2405
    %v2407 = vpop.f32.mrf.mxu0
    %2408 = vmatprep.mubr.f32.mxu0 0.0
    %2409 = vmatmul.mubr.f32.gmra.mxu0 %v250
    %v2410 = vpop.f32.mrf.mxu0
    %v2411 = vadd.f32 %v2106, %v2410
    %v2412 = vpop.f32.mrf.mxu0
    %2413 = vmatprep.mubr.f32.mxu0 0.0
    %2414 = vmatmul.mubr.f32.gmra.mxu0 %v253
    %v2415 = vpop.f32.mrf.mxu0
    %v2416 = vadd.f32 %v2111, %v2415
    %v2417 = vpop.f32.mrf.mxu0
    %2418 = vmatprep.mubr.f32.mxu0 0.0
    %2419 = vmatmul.mubr.f32.gmra.mxu0 %v256
    %v2420 = vpop.f32.mrf.mxu0
    %v2421 = vadd.f32 %v2116, %v2420
    %v2422 = vpop.f32.mrf.mxu0
    %2423 = vmatprep.mubr.f32.mxu0 0.0
    %2424 = vmatmul.mubr.f32.gmra.mxu0 %v259
    %v2425 = vpop.f32.mrf.mxu0
    %v2426 = vadd.f32 %v2121, %v2425
    %v2427 = vpop.f32.mrf.mxu0
    %2428 = vmatprep.mubr.f32.mxu0 0.0
    %2429 = vmatmul.mubr.f32.gmra.mxu0 %v262
    %v2430 = vpop.f32.mrf.mxu0
    %v2431 = vadd.f32 %v2126, %v2430
    %v2432 = vpop.f32.mrf.mxu0
    %2433 = vmatprep.mubr.f32.mxu0 0.0
    %2434 = vmatmul.mubr.f32.gmra.mxu0 %v265
    %v2435 = vpop.f32.mrf.mxu0
    %v2436 = vadd.f32 %v2131, %v2435
    %v2437 = vpop.f32.mrf.mxu0
    %2438 = vmatprep.mubr.f32.mxu0 0.0
    %2439 = vmatmul.mubr.f32.gmra.mxu0 %v268
    %v2440 = vpop.f32.mrf.mxu0
    %v2441 = vadd.f32 %v2136, %v2440
    %v2442 = vpop.f32.mrf.mxu0
    %2443 = vmatprep.mubr.f32.mxu0 0.0
    %2444 = vmatmul.mubr.f32.gmra.mxu0 %v271
    %v2445 = vpop.f32.mrf.mxu0
    %v2446 = vadd.f32 %v2141, %v2445
    %v2447 = vpop.f32.mrf.mxu0
    %2448 = vmatprep.mubr.f32.mxu0 0.0
    %2449 = vmatmul.mubr.f32.gmra.mxu0 %v274
    %v2450 = vpop.f32.mrf.mxu0
    %v2451 = vadd.f32 %v2146, %v2450
    %v2452 = vpop.f32.mrf.mxu0
    %2453 = vmatprep.mubr.f32.mxu0 0.0
    %2454 = vmatmul.mubr.f32.gmra.mxu0 %v277
    %v2455 = vpop.f32.mrf.mxu0
    %v2456 = vadd.f32 %v2151, %v2455
    %v2457 = vpop.f32.mrf.mxu0
    %2458 = vmatprep.mubr.f32.mxu0 0.0
    %2459 = vmatmul.mubr.f32.gmra.mxu0 %v280
    %v2460 = vpop.f32.mrf.mxu0
    %v2461 = vadd.f32 %v2156, %v2460
    %v2462 = vpop.f32.mrf.mxu0
    %2463 = vmatprep.mubr.f32.mxu0 0.0
    %2464 = vmatmul.mubr.f32.gmra.mxu0 %v283
    %v2465 = vpop.f32.mrf.mxu0
    %v2466 = vadd.f32 %v2161, %v2465
    %v2467 = vpop.f32.mrf.mxu0
    %2468 = vmatprep.mubr.f32.mxu0 0.0
    %2469 = vmatmul.mubr.f32.gmra.mxu0 %v286
    %v2470 = vpop.f32.mrf.mxu0
    %v2471 = vadd.f32 %v2166, %v2470
    %v2472 = vpop.f32.mrf.mxu0
    %2473 = vmatprep.mubr.f32.mxu0 0.0
    %2474 = vmatmul.mubr.f32.gmra.mxu0 %v289
    %v2475 = vpop.f32.mrf.mxu0
    %v2476 = vadd.f32 %v2171, %v2475
    %v2477 = vpop.f32.mrf.mxu0
    %2478 = vdwg.mxu0
    %v2479 = vmax.f32 %v2241, 0.0
    %v2480 = vmax.f32 %v2246, 0.0
    %v2481 = vmax.f32 %v2251, 0.0
    %v2482 = vmax.f32 %v2256, 0.0
    %v2483 = vmax.f32 %v2261, 0.0
    %v2484 = vmax.f32 %v2266, 0.0
    %v2485 = vmax.f32 %v2271, 0.0
    %v2486 = vmax.f32 %v2276, 0.0
    %v2487 = vmax.f32 %v2281, 0.0
    %v2488 = vmax.f32 %v2286, 0.0
    %v2489 = vmax.f32 %v2291, 0.0
    %v2490 = vmax.f32 %v2296, 0.0
    %v2491 = vmax.f32 %v2301, 0.0
    %v2492 = vmax.f32 %v2306, 0.0
    %v2493 = vmax.f32 %v2311, 0.0
    %v2494 = vmax.f32 %v2316, 0.0
    %v2495 = vmax.f32 %v2321, 0.0
    %v2496 = vmax.f32 %v2326, 0.0
    %v2497 = vmax.f32 %v2331, 0.0
    %v2498 = vmax.f32 %v2336, 0.0
    %v2499 = vmax.f32 %v2341, 0.0
    %v2500 = vmax.f32 %v2346, 0.0
    %v2501 = vmax.f32 %v2351, 0.0
    %v2502 = vmax.f32 %v2356, 0.0
    %v2503 = vmax.f32 %v2361, 0.0
    %v2504 = vmax.f32 %v2366, 0.0
    %v2505 = vmax.f32 %v2371, 0.0
    %v2506 = vmax.f32 %v2376, 0.0
    %v2507 = vmax.f32 %v2381, 0.0
    %v2508 = vmax.f32 %v2386, 0.0
    %v2509 = vmax.f32 %v2391, 0.0
    %v2510 = vmax.f32 %v2396, 0.0
    %v2511 = vmax.f32 %v2401, 0.0
    %v2512 = vmax.f32 %v2406, 0.0
    %v2513 = vmax.f32 %v2411, 0.0
    %v2514 = vmax.f32 %v2416, 0.0
    %v2515 = vmax.f32 %v2421, 0.0
    %v2516 = vmax.f32 %v2426, 0.0
    %v2517 = vmax.f32 %v2431, 0.0
    %v2518 = vmax.f32 %v2436, 0.0
    %v2519 = vmax.f32 %v2441, 0.0
    %v2520 = vmax.f32 %v2446, 0.0
    %v2521 = vmax.f32 %v2451, 0.0
    %v2522 = vmax.f32 %v2456, 0.0
    %v2523 = vmax.f32 %v2461, 0.0
    %v2524 = vmax.f32 %v2466, 0.0
    %v2525 = vmax.f32 %v2471, 0.0
    %v2526 = vmax.f32 %v2476, 0.0
    %v2527 = vld [vmem:[%s7] sm:$0xff]
    %v2528 = vld [vmem:[%s7 + $0x8] sm:$0xff]
    %v2530 = vsel %vm1412, %v2479, 0
    %v2533 = vsel %vm1412, %v2480, 0
    %v2536 = vsel %vm1412, %v2481, 0
    %v2539 = vsel %vm1412, %v2482, 0
    %v2542 = vsel %vm1412, %v2483, 0
    %v2545 = vsel %vm1412, %v2484, 0
    %v2548 = vsel %vm1412, %v2485, 0
    %v2551 = vsel %vm1412, %v2486, 0
    %v2554 = vsel %vm1412, %v2487, 0
    %v2557 = vsel %vm1412, %v2488, 0
    %v2560 = vsel %vm1412, %v2489, 0
    %v2563 = vsel %vm1412, %v2490, 0
    %v2566 = vsel %vm1412, %v2491, 0
    %v2569 = vsel %vm1412, %v2492, 0
    %v2572 = vsel %vm1412, %v2493, 0
    %v2575 = vsel %vm1412, %v2494, 0
    %v2578 = vsel %vm1412, %v2495, 0
    %v2581 = vsel %vm1412, %v2496, 0
    %v2584 = vsel %vm1412, %v2497, 0
    %v2587 = vsel %vm1412, %v2498, 0
    %v2590 = vsel %vm1412, %v2499, 0
    %v2593 = vsel %vm1412, %v2500, 0
    %v2596 = vsel %vm1412, %v2501, 0
    %v2599 = vsel %vm1412, %v2502, 0
    %v2602 = vsel %vm1412, %v2503, 0
    %v2605 = vsel %vm1412, %v2504, 0
    %v2608 = vsel %vm1412, %v2505, 0
    %v2611 = vsel %vm1412, %v2506, 0
    %v2614 = vsel %vm1412, %v2507, 0
    %v2617 = vsel %vm1412, %v2508, 0
    %v2620 = vsel %vm1412, %v2509, 0
    %v2623 = vsel %vm1412, %v2510, 0
    %v2626 = vsel %vm1412, %v2511, 0
    %v2629 = vsel %vm1412, %v2512, 0
    %v2632 = vsel %vm1412, %v2513, 0
    %v2635 = vsel %vm1412, %v2514, 0
    %v2638 = vsel %vm1412, %v2515, 0
    %v2641 = vsel %vm1412, %v2516, 0
    %v2644 = vsel %vm1412, %v2517, 0
    %v2647 = vsel %vm1412, %v2518, 0
    %v2650 = vsel %vm1412, %v2519, 0
    %v2653 = vsel %vm1412, %v2520, 0
    %v2656 = vsel %vm1412, %v2521, 0
    %v2659 = vsel %vm1412, %v2522, 0
    %v2662 = vsel %vm1412, %v2523, 0
    %v2665 = vsel %vm1412, %v2524, 0
    %v2668 = vsel %vm1412, %v2525, 0
    %v2671 = vsel %vm1412, %v2526, 0
    %2673 = vmatprep.subr.mxu0 0.0
    %2674 = vmatpush1.msra.mxu0 0.0
    %2675 = vmatprep.subr.mxu0 0.0
    %2676 = vmatpush1.msra.mxu0 0.0
    %2677 = vmatprep.subr.mxu0 0.0
    %2678 = vmatpush1.msra.mxu0 0.0
    %2679 = vmatprep.subr.mxu0 0.0
    %2680 = vmatpush1.msra.mxu0 0.0
    %2681 = vmatprep.subr.mxu0 0.0
    %2682 = vmatpush1.msra.mxu0 0.0
    %2683 = vmatprep.subr.mxu0 0.0
    %2684 = vmatpush1.msra.mxu0 0.0
    %2685 = vmatprep.subr.mxu0 0.0
    %2686 = vmatpush1.msra.mxu0 0.0
    %2687 = vmatprep.subr.mxu0 0.0
    %2688 = vmatpush1.msra.mxu0 0.0
    %2689 = vmatprep.subr.mxu0 0.0
    %2690 = vmatpush1.msra.mxu0 0.0
    %2691 = vmatprep.subr.mxu0 0.0
    %2692 = vmatpush1.msra.mxu0 0.0
    %2693 = vmatprep.subr.mxu0 0.0
    %2694 = vmatpush1.msra.mxu0 0.0
    %2695 = vmatprep.subr.mxu0 0.0
    %2696 = vmatpush1.msra.mxu0 0.0
    %2697 = vmatprep.subr.mxu0 0.0
    %2698 = vmatpush1.msra.mxu0 0.0
    %2699 = vmatprep.subr.mxu0 0.0
    %2700 = vmatpush1.msra.mxu0 0.0
    %2701 = vmatprep.subr.mxu0 0.0
    %2702 = vmatpush1.msra.mxu0 %v2528
    %2703 = vmatprep.subr.mxu0 0.0
    %2704 = vmatpush1.msra.mxu0 %v2527
    %2705 = vmatprep.subr.mxu0 0.0
    %2706 = vmatpush2.msra.mxu0 0.0
    %2707 = vmatprep.subr.mxu0 0.0
    %2708 = vmatpush2.msra.mxu0 0.0
    %2709 = vmatprep.subr.mxu0 0.0
    %2710 = vmatpush2.msra.mxu0 0.0
    %2711 = vmatprep.subr.mxu0 0.0
    %2712 = vmatpush2.msra.mxu0 0.0
    %2713 = vmatprep.subr.mxu0 0.0
    %2714 = vmatpush2.msra.mxu0 0.0
    %2715 = vmatprep.subr.mxu0 0.0
    %2716 = vmatpush2.msra.mxu0 0.0
    %2717 = vmatprep.subr.mxu0 0.0
    %2718 = vmatpush2.msra.mxu0 0.0
    %2719 = vmatprep.subr.mxu0 0.0
    %2720 = vmatpush2.msra.mxu0 0.0
    %2721 = vmatprep.subr.mxu0 0.0
    %2722 = vmatpush2.msra.mxu0 0.0
    %2723 = vmatprep.subr.mxu0 0.0
    %2724 = vmatpush2.msra.mxu0 0.0
    %2725 = vmatprep.subr.mxu0 0.0
    %2726 = vmatpush2.msra.mxu0 0.0
    %2727 = vmatprep.subr.mxu0 0.0
    %2728 = vmatpush2.msra.mxu0 0.0
    %2729 = vmatprep.subr.mxu0 0.0
    %2730 = vmatpush2.msra.mxu0 0.0
    %2731 = vmatprep.subr.mxu0 0.0
    %2732 = vmatpush2.msra.mxu0 0.0
    %2733 = vmatprep.subr.mxu0 0.0
    %2734 = vmatpush2.msra.mxu0 0.0
    %2735 = vmatprep.subr.mxu0 0.0
    %2736 = vmatpush2.msra.mxu0 0.0
    %2737 = vmatprep.mubr.f32.mxu0 0.0
    %2738 = vmatmul.mubr.f32.gmra.mxu0 %v2530
    %v2739 = vpop.f32.mrf.mxu0
    %v2740 = vadd.f32 0.0, %v2739
    %v2741 = vpop.f32.mrf.mxu0
    %2742 = vmatprep.mubr.f32.mxu0 0.0
    %2743 = vmatmul.mubr.f32.gmra.mxu0 %v2533
    %v2744 = vpop.f32.mrf.mxu0
    %v2745 = vadd.f32 0.0, %v2744
    %v2746 = vpop.f32.mrf.mxu0
    %2747 = vmatprep.mubr.f32.mxu0 0.0
    %2748 = vmatmul.mubr.f32.gmra.mxu0 %v2536
    %v2749 = vpop.f32.mrf.mxu0
    %v2750 = vadd.f32 0.0, %v2749
    %v2751 = vpop.f32.mrf.mxu0
    %2752 = vmatprep.mubr.f32.mxu0 0.0
    %2753 = vmatmul.mubr.f32.gmra.mxu0 %v2539
    %v2754 = vpop.f32.mrf.mxu0
    %v2755 = vadd.f32 0.0, %v2754
    %v2756 = vpop.f32.mrf.mxu0
    %2757 = vmatprep.mubr.f32.mxu0 0.0
    %2758 = vmatmul.mubr.f32.gmra.mxu0 %v2542
    %v2759 = vpop.f32.mrf.mxu0
    %v2760 = vadd.f32 0.0, %v2759
    %v2761 = vpop.f32.mrf.mxu0
    %2762 = vmatprep.mubr.f32.mxu0 0.0
    %2763 = vmatmul.mubr.f32.gmra.mxu0 %v2545
    %v2764 = vpop.f32.mrf.mxu0
    %v2765 = vadd.f32 0.0, %v2764
    %v2766 = vpop.f32.mrf.mxu0
    %2767 = vmatprep.mubr.f32.mxu0 0.0
    %2768 = vmatmul.mubr.f32.gmra.mxu0 %v2548
    %v2769 = vpop.f32.mrf.mxu0
    %v2770 = vadd.f32 0.0, %v2769
    %v2771 = vpop.f32.mrf.mxu0
    %2772 = vmatprep.mubr.f32.mxu0 0.0
    %2773 = vmatmul.mubr.f32.gmra.mxu0 %v2551
    %v2774 = vpop.f32.mrf.mxu0
    %v2775 = vadd.f32 0.0, %v2774
    %v2776 = vpop.f32.mrf.mxu0
    %2777 = vmatprep.mubr.f32.mxu0 0.0
    %2778 = vmatmul.mubr.f32.gmra.mxu0 %v2554
    %v2779 = vpop.f32.mrf.mxu0
    %v2780 = vadd.f32 0.0, %v2779
    %v2781 = vpop.f32.mrf.mxu0
    %2782 = vmatprep.mubr.f32.mxu0 0.0
    %2783 = vmatmul.mubr.f32.gmra.mxu0 %v2557
    %v2784 = vpop.f32.mrf.mxu0
    %v2785 = vadd.f32 0.0, %v2784
    %v2786 = vpop.f32.mrf.mxu0
    %2787 = vmatprep.mubr.f32.mxu0 0.0
    %2788 = vmatmul.mubr.f32.gmra.mxu0 %v2560
    %v2789 = vpop.f32.mrf.mxu0
    %v2790 = vadd.f32 0.0, %v2789
    %v2791 = vpop.f32.mrf.mxu0
    %2792 = vmatprep.mubr.f32.mxu0 0.0
    %2793 = vmatmul.mubr.f32.gmra.mxu0 %v2563
    %v2794 = vpop.f32.mrf.mxu0
    %v2795 = vadd.f32 0.0, %v2794
    %v2796 = vpop.f32.mrf.mxu0
    %2797 = vmatprep.mubr.f32.mxu0 0.0
    %2798 = vmatmul.mubr.f32.gmra.mxu0 %v2566
    %v2799 = vpop.f32.mrf.mxu0
    %v2800 = vadd.f32 0.0, %v2799
    %v2801 = vpop.f32.mrf.mxu0
    %2802 = vmatprep.mubr.f32.mxu0 0.0
    %2803 = vmatmul.mubr.f32.gmra.mxu0 %v2569
    %v2804 = vpop.f32.mrf.mxu0
    %v2805 = vadd.f32 0.0, %v2804
    %v2806 = vpop.f32.mrf.mxu0
    %2807 = vmatprep.mubr.f32.mxu0 0.0
    %2808 = vmatmul.mubr.f32.gmra.mxu0 %v2572
    %v2809 = vpop.f32.mrf.mxu0
    %v2810 = vadd.f32 0.0, %v2809
    %v2811 = vpop.f32.mrf.mxu0
    %2812 = vmatprep.mubr.f32.mxu0 0.0
    %2813 = vmatmul.mubr.f32.gmra.mxu0 %v2575
    %v2814 = vpop.f32.mrf.mxu0
    %v2815 = vadd.f32 0.0, %v2814
    %v2816 = vpop.f32.mrf.mxu0
    %2817 = vmatprep.mubr.f32.mxu0 0.0
    %2818 = vmatmul.mubr.f32.gmra.mxu0 %v2578
    %v2819 = vpop.f32.mrf.mxu0
    %v2820 = vadd.f32 0.0, %v2819
    %v2821 = vpop.f32.mrf.mxu0
    %2822 = vmatprep.mubr.f32.mxu0 0.0
    %2823 = vmatmul.mubr.f32.gmra.mxu0 %v2581
    %v2824 = vpop.f32.mrf.mxu0
    %v2825 = vadd.f32 0.0, %v2824
    %v2826 = vpop.f32.mrf.mxu0
    %2827 = vmatprep.mubr.f32.mxu0 0.0
    %2828 = vmatmul.mubr.f32.gmra.mxu0 %v2584
    %v2829 = vpop.f32.mrf.mxu0
    %v2830 = vadd.f32 0.0, %v2829
    %v2831 = vpop.f32.mrf.mxu0
    %2832 = vmatprep.mubr.f32.mxu0 0.0
    %2833 = vmatmul.mubr.f32.gmra.mxu0 %v2587
    %v2834 = vpop.f32.mrf.mxu0
    %v2835 = vadd.f32 0.0, %v2834
    %v2836 = vpop.f32.mrf.mxu0
    %2837 = vmatprep.mubr.f32.mxu0 0.0
    %2838 = vmatmul.mubr.f32.gmra.mxu0 %v2590
    %v2839 = vpop.f32.mrf.mxu0
    %v2840 = vadd.f32 0.0, %v2839
    %v2841 = vpop.f32.mrf.mxu0
    %2842 = vmatprep.mubr.f32.mxu0 0.0
    %2843 = vmatmul.mubr.f32.gmra.mxu0 %v2593
    %v2844 = vpop.f32.mrf.mxu0
    %v2845 = vadd.f32 0.0, %v2844
    %v2846 = vpop.f32.mrf.mxu0
    %2847 = vmatprep.mubr.f32.mxu0 0.0
    %2848 = vmatmul.mubr.f32.gmra.mxu0 %v2596
    %v2849 = vpop.f32.mrf.mxu0
    %v2850 = vadd.f32 0.0, %v2849
    %v2851 = vpop.f32.mrf.mxu0
    %2852 = vmatprep.mubr.f32.mxu0 0.0
    %2853 = vmatmul.mubr.f32.gmra.mxu0 %v2599
    %v2854 = vpop.f32.mrf.mxu0
    %v2855 = vadd.f32 0.0, %v2854
    %v2856 = vpop.f32.mrf.mxu0
    %2857 = vmatprep.mubr.f32.mxu0 0.0
    %2858 = vmatmul.mubr.f32.gmra.mxu0 %v2602
    %v2859 = vpop.f32.mrf.mxu0
    %v2860 = vadd.f32 0.0, %v2859
    %v2861 = vpop.f32.mrf.mxu0
    %2862 = vmatprep.mubr.f32.mxu0 0.0
    %2863 = vmatmul.mubr.f32.gmra.mxu0 %v2605
    %v2864 = vpop.f32.mrf.mxu0
    %v2865 = vadd.f32 0.0, %v2864
    %v2866 = vpop.f32.mrf.mxu0
    %2867 = vmatprep.mubr.f32.mxu0 0.0
    %2868 = vmatmul.mubr.f32.gmra.mxu0 %v2608
    %v2869 = vpop.f32.mrf.mxu0
    %v2870 = vadd.f32 0.0, %v2869
    %v2871 = vpop.f32.mrf.mxu0
    %2872 = vmatprep.mubr.f32.mxu0 0.0
    %2873 = vmatmul.mubr.f32.gmra.mxu0 %v2611
    %v2874 = vpop.f32.mrf.mxu0
    %v2875 = vadd.f32 0.0, %v2874
    %v2876 = vpop.f32.mrf.mxu0
    %2877 = vmatprep.mubr.f32.mxu0 0.0
    %2878 = vmatmul.mubr.f32.gmra.mxu0 %v2614
    %v2879 = vpop.f32.mrf.mxu0
    %v2880 = vadd.f32 0.0, %v2879
    %v2881 = vpop.f32.mrf.mxu0
    %2882 = vmatprep.mubr.f32.mxu0 0.0
    %2883 = vmatmul.mubr.f32.gmra.mxu0 %v2617
    %v2884 = vpop.f32.mrf.mxu0
    %v2885 = vadd.f32 0.0, %v2884
    %v2886 = vpop.f32.mrf.mxu0
    %2887 = vmatprep.mubr.f32.mxu0 0.0
    %2888 = vmatmul.mubr.f32.gmra.mxu0 %v2620
    %v2889 = vpop.f32.mrf.mxu0
    %v2890 = vadd.f32 0.0, %v2889
    %v2891 = vpop.f32.mrf.mxu0
    %2892 = vmatprep.mubr.f32.mxu0 0.0
    %2893 = vmatmul.mubr.f32.gmra.mxu0 %v2623
    %v2894 = vpop.f32.mrf.mxu0
    %v2895 = vadd.f32 0.0, %v2894
    %v2896 = vpop.f32.mrf.mxu0
    %2897 = vmatprep.mubr.f32.mxu0 0.0
    %2898 = vmatmul.mubr.f32.gmra.mxu0 %v2626
    %v2899 = vpop.f32.mrf.mxu0
    %v2900 = vadd.f32 0.0, %v2899
    %v2901 = vpop.f32.mrf.mxu0
    %2902 = vmatprep.mubr.f32.mxu0 0.0
    %2903 = vmatmul.mubr.f32.gmra.mxu0 %v2629
    %v2904 = vpop.f32.mrf.mxu0
    %v2905 = vadd.f32 0.0, %v2904
    %v2906 = vpop.f32.mrf.mxu0
    %2907 = vmatprep.mubr.f32.mxu0 0.0
    %2908 = vmatmul.mubr.f32.gmra.mxu0 %v2632
    %v2909 = vpop.f32.mrf.mxu0
    %v2910 = vadd.f32 0.0, %v2909
    %v2911 = vpop.f32.mrf.mxu0
    %2912 = vmatprep.mubr.f32.mxu0 0.0
    %2913 = vmatmul.mubr.f32.gmra.mxu0 %v2635
    %v2914 = vpop.f32.mrf.mxu0
    %v2915 = vadd.f32 0.0, %v2914
    %v2916 = vpop.f32.mrf.mxu0
    %2917 = vmatprep.mubr.f32.mxu0 0.0
    %2918 = vmatmul.mubr.f32.gmra.mxu0 %v2638
    %v2919 = vpop.f32.mrf.mxu0
    %v2920 = vadd.f32 0.0, %v2919
    %v2921 = vpop.f32.mrf.mxu0
    %2922 = vmatprep.mubr.f32.mxu0 0.0
    %2923 = vmatmul.mubr.f32.gmra.mxu0 %v2641
    %v2924 = vpop.f32.mrf.mxu0
    %v2925 = vadd.f32 0.0, %v2924
    %v2926 = vpop.f32.mrf.mxu0
    %2927 = vmatprep.mubr.f32.mxu0 0.0
    %2928 = vmatmul.mubr.f32.gmra.mxu0 %v2644
    %v2929 = vpop.f32.mrf.mxu0
    %v2930 = vadd.f32 0.0, %v2929
    %v2931 = vpop.f32.mrf.mxu0
    %2932 = vmatprep.mubr.f32.mxu0 0.0
    %2933 = vmatmul.mubr.f32.gmra.mxu0 %v2647
    %v2934 = vpop.f32.mrf.mxu0
    %v2935 = vadd.f32 0.0, %v2934
    %v2936 = vpop.f32.mrf.mxu0
    %2937 = vmatprep.mubr.f32.mxu0 0.0
    %2938 = vmatmul.mubr.f32.gmra.mxu0 %v2650
    %v2939 = vpop.f32.mrf.mxu0
    %v2940 = vadd.f32 0.0, %v2939
    %v2941 = vpop.f32.mrf.mxu0
    %2942 = vmatprep.mubr.f32.mxu0 0.0
    %2943 = vmatmul.mubr.f32.gmra.mxu0 %v2653
    %v2944 = vpop.f32.mrf.mxu0
    %v2945 = vadd.f32 0.0, %v2944
    %v2946 = vpop.f32.mrf.mxu0
    %2947 = vmatprep.mubr.f32.mxu0 0.0
    %2948 = vmatmul.mubr.f32.gmra.mxu0 %v2656
    %v2949 = vpop.f32.mrf.mxu0
    %v2950 = vadd.f32 0.0, %v2949
    %v2951 = vpop.f32.mrf.mxu0
    %2952 = vmatprep.mubr.f32.mxu0 0.0
    %2953 = vmatmul.mubr.f32.gmra.mxu0 %v2659
    %v2954 = vpop.f32.mrf.mxu0
    %v2955 = vadd.f32 0.0, %v2954
    %v2956 = vpop.f32.mrf.mxu0
    %2957 = vmatprep.mubr.f32.mxu0 0.0
    %2958 = vmatmul.mubr.f32.gmra.mxu0 %v2662
    %v2959 = vpop.f32.mrf.mxu0
    %v2960 = vadd.f32 0.0, %v2959
    %v2961 = vpop.f32.mrf.mxu0
    %2962 = vmatprep.mubr.f32.mxu0 0.0
    %2963 = vmatmul.mubr.f32.gmra.mxu0 %v2665
    %v2964 = vpop.f32.mrf.mxu0
    %v2965 = vadd.f32 0.0, %v2964
    %v2966 = vpop.f32.mrf.mxu0
    %2967 = vmatprep.mubr.f32.mxu0 0.0
    %2968 = vmatmul.mubr.f32.gmra.mxu0 %v2668
    %v2969 = vpop.f32.mrf.mxu0
    %v2970 = vadd.f32 0.0, %v2969
    %v2971 = vpop.f32.mrf.mxu0
    %2972 = vmatprep.mubr.f32.mxu0 0.0
    %2973 = vmatmul.mubr.f32.gmra.mxu0 %v2671
    %v2974 = vpop.f32.mrf.mxu0
    %v2975 = vadd.f32 0.0, %v2974
    %v2976 = vpop.f32.mrf.mxu0
    %2977 = vdwg.mxu0
    %v2978 = vld [vmem:[%s8] sm:$0x1]
    %v2980 = vlaneseq
    %v2981 = vshrl.u32 %v2980, 7
    %v2982 = vsub.s32 0, %v2981
    %v2983 = vrot.slane %v2978, %v2982
    %2985 = vmatprep.subr.mxu0 0.0
    %2986 = vmatpush1.msra.mxu0 %v2815
    %2987 = vmatprep.subr.mxu0 0.0
    %2988 = vmatpush1.msra.mxu0 %v2810
    %2989 = vmatprep.subr.mxu0 0.0
    %2990 = vmatpush1.msra.mxu0 %v2805
    %2991 = vmatprep.subr.mxu0 0.0
    %2992 = vmatpush1.msra.mxu0 %v2800
    %2993 = vmatprep.subr.mxu0 0.0
    %2994 = vmatpush1.msra.mxu0 %v2795
    %2995 = vmatprep.subr.mxu0 0.0
    %2996 = vmatpush1.msra.mxu0 %v2790
    %2997 = vmatprep.subr.mxu0 0.0
    %2998 = vmatpush1.msra.mxu0 %v2785
    %2999 = vmatprep.subr.mxu0 0.0
    %3000 = vmatpush1.msra.mxu0 %v2780
    %3001 = vmatprep.subr.mxu0 0.0
    %3002 = vmatpush1.msra.mxu0 %v2775
    %3003 = vmatprep.subr.mxu0 0.0
    %3004 = vmatpush1.msra.mxu0 %v2770
    %3005 = vmatprep.subr.mxu0 0.0
    %3006 = vmatpush1.msra.mxu0 %v2765
    %3007 = vmatprep.subr.mxu0 0.0
    %3008 = vmatpush1.msra.mxu0 %v2760
    %3009 = vmatprep.subr.mxu0 0.0
    %3010 = vmatpush1.msra.mxu0 %v2755
    %3011 = vmatprep.subr.mxu0 0.0
    %3012 = vmatpush1.msra.mxu0 %v2750
    %3013 = vmatprep.subr.mxu0 0.0
    %3014 = vmatpush1.msra.mxu0 %v2745
    %3015 = vmatprep.subr.mxu0 0.0
    %3016 = vmatpush1.msra.mxu0 %v2740
    %3017 = vmatprep.subr.mxu0 0.0
    %3018 = vmatpush2.msra.mxu0 %v2895
    %3019 = vmatprep.subr.mxu0 0.0
    %3020 = vmatpush2.msra.mxu0 %v2890
    %3021 = vmatprep.subr.mxu0 0.0
    %3022 = vmatpush2.msra.mxu0 %v2885
    %3023 = vmatprep.subr.mxu0 0.0
    %3024 = vmatpush2.msra.mxu0 %v2880
    %3025 = vmatprep.subr.mxu0 0.0
    %3026 = vmatpush2.msra.mxu0 %v2875
    %3027 = vmatprep.subr.mxu0 0.0
    %3028 = vmatpush2.msra.mxu0 %v2870
    %3029 = vmatprep.subr.mxu0 0.0
    %3030 = vmatpush2.msra.mxu0 %v2865
    %3031 = vmatprep.subr.mxu0 0.0
    %3032 = vmatpush2.msra.mxu0 %v2860
    %3033 = vmatprep.subr.mxu0 0.0
    %3034 = vmatpush2.msra.mxu0 %v2855
    %3035 = vmatprep.subr.mxu0 0.0
    %3036 = vmatpush2.msra.mxu0 %v2850
    %3037 = vmatprep.subr.mxu0 0.0
    %3038 = vmatpush2.msra.mxu0 %v2845
    %3039 = vmatprep.subr.mxu0 0.0
    %3040 = vmatpush2.msra.mxu0 %v2840
    %3041 = vmatprep.subr.mxu0 0.0
    %3042 = vmatpush2.msra.mxu0 %v2835
    %3043 = vmatprep.subr.mxu0 0.0
    %3044 = vmatpush2.msra.mxu0 %v2830
    %3045 = vmatprep.subr.mxu0 0.0
    %3046 = vmatpush2.msra.mxu0 %v2825
    %3047 = vmatprep.subr.mxu0 0.0
    %3048 = vmatpush2.msra.mxu0 %v2820
    %3049 = vmatprep.mubr.f32.mxu0 %v147
    %3050 = vmatmul.mubr.f32.gmra.mxu0 %v146
    %v3051 = vpop.f32.mrf.mxu0
    %v3052 = vadd.f32 %v2983, %v3051
    %v3053 = vpop.f32.mrf.mxu0
    %3054 = vmatprep.mubr.f32.mxu0 %v150
    %3055 = vmatmul.mubr.f32.gmra.mxu0 %v149
    %v3056 = vpop.f32.mrf.mxu0
    %v3057 = vadd.f32 %v2983, %v3056
    %v3058 = vpop.f32.mrf.mxu0
    %3059 = vmatprep.mubr.f32.mxu0 %v153
    %3060 = vmatmul.mubr.f32.gmra.mxu0 %v152
    %v3061 = vpop.f32.mrf.mxu0
    %v3062 = vadd.f32 %v2983, %v3061
    %v3063 = vpop.f32.mrf.mxu0
    %3064 = vmatprep.mubr.f32.mxu0 %v156
    %3065 = vmatmul.mubr.f32.gmra.mxu0 %v155
    %v3066 = vpop.f32.mrf.mxu0
    %v3067 = vadd.f32 %v2983, %v3066
    %v3068 = vpop.f32.mrf.mxu0
    %3069 = vmatprep.mubr.f32.mxu0 %v159
    %3070 = vmatmul.mubr.f32.gmra.mxu0 %v158
    %v3071 = vpop.f32.mrf.mxu0
    %v3072 = vadd.f32 %v2983, %v3071
    %v3073 = vpop.f32.mrf.mxu0
    %3074 = vmatprep.mubr.f32.mxu0 %v162
    %3075 = vmatmul.mubr.f32.gmra.mxu0 %v161
    %v3076 = vpop.f32.mrf.mxu0
    %v3077 = vadd.f32 %v2983, %v3076
    %v3078 = vpop.f32.mrf.mxu0
    %3079 = vmatprep.mubr.f32.mxu0 %v165
    %3080 = vmatmul.mubr.f32.gmra.mxu0 %v164
    %v3081 = vpop.f32.mrf.mxu0
    %v3082 = vadd.f32 %v2983, %v3081
    %v3083 = vpop.f32.mrf.mxu0
    %3084 = vmatprep.mubr.f32.mxu0 %v168
    %3085 = vmatmul.mubr.f32.gmra.mxu0 %v167
    %v3086 = vpop.f32.mrf.mxu0
    %v3087 = vadd.f32 %v2983, %v3086
    %v3088 = vpop.f32.mrf.mxu0
    %3089 = vmatprep.mubr.f32.mxu0 %v171
    %3090 = vmatmul.mubr.f32.gmra.mxu0 %v170
    %v3091 = vpop.f32.mrf.mxu0
    %v3092 = vadd.f32 %v2983, %v3091
    %v3093 = vpop.f32.mrf.mxu0
    %3094 = vmatprep.mubr.f32.mxu0 %v174
    %3095 = vmatmul.mubr.f32.gmra.mxu0 %v173
    %v3096 = vpop.f32.mrf.mxu0
    %v3097 = vadd.f32 %v2983, %v3096
    %v3098 = vpop.f32.mrf.mxu0
    %3099 = vmatprep.mubr.f32.mxu0 %v177
    %3100 = vmatmul.mubr.f32.gmra.mxu0 %v176
    %v3101 = vpop.f32.mrf.mxu0
    %v3102 = vadd.f32 %v2983, %v3101
    %v3103 = vpop.f32.mrf.mxu0
    %3104 = vmatprep.mubr.f32.mxu0 %v180
    %3105 = vmatmul.mubr.f32.gmra.mxu0 %v179
    %v3106 = vpop.f32.mrf.mxu0
    %v3107 = vadd.f32 %v2983, %v3106
    %v3108 = vpop.f32.mrf.mxu0
    %3109 = vmatprep.mubr.f32.mxu0 %v183
    %3110 = vmatmul.mubr.f32.gmra.mxu0 %v182
    %v3111 = vpop.f32.mrf.mxu0
    %v3112 = vadd.f32 %v2983, %v3111
    %v3113 = vpop.f32.mrf.mxu0
    %3114 = vmatprep.mubr.f32.mxu0 %v186
    %3115 = vmatmul.mubr.f32.gmra.mxu0 %v185
    %v3116 = vpop.f32.mrf.mxu0
    %v3117 = vadd.f32 %v2983, %v3116
    %v3118 = vpop.f32.mrf.mxu0
    %3119 = vmatprep.mubr.f32.mxu0 %v189
    %3120 = vmatmul.mubr.f32.gmra.mxu0 %v188
    %v3121 = vpop.f32.mrf.mxu0
    %v3122 = vadd.f32 %v2983, %v3121
    %v3123 = vpop.f32.mrf.mxu0
    %3124 = vmatprep.mubr.f32.mxu0 %v192
    %3125 = vmatmul.mubr.f32.gmra.mxu0 %v191
    %v3126 = vpop.f32.mrf.mxu0
    %v3127 = vadd.f32 %v2983, %v3126
    %v3128 = vpop.f32.mrf.mxu0
    %3129 = vmatprep.mubr.f32.mxu0 %v195
    %3130 = vmatmul.mubr.f32.gmra.mxu0 %v194
    %v3131 = vpop.f32.mrf.mxu0
    %v3132 = vadd.f32 %v2983, %v3131
    %v3133 = vpop.f32.mrf.mxu0
    %3134 = vmatprep.mubr.f32.mxu0 %v198
    %3135 = vmatmul.mubr.f32.gmra.mxu0 %v197
    %v3136 = vpop.f32.mrf.mxu0
    %v3137 = vadd.f32 %v2983, %v3136
    %v3138 = vpop.f32.mrf.mxu0
    %3139 = vmatprep.mubr.f32.mxu0 %v201
    %3140 = vmatmul.mubr.f32.gmra.mxu0 %v200
    %v3141 = vpop.f32.mrf.mxu0
    %v3142 = vadd.f32 %v2983, %v3141
    %v3143 = vpop.f32.mrf.mxu0
    %3144 = vmatprep.mubr.f32.mxu0 %v204
    %3145 = vmatmul.mubr.f32.gmra.mxu0 %v203
    %v3146 = vpop.f32.mrf.mxu0
    %v3147 = vadd.f32 %v2983, %v3146
    %v3148 = vpop.f32.mrf.mxu0
    %3149 = vmatprep.mubr.f32.mxu0 %v207
    %3150 = vmatmul.mubr.f32.gmra.mxu0 %v206
    %v3151 = vpop.f32.mrf.mxu0
    %v3152 = vadd.f32 %v2983, %v3151
    %v3153 = vpop.f32.mrf.mxu0
    %3154 = vmatprep.mubr.f32.mxu0 %v210
    %3155 = vmatmul.mubr.f32.gmra.mxu0 %v209
    %v3156 = vpop.f32.mrf.mxu0
    %v3157 = vadd.f32 %v2983, %v3156
    %v3158 = vpop.f32.mrf.mxu0
    %3159 = vmatprep.mubr.f32.mxu0 %v213
    %3160 = vmatmul.mubr.f32.gmra.mxu0 %v212
    %v3161 = vpop.f32.mrf.mxu0
    %v3162 = vadd.f32 %v2983, %v3161
    %v3163 = vpop.f32.mrf.mxu0
    %3164 = vmatprep.mubr.f32.mxu0 %v216
    %3165 = vmatmul.mubr.f32.gmra.mxu0 %v215
    %v3166 = vpop.f32.mrf.mxu0
    %v3167 = vadd.f32 %v2983, %v3166
    %v3168 = vpop.f32.mrf.mxu0
    %3169 = vmatprep.mubr.f32.mxu0 %v219
    %3170 = vmatmul.mubr.f32.gmra.mxu0 %v218
    %v3171 = vpop.f32.mrf.mxu0
    %v3172 = vadd.f32 %v2983, %v3171
    %v3173 = vpop.f32.mrf.mxu0
    %3174 = vmatprep.mubr.f32.mxu0 %v222
    %3175 = vmatmul.mubr.f32.gmra.mxu0 %v221
    %v3176 = vpop.f32.mrf.mxu0
    %v3177 = vadd.f32 %v2983, %v3176
    %v3178 = vpop.f32.mrf.mxu0
    %3179 = vmatprep.mubr.f32.mxu0 %v225
    %3180 = vmatmul.mubr.f32.gmra.mxu0 %v224
    %v3181 = vpop.f32.mrf.mxu0
    %v3182 = vadd.f32 %v2983, %v3181
    %v3183 = vpop.f32.mrf.mxu0
    %3184 = vmatprep.mubr.f32.mxu0 %v228
    %3185 = vmatmul.mubr.f32.gmra.mxu0 %v227
    %v3186 = vpop.f32.mrf.mxu0
    %v3187 = vadd.f32 %v2983, %v3186
    %v3188 = vpop.f32.mrf.mxu0
    %3189 = vmatprep.mubr.f32.mxu0 %v231
    %3190 = vmatmul.mubr.f32.gmra.mxu0 %v230
    %v3191 = vpop.f32.mrf.mxu0
    %v3192 = vadd.f32 %v2983, %v3191
    %v3193 = vpop.f32.mrf.mxu0
    %3194 = vmatprep.mubr.f32.mxu0 %v234
    %3195 = vmatmul.mubr.f32.gmra.mxu0 %v233
    %v3196 = vpop.f32.mrf.mxu0
    %v3197 = vadd.f32 %v2983, %v3196
    %v3198 = vpop.f32.mrf.mxu0
    %3199 = vmatprep.mubr.f32.mxu0 %v237
    %3200 = vmatmul.mubr.f32.gmra.mxu0 %v236
    %v3201 = vpop.f32.mrf.mxu0
    %v3202 = vadd.f32 %v2983, %v3201
    %v3203 = vpop.f32.mrf.mxu0
    %3204 = vmatprep.mubr.f32.mxu0 %v240
    %3205 = vmatmul.mubr.f32.gmra.mxu0 %v239
    %v3206 = vpop.f32.mrf.mxu0
    %v3207 = vadd.f32 %v2983, %v3206
    %v3208 = vpop.f32.mrf.mxu0
    %3209 = vmatprep.mubr.f32.mxu0 %v243
    %3210 = vmatmul.mubr.f32.gmra.mxu0 %v242
    %v3211 = vpop.f32.mrf.mxu0
    %v3212 = vadd.f32 %v2983, %v3211
    %v3213 = vpop.f32.mrf.mxu0
    %3214 = vmatprep.mubr.f32.mxu0 %v246
    %3215 = vmatmul.mubr.f32.gmra.mxu0 %v245
    %v3216 = vpop.f32.mrf.mxu0
    %v3217 = vadd.f32 %v2983, %v3216
    %v3218 = vpop.f32.mrf.mxu0
    %3219 = vmatprep.mubr.f32.mxu0 %v249
    %3220 = vmatmul.mubr.f32.gmra.mxu0 %v248
    %v3221 = vpop.f32.mrf.mxu0
    %v3222 = vadd.f32 %v2983, %v3221
    %v3223 = vpop.f32.mrf.mxu0
    %3224 = vmatprep.mubr.f32.mxu0 %v252
    %3225 = vmatmul.mubr.f32.gmra.mxu0 %v251
    %v3226 = vpop.f32.mrf.mxu0
    %v3227 = vadd.f32 %v2983, %v3226
    %v3228 = vpop.f32.mrf.mxu0
    %3229 = vmatprep.mubr.f32.mxu0 %v255
    %3230 = vmatmul.mubr.f32.gmra.mxu0 %v254
    %v3231 = vpop.f32.mrf.mxu0
    %v3232 = vadd.f32 %v2983, %v3231
    %v3233 = vpop.f32.mrf.mxu0
    %3234 = vmatprep.mubr.f32.mxu0 %v258
    %3235 = vmatmul.mubr.f32.gmra.mxu0 %v257
    %v3236 = vpop.f32.mrf.mxu0
    %v3237 = vadd.f32 %v2983, %v3236
    %v3238 = vpop.f32.mrf.mxu0
    %3239 = vmatprep.mubr.f32.mxu0 %v261
    %3240 = vmatmul.mubr.f32.gmra.mxu0 %v260
    %v3241 = vpop.f32.mrf.mxu0
    %v3242 = vadd.f32 %v2983, %v3241
    %v3243 = vpop.f32.mrf.mxu0
    %3244 = vmatprep.mubr.f32.mxu0 %v264
    %3245 = vmatmul.mubr.f32.gmra.mxu0 %v263
    %v3246 = vpop.f32.mrf.mxu0
    %v3247 = vadd.f32 %v2983, %v3246
    %v3248 = vpop.f32.mrf.mxu0
    %3249 = vmatprep.mubr.f32.mxu0 %v267
    %3250 = vmatmul.mubr.f32.gmra.mxu0 %v266
    %v3251 = vpop.f32.mrf.mxu0
    %v3252 = vadd.f32 %v2983, %v3251
    %v3253 = vpop.f32.mrf.mxu0
    %3254 = vmatprep.mubr.f32.mxu0 %v270
    %3255 = vmatmul.mubr.f32.gmra.mxu0 %v269
    %v3256 = vpop.f32.mrf.mxu0
    %v3257 = vadd.f32 %v2983, %v3256
    %v3258 = vpop.f32.mrf.mxu0
    %3259 = vmatprep.mubr.f32.mxu0 %v273
    %3260 = vmatmul.mubr.f32.gmra.mxu0 %v272
    %v3261 = vpop.f32.mrf.mxu0
    %v3262 = vadd.f32 %v2983, %v3261
    %v3263 = vpop.f32.mrf.mxu0
    %3264 = vmatprep.mubr.f32.mxu0 %v276
    %3265 = vmatmul.mubr.f32.gmra.mxu0 %v275
    %v3266 = vpop.f32.mrf.mxu0
    %v3267 = vadd.f32 %v2983, %v3266
    %v3268 = vpop.f32.mrf.mxu0
    %3269 = vmatprep.mubr.f32.mxu0 %v279
    %3270 = vmatmul.mubr.f32.gmra.mxu0 %v278
    %v3271 = vpop.f32.mrf.mxu0
    %v3272 = vadd.f32 %v2983, %v3271
    %v3273 = vpop.f32.mrf.mxu0
    %3274 = vmatprep.mubr.f32.mxu0 %v282
    %3275 = vmatmul.mubr.f32.gmra.mxu0 %v281
    %v3276 = vpop.f32.mrf.mxu0
    %v3277 = vadd.f32 %v2983, %v3276
    %v3278 = vpop.f32.mrf.mxu0
    %3279 = vmatprep.mubr.f32.mxu0 %v285
    %3280 = vmatmul.mubr.f32.gmra.mxu0 %v284
    %v3281 = vpop.f32.mrf.mxu0
    %v3282 = vadd.f32 %v2983, %v3281
    %v3283 = vpop.f32.mrf.mxu0
    %3284 = vmatprep.mubr.f32.mxu0 %v288
    %3285 = vmatmul.mubr.f32.gmra.mxu0 %v287
    %v3286 = vpop.f32.mrf.mxu0
    %v3287 = vadd.f32 %v2983, %v3286
    %v3288 = vpop.f32.mrf.mxu0
    %3289 = vdwg.mxu0
    %3290 = vmatprep.subr.mxu0 0.0
    %3291 = vmatpush1.msra.mxu0 %v2975
    %3292 = vmatprep.subr.mxu0 0.0
    %3293 = vmatpush1.msra.mxu0 %v2970
    %3294 = vmatprep.subr.mxu0 0.0
    %3295 = vmatpush1.msra.mxu0 %v2965
    %3296 = vmatprep.subr.mxu0 0.0
    %3297 = vmatpush1.msra.mxu0 %v2960
    %3298 = vmatprep.subr.mxu0 0.0
    %3299 = vmatpush1.msra.mxu0 %v2955
    %3300 = vmatprep.subr.mxu0 0.0
    %3301 = vmatpush1.msra.mxu0 %v2950
    %3302 = vmatprep.subr.mxu0 0.0
    %3303 = vmatpush1.msra.mxu0 %v2945
    %3304 = vmatprep.subr.mxu0 0.0
    %3305 = vmatpush1.msra.mxu0 %v2940
    %3306 = vmatprep.subr.mxu0 0.0
    %3307 = vmatpush1.msra.mxu0 %v2935
    %3308 = vmatprep.subr.mxu0 0.0
    %3309 = vmatpush1.msra.mxu0 %v2930
    %3310 = vmatprep.subr.mxu0 0.0
    %3311 = vmatpush1.msra.mxu0 %v2925
    %3312 = vmatprep.subr.mxu0 0.0
    %3313 = vmatpush1.msra.mxu0 %v2920
    %3314 = vmatprep.subr.mxu0 0.0
    %3315 = vmatpush1.msra.mxu0 %v2915
    %3316 = vmatprep.subr.mxu0 0.0
    %3317 = vmatpush1.msra.mxu0 %v2910
    %3318 = vmatprep.subr.mxu0 0.0
    %3319 = vmatpush1.msra.mxu0 %v2905
    %3320 = vmatprep.subr.mxu0 0.0
    %3321 = vmatpush1.msra.mxu0 %v2900
    %3322 = vmatprep.subr.mxu0 0.0
    %3323 = vmatpush2.msra.mxu0 0.0
    %3324 = vmatprep.subr.mxu0 0.0
    %3325 = vmatpush2.msra.mxu0 0.0
    %3326 = vmatprep.subr.mxu0 0.0
    %3327 = vmatpush2.msra.mxu0 0.0
    %3328 = vmatprep.subr.mxu0 0.0
    %3329 = vmatpush2.msra.mxu0 0.0
    %3330 = vmatprep.subr.mxu0 0.0
    %3331 = vmatpush2.msra.mxu0 0.0
    %3332 = vmatprep.subr.mxu0 0.0
    %3333 = vmatpush2.msra.mxu0 0.0
    %3334 = vmatprep.subr.mxu0 0.0
    %3335 = vmatpush2.msra.mxu0 0.0
    %3336 = vmatprep.subr.mxu0 0.0
    %3337 = vmatpush2.msra.mxu0 0.0
    %3338 = vmatprep.subr.mxu0 0.0
    %3339 = vmatpush2.msra.mxu0 0.0
    %3340 = vmatprep.subr.mxu0 0.0
    %3341 = vmatpush2.msra.mxu0 0.0
    %3342 = vmatprep.subr.mxu0 0.0
    %3343 = vmatpush2.msra.mxu0 0.0
    %3344 = vmatprep.subr.mxu0 0.0
    %3345 = vmatpush2.msra.mxu0 0.0
    %3346 = vmatprep.subr.mxu0 0.0
    %3347 = vmatpush2.msra.mxu0 0.0
    %3348 = vmatprep.subr.mxu0 0.0
    %3349 = vmatpush2.msra.mxu0 0.0
    %3350 = vmatprep.subr.mxu0 0.0
    %3351 = vmatpush2.msra.mxu0 0.0
    %3352 = vmatprep.subr.mxu0 0.0
    %3353 = vmatpush2.msra.mxu0 0.0
    %3354 = vmatprep.mubr.f32.mxu0 0.0
    %3355 = vmatmul.mubr.f32.gmra.mxu0 %v148
    %v3356 = vpop.f32.mrf.mxu0
    %v3357 = vadd.f32 %v3052, %v3356
    %v3358 = vpop.f32.mrf.mxu0
    %3359 = vmatprep.mubr.f32.mxu0 0.0
    %3360 = vmatmul.mubr.f32.gmra.mxu0 %v151
    %v3361 = vpop.f32.mrf.mxu0
    %v3362 = vadd.f32 %v3057, %v3361
    %v3363 = vpop.f32.mrf.mxu0
    %3364 = vmatprep.mubr.f32.mxu0 0.0
    %3365 = vmatmul.mubr.f32.gmra.mxu0 %v154
    %v3366 = vpop.f32.mrf.mxu0
    %v3367 = vadd.f32 %v3062, %v3366
    %v3368 = vpop.f32.mrf.mxu0
    %3369 = vmatprep.mubr.f32.mxu0 0.0
    %3370 = vmatmul.mubr.f32.gmra.mxu0 %v157
    %v3371 = vpop.f32.mrf.mxu0
    %v3372 = vadd.f32 %v3067, %v3371
    %v3373 = vpop.f32.mrf.mxu0
    %3374 = vmatprep.mubr.f32.mxu0 0.0
    %3375 = vmatmul.mubr.f32.gmra.mxu0 %v160
    %v3376 = vpop.f32.mrf.mxu0
    %v3377 = vadd.f32 %v3072, %v3376
    %v3378 = vpop.f32.mrf.mxu0
    %3379 = vmatprep.mubr.f32.mxu0 0.0
    %3380 = vmatmul.mubr.f32.gmra.mxu0 %v163
    %v3381 = vpop.f32.mrf.mxu0
    %v3382 = vadd.f32 %v3077, %v3381
    %v3383 = vpop.f32.mrf.mxu0
    %3384 = vmatprep.mubr.f32.mxu0 0.0
    %3385 = vmatmul.mubr.f32.gmra.mxu0 %v166
    %v3386 = vpop.f32.mrf.mxu0
    %v3387 = vadd.f32 %v3082, %v3386
    %v3388 = vpop.f32.mrf.mxu0
    %3389 = vmatprep.mubr.f32.mxu0 0.0
    %3390 = vmatmul.mubr.f32.gmra.mxu0 %v169
    %v3391 = vpop.f32.mrf.mxu0
    %v3392 = vadd.f32 %v3087, %v3391
    %v3393 = vpop.f32.mrf.mxu0
    %3394 = vmatprep.mubr.f32.mxu0 0.0
    %3395 = vmatmul.mubr.f32.gmra.mxu0 %v172
    %v3396 = vpop.f32.mrf.mxu0
    %v3397 = vadd.f32 %v3092, %v3396
    %v3398 = vpop.f32.mrf.mxu0
    %3399 = vmatprep.mubr.f32.mxu0 0.0
    %3400 = vmatmul.mubr.f32.gmra.mxu0 %v175
    %v3401 = vpop.f32.mrf.mxu0
    %v3402 = vadd.f32 %v3097, %v3401
    %v3403 = vpop.f32.mrf.mxu0
    %3404 = vmatprep.mubr.f32.mxu0 0.0
    %3405 = vmatmul.mubr.f32.gmra.mxu0 %v178
    %v3406 = vpop.f32.mrf.mxu0
    %v3407 = vadd.f32 %v3102, %v3406
    %v3408 = vpop.f32.mrf.mxu0
    %3409 = vmatprep.mubr.f32.mxu0 0.0
    %3410 = vmatmul.mubr.f32.gmra.mxu0 %v181
    %v3411 = vpop.f32.mrf.mxu0
    %v3412 = vadd.f32 %v3107, %v3411
    %v3413 = vpop.f32.mrf.mxu0
    %3414 = vmatprep.mubr.f32.mxu0 0.0
    %3415 = vmatmul.mubr.f32.gmra.mxu0 %v184
    %v3416 = vpop.f32.mrf.mxu0
    %v3417 = vadd.f32 %v3112, %v3416
    %v3418 = vpop.f32.mrf.mxu0
    %3419 = vmatprep.mubr.f32.mxu0 0.0
    %3420 = vmatmul.mubr.f32.gmra.mxu0 %v187
    %v3421 = vpop.f32.mrf.mxu0
    %v3422 = vadd.f32 %v3117, %v3421
    %v3423 = vpop.f32.mrf.mxu0
    %3424 = vmatprep.mubr.f32.mxu0 0.0
    %3425 = vmatmul.mubr.f32.gmra.mxu0 %v190
    %v3426 = vpop.f32.mrf.mxu0
    %v3427 = vadd.f32 %v3122, %v3426
    %v3428 = vpop.f32.mrf.mxu0
    %3429 = vmatprep.mubr.f32.mxu0 0.0
    %3430 = vmatmul.mubr.f32.gmra.mxu0 %v193
    %v3431 = vpop.f32.mrf.mxu0
    %v3432 = vadd.f32 %v3127, %v3431
    %v3433 = vpop.f32.mrf.mxu0
    %3434 = vmatprep.mubr.f32.mxu0 0.0
    %3435 = vmatmul.mubr.f32.gmra.mxu0 %v196
    %v3436 = vpop.f32.mrf.mxu0
    %v3437 = vadd.f32 %v3132, %v3436
    %v3438 = vpop.f32.mrf.mxu0
    %3439 = vmatprep.mubr.f32.mxu0 0.0
    %3440 = vmatmul.mubr.f32.gmra.mxu0 %v199
    %v3441 = vpop.f32.mrf.mxu0
    %v3442 = vadd.f32 %v3137, %v3441
    %v3443 = vpop.f32.mrf.mxu0
    %3444 = vmatprep.mubr.f32.mxu0 0.0
    %3445 = vmatmul.mubr.f32.gmra.mxu0 %v202
    %v3446 = vpop.f32.mrf.mxu0
    %v3447 = vadd.f32 %v3142, %v3446
    %v3448 = vpop.f32.mrf.mxu0
    %3449 = vmatprep.mubr.f32.mxu0 0.0
    %3450 = vmatmul.mubr.f32.gmra.mxu0 %v205
    %v3451 = vpop.f32.mrf.mxu0
    %v3452 = vadd.f32 %v3147, %v3451
    %v3453 = vpop.f32.mrf.mxu0
    %3454 = vmatprep.mubr.f32.mxu0 0.0
    %3455 = vmatmul.mubr.f32.gmra.mxu0 %v208
    %v3456 = vpop.f32.mrf.mxu0
    %v3457 = vadd.f32 %v3152, %v3456
    %v3458 = vpop.f32.mrf.mxu0
    %3459 = vmatprep.mubr.f32.mxu0 0.0
    %3460 = vmatmul.mubr.f32.gmra.mxu0 %v211
    %v3461 = vpop.f32.mrf.mxu0
    %v3462 = vadd.f32 %v3157, %v3461
    %v3463 = vpop.f32.mrf.mxu0
    %3464 = vmatprep.mubr.f32.mxu0 0.0
    %3465 = vmatmul.mubr.f32.gmra.mxu0 %v214
    %v3466 = vpop.f32.mrf.mxu0
    %v3467 = vadd.f32 %v3162, %v3466
    %v3468 = vpop.f32.mrf.mxu0
    %3469 = vmatprep.mubr.f32.mxu0 0.0
    %3470 = vmatmul.mubr.f32.gmra.mxu0 %v217
    %v3471 = vpop.f32.mrf.mxu0
    %v3472 = vadd.f32 %v3167, %v3471
    %v3473 = vpop.f32.mrf.mxu0
    %3474 = vmatprep.mubr.f32.mxu0 0.0
    %3475 = vmatmul.mubr.f32.gmra.mxu0 %v220
    %v3476 = vpop.f32.mrf.mxu0
    %v3477 = vadd.f32 %v3172, %v3476
    %v3478 = vpop.f32.mrf.mxu0
    %3479 = vmatprep.mubr.f32.mxu0 0.0
    %3480 = vmatmul.mubr.f32.gmra.mxu0 %v223
    %v3481 = vpop.f32.mrf.mxu0
    %v3482 = vadd.f32 %v3177, %v3481
    %v3483 = vpop.f32.mrf.mxu0
    %3484 = vmatprep.mubr.f32.mxu0 0.0
    %3485 = vmatmul.mubr.f32.gmra.mxu0 %v226
    %v3486 = vpop.f32.mrf.mxu0
    %v3487 = vadd.f32 %v3182, %v3486
    %v3488 = vpop.f32.mrf.mxu0
    %3489 = vmatprep.mubr.f32.mxu0 0.0
    %3490 = vmatmul.mubr.f32.gmra.mxu0 %v229
    %v3491 = vpop.f32.mrf.mxu0
    %v3492 = vadd.f32 %v3187, %v3491
    %v3493 = vpop.f32.mrf.mxu0
    %3494 = vmatprep.mubr.f32.mxu0 0.0
    %3495 = vmatmul.mubr.f32.gmra.mxu0 %v232
    %v3496 = vpop.f32.mrf.mxu0
    %v3497 = vadd.f32 %v3192, %v3496
    %v3498 = vpop.f32.mrf.mxu0
    %3499 = vmatprep.mubr.f32.mxu0 0.0
    %3500 = vmatmul.mubr.f32.gmra.mxu0 %v235
    %v3501 = vpop.f32.mrf.mxu0
    %v3502 = vadd.f32 %v3197, %v3501
    %v3503 = vpop.f32.mrf.mxu0
    %3504 = vmatprep.mubr.f32.mxu0 0.0
    %3505 = vmatmul.mubr.f32.gmra.mxu0 %v238
    %v3506 = vpop.f32.mrf.mxu0
    %v3507 = vadd.f32 %v3202, %v3506
    %v3508 = vpop.f32.mrf.mxu0
    %3509 = vmatprep.mubr.f32.mxu0 0.0
    %3510 = vmatmul.mubr.f32.gmra.mxu0 %v241
    %v3511 = vpop.f32.mrf.mxu0
    %v3512 = vadd.f32 %v3207, %v3511
    %v3513 = vpop.f32.mrf.mxu0
    %3514 = vmatprep.mubr.f32.mxu0 0.0
    %3515 = vmatmul.mubr.f32.gmra.mxu0 %v244
    %v3516 = vpop.f32.mrf.mxu0
    %v3517 = vadd.f32 %v3212, %v3516
    %v3518 = vpop.f32.mrf.mxu0
    %3519 = vmatprep.mubr.f32.mxu0 0.0
    %3520 = vmatmul.mubr.f32.gmra.mxu0 %v247
    %v3521 = vpop.f32.mrf.mxu0
    %v3522 = vadd.f32 %v3217, %v3521
    %v3523 = vpop.f32.mrf.mxu0
    %3524 = vmatprep.mubr.f32.mxu0 0.0
    %3525 = vmatmul.mubr.f32.gmra.mxu0 %v250
    %v3526 = vpop.f32.mrf.mxu0
    %v3527 = vadd.f32 %v3222, %v3526
    %v3528 = vpop.f32.mrf.mxu0
    %3529 = vmatprep.mubr.f32.mxu0 0.0
    %3530 = vmatmul.mubr.f32.gmra.mxu0 %v253
    %v3531 = vpop.f32.mrf.mxu0
    %v3532 = vadd.f32 %v3227, %v3531
    %v3533 = vpop.f32.mrf.mxu0
    %3534 = vmatprep.mubr.f32.mxu0 0.0
    %3535 = vmatmul.mubr.f32.gmra.mxu0 %v256
    %v3536 = vpop.f32.mrf.mxu0
    %v3537 = vadd.f32 %v3232, %v3536
    %v3538 = vpop.f32.mrf.mxu0
    %3539 = vmatprep.mubr.f32.mxu0 0.0
    %3540 = vmatmul.mubr.f32.gmra.mxu0 %v259
    %v3541 = vpop.f32.mrf.mxu0
    %v3542 = vadd.f32 %v3237, %v3541
    %v3543 = vpop.f32.mrf.mxu0
    %3544 = vmatprep.mubr.f32.mxu0 0.0
    %3545 = vmatmul.mubr.f32.gmra.mxu0 %v262
    %v3546 = vpop.f32.mrf.mxu0
    %v3547 = vadd.f32 %v3242, %v3546
    %v3548 = vpop.f32.mrf.mxu0
    %3549 = vmatprep.mubr.f32.mxu0 0.0
    %3550 = vmatmul.mubr.f32.gmra.mxu0 %v265
    %v3551 = vpop.f32.mrf.mxu0
    %v3552 = vadd.f32 %v3247, %v3551
    %v3553 = vpop.f32.mrf.mxu0
    %3554 = vmatprep.mubr.f32.mxu0 0.0
    %3555 = vmatmul.mubr.f32.gmra.mxu0 %v268
    %v3556 = vpop.f32.mrf.mxu0
    %v3557 = vadd.f32 %v3252, %v3556
    %v3558 = vpop.f32.mrf.mxu0
    %3559 = vmatprep.mubr.f32.mxu0 0.0
    %3560 = vmatmul.mubr.f32.gmra.mxu0 %v271
    %v3561 = vpop.f32.mrf.mxu0
    %v3562 = vadd.f32 %v3257, %v3561
    %v3563 = vpop.f32.mrf.mxu0
    %3564 = vmatprep.mubr.f32.mxu0 0.0
    %3565 = vmatmul.mubr.f32.gmra.mxu0 %v274
    %v3566 = vpop.f32.mrf.mxu0
    %v3567 = vadd.f32 %v3262, %v3566
    %v3568 = vpop.f32.mrf.mxu0
    %3569 = vmatprep.mubr.f32.mxu0 0.0
    %3570 = vmatmul.mubr.f32.gmra.mxu0 %v277
    %v3571 = vpop.f32.mrf.mxu0
    %v3572 = vadd.f32 %v3267, %v3571
    %v3573 = vpop.f32.mrf.mxu0
    %3574 = vmatprep.mubr.f32.mxu0 0.0
    %3575 = vmatmul.mubr.f32.gmra.mxu0 %v280
    %v3576 = vpop.f32.mrf.mxu0
    %v3577 = vadd.f32 %v3272, %v3576
    %v3578 = vpop.f32.mrf.mxu0
    %3579 = vmatprep.mubr.f32.mxu0 0.0
    %3580 = vmatmul.mubr.f32.gmra.mxu0 %v283
    %v3581 = vpop.f32.mrf.mxu0
    %v3582 = vadd.f32 %v3277, %v3581
    %v3583 = vpop.f32.mrf.mxu0
    %3584 = vmatprep.mubr.f32.mxu0 0.0
    %3585 = vmatmul.mubr.f32.gmra.mxu0 %v286
    %v3586 = vpop.f32.mrf.mxu0
    %v3587 = vadd.f32 %v3282, %v3586
    %v3588 = vpop.f32.mrf.mxu0
    %3589 = vmatprep.mubr.f32.mxu0 0.0
    %3590 = vmatmul.mubr.f32.gmra.mxu0 %v289
    %v3591 = vpop.f32.mrf.mxu0
    %v3592 = vadd.f32 %v3287, %v3591
    %v3593 = vpop.f32.mrf.mxu0
    %3594 = vdwg.mxu0
    %v3595 = vld [vmem:[%s2] sm:$0xff]
    %v3596 = vld [vmem:[%s2 + $0x8] sm:$0xff]
    %v3597 = vld [vmem:[%s2 + $0x10] sm:$0xff]
    %v3598 = vld [vmem:[%s2 + $0x18] sm:$0xff]
    %v3599 = vld [vmem:[%s2 + $0x20] sm:$0xff]
    %v3600 = vld [vmem:[%s2 + $0x28] sm:$0xff]
    %3601 = vmatprep.subr.mxu0 0.0
    %3602 = vmatpush1.msra.mxu0 %v3432
    %3603 = vmatprep.subr.mxu0 0.0
    %3604 = vmatpush1.msra.mxu0 %v3427
    %3605 = vmatprep.subr.mxu0 0.0
    %3606 = vmatpush1.msra.mxu0 %v3422
    %3607 = vmatprep.subr.mxu0 0.0
    %3608 = vmatpush1.msra.mxu0 %v3417
    %3609 = vmatprep.subr.mxu0 0.0
    %3610 = vmatpush1.msra.mxu0 %v3412
    %3611 = vmatprep.subr.mxu0 0.0
    %3612 = vmatpush1.msra.mxu0 %v3407
    %3613 = vmatprep.subr.mxu0 0.0
    %3614 = vmatpush1.msra.mxu0 %v3402
    %3615 = vmatprep.subr.mxu0 0.0
    %3616 = vmatpush1.msra.mxu0 %v3397
    %3617 = vmatprep.subr.mxu0 0.0
    %3618 = vmatpush1.msra.mxu0 %v3392
    %3619 = vmatprep.subr.mxu0 0.0
    %3620 = vmatpush1.msra.mxu0 %v3387
    %3621 = vmatprep.subr.mxu0 0.0
    %3622 = vmatpush1.msra.mxu0 %v3382
    %3623 = vmatprep.subr.mxu0 0.0
    %3624 = vmatpush1.msra.mxu0 %v3377
    %3625 = vmatprep.subr.mxu0 0.0
    %3626 = vmatpush1.msra.mxu0 %v3372
    %3627 = vmatprep.subr.mxu0 0.0
    %3628 = vmatpush1.msra.mxu0 %v3367
    %3629 = vmatprep.subr.mxu0 0.0
    %3630 = vmatpush1.msra.mxu0 %v3362
    %3631 = vmatprep.subr.mxu0 0.0
    %3632 = vmatpush1.msra.mxu0 %v3357
    %3633 = vmatprep.subr.mxu0 0.0
    %3634 = vmatpush2.msra.mxu0 %v3512
    %3635 = vmatprep.subr.mxu0 0.0
    %3636 = vmatpush2.msra.mxu0 %v3507
    %3637 = vmatprep.subr.mxu0 0.0
    %3638 = vmatpush2.msra.mxu0 %v3502
    %3639 = vmatprep.subr.mxu0 0.0
    %3640 = vmatpush2.msra.mxu0 %v3497
    %3641 = vmatprep.subr.mxu0 0.0
    %3642 = vmatpush2.msra.mxu0 %v3492
    %3643 = vmatprep.subr.mxu0 0.0
    %3644 = vmatpush2.msra.mxu0 %v3487
    %3645 = vmatprep.subr.mxu0 0.0
    %3646 = vmatpush2.msra.mxu0 %v3482
    %3647 = vmatprep.subr.mxu0 0.0
    %3648 = vmatpush2.msra.mxu0 %v3477
    %3649 = vmatprep.subr.mxu0 0.0
    %3650 = vmatpush2.msra.mxu0 %v3472
    %3651 = vmatprep.subr.mxu0 0.0
    %3652 = vmatpush2.msra.mxu0 %v3467
    %3653 = vmatprep.subr.mxu0 0.0
    %3654 = vmatpush2.msra.mxu0 %v3462
    %3655 = vmatprep.subr.mxu0 0.0
    %3656 = vmatpush2.msra.mxu0 %v3457
    %3657 = vmatprep.subr.mxu0 0.0
    %3658 = vmatpush2.msra.mxu0 %v3452
    %3659 = vmatprep.subr.mxu0 0.0
    %3660 = vmatpush2.msra.mxu0 %v3447
    %3661 = vmatprep.subr.mxu0 0.0
    %3662 = vmatpush2.msra.mxu0 %v3442
    %3663 = vmatprep.subr.mxu0 0.0
    %3664 = vmatpush2.msra.mxu0 %v3437
    %3665 = vmatprep.mubr.f32.mxu0 %v3596
    %3666 = vmatmul.mubr.f32.gmra.mxu0 %v3595
    %v3667 = vpop.f32.mrf.mxu0
    %v3668 = vadd.f32 0.0, %v3667
    %v3669 = vpop.f32.mrf.mxu0
    %3670 = vmatprep.mubr.f32.mxu0 %v3599
    %3671 = vmatmul.mubr.f32.gmra.mxu0 %v3598
    %v3672 = vpop.f32.mrf.mxu0
    %v3673 = vadd.f32 0.0, %v3672
    %v3674 = vpop.f32.mrf.mxu0
    %3675 = vdwg.mxu0
    %3676 = vmatprep.subr.mxu0 0.0
    %3677 = vmatpush1.msra.mxu0 %v3592
    %3678 = vmatprep.subr.mxu0 0.0
    %3679 = vmatpush1.msra.mxu0 %v3587
    %3680 = vmatprep.subr.mxu0 0.0
    %3681 = vmatpush1.msra.mxu0 %v3582
    %3682 = vmatprep.subr.mxu0 0.0
    %3683 = vmatpush1.msra.mxu0 %v3577
    %3684 = vmatprep.subr.mxu0 0.0
    %3685 = vmatpush1.msra.mxu0 %v3572
    %3686 = vmatprep.subr.mxu0 0.0
    %3687 = vmatpush1.msra.mxu0 %v3567
    %3688 = vmatprep.subr.mxu0 0.0
    %3689 = vmatpush1.msra.mxu0 %v3562
    %3690 = vmatprep.subr.mxu0 0.0
    %3691 = vmatpush1.msra.mxu0 %v3557
    %3692 = vmatprep.subr.mxu0 0.0
    %3693 = vmatpush1.msra.mxu0 %v3552
    %3694 = vmatprep.subr.mxu0 0.0
    %3695 = vmatpush1.msra.mxu0 %v3547
    %3696 = vmatprep.subr.mxu0 0.0
    %3697 = vmatpush1.msra.mxu0 %v3542
    %3698 = vmatprep.subr.mxu0 0.0
    %3699 = vmatpush1.msra.mxu0 %v3537
    %3700 = vmatprep.subr.mxu0 0.0
    %3701 = vmatpush1.msra.mxu0 %v3532
    %3702 = vmatprep.subr.mxu0 0.0
    %3703 = vmatpush1.msra.mxu0 %v3527
    %3704 = vmatprep.subr.mxu0 0.0
    %3705 = vmatpush1.msra.mxu0 %v3522
    %3706 = vmatprep.subr.mxu0 0.0
    %3707 = vmatpush1.msra.mxu0 %v3517
    %3708 = vmatprep.subr.mxu0 0.0
    %3709 = vmatpush2.msra.mxu0 0.0
    %3710 = vmatprep.subr.mxu0 0.0
    %3711 = vmatpush2.msra.mxu0 0.0
    %3712 = vmatprep.subr.mxu0 0.0
    %3713 = vmatpush2.msra.mxu0 0.0
    %3714 = vmatprep.subr.mxu0 0.0
    %3715 = vmatpush2.msra.mxu0 0.0
    %3716 = vmatprep.subr.mxu0 0.0
    %3717 = vmatpush2.msra.mxu0 0.0
    %3718 = vmatprep.subr.mxu0 0.0
    %3719 = vmatpush2.msra.mxu0 0.0
    %3720 = vmatprep.subr.mxu0 0.0
    %3721 = vmatpush2.msra.mxu0 0.0
    %3722 = vmatprep.subr.mxu0 0.0
    %3723 = vmatpush2.msra.mxu0 0.0
    %3724 = vmatprep.subr.mxu0 0.0
    %3725 = vmatpush2.msra.mxu0 0.0
    %3726 = vmatprep.subr.mxu0 0.0
    %3727 = vmatpush2.msra.mxu0 0.0
    %3728 = vmatprep.subr.mxu0 0.0
    %3729 = vmatpush2.msra.mxu0 0.0
    %3730 = vmatprep.subr.mxu0 0.0
    %3731 = vmatpush2.msra.mxu0 0.0
    %3732 = vmatprep.subr.mxu0 0.0
    %3733 = vmatpush2.msra.mxu0 0.0
    %3734 = vmatprep.subr.mxu0 0.0
    %3735 = vmatpush2.msra.mxu0 0.0
    %3736 = vmatprep.subr.mxu0 0.0
    %3737 = vmatpush2.msra.mxu0 0.0
    %3738 = vmatprep.subr.mxu0 0.0
    %3739 = vmatpush2.msra.mxu0 0.0
    %3740 = vmatprep.mubr.f32.mxu0 0.0
    %3741 = vmatmul.mubr.f32.gmra.mxu0 %v3597
    %v3742 = vpop.f32.mrf.mxu0
    %v3743 = vadd.f32 %v3668, %v3742
    %v3744 = vpop.f32.mrf.mxu0
    %3745 = vmatprep.mubr.f32.mxu0 0.0
    %3746 = vmatmul.mubr.f32.gmra.mxu0 %v3600
    %v3747 = vpop.f32.mrf.mxu0
    %v3748 = vadd.f32 %v3673, %v3747
    %v3749 = vpop.f32.mrf.mxu0
    %3750 = vdwg.mxu0
    %v3751 = vld [vmem:[%s9] sm:$0xff]
    %v3752 = vld [vmem:[%s9 + $0x8] sm:$0xff]
    %v3753 = vld [vmem:[%s9 + $0x10] sm:$0xff]
    %v3754 = vld [vmem:[%s9 + $0x18] sm:$0xff]
    %v3755 = vld [vmem:[%s10] sm:$0x1]
    %v3757 = vlaneseq
    %v3758 = vshrl.u32 %v3757, 7
    %v3759 = vsub.s32 0, %v3758
    %v3760 = vrot.slane %v3755, %v3759
    %vm3762 = vcmask 261120
    %v3764 = vsel %vm3762, %v3743, 0
    %v3767 = vsel %vm3762, %v3748, 0
    %3769 = vmatprep.subr.mxu0 0.0
    %3770 = vmatpush1.msra.mxu0 0.0
    %3771 = vmatprep.subr.mxu0 0.0
    %3772 = vmatpush1.msra.mxu0 0.0
    %3773 = vmatprep.subr.mxu0 0.0
    %3774 = vmatpush1.msra.mxu0 0.0
    %3775 = vmatprep.subr.mxu0 0.0
    %3776 = vmatpush1.msra.mxu0 0.0
    %3777 = vmatprep.subr.mxu0 0.0
    %3778 = vmatpush1.msra.mxu0 0.0
    %3779 = vmatprep.subr.mxu0 0.0
    %3780 = vmatpush1.msra.mxu0 0.0
    %3781 = vmatprep.subr.mxu0 0.0
    %3782 = vmatpush1.msra.mxu0 0.0
    %3783 = vmatprep.subr.mxu0 0.0
    %3784 = vmatpush1.msra.mxu0 0.0
    %3785 = vmatprep.subr.mxu0 0.0
    %3786 = vmatpush1.msra.mxu0 0.0
    %3787 = vmatprep.subr.mxu0 0.0
    %3788 = vmatpush1.msra.mxu0 0.0
    %3789 = vmatprep.subr.mxu0 0.0
    %3790 = vmatpush1.msra.mxu0 0.0
    %3791 = vmatprep.subr.mxu0 0.0
    %3792 = vmatpush1.msra.mxu0 0.0
    %3793 = vmatprep.subr.mxu0 0.0
    %3794 = vmatpush1.msra.mxu0 %v3754
    %3795 = vmatprep.subr.mxu0 0.0
    %3796 = vmatpush1.msra.mxu0 %v3753
    %3797 = vmatprep.subr.mxu0 0.0
    %3798 = vmatpush1.msra.mxu0 %v3752
    %3799 = vmatprep.subr.mxu0 0.0
    %3800 = vmatpush1.msra.mxu0 %v3751
    %3801 = vmatprep.subr.mxu0 0.0
    %3802 = vmatpush2.msra.mxu0 0.0
    %3803 = vmatprep.subr.mxu0 0.0
    %3804 = vmatpush2.msra.mxu0 0.0
    %3805 = vmatprep.subr.mxu0 0.0
    %3806 = vmatpush2.msra.mxu0 0.0
    %3807 = vmatprep.subr.mxu0 0.0
    %3808 = vmatpush2.msra.mxu0 0.0
    %3809 = vmatprep.subr.mxu0 0.0
    %3810 = vmatpush2.msra.mxu0 0.0
    %3811 = vmatprep.subr.mxu0 0.0
    %3812 = vmatpush2.msra.mxu0 0.0
    %3813 = vmatprep.subr.mxu0 0.0
    %3814 = vmatpush2.msra.mxu0 0.0
    %3815 = vmatprep.subr.mxu0 0.0
    %3816 = vmatpush2.msra.mxu0 0.0
    %3817 = vmatprep.subr.mxu0 0.0
    %3818 = vmatpush2.msra.mxu0 0.0
    %3819 = vmatprep.subr.mxu0 0.0
    %3820 = vmatpush2.msra.mxu0 0.0
    %3821 = vmatprep.subr.mxu0 0.0
    %3822 = vmatpush2.msra.mxu0 0.0
    %3823 = vmatprep.subr.mxu0 0.0
    %3824 = vmatpush2.msra.mxu0 0.0
    %3825 = vmatprep.subr.mxu0 0.0
    %3826 = vmatpush2.msra.mxu0 0.0
    %3827 = vmatprep.subr.mxu0 0.0
    %3828 = vmatpush2.msra.mxu0 0.0
    %3829 = vmatprep.subr.mxu0 0.0
    %3830 = vmatpush2.msra.mxu0 0.0
    %3831 = vmatprep.subr.mxu0 0.0
    %3832 = vmatpush2.msra.mxu0 0.0
    %3833 = vmatprep.mubr.f32.mxu0 0.0
    %3834 = vmatmul.mubr.f32.gmra.mxu0 %v3764
    %v3835 = vpop.f32.mrf.mxu0
    %v3836 = vadd.f32 %v3760, %v3835
    %v3837 = vpop.f32.mrf.mxu0
    %3838 = vmatprep.mubr.f32.mxu0 0.0
    %3839 = vmatmul.mubr.f32.gmra.mxu0 %v3767
    %v3840 = vpop.f32.mrf.mxu0
    %v3841 = vadd.f32 %v3760, %v3840
    %v3842 = vpop.f32.mrf.mxu0
    %3843 = vdwg.mxu0
    %v3844 = vld [vmem:[%s11] sm:$0xff]
    %v3845 = vld [vmem:[%s11 + $0x8] sm:$0xff]
    %v3846 = vadd.f32 %v3836, %v3844
    %v3847 = vadd.f32 %v3841, %v3845
    %v3848 = vld [vmem:[%s12] sm:$0xff]
    %v3849 = vld [vmem:[%s12 + $0x8] sm:$0xff]
    %v3850 = vld [vmem:[%s12 + $0x10] sm:$0xff]
    %v3851 = vld [vmem:[%s12 + $0x18] sm:$0xff]
    %v3852 = vld [vmem:[%s13] sm:$0x1]
    %v3854 = vlaneseq
    %v3855 = vshrl.u32 %v3854, 7
    %v3856 = vsub.s32 0, %v3855
    %v3857 = vrot.slane %v3852, %v3856
    %v3860 = vsel %vm3762, %v3846, 0
    %v3863 = vsel %vm3762, %v3847, 0
    %3865 = vmatprep.subr.mxu0 0.0
    %3866 = vmatpush1.msra.mxu0 0.0
    %3867 = vmatprep.subr.mxu0 0.0
    %3868 = vmatpush1.msra.mxu0 0.0
    %3869 = vmatprep.subr.mxu0 0.0
    %3870 = vmatpush1.msra.mxu0 0.0
    %3871 = vmatprep.subr.mxu0 0.0
    %3872 = vmatpush1.msra.mxu0 0.0
    %3873 = vmatprep.subr.mxu0 0.0
    %3874 = vmatpush1.msra.mxu0 0.0
    %3875 = vmatprep.subr.mxu0 0.0
    %3876 = vmatpush1.msra.mxu0 0.0
    %3877 = vmatprep.subr.mxu0 0.0
    %3878 = vmatpush1.msra.mxu0 0.0
    %3879 = vmatprep.subr.mxu0 0.0
    %3880 = vmatpush1.msra.mxu0 0.0
    %3881 = vmatprep.subr.mxu0 0.0
    %3882 = vmatpush1.msra.mxu0 0.0
    %3883 = vmatprep.subr.mxu0 0.0
    %3884 = vmatpush1.msra.mxu0 0.0
    %3885 = vmatprep.subr.mxu0 0.0
    %3886 = vmatpush1.msra.mxu0 0.0
    %3887 = vmatprep.subr.mxu0 0.0
    %3888 = vmatpush1.msra.mxu0 0.0
    %3889 = vmatprep.subr.mxu0 0.0
    %3890 = vmatpush1.msra.mxu0 %v3851
    %3891 = vmatprep.subr.mxu0 0.0
    %3892 = vmatpush1.msra.mxu0 %v3850
    %3893 = vmatprep.subr.mxu0 0.0
    %3894 = vmatpush1.msra.mxu0 %v3849
    %3895 = vmatprep.subr.mxu0 0.0
    %3896 = vmatpush1.msra.mxu0 %v3848
    %3897 = vmatprep.subr.mxu0 0.0
    %3898 = vmatpush2.msra.mxu0 0.0
    %3899 = vmatprep.subr.mxu0 0.0
    %3900 = vmatpush2.msra.mxu0 0.0
    %3901 = vmatprep.subr.mxu0 0.0
    %3902 = vmatpush2.msra.mxu0 0.0
    %3903 = vmatprep.subr.mxu0 0.0
    %3904 = vmatpush2.msra.mxu0 0.0
    %3905 = vmatprep.subr.mxu0 0.0
    %3906 = vmatpush2.msra.mxu0 0.0
    %3907 = vmatprep.subr.mxu0 0.0
    %3908 = vmatpush2.msra.mxu0 0.0
    %3909 = vmatprep.subr.mxu0 0.0
    %3910 = vmatpush2.msra.mxu0 0.0
    %3911 = vmatprep.subr.mxu0 0.0
    %3912 = vmatpush2.msra.mxu0 0.0
    %3913 = vmatprep.subr.mxu0 0.0
    %3914 = vmatpush2.msra.mxu0 0.0
    %3915 = vmatprep.subr.mxu0 0.0
    %3916 = vmatpush2.msra.mxu0 0.0
    %3917 = vmatprep.subr.mxu0 0.0
    %3918 = vmatpush2.msra.mxu0 0.0
    %3919 = vmatprep.subr.mxu0 0.0
    %3920 = vmatpush2.msra.mxu0 0.0
    %3921 = vmatprep.subr.mxu0 0.0
    %3922 = vmatpush2.msra.mxu0 0.0
    %3923 = vmatprep.subr.mxu0 0.0
    %3924 = vmatpush2.msra.mxu0 0.0
    %3925 = vmatprep.subr.mxu0 0.0
    %3926 = vmatpush2.msra.mxu0 0.0
    %3927 = vmatprep.subr.mxu0 0.0
    %3928 = vmatpush2.msra.mxu0 0.0
    %3929 = vmatprep.mubr.f32.mxu0 0.0
    %3930 = vmatmul.mubr.f32.gmra.mxu0 %v3860
    %v3931 = vpop.f32.mrf.mxu0
    %v3932 = vadd.f32 %v3857, %v3931
    %v3933 = vpop.f32.mrf.mxu0
    %3934 = vmatprep.mubr.f32.mxu0 0.0
    %3935 = vmatmul.mubr.f32.gmra.mxu0 %v3863
    %v3936 = vpop.f32.mrf.mxu0
    %v3937 = vadd.f32 %v3857, %v3936
    %v3938 = vpop.f32.mrf.mxu0
    %3939 = vdwg.mxu0
    %3941 = vrot.lane.b32.xlu0 %v3932, 96
    %v3942 = vpop.permute.xlu0 %3941
    %vm3943 = vcmask 64512
    %v3944 = vsel %vm3943, %v3932, 0
    %v3946 = vsel %vm3943, %v3942, 0
    %3948 = vmatprep.subr.mxu0 0.0
    %3949 = vmatpush1.xpose.msra.mxu0 0.0
    %3950 = vmatprep.subr.mxu0 0.0
    %3951 = vmatpush1.xpose.msra.mxu0 0.0
    %3952 = vmatprep.subr.mxu0 0.0
    %3953 = vmatpush1.xpose.msra.mxu0 0.0
    %3954 = vmatprep.subr.mxu0 0.0
    %3955 = vmatpush1.xpose.msra.mxu0 0.0
    %3956 = vmatprep.subr.mxu0 0.0
    %3957 = vmatpush1.xpose.msra.mxu0 0.0
    %3958 = vmatprep.subr.mxu0 0.0
    %3959 = vmatpush1.xpose.msra.mxu0 0.0
    %3960 = vmatprep.subr.mxu0 0.0
    %3961 = vmatpush1.xpose.msra.mxu0 0.0
    %3962 = vmatprep.subr.mxu0 0.0
    %3963 = vmatpush1.xpose.msra.mxu0 0.0
    %3964 = vmatprep.subr.mxu0 0.0
    %3965 = vmatpush1.xpose.msra.mxu0 0.0
    %3966 = vmatprep.subr.mxu0 0.0
    %3967 = vmatpush1.xpose.msra.mxu0 0.0
    %3968 = vmatprep.subr.mxu0 0.0
    %3969 = vmatpush1.xpose.msra.mxu0 0.0
    %3970 = vmatprep.subr.mxu0 0.0
    %3971 = vmatpush1.xpose.msra.mxu0 0.0
    %3972 = vmatprep.subr.mxu0 0.0
    %3973 = vmatpush1.xpose.msra.mxu0 0.0
    %3974 = vmatprep.subr.mxu0 0.0
    %3975 = vmatpush1.xpose.msra.mxu0 0.0
    %3976 = vmatprep.subr.mxu0 0.0
    %3977 = vmatpush1.xpose.msra.mxu0 0.0
    %3978 = vmatprep.subr.mxu0 0.0
    %3979 = vmatpush1.xpose.msra.mxu0 %v3946
    %3980 = vmatprep.subr.mxu0 0.0
    %3981 = vmatpush2.xpose.msra.mxu0 0.0
    %3982 = vmatprep.subr.mxu0 0.0
    %3983 = vmatpush2.xpose.msra.mxu0 0.0
    %3984 = vmatprep.subr.mxu0 0.0
    %3985 = vmatpush2.xpose.msra.mxu0 0.0
    %3986 = vmatprep.subr.mxu0 0.0
    %3987 = vmatpush2.xpose.msra.mxu0 0.0
    %3988 = vmatprep.subr.mxu0 0.0
    %3989 = vmatpush2.xpose.msra.mxu0 0.0
    %3990 = vmatprep.subr.mxu0 0.0
    %3991 = vmatpush2.xpose.msra.mxu0 0.0
    %3992 = vmatprep.subr.mxu0 0.0
    %3993 = vmatpush2.xpose.msra.mxu0 0.0
    %3994 = vmatprep.subr.mxu0 0.0
    %3995 = vmatpush2.xpose.msra.mxu0 0.0
    %3996 = vmatprep.subr.mxu0 0.0
    %3997 = vmatpush2.xpose.msra.mxu0 0.0
    %3998 = vmatprep.subr.mxu0 0.0
    %3999 = vmatpush2.xpose.msra.mxu0 0.0
    %4000 = vmatprep.subr.mxu0 0.0
    %4001 = vmatpush2.xpose.msra.mxu0 0.0
    %4002 = vmatprep.subr.mxu0 0.0
    %4003 = vmatpush2.xpose.msra.mxu0 0.0
    %4004 = vmatprep.subr.mxu0 0.0
    %4005 = vmatpush2.xpose.msra.mxu0 0.0
    %4006 = vmatprep.subr.mxu0 0.0
    %4007 = vmatpush2.xpose.msra.mxu0 0.0
    %4008 = vmatprep.subr.mxu0 0.0
    %4009 = vmatpush2.xpose.msra.mxu0 0.0
    %4010 = vmatprep.subr.mxu0 0.0
    %4011 = vmatpush2.xpose.msra.mxu0 0.0
    %4012 = vmatprep.mubr.f32.mxu0 0.0
    %4013 = vmatmul.mubr.f32.gmra.mxu0 %v3944
    %v4014 = vpop.f32.mrf.mxu0
    %v4015 = vadd.f32 0.0, %v4014
    %v4016 = vpop.f32.mrf.mxu0
    %4017 = vdwg.mxu0
    %4019 = vrot.lane.b32.xlu0 %v3937, 96
    %v4020 = vpop.permute.xlu0 %4019
    %v4021 = vsel %vm3943, %v3937, 0
    %v4023 = vsel %vm3943, %v4020, 0
    %4025 = vmatprep.subr.mxu0 0.0
    %4026 = vmatpush1.xpose.msra.mxu0 0.0
    %4027 = vmatprep.subr.mxu0 0.0
    %4028 = vmatpush1.xpose.msra.mxu0 0.0
    %4029 = vmatprep.subr.mxu0 0.0
    %4030 = vmatpush1.xpose.msra.mxu0 0.0
    %4031 = vmatprep.subr.mxu0 0.0
    %4032 = vmatpush1.xpose.msra.mxu0 0.0
    %4033 = vmatprep.subr.mxu0 0.0
    %4034 = vmatpush1.xpose.msra.mxu0 0.0
    %4035 = vmatprep.subr.mxu0 0.0
    %4036 = vmatpush1.xpose.msra.mxu0 0.0
    %4037 = vmatprep.subr.mxu0 0.0
    %4038 = vmatpush1.xpose.msra.mxu0 0.0
    %4039 = vmatprep.subr.mxu0 0.0
    %4040 = vmatpush1.xpose.msra.mxu0 0.0
    %4041 = vmatprep.subr.mxu0 0.0
    %4042 = vmatpush1.xpose.msra.mxu0 0.0
    %4043 = vmatprep.subr.mxu0 0.0
    %4044 = vmatpush1.xpose.msra.mxu0 0.0
    %4045 = vmatprep.subr.mxu0 0.0
    %4046 = vmatpush1.xpose.msra.mxu0 0.0
    %4047 = vmatprep.subr.mxu0 0.0
    %4048 = vmatpush1.xpose.msra.mxu0 0.0
    %4049 = vmatprep.subr.mxu0 0.0
    %4050 = vmatpush1.xpose.msra.mxu0 0.0
    %4051 = vmatprep.subr.mxu0 0.0
    %4052 = vmatpush1.xpose.msra.mxu0 0.0
    %4053 = vmatprep.subr.mxu0 0.0
    %4054 = vmatpush1.xpose.msra.mxu0 0.0
    %4055 = vmatprep.subr.mxu0 0.0
    %4056 = vmatpush1.xpose.msra.mxu0 %v4023
    %4057 = vmatprep.subr.mxu0 0.0
    %4058 = vmatpush2.xpose.msra.mxu0 0.0
    %4059 = vmatprep.subr.mxu0 0.0
    %4060 = vmatpush2.xpose.msra.mxu0 0.0
    %4061 = vmatprep.subr.mxu0 0.0
    %4062 = vmatpush2.xpose.msra.mxu0 0.0
    %4063 = vmatprep.subr.mxu0 0.0
    %4064 = vmatpush2.xpose.msra.mxu0 0.0
    %4065 = vmatprep.subr.mxu0 0.0
    %4066 = vmatpush2.xpose.msra.mxu0 0.0
    %4067 = vmatprep.subr.mxu0 0.0
    %4068 = vmatpush2.xpose.msra.mxu0 0.0
    %4069 = vmatprep.subr.mxu0 0.0
    %4070 = vmatpush2.xpose.msra.mxu0 0.0
    %4071 = vmatprep.subr.mxu0 0.0
    %4072 = vmatpush2.xpose.msra.mxu0 0.0
    %4073 = vmatprep.subr.mxu0 0.0
    %4074 = vmatpush2.xpose.msra.mxu0 0.0
    %4075 = vmatprep.subr.mxu0 0.0
    %4076 = vmatpush2.xpose.msra.mxu0 0.0
    %4077 = vmatprep.subr.mxu0 0.0
    %4078 = vmatpush2.xpose.msra.mxu0 0.0
    %4079 = vmatprep.subr.mxu0 0.0
    %4080 = vmatpush2.xpose.msra.mxu0 0.0
    %4081 = vmatprep.subr.mxu0 0.0
    %4082 = vmatpush2.xpose.msra.mxu0 0.0
    %4083 = vmatprep.subr.mxu0 0.0
    %4084 = vmatpush2.xpose.msra.mxu0 0.0
    %4085 = vmatprep.subr.mxu0 0.0
    %4086 = vmatpush2.xpose.msra.mxu0 0.0
    %4087 = vmatprep.subr.mxu0 0.0
    %4088 = vmatpush2.xpose.msra.mxu0 0.0
    %4089 = vmatprep.mubr.f32.mxu0 0.0
    %4090 = vmatmul.mubr.f32.gmra.mxu0 %v4021
    %v4091 = vpop.f32.mrf.mxu0
    %v4092 = vadd.f32 0.0, %v4091
    %v4093 = vpop.f32.mrf.mxu0
    %4094 = vdwg.mxu0
    %v4095 = vmul.f32 %v4015, 0.35355338
    %v4096 = vmul.f32 %v4092, 0.35355338
    %v4097 = vsel %vm3943, %v4095, -inf
    %4098 = vmax.xlane.f32.xlu0 %v4097
    %v4099 = vpop.xlane.xlu0 %4098
    %v4100 = vsel %vm3943, %v4096, -inf
    %4101 = vmax.xlane.f32.xlu0 %v4100
    %v4102 = vpop.xlane.xlu0 %4101
    %v4103 = vsub.f32 %v4095, %v4099
    %v4104 = vsub.f32 %v4096, %v4102
    %v4105 = vmul.f32 %v4103, 1.442695
    %v4106 = vpow.pop %v4105
    %v4107 = vmul.f32 %v4104, 1.442695
    %v4108 = vpow.pop %v4107
    %v4109 = vsel %vm3943, %v4106, 0.0
    %4110 = vadd.xlane.f32.xlu0 %v4109
    %v4111 = vpop.xlane.xlu0 %4110
    %v4112 = vsel %vm3943, %v4108, 0.0
    %4113 = vadd.xlane.f32.xlu0 %v4112
    %v4114 = vpop.xlane.xlu0 %4113
    %v4115 = vrcp.pop %v4111
    %v4116 = vrcp.pop %v4114
    %v4117 = vmul.f32 %v4106, %v4115
    %v4118 = vmul.f32 %v4108, %v4116
    %4119 = vrot.lane.b32.xlu0 %v3932, 64
    %v4120 = vpop.permute.xlu0 %4119
    %v4123 = vsel %vm3943, %v4117, 0
    %4125 = vmatprep.subr.mxu0 0.0
    %4126 = vmatpush1.msra.mxu0 0.0
    %4127 = vmatprep.subr.mxu0 0.0
    %4128 = vmatpush1.msra.mxu0 0.0
    %4129 = vmatprep.subr.mxu0 0.0
    %4130 = vmatpush1.msra.mxu0 0.0
    %4131 = vmatprep.subr.mxu0 0.0
    %4132 = vmatpush1.msra.mxu0 0.0
    %4133 = vmatprep.subr.mxu0 0.0
    %4134 = vmatpush1.msra.mxu0 0.0
    %4135 = vmatprep.subr.mxu0 0.0
    %4136 = vmatpush1.msra.mxu0 0.0
    %4137 = vmatprep.subr.mxu0 0.0
    %4138 = vmatpush1.msra.mxu0 0.0
    %4139 = vmatprep.subr.mxu0 0.0
    %4140 = vmatpush1.msra.mxu0 0.0
    %4141 = vmatprep.subr.mxu0 0.0
    %4142 = vmatpush1.msra.mxu0 0.0
    %4143 = vmatprep.subr.mxu0 0.0
    %4144 = vmatpush1.msra.mxu0 0.0
    %4145 = vmatprep.subr.mxu0 0.0
    %4146 = vmatpush1.msra.mxu0 0.0
    %4147 = vmatprep.subr.mxu0 0.0
    %4148 = vmatpush1.msra.mxu0 0.0
    %4149 = vmatprep.subr.mxu0 0.0
    %4150 = vmatpush1.msra.mxu0 0.0
    %4151 = vmatprep.subr.mxu0 0.0
    %4152 = vmatpush1.msra.mxu0 0.0
    %4153 = vmatprep.subr.mxu0 0.0
    %4154 = vmatpush1.msra.mxu0 0.0
    %4155 = vmatprep.subr.mxu0 0.0
    %4156 = vmatpush1.msra.mxu0 %v4120
    %4157 = vmatprep.subr.mxu0 0.0
    %4158 = vmatpush2.msra.mxu0 0.0
    %4159 = vmatprep.subr.mxu0 0.0
    %4160 = vmatpush2.msra.mxu0 0.0
    %4161 = vmatprep.subr.mxu0 0.0
    %4162 = vmatpush2.msra.mxu0 0.0
    %4163 = vmatprep.subr.mxu0 0.0
    %4164 = vmatpush2.msra.mxu0 0.0
    %4165 = vmatprep.subr.mxu0 0.0
    %4166 = vmatpush2.msra.mxu0 0.0
    %4167 = vmatprep.subr.mxu0 0.0
    %4168 = vmatpush2.msra.mxu0 0.0
    %4169 = vmatprep.subr.mxu0 0.0
    %4170 = vmatpush2.msra.mxu0 0.0
    %4171 = vmatprep.subr.mxu0 0.0
    %4172 = vmatpush2.msra.mxu0 0.0
    %4173 = vmatprep.subr.mxu0 0.0
    %4174 = vmatpush2.msra.mxu0 0.0
    %4175 = vmatprep.subr.mxu0 0.0
    %4176 = vmatpush2.msra.mxu0 0.0
    %4177 = vmatprep.subr.mxu0 0.0
    %4178 = vmatpush2.msra.mxu0 0.0
    %4179 = vmatprep.subr.mxu0 0.0
    %4180 = vmatpush2.msra.mxu0 0.0
    %4181 = vmatprep.subr.mxu0 0.0
    %4182 = vmatpush2.msra.mxu0 0.0
    %4183 = vmatprep.subr.mxu0 0.0
    %4184 = vmatpush2.msra.mxu0 0.0
    %4185 = vmatprep.subr.mxu0 0.0
    %4186 = vmatpush2.msra.mxu0 0.0
    %4187 = vmatprep.subr.mxu0 0.0
    %4188 = vmatpush2.msra.mxu0 0.0
    %4189 = vmatprep.mubr.f32.mxu0 0.0
    %4190 = vmatmul.mubr.f32.gmra.mxu0 %v4123
    %v4191 = vpop.f32.mrf.mxu0
    %v4192 = vadd.f32 0.0, %v4191
    %v4193 = vpop.f32.mrf.mxu0
    %4194 = vdwg.mxu0
    %4195 = vrot.lane.b32.xlu0 %v3937, 64
    %v4196 = vpop.permute.xlu0 %4195
    %v4199 = vsel %vm3943, %v4118, 0
    %4201 = vmatprep.subr.mxu0 0.0
    %4202 = vmatpush1.msra.mxu0 0.0
    %4203 = vmatprep.subr.mxu0 0.0
    %4204 = vmatpush1.msra.mxu0 0.0
    %4205 = vmatprep.subr.mxu0 0.0
    %4206 = vmatpush1.msra.mxu0 0.0
    %4207 = vmatprep.subr.mxu0 0.0
    %4208 = vmatpush1.msra.mxu0 0.0
    %4209 = vmatprep.subr.mxu0 0.0
    %4210 = vmatpush1.msra.mxu0 0.0
    %4211 = vmatprep.subr.mxu0 0.0
    %4212 = vmatpush1.msra.mxu0 0.0
    %4213 = vmatprep.subr.mxu0 0.0
    %4214 = vmatpush1.msra.mxu0 0.0
    %4215 = vmatprep.subr.mxu0 0.0
    %4216 = vmatpush1.msra.mxu0 0.0
    %4217 = vmatprep.subr.mxu0 0.0
    %4218 = vmatpush1.msra.mxu0 0.0
    %4219 = vmatprep.subr.mxu0 0.0
    %4220 = vmatpush1.msra.mxu0 0.0
    %4221 = vmatprep.subr.mxu0 0.0
    %4222 = vmatpush1.msra.mxu0 0.0
    %4223 = vmatprep.subr.mxu0 0.0
    %4224 = vmatpush1.msra.mxu0 0.0
    %4225 = vmatprep.subr.mxu0 0.0
    %4226 = vmatpush1.msra.mxu0 0.0
    %4227 = vmatprep.subr.mxu0 0.0
    %4228 = vmatpush1.msra.mxu0 0.0
    %4229 = vmatprep.subr.mxu0 0.0
    %4230 = vmatpush1.msra.mxu0 0.0
    %4231 = vmatprep.subr.mxu0 0.0
    %4232 = vmatpush1.msra.mxu0 %v4196
    %4233 = vmatprep.subr.mxu0 0.0
    %4234 = vmatpush2.msra.mxu0 0.0
    %4235 = vmatprep.subr.mxu0 0.0
    %4236 = vmatpush2.msra.mxu0 0.0
    %4237 = vmatprep.subr.mxu0 0.0
    %4238 = vmatpush2.msra.mxu0 0.0
    %4239 = vmatprep.subr.mxu0 0.0
    %4240 = vmatpush2.msra.mxu0 0.0
    %4241 = vmatprep.subr.mxu0 0.0
    %4242 = vmatpush2.msra.mxu0 0.0
    %4243 = vmatprep.subr.mxu0 0.0
    %4244 = vmatpush2.msra.mxu0 0.0
    %4245 = vmatprep.subr.mxu0 0.0
    %4246 = vmatpush2.msra.mxu0 0.0
    %4247 = vmatprep.subr.mxu0 0.0
    %4248 = vmatpush2.msra.mxu0 0.0
    %4249 = vmatprep.subr.mxu0 0.0
    %4250 = vmatpush2.msra.mxu0 0.0
    %4251 = vmatprep.subr.mxu0 0.0
    %4252 = vmatpush2.msra.mxu0 0.0
    %4253 = vmatprep.subr.mxu0 0.0
    %4254 = vmatpush2.msra.mxu0 0.0
    %4255 = vmatprep.subr.mxu0 0.0
    %4256 = vmatpush2.msra.mxu0 0.0
    %4257 = vmatprep.subr.mxu0 0.0
    %4258 = vmatpush2.msra.mxu0 0.0
    %4259 = vmatprep.subr.mxu0 0.0
    %4260 = vmatpush2.msra.mxu0 0.0
    %4261 = vmatprep.subr.mxu0 0.0
    %4262 = vmatpush2.msra.mxu0 0.0
    %4263 = vmatprep.subr.mxu0 0.0
    %4264 = vmatpush2.msra.mxu0 0.0
    %4265 = vmatprep.mubr.f32.mxu0 0.0
    %4266 = vmatmul.mubr.f32.gmra.mxu0 %v4199
    %v4267 = vpop.f32.mrf.mxu0
    %v4268 = vadd.f32 0.0, %v4267
    %v4269 = vpop.f32.mrf.mxu0
    %4270 = vdwg.mxu0
    %4271 = vrot.lane.b32.xlu0 %v3932, 120
    %v4272 = vpop.permute.xlu0 %4271
    %4273 = vrot.lane.b32.xlu0 %v3932, 88
    %v4274 = vpop.permute.xlu0 %4273
    %v4275 = vsel %vm3943, %v4272, 0
    %v4277 = vsel %vm3943, %v4274, 0
    %4279 = vmatprep.subr.mxu0 0.0
    %4280 = vmatpush1.xpose.msra.mxu0 0.0
    %4281 = vmatprep.subr.mxu0 0.0
    %4282 = vmatpush1.xpose.msra.mxu0 0.0
    %4283 = vmatprep.subr.mxu0 0.0
    %4284 = vmatpush1.xpose.msra.mxu0 0.0
    %4285 = vmatprep.subr.mxu0 0.0
    %4286 = vmatpush1.xpose.msra.mxu0 0.0
    %4287 = vmatprep.subr.mxu0 0.0
    %4288 = vmatpush1.xpose.msra.mxu0 0.0
    %4289 = vmatprep.subr.mxu0 0.0
    %4290 = vmatpush1.xpose.msra.mxu0 0.0
    %4291 = vmatprep.subr.mxu0 0.0
    %4292 = vmatpush1.xpose.msra.mxu0 0.0
    %4293 = vmatprep.subr.mxu0 0.0
    %4294 = vmatpush1.xpose.msra.mxu0 0.0
    %4295 = vmatprep.subr.mxu0 0.0
    %4296 = vmatpush1.xpose.msra.mxu0 0.0
    %4297 = vmatprep.subr.mxu0 0.0
    %4298 = vmatpush1.xpose.msra.mxu0 0.0
    %4299 = vmatprep.subr.mxu0 0.0
    %4300 = vmatpush1.xpose.msra.mxu0 0.0
    %4301 = vmatprep.subr.mxu0 0.0
    %4302 = vmatpush1.xpose.msra.mxu0 0.0
    %4303 = vmatprep.subr.mxu0 0.0
    %4304 = vmatpush1.xpose.msra.mxu0 0.0
    %4305 = vmatprep.subr.mxu0 0.0
    %4306 = vmatpush1.xpose.msra.mxu0 0.0
    %4307 = vmatprep.subr.mxu0 0.0
    %4308 = vmatpush1.xpose.msra.mxu0 0.0
    %4309 = vmatprep.subr.mxu0 0.0
    %4310 = vmatpush1.xpose.msra.mxu0 %v4277
    %4311 = vmatprep.subr.mxu0 0.0
    %4312 = vmatpush2.xpose.msra.mxu0 0.0
    %4313 = vmatprep.subr.mxu0 0.0
    %4314 = vmatpush2.xpose.msra.mxu0 0.0
    %4315 = vmatprep.subr.mxu0 0.0
    %4316 = vmatpush2.xpose.msra.mxu0 0.0
    %4317 = vmatprep.subr.mxu0 0.0
    %4318 = vmatpush2.xpose.msra.mxu0 0.0
    %4319 = vmatprep.subr.mxu0 0.0
    %4320 = vmatpush2.xpose.msra.mxu0 0.0
    %4321 = vmatprep.subr.mxu0 0.0
    %4322 = vmatpush2.xpose.msra.mxu0 0.0
    %4323 = vmatprep.subr.mxu0 0.0
    %4324 = vmatpush2.xpose.msra.mxu0 0.0
    %4325 = vmatprep.subr.mxu0 0.0
    %4326 = vmatpush2.xpose.msra.mxu0 0.0
    %4327 = vmatprep.subr.mxu0 0.0
    %4328 = vmatpush2.xpose.msra.mxu0 0.0
    %4329 = vmatprep.subr.mxu0 0.0
    %4330 = vmatpush2.xpose.msra.mxu0 0.0
    %4331 = vmatprep.subr.mxu0 0.0
    %4332 = vmatpush2.xpose.msra.mxu0 0.0
    %4333 = vmatprep.subr.mxu0 0.0
    %4334 = vmatpush2.xpose.msra.mxu0 0.0
    %4335 = vmatprep.subr.mxu0 0.0
    %4336 = vmatpush2.xpose.msra.mxu0 0.0
    %4337 = vmatprep.subr.mxu0 0.0
    %4338 = vmatpush2.xpose.msra.mxu0 0.0
    %4339 = vmatprep.subr.mxu0 0.0
    %4340 = vmatpush2.xpose.msra.mxu0 0.0
    %4341 = vmatprep.subr.mxu0 0.0
    %4342 = vmatpush2.xpose.msra.mxu0 0.0
    %4343 = vmatprep.mubr.f32.mxu0 0.0
    %4344 = vmatmul.mubr.f32.gmra.mxu0 %v4275
    %v4345 = vpop.f32.mrf.mxu0
    %v4346 = vadd.f32 0.0, %v4345
    %v4347 = vpop.f32.mrf.mxu0
    %4348 = vdwg.mxu0
    %4349 = vrot.lane.b32.xlu0 %v3937, 120
    %v4350 = vpop.permute.xlu0 %4349
    %4351 = vrot.lane.b32.xlu0 %v3937, 88
    %v4352 = vpop.permute.xlu0 %4351
    %v4353 = vsel %vm3943, %v4350, 0
    %v4355 = vsel %vm3943, %v4352, 0
    %4357 = vmatprep.subr.mxu0 0.0
    %4358 = vmatpush1.xpose.msra.mxu0 0.0
    %4359 = vmatprep.subr.mxu0 0.0
    %4360 = vmatpush1.xpose.msra.mxu0 0.0
    %4361 = vmatprep.subr.mxu0 0.0
    %4362 = vmatpush1.xpose.msra.mxu0 0.0
    %4363 = vmatprep.subr.mxu0 0.0
    %4364 = vmatpush1.xpose.msra.mxu0 0.0
    %4365 = vmatprep.subr.mxu0 0.0
    %4366 = vmatpush1.xpose.msra.mxu0 0.0
    %4367 = vmatprep.subr.mxu0 0.0
    %4368 = vmatpush1.xpose.msra.mxu0 0.0
    %4369 = vmatprep.subr.mxu0 0.0
    %4370 = vmatpush1.xpose.msra.mxu0 0.0
    %4371 = vmatprep.subr.mxu0 0.0
    %4372 = vmatpush1.xpose.msra.mxu0 0.0
    %4373 = vmatprep.subr.mxu0 0.0
    %4374 = vmatpush1.xpose.msra.mxu0 0.0
    %4375 = vmatprep.subr.mxu0 0.0
    %4376 = vmatpush1.xpose.msra.mxu0 0.0
    %4377 = vmatprep.subr.mxu0 0.0
    %4378 = vmatpush1.xpose.msra.mxu0 0.0
    %4379 = vmatprep.subr.mxu0 0.0
    %4380 = vmatpush1.xpose.msra.mxu0 0.0
    %4381 = vmatprep.subr.mxu0 0.0
    %4382 = vmatpush1.xpose.msra.mxu0 0.0
    %4383 = vmatprep.subr.mxu0 0.0
    %4384 = vmatpush1.xpose.msra.mxu0 0.0
    %4385 = vmatprep.subr.mxu0 0.0
    %4386 = vmatpush1.xpose.msra.mxu0 0.0
    %4387 = vmatprep.subr.mxu0 0.0
    %4388 = vmatpush1.xpose.msra.mxu0 %v4355
    %4389 = vmatprep.subr.mxu0 0.0
    %4390 = vmatpush2.xpose.msra.mxu0 0.0
    %4391 = vmatprep.subr.mxu0 0.0
    %4392 = vmatpush2.xpose.msra.mxu0 0.0
    %4393 = vmatprep.subr.mxu0 0.0
    %4394 = vmatpush2.xpose.msra.mxu0 0.0
    %4395 = vmatprep.subr.mxu0 0.0
    %4396 = vmatpush2.xpose.msra.mxu0 0.0
    %4397 = vmatprep.subr.mxu0 0.0
    %4398 = vmatpush2.xpose.msra.mxu0 0.0
    %4399 = vmatprep.subr.mxu0 0.0
    %4400 = vmatpush2.xpose.msra.mxu0 0.0
    %4401 = vmatprep.subr.mxu0 0.0
    %4402 = vmatpush2.xpose.msra.mxu0 0.0
    %4403 = vmatprep.subr.mxu0 0.0
    %4404 = vmatpush2.xpose.msra.mxu0 0.0
    %4405 = vmatprep.subr.mxu0 0.0
    %4406 = vmatpush2.xpose.msra.mxu0 0.0
    %4407 = vmatprep.subr.mxu0 0.0
    %4408 = vmatpush2.xpose.msra.mxu0 0.0
    %4409 = vmatprep.subr.mxu0 0.0
    %4410 = vmatpush2.xpose.msra.mxu0 0.0
    %4411 = vmatprep.subr.mxu0 0.0
    %4412 = vmatpush2.xpose.msra.mxu0 0.0
    %4413 = vmatprep.subr.mxu0 0.0
    %4414 = vmatpush2.xpose.msra.mxu0 0.0
    %4415 = vmatprep.subr.mxu0 0.0
    %4416 = vmatpush2.xpose.msra.mxu0 0.0
    %4417 = vmatprep.subr.mxu0 0.0
    %4418 = vmatpush2.xpose.msra.mxu0 0.0
    %4419 = vmatprep.subr.mxu0 0.0
    %4420 = vmatpush2.xpose.msra.mxu0 0.0
    %4421 = vmatprep.mubr.f32.mxu0 0.0
    %4422 = vmatmul.mubr.f32.gmra.mxu0 %v4353
    %v4423 = vpop.f32.mrf.mxu0
    %v4424 = vadd.f32 0.0, %v4423
    %v4425 = vpop.f32.mrf.mxu0
    %4426 = vdwg.mxu0
    %v4427 = vmul.f32 %v4346, 0.35355338
    %v4428 = vmul.f32 %v4424, 0.35355338
    %v4429 = vsel %vm3943, %v4427, -inf
    %4430 = vmax.xlane.f32.xlu0 %v4429
    %v4431 = vpop.xlane.xlu0 %4430
    %v4432 = vsel %vm3943, %v4428, -inf
    %4433 = vmax.xlane.f32.xlu0 %v4432
    %v4434 = vpop.xlane.xlu0 %4433
    %v4435 = vsub.f32 %v4427, %v4431
    %v4436 = vsub.f32 %v4428, %v4434
    %v4437 = vmul.f32 %v4435, 1.442695
    %v4438 = vpow.pop %v4437
    %v4439 = vmul.f32 %v4436, 1.442695
    %v4440 = vpow.pop %v4439
    %v4441 = vsel %vm3943, %v4438, 0.0
    %4442 = vadd.xlane.f32.xlu0 %v4441
    %v4443 = vpop.xlane.xlu0 %4442
    %v4444 = vsel %vm3943, %v4440, 0.0
    %4445 = vadd.xlane.f32.xlu0 %v4444
    %v4446 = vpop.xlane.xlu0 %4445
    %v4447 = vrcp.pop %v4443
    %v4448 = vrcp.pop %v4446
    %v4449 = vmul.f32 %v4438, %v4447
    %v4450 = vmul.f32 %v4440, %v4448
    %4451 = vrot.lane.b32.xlu0 %v3932, 56
    %v4452 = vpop.permute.xlu0 %4451
    %v4455 = vsel %vm3943, %v4449, 0
    %4457 = vmatprep.subr.mxu0 0.0
    %4458 = vmatpush1.msra.mxu0 0.0
    %4459 = vmatprep.subr.mxu0 0.0
    %4460 = vmatpush1.msra.mxu0 0.0
    %4461 = vmatprep.subr.mxu0 0.0
    %4462 = vmatpush1.msra.mxu0 0.0
    %4463 = vmatprep.subr.mxu0 0.0
    %4464 = vmatpush1.msra.mxu0 0.0
    %4465 = vmatprep.subr.mxu0 0.0
    %4466 = vmatpush1.msra.mxu0 0.0
    %4467 = vmatprep.subr.mxu0 0.0
    %4468 = vmatpush1.msra.mxu0 0.0
    %4469 = vmatprep.subr.mxu0 0.0
    %4470 = vmatpush1.msra.mxu0 0.0
    %4471 = vmatprep.subr.mxu0 0.0
    %4472 = vmatpush1.msra.mxu0 0.0
    %4473 = vmatprep.subr.mxu0 0.0
    %4474 = vmatpush1.msra.mxu0 0.0
    %4475 = vmatprep.subr.mxu0 0.0
    %4476 = vmatpush1.msra.mxu0 0.0
    %4477 = vmatprep.subr.mxu0 0.0
    %4478 = vmatpush1.msra.mxu0 0.0
    %4479 = vmatprep.subr.mxu0 0.0
    %4480 = vmatpush1.msra.mxu0 0.0
    %4481 = vmatprep.subr.mxu0 0.0
    %4482 = vmatpush1.msra.mxu0 0.0
    %4483 = vmatprep.subr.mxu0 0.0
    %4484 = vmatpush1.msra.mxu0 0.0
    %4485 = vmatprep.subr.mxu0 0.0
    %4486 = vmatpush1.msra.mxu0 0.0
    %4487 = vmatprep.subr.mxu0 0.0
    %4488 = vmatpush1.msra.mxu0 %v4452
    %4489 = vmatprep.subr.mxu0 0.0
    %4490 = vmatpush2.msra.mxu0 0.0
    %4491 = vmatprep.subr.mxu0 0.0
    %4492 = vmatpush2.msra.mxu0 0.0
    %4493 = vmatprep.subr.mxu0 0.0
    %4494 = vmatpush2.msra.mxu0 0.0
    %4495 = vmatprep.subr.mxu0 0.0
    %4496 = vmatpush2.msra.mxu0 0.0
    %4497 = vmatprep.subr.mxu0 0.0
    %4498 = vmatpush2.msra.mxu0 0.0
    %4499 = vmatprep.subr.mxu0 0.0
    %4500 = vmatpush2.msra.mxu0 0.0
    %4501 = vmatprep.subr.mxu0 0.0
    %4502 = vmatpush2.msra.mxu0 0.0
    %4503 = vmatprep.subr.mxu0 0.0
    %4504 = vmatpush2.msra.mxu0 0.0
    %4505 = vmatprep.subr.mxu0 0.0
    %4506 = vmatpush2.msra.mxu0 0.0
    %4507 = vmatprep.subr.mxu0 0.0
    %4508 = vmatpush2.msra.mxu0 0.0
    %4509 = vmatprep.subr.mxu0 0.0
    %4510 = vmatpush2.msra.mxu0 0.0
    %4511 = vmatprep.subr.mxu0 0.0
    %4512 = vmatpush2.msra.mxu0 0.0
    %4513 = vmatprep.subr.mxu0 0.0
    %4514 = vmatpush2.msra.mxu0 0.0
    %4515 = vmatprep.subr.mxu0 0.0
    %4516 = vmatpush2.msra.mxu0 0.0
    %4517 = vmatprep.subr.mxu0 0.0
    %4518 = vmatpush2.msra.mxu0 0.0
    %4519 = vmatprep.subr.mxu0 0.0
    %4520 = vmatpush2.msra.mxu0 0.0
    %4521 = vmatprep.mubr.f32.mxu0 0.0
    %4522 = vmatmul.mubr.f32.gmra.mxu0 %v4455
    %v4523 = vpop.f32.mrf.mxu0
    %v4524 = vadd.f32 0.0, %v4523
    %v4525 = vpop.f32.mrf.mxu0
    %4526 = vdwg.mxu0
    %4527 = vrot.lane.b32.xlu0 %v3937, 56
    %v4528 = vpop.permute.xlu0 %4527
    %v4531 = vsel %vm3943, %v4450, 0
    %4533 = vmatprep.subr.mxu0 0.0
    %4534 = vmatpush1.msra.mxu0 0.0
    %4535 = vmatprep.subr.mxu0 0.0
    %4536 = vmatpush1.msra.mxu0 0.0
    %4537 = vmatprep.subr.mxu0 0.0
    %4538 = vmatpush1.msra.mxu0 0.0
    %4539 = vmatprep.subr.mxu0 0.0
    %4540 = vmatpush1.msra.mxu0 0.0
    %4541 = vmatprep.subr.mxu0 0.0
    %4542 = vmatpush1.msra.mxu0 0.0
    %4543 = vmatprep.subr.mxu0 0.0
    %4544 = vmatpush1.msra.mxu0 0.0
    %4545 = vmatprep.subr.mxu0 0.0
    %4546 = vmatpush1.msra.mxu0 0.0
    %4547 = vmatprep.subr.mxu0 0.0
    %4548 = vmatpush1.msra.mxu0 0.0
    %4549 = vmatprep.subr.mxu0 0.0
    %4550 = vmatpush1.msra.mxu0 0.0
    %4551 = vmatprep.subr.mxu0 0.0
    %4552 = vmatpush1.msra.mxu0 0.0
    %4553 = vmatprep.subr.mxu0 0.0
    %4554 = vmatpush1.msra.mxu0 0.0
    %4555 = vmatprep.subr.mxu0 0.0
    %4556 = vmatpush1.msra.mxu0 0.0
    %4557 = vmatprep.subr.mxu0 0.0
    %4558 = vmatpush1.msra.mxu0 0.0
    %4559 = vmatprep.subr.mxu0 0.0
    %4560 = vmatpush1.msra.mxu0 0.0
    %4561 = vmatprep.subr.mxu0 0.0
    %4562 = vmatpush1.msra.mxu0 0.0
    %4563 = vmatprep.subr.mxu0 0.0
    %4564 = vmatpush1.msra.mxu0 %v4528
    %4565 = vmatprep.subr.mxu0 0.0
    %4566 = vmatpush2.msra.mxu0 0.0
    %4567 = vmatprep.subr.mxu0 0.0
    %4568 = vmatpush2.msra.mxu0 0.0
    %4569 = vmatprep.subr.mxu0 0.0
    %4570 = vmatpush2.msra.mxu0 0.0
    %4571 = vmatprep.subr.mxu0 0.0
    %4572 = vmatpush2.msra.mxu0 0.0
    %4573 = vmatprep.subr.mxu0 0.0
    %4574 = vmatpush2.msra.mxu0 0.0
    %4575 = vmatprep.subr.mxu0 0.0
    %4576 = vmatpush2.msra.mxu0 0.0
    %4577 = vmatprep.subr.mxu0 0.0
    %4578 = vmatpush2.msra.mxu0 0.0
    %4579 = vmatprep.subr.mxu0 0.0
    %4580 = vmatpush2.msra.mxu0 0.0
    %4581 = vmatprep.subr.mxu0 0.0
    %4582 = vmatpush2.msra.mxu0 0.0
    %4583 = vmatprep.subr.mxu0 0.0
    %4584 = vmatpush2.msra.mxu0 0.0
    %4585 = vmatprep.subr.mxu0 0.0
    %4586 = vmatpush2.msra.mxu0 0.0
    %4587 = vmatprep.subr.mxu0 0.0
    %4588 = vmatpush2.msra.mxu0 0.0
    %4589 = vmatprep.subr.mxu0 0.0
    %4590 = vmatpush2.msra.mxu0 0.0
    %4591 = vmatprep.subr.mxu0 0.0
    %4592 = vmatpush2.msra.mxu0 0.0
    %4593 = vmatprep.subr.mxu0 0.0
    %4594 = vmatpush2.msra.mxu0 0.0
    %4595 = vmatprep.subr.mxu0 0.0
    %4596 = vmatpush2.msra.mxu0 0.0
    %4597 = vmatprep.mubr.f32.mxu0 0.0
    %4598 = vmatmul.mubr.f32.gmra.mxu0 %v4531
    %v4599 = vpop.f32.mrf.mxu0
    %v4600 = vadd.f32 0.0, %v4599
    %v4601 = vpop.f32.mrf.mxu0
    %4602 = vdwg.mxu0
    %4603 = vrot.lane.b32.xlu0 %v3932, 112
    %v4604 = vpop.permute.xlu0 %4603
    %4605 = vrot.lane.b32.xlu0 %v3932, 80
    %v4606 = vpop.permute.xlu0 %4605
    %v4607 = vsel %vm3943, %v4604, 0
    %v4609 = vsel %vm3943, %v4606, 0
    %4611 = vmatprep.subr.mxu0 0.0
    %4612 = vmatpush1.xpose.msra.mxu0 0.0
    %4613 = vmatprep.subr.mxu0 0.0
    %4614 = vmatpush1.xpose.msra.mxu0 0.0
    %4615 = vmatprep.subr.mxu0 0.0
    %4616 = vmatpush1.xpose.msra.mxu0 0.0
    %4617 = vmatprep.subr.mxu0 0.0
    %4618 = vmatpush1.xpose.msra.mxu0 0.0
    %4619 = vmatprep.subr.mxu0 0.0
    %4620 = vmatpush1.xpose.msra.mxu0 0.0
    %4621 = vmatprep.subr.mxu0 0.0
    %4622 = vmatpush1.xpose.msra.mxu0 0.0
    %4623 = vmatprep.subr.mxu0 0.0
    %4624 = vmatpush1.xpose.msra.mxu0 0.0
    %4625 = vmatprep.subr.mxu0 0.0
    %4626 = vmatpush1.xpose.msra.mxu0 0.0
    %4627 = vmatprep.subr.mxu0 0.0
    %4628 = vmatpush1.xpose.msra.mxu0 0.0
    %4629 = vmatprep.subr.mxu0 0.0
    %4630 = vmatpush1.xpose.msra.mxu0 0.0
    %4631 = vmatprep.subr.mxu0 0.0
    %4632 = vmatpush1.xpose.msra.mxu0 0.0
    %4633 = vmatprep.subr.mxu0 0.0
    %4634 = vmatpush1.xpose.msra.mxu0 0.0
    %4635 = vmatprep.subr.mxu0 0.0
    %4636 = vmatpush1.xpose.msra.mxu0 0.0
    %4637 = vmatprep.subr.mxu0 0.0
    %4638 = vmatpush1.xpose.msra.mxu0 0.0
    %4639 = vmatprep.subr.mxu0 0.0
    %4640 = vmatpush1.xpose.msra.mxu0 0.0
    %4641 = vmatprep.subr.mxu0 0.0
    %4642 = vmatpush1.xpose.msra.mxu0 %v4609
    %4643 = vmatprep.subr.mxu0 0.0
    %4644 = vmatpush2.xpose.msra.mxu0 0.0
    %4645 = vmatprep.subr.mxu0 0.0
    %4646 = vmatpush2.xpose.msra.mxu0 0.0
    %4647 = vmatprep.subr.mxu0 0.0
    %4648 = vmatpush2.xpose.msra.mxu0 0.0
    %4649 = vmatprep.subr.mxu0 0.0
    %4650 = vmatpush2.xpose.msra.mxu0 0.0
    %4651 = vmatprep.subr.mxu0 0.0
    %4652 = vmatpush2.xpose.msra.mxu0 0.0
    %4653 = vmatprep.subr.mxu0 0.0
    %4654 = vmatpush2.xpose.msra.mxu0 0.0
    %4655 = vmatprep.subr.mxu0 0.0
    %4656 = vmatpush2.xpose.msra.mxu0 0.0
    %4657 = vmatprep.subr.mxu0 0.0
    %4658 = vmatpush2.xpose.msra.mxu0 0.0
    %4659 = vmatprep.subr.mxu0 0.0
    %4660 = vmatpush2.xpose.msra.mxu0 0.0
    %4661 = vmatprep.subr.mxu0 0.0
    %4662 = vmatpush2.xpose.msra.mxu0 0.0
    %4663 = vmatprep.subr.mxu0 0.0
    %4664 = vmatpush2.xpose.msra.mxu0 0.0
    %4665 = vmatprep.subr.mxu0 0.0
    %4666 = vmatpush2.xpose.msra.mxu0 0.0
    %4667 = vmatprep.subr.mxu0 0.0
    %4668 = vmatpush2.xpose.msra.mxu0 0.0
    %4669 = vmatprep.subr.mxu0 0.0
    %4670 = vmatpush2.xpose.msra.mxu0 0.0
    %4671 = vmatprep.subr.mxu0 0.0
    %4672 = vmatpush2.xpose.msra.mxu0 0.0
    %4673 = vmatprep.subr.mxu0 0.0
    %4674 = vmatpush2.xpose.msra.mxu0 0.0
    %4675 = vmatprep.mubr.f32.mxu0 0.0
    %4676 = vmatmul.mubr.f32.gmra.mxu0 %v4607
    %v4677 = vpop.f32.mrf.mxu0
    %v4678 = vadd.f32 0.0, %v4677
    %v4679 = vpop.f32.mrf.mxu0
    %4680 = vdwg.mxu0
    %4681 = vrot.lane.b32.xlu0 %v3937, 112
    %v4682 = vpop.permute.xlu0 %4681
    %4683 = vrot.lane.b32.xlu0 %v3937, 80
    %v4684 = vpop.permute.xlu0 %4683
    %v4685 = vsel %vm3943, %v4682, 0
    %v4687 = vsel %vm3943, %v4684, 0
    %4689 = vmatprep.subr.mxu0 0.0
    %4690 = vmatpush1.xpose.msra.mxu0 0.0
    %4691 = vmatprep.subr.mxu0 0.0
    %4692 = vmatpush1.xpose.msra.mxu0 0.0
    %4693 = vmatprep.subr.mxu0 0.0
    %4694 = vmatpush1.xpose.msra.mxu0 0.0
    %4695 = vmatprep.subr.mxu0 0.0
    %4696 = vmatpush1.xpose.msra.mxu0 0.0
    %4697 = vmatprep.subr.mxu0 0.0
    %4698 = vmatpush1.xpose.msra.mxu0 0.0
    %4699 = vmatprep.subr.mxu0 0.0
    %4700 = vmatpush1.xpose.msra.mxu0 0.0
    %4701 = vmatprep.subr.mxu0 0.0
    %4702 = vmatpush1.xpose.msra.mxu0 0.0
    %4703 = vmatprep.subr.mxu0 0.0
    %4704 = vmatpush1.xpose.msra.mxu0 0.0
    %4705 = vmatprep.subr.mxu0 0.0
    %4706 = vmatpush1.xpose.msra.mxu0 0.0
    %4707 = vmatprep.subr.mxu0 0.0
    %4708 = vmatpush1.xpose.msra.mxu0 0.0
    %4709 = vmatprep.subr.mxu0 0.0
    %4710 = vmatpush1.xpose.msra.mxu0 0.0
    %4711 = vmatprep.subr.mxu0 0.0
    %4712 = vmatpush1.xpose.msra.mxu0 0.0
    %4713 = vmatprep.subr.mxu0 0.0
    %4714 = vmatpush1.xpose.msra.mxu0 0.0
    %4715 = vmatprep.subr.mxu0 0.0
    %4716 = vmatpush1.xpose.msra.mxu0 0.0
    %4717 = vmatprep.subr.mxu0 0.0
    %4718 = vmatpush1.xpose.msra.mxu0 0.0
    %4719 = vmatprep.subr.mxu0 0.0
    %4720 = vmatpush1.xpose.msra.mxu0 %v4687
    %4721 = vmatprep.subr.mxu0 0.0
    %4722 = vmatpush2.xpose.msra.mxu0 0.0
    %4723 = vmatprep.subr.mxu0 0.0
    %4724 = vmatpush2.xpose.msra.mxu0 0.0
    %4725 = vmatprep.subr.mxu0 0.0
    %4726 = vmatpush2.xpose.msra.mxu0 0.0
    %4727 = vmatprep.subr.mxu0 0.0
    %4728 = vmatpush2.xpose.msra.mxu0 0.0
    %4729 = vmatprep.subr.mxu0 0.0
    %4730 = vmatpush2.xpose.msra.mxu0 0.0
    %4731 = vmatprep.subr.mxu0 0.0
    %4732 = vmatpush2.xpose.msra.mxu0 0.0
    %4733 = vmatprep.subr.mxu0 0.0
    %4734 = vmatpush2.xpose.msra.mxu0 0.0
    %4735 = vmatprep.subr.mxu0 0.0
    %4736 = vmatpush2.xpose.msra.mxu0 0.0
    %4737 = vmatprep.subr.mxu0 0.0
    %4738 = vmatpush2.xpose.msra.mxu0 0.0
    %4739 = vmatprep.subr.mxu0 0.0
    %4740 = vmatpush2.xpose.msra.mxu0 0.0
    %4741 = vmatprep.subr.mxu0 0.0
    %4742 = vmatpush2.xpose.msra.mxu0 0.0
    %4743 = vmatprep.subr.mxu0 0.0
    %4744 = vmatpush2.xpose.msra.mxu0 0.0
    %4745 = vmatprep.subr.mxu0 0.0
    %4746 = vmatpush2.xpose.msra.mxu0 0.0
    %4747 = vmatprep.subr.mxu0 0.0
    %4748 = vmatpush2.xpose.msra.mxu0 0.0
    %4749 = vmatprep.subr.mxu0 0.0
    %4750 = vmatpush2.xpose.msra.mxu0 0.0
    %4751 = vmatprep.subr.mxu0 0.0
    %4752 = vmatpush2.xpose.msra.mxu0 0.0
    %4753 = vmatprep.mubr.f32.mxu0 0.0
    %4754 = vmatmul.mubr.f32.gmra.mxu0 %v4685
    %v4755 = vpop.f32.mrf.mxu0
    %v4756 = vadd.f32 0.0, %v4755
    %v4757 = vpop.f32.mrf.mxu0
    %4758 = vdwg.mxu0
    %v4759 = vmul.f32 %v4678, 0.35355338
    %v4760 = vmul.f32 %v4756, 0.35355338
    %v4761 = vsel %vm3943, %v4759, -inf
    %4762 = vmax.xlane.f32.xlu0 %v4761
    %v4763 = vpop.xlane.xlu0 %4762
    %v4764 = vsel %vm3943, %v4760, -inf
    %4765 = vmax.xlane.f32.xlu0 %v4764
    %v4766 = vpop.xlane.xlu0 %4765
    %v4767 = vsub.f32 %v4759, %v4763
    %v4768 = vsub.f32 %v4760, %v4766
    %v4769 = vmul.f32 %v4767, 1.442695
    %v4770 = vpow.pop %v4769
    %v4771 = vmul.f32 %v4768, 1.442695
    %v4772 = vpow.pop %v4771
    %v4773 = vsel %vm3943, %v4770, 0.0
    %4774 = vadd.xlane.f32.xlu0 %v4773
    %v4775 = vpop.xlane.xlu0 %4774
    %v4776 = vsel %vm3943, %v4772, 0.0
    %4777 = vadd.xlane.f32.xlu0 %v4776
    %v4778 = vpop.xlane.xlu0 %4777
    %v4779 = vrcp.pop %v4775
    %v4780 = vrcp.pop %v4778
    %v4781 = vmul.f32 %v4770, %v4779
    %v4782 = vmul.f32 %v4772, %v4780
    %4783 = vrot.lane.b32.xlu0 %v3932, 48
    %v4784 = vpop.permute.xlu0 %4783
    %v4787 = vsel %vm3943, %v4781, 0
    %4789 = vmatprep.subr.mxu0 0.0
    %4790 = vmatpush1.msra.mxu0 0.0
    %4791 = vmatprep.subr.mxu0 0.0
    %4792 = vmatpush1.msra.mxu0 0.0
    %4793 = vmatprep.subr.mxu0 0.0
    %4794 = vmatpush1.msra.mxu0 0.0
    %4795 = vmatprep.subr.mxu0 0.0
    %4796 = vmatpush1.msra.mxu0 0.0
    %4797 = vmatprep.subr.mxu0 0.0
    %4798 = vmatpush1.msra.mxu0 0.0
    %4799 = vmatprep.subr.mxu0 0.0
    %4800 = vmatpush1.msra.mxu0 0.0
    %4801 = vmatprep.subr.mxu0 0.0
    %4802 = vmatpush1.msra.mxu0 0.0
    %4803 = vmatprep.subr.mxu0 0.0
    %4804 = vmatpush1.msra.mxu0 0.0
    %4805 = vmatprep.subr.mxu0 0.0
    %4806 = vmatpush1.msra.mxu0 0.0
    %4807 = vmatprep.subr.mxu0 0.0
    %4808 = vmatpush1.msra.mxu0 0.0
    %4809 = vmatprep.subr.mxu0 0.0
    %4810 = vmatpush1.msra.mxu0 0.0
    %4811 = vmatprep.subr.mxu0 0.0
    %4812 = vmatpush1.msra.mxu0 0.0
    %4813 = vmatprep.subr.mxu0 0.0
    %4814 = vmatpush1.msra.mxu0 0.0
    %4815 = vmatprep.subr.mxu0 0.0
    %4816 = vmatpush1.msra.mxu0 0.0
    %4817 = vmatprep.subr.mxu0 0.0
    %4818 = vmatpush1.msra.mxu0 0.0
    %4819 = vmatprep.subr.mxu0 0.0
    %4820 = vmatpush1.msra.mxu0 %v4784
    %4821 = vmatprep.subr.mxu0 0.0
    %4822 = vmatpush2.msra.mxu0 0.0
    %4823 = vmatprep.subr.mxu0 0.0
    %4824 = vmatpush2.msra.mxu0 0.0
    %4825 = vmatprep.subr.mxu0 0.0
    %4826 = vmatpush2.msra.mxu0 0.0
    %4827 = vmatprep.subr.mxu0 0.0
    %4828 = vmatpush2.msra.mxu0 0.0
    %4829 = vmatprep.subr.mxu0 0.0
    %4830 = vmatpush2.msra.mxu0 0.0
    %4831 = vmatprep.subr.mxu0 0.0
    %4832 = vmatpush2.msra.mxu0 0.0
    %4833 = vmatprep.subr.mxu0 0.0
    %4834 = vmatpush2.msra.mxu0 0.0
    %4835 = vmatprep.subr.mxu0 0.0
    %4836 = vmatpush2.msra.mxu0 0.0
    %4837 = vmatprep.subr.mxu0 0.0
    %4838 = vmatpush2.msra.mxu0 0.0
    %4839 = vmatprep.subr.mxu0 0.0
    %4840 = vmatpush2.msra.mxu0 0.0
    %4841 = vmatprep.subr.mxu0 0.0
    %4842 = vmatpush2.msra.mxu0 0.0
    %4843 = vmatprep.subr.mxu0 0.0
    %4844 = vmatpush2.msra.mxu0 0.0
    %4845 = vmatprep.subr.mxu0 0.0
    %4846 = vmatpush2.msra.mxu0 0.0
    %4847 = vmatprep.subr.mxu0 0.0
    %4848 = vmatpush2.msra.mxu0 0.0
    %4849 = vmatprep.subr.mxu0 0.0
    %4850 = vmatpush2.msra.mxu0 0.0
    %4851 = vmatprep.subr.mxu0 0.0
    %4852 = vmatpush2.msra.mxu0 0.0
    %4853 = vmatprep.mubr.f32.mxu0 0.0
    %4854 = vmatmul.mubr.f32.gmra.mxu0 %v4787
    %v4855 = vpop.f32.mrf.mxu0
    %v4856 = vadd.f32 0.0, %v4855
    %v4857 = vpop.f32.mrf.mxu0
    %4858 = vdwg.mxu0
    %4859 = vrot.lane.b32.xlu0 %v3937, 48
    %v4860 = vpop.permute.xlu0 %4859
    %v4863 = vsel %vm3943, %v4782, 0
    %4865 = vmatprep.subr.mxu0 0.0
    %4866 = vmatpush1.msra.mxu0 0.0
    %4867 = vmatprep.subr.mxu0 0.0
    %4868 = vmatpush1.msra.mxu0 0.0
    %4869 = vmatprep.subr.mxu0 0.0
    %4870 = vmatpush1.msra.mxu0 0.0
    %4871 = vmatprep.subr.mxu0 0.0
    %4872 = vmatpush1.msra.mxu0 0.0
    %4873 = vmatprep.subr.mxu0 0.0
    %4874 = vmatpush1.msra.mxu0 0.0
    %4875 = vmatprep.subr.mxu0 0.0
    %4876 = vmatpush1.msra.mxu0 0.0
    %4877 = vmatprep.subr.mxu0 0.0
    %4878 = vmatpush1.msra.mxu0 0.0
    %4879 = vmatprep.subr.mxu0 0.0
    %4880 = vmatpush1.msra.mxu0 0.0
    %4881 = vmatprep.subr.mxu0 0.0
    %4882 = vmatpush1.msra.mxu0 0.0
    %4883 = vmatprep.subr.mxu0 0.0
    %4884 = vmatpush1.msra.mxu0 0.0
    %4885 = vmatprep.subr.mxu0 0.0
    %4886 = vmatpush1.msra.mxu0 0.0
    %4887 = vmatprep.subr.mxu0 0.0
    %4888 = vmatpush1.msra.mxu0 0.0
    %4889 = vmatprep.subr.mxu0 0.0
    %4890 = vmatpush1.msra.mxu0 0.0
    %4891 = vmatprep.subr.mxu0 0.0
    %4892 = vmatpush1.msra.mxu0 0.0
    %4893 = vmatprep.subr.mxu0 0.0
    %4894 = vmatpush1.msra.mxu0 0.0
    %4895 = vmatprep.subr.mxu0 0.0
    %4896 = vmatpush1.msra.mxu0 %v4860
    %4897 = vmatprep.subr.mxu0 0.0
    %4898 = vmatpush2.msra.mxu0 0.0
    %4899 = vmatprep.subr.mxu0 0.0
    %4900 = vmatpush2.msra.mxu0 0.0
    %4901 = vmatprep.subr.mxu0 0.0
    %4902 = vmatpush2.msra.mxu0 0.0
    %4903 = vmatprep.subr.mxu0 0.0
    %4904 = vmatpush2.msra.mxu0 0.0
    %4905 = vmatprep.subr.mxu0 0.0
    %4906 = vmatpush2.msra.mxu0 0.0
    %4907 = vmatprep.subr.mxu0 0.0
    %4908 = vmatpush2.msra.mxu0 0.0
    %4909 = vmatprep.subr.mxu0 0.0
    %4910 = vmatpush2.msra.mxu0 0.0
    %4911 = vmatprep.subr.mxu0 0.0
    %4912 = vmatpush2.msra.mxu0 0.0
    %4913 = vmatprep.subr.mxu0 0.0
    %4914 = vmatpush2.msra.mxu0 0.0
    %4915 = vmatprep.subr.mxu0 0.0
    %4916 = vmatpush2.msra.mxu0 0.0
    %4917 = vmatprep.subr.mxu0 0.0
    %4918 = vmatpush2.msra.mxu0 0.0
    %4919 = vmatprep.subr.mxu0 0.0
    %4920 = vmatpush2.msra.mxu0 0.0
    %4921 = vmatprep.subr.mxu0 0.0
    %4922 = vmatpush2.msra.mxu0 0.0
    %4923 = vmatprep.subr.mxu0 0.0
    %4924 = vmatpush2.msra.mxu0 0.0
    %4925 = vmatprep.subr.mxu0 0.0
    %4926 = vmatpush2.msra.mxu0 0.0
    %4927 = vmatprep.subr.mxu0 0.0
    %4928 = vmatpush2.msra.mxu0 0.0
    %4929 = vmatprep.mubr.f32.mxu0 0.0
    %4930 = vmatmul.mubr.f32.gmra.mxu0 %v4863
    %v4931 = vpop.f32.mrf.mxu0
    %v4932 = vadd.f32 0.0, %v4931
    %v4933 = vpop.f32.mrf.mxu0
    %4934 = vdwg.mxu0
    %4935 = vrot.lane.b32.xlu0 %v3932, 104
    %v4936 = vpop.permute.xlu0 %4935
    %4937 = vrot.lane.b32.xlu0 %v3932, 72
    %v4938 = vpop.permute.xlu0 %4937
    %v4939 = vsel %vm3943, %v4936, 0
    %v4941 = vsel %vm3943, %v4938, 0
    %4943 = vmatprep.subr.mxu0 0.0
    %4944 = vmatpush1.xpose.msra.mxu0 0.0
    %4945 = vmatprep.subr.mxu0 0.0
    %4946 = vmatpush1.xpose.msra.mxu0 0.0
    %4947 = vmatprep.subr.mxu0 0.0
    %4948 = vmatpush1.xpose.msra.mxu0 0.0
    %4949 = vmatprep.subr.mxu0 0.0
    %4950 = vmatpush1.xpose.msra.mxu0 0.0
    %4951 = vmatprep.subr.mxu0 0.0
    %4952 = vmatpush1.xpose.msra.mxu0 0.0
    %4953 = vmatprep.subr.mxu0 0.0
    %4954 = vmatpush1.xpose.msra.mxu0 0.0
    %4955 = vmatprep.subr.mxu0 0.0
    %4956 = vmatpush1.xpose.msra.mxu0 0.0
    %4957 = vmatprep.subr.mxu0 0.0
    %4958 = vmatpush1.xpose.msra.mxu0 0.0
    %4959 = vmatprep.subr.mxu0 0.0
    %4960 = vmatpush1.xpose.msra.mxu0 0.0
    %4961 = vmatprep.subr.mxu0 0.0
    %4962 = vmatpush1.xpose.msra.mxu0 0.0
    %4963 = vmatprep.subr.mxu0 0.0
    %4964 = vmatpush1.xpose.msra.mxu0 0.0
    %4965 = vmatprep.subr.mxu0 0.0
    %4966 = vmatpush1.xpose.msra.mxu0 0.0
    %4967 = vmatprep.subr.mxu0 0.0
    %4968 = vmatpush1.xpose.msra.mxu0 0.0
    %4969 = vmatprep.subr.mxu0 0.0
    %4970 = vmatpush1.xpose.msra.mxu0 0.0
    %4971 = vmatprep.subr.mxu0 0.0
    %4972 = vmatpush1.xpose.msra.mxu0 0.0
    %4973 = vmatprep.subr.mxu0 0.0
    %4974 = vmatpush1.xpose.msra.mxu0 %v4941
    %4975 = vmatprep.subr.mxu0 0.0
    %4976 = vmatpush2.xpose.msra.mxu0 0.0
    %4977 = vmatprep.subr.mxu0 0.0
    %4978 = vmatpush2.xpose.msra.mxu0 0.0
    %4979 = vmatprep.subr.mxu0 0.0
    %4980 = vmatpush2.xpose.msra.mxu0 0.0
    %4981 = vmatprep.subr.mxu0 0.0
    %4982 = vmatpush2.xpose.msra.mxu0 0.0
    %4983 = vmatprep.subr.mxu0 0.0
    %4984 = vmatpush2.xpose.msra.mxu0 0.0
    %4985 = vmatprep.subr.mxu0 0.0
    %4986 = vmatpush2.xpose.msra.mxu0 0.0
    %4987 = vmatprep.subr.mxu0 0.0
    %4988 = vmatpush2.xpose.msra.mxu0 0.0
    %4989 = vmatprep.subr.mxu0 0.0
    %4990 = vmatpush2.xpose.msra.mxu0 0.0
    %4991 = vmatprep.subr.mxu0 0.0
    %4992 = vmatpush2.xpose.msra.mxu0 0.0
    %4993 = vmatprep.subr.mxu0 0.0
    %4994 = vmatpush2.xpose.msra.mxu0 0.0
    %4995 = vmatprep.subr.mxu0 0.0
    %4996 = vmatpush2.xpose.msra.mxu0 0.0
    %4997 = vmatprep.subr.mxu0 0.0
    %4998 = vmatpush2.xpose.msra.mxu0 0.0
    %4999 = vmatprep.subr.mxu0 0.0
    %5000 = vmatpush2.xpose.msra.mxu0 0.0
    %5001 = vmatprep.subr.mxu0 0.0
    %5002 = vmatpush2.xpose.msra.mxu0 0.0
    %5003 = vmatprep.subr.mxu0 0.0
    %5004 = vmatpush2.xpose.msra.mxu0 0.0
    %5005 = vmatprep.subr.mxu0 0.0
    %5006 = vmatpush2.xpose.msra.mxu0 0.0
    %5007 = vmatprep.mubr.f32.mxu0 0.0
    %5008 = vmatmul.mubr.f32.gmra.mxu0 %v4939
    %v5009 = vpop.f32.mrf.mxu0
    %v5010 = vadd.f32 0.0, %v5009
    %v5011 = vpop.f32.mrf.mxu0
    %5012 = vdwg.mxu0
    %5013 = vrot.lane.b32.xlu0 %v3937, 104
    %v5014 = vpop.permute.xlu0 %5013
    %5015 = vrot.lane.b32.xlu0 %v3937, 72
    %v5016 = vpop.permute.xlu0 %5015
    %v5017 = vsel %vm3943, %v5014, 0
    %v5019 = vsel %vm3943, %v5016, 0
    %5021 = vmatprep.subr.mxu0 0.0
    %5022 = vmatpush1.xpose.msra.mxu0 0.0
    %5023 = vmatprep.subr.mxu0 0.0
    %5024 = vmatpush1.xpose.msra.mxu0 0.0
    %5025 = vmatprep.subr.mxu0 0.0
    %5026 = vmatpush1.xpose.msra.mxu0 0.0
    %5027 = vmatprep.subr.mxu0 0.0
    %5028 = vmatpush1.xpose.msra.mxu0 0.0
    %5029 = vmatprep.subr.mxu0 0.0
    %5030 = vmatpush1.xpose.msra.mxu0 0.0
    %5031 = vmatprep.subr.mxu0 0.0
    %5032 = vmatpush1.xpose.msra.mxu0 0.0
    %5033 = vmatprep.subr.mxu0 0.0
    %5034 = vmatpush1.xpose.msra.mxu0 0.0
    %5035 = vmatprep.subr.mxu0 0.0
    %5036 = vmatpush1.xpose.msra.mxu0 0.0
    %5037 = vmatprep.subr.mxu0 0.0
    %5038 = vmatpush1.xpose.msra.mxu0 0.0
    %5039 = vmatprep.subr.mxu0 0.0
    %5040 = vmatpush1.xpose.msra.mxu0 0.0
    %5041 = vmatprep.subr.mxu0 0.0
    %5042 = vmatpush1.xpose.msra.mxu0 0.0
    %5043 = vmatprep.subr.mxu0 0.0
    %5044 = vmatpush1.xpose.msra.mxu0 0.0
    %5045 = vmatprep.subr.mxu0 0.0
    %5046 = vmatpush1.xpose.msra.mxu0 0.0
    %5047 = vmatprep.subr.mxu0 0.0
    %5048 = vmatpush1.xpose.msra.mxu0 0.0
    %5049 = vmatprep.subr.mxu0 0.0
    %5050 = vmatpush1.xpose.msra.mxu0 0.0
    %5051 = vmatprep.subr.mxu0 0.0
    %5052 = vmatpush1.xpose.msra.mxu0 %v5019
    %5053 = vmatprep.subr.mxu0 0.0
    %5054 = vmatpush2.xpose.msra.mxu0 0.0
    %5055 = vmatprep.subr.mxu0 0.0
    %5056 = vmatpush2.xpose.msra.mxu0 0.0
    %5057 = vmatprep.subr.mxu0 0.0
    %5058 = vmatpush2.xpose.msra.mxu0 0.0
    %5059 = vmatprep.subr.mxu0 0.0
    %5060 = vmatpush2.xpose.msra.mxu0 0.0
    %5061 = vmatprep.subr.mxu0 0.0
    %5062 = vmatpush2.xpose.msra.mxu0 0.0
    %5063 = vmatprep.subr.mxu0 0.0
    %5064 = vmatpush2.xpose.msra.mxu0 0.0
    %5065 = vmatprep.subr.mxu0 0.0
    %5066 = vmatpush2.xpose.msra.mxu0 0.0
    %5067 = vmatprep.subr.mxu0 0.0
    %5068 = vmatpush2.xpose.msra.mxu0 0.0
    %5069 = vmatprep.subr.mxu0 0.0
    %5070 = vmatpush2.xpose.msra.mxu0 0.0
    %5071 = vmatprep.subr.mxu0 0.0
    %5072 = vmatpush2.xpose.msra.mxu0 0.0
    %5073 = vmatprep.subr.mxu0 0.0
    %5074 = vmatpush2.xpose.msra.mxu0 0.0
    %5075 = vmatprep.subr.mxu0 0.0
    %5076 = vmatpush2.xpose.msra.mxu0 0.0
    %5077 = vmatprep.subr.mxu0 0.0
    %5078 = vmatpush2.xpose.msra.mxu0 0.0
    %5079 = vmatprep.subr.mxu0 0.0
    %5080 = vmatpush2.xpose.msra.mxu0 0.0
    %5081 = vmatprep.subr.mxu0 0.0
    %5082 = vmatpush2.xpose.msra.mxu0 0.0
    %5083 = vmatprep.subr.mxu0 0.0
    %5084 = vmatpush2.xpose.msra.mxu0 0.0
    %5085 = vmatprep.mubr.f32.mxu0 0.0
    %5086 = vmatmul.mubr.f32.gmra.mxu0 %v5017
    %v5087 = vpop.f32.mrf.mxu0
    %v5088 = vadd.f32 0.0, %v5087
    %v5089 = vpop.f32.mrf.mxu0
    %5090 = vdwg.mxu0
    %v5091 = vmul.f32 %v5010, 0.35355338
    %v5092 = vmul.f32 %v5088, 0.35355338
    %v5093 = vsel %vm3943, %v5091, -inf
    %5094 = vmax.xlane.f32.xlu0 %v5093
    %v5095 = vpop.xlane.xlu0 %5094
    %v5096 = vsel %vm3943, %v5092, -inf
    %5097 = vmax.xlane.f32.xlu0 %v5096
    %v5098 = vpop.xlane.xlu0 %5097
    %v5099 = vsub.f32 %v5091, %v5095
    %v5100 = vsub.f32 %v5092, %v5098
    %v5101 = vmul.f32 %v5099, 1.442695
    %v5102 = vpow.pop %v5101
    %v5103 = vmul.f32 %v5100, 1.442695
    %v5104 = vpow.pop %v5103
    %v5105 = vsel %vm3943, %v5102, 0.0
    %5106 = vadd.xlane.f32.xlu0 %v5105
    %v5107 = vpop.xlane.xlu0 %5106
    %v5108 = vsel %vm3943, %v5104, 0.0
    %5109 = vadd.xlane.f32.xlu0 %v5108
    %v5110 = vpop.xlane.xlu0 %5109
    %v5111 = vrcp.pop %v5107
    %v5112 = vrcp.pop %v5110
    %v5113 = vmul.f32 %v5102, %v5111
    %v5114 = vmul.f32 %v5104, %v5112
    %5115 = vrot.lane.b32.xlu0 %v3932, 40
    %v5116 = vpop.permute.xlu0 %5115
    %v5119 = vsel %vm3943, %v5113, 0
    %5121 = vmatprep.subr.mxu0 0.0
    %5122 = vmatpush1.msra.mxu0 0.0
    %5123 = vmatprep.subr.mxu0 0.0
    %5124 = vmatpush1.msra.mxu0 0.0
    %5125 = vmatprep.subr.mxu0 0.0
    %5126 = vmatpush1.msra.mxu0 0.0
    %5127 = vmatprep.subr.mxu0 0.0
    %5128 = vmatpush1.msra.mxu0 0.0
    %5129 = vmatprep.subr.mxu0 0.0
    %5130 = vmatpush1.msra.mxu0 0.0
    %5131 = vmatprep.subr.mxu0 0.0
    %5132 = vmatpush1.msra.mxu0 0.0
    %5133 = vmatprep.subr.mxu0 0.0
    %5134 = vmatpush1.msra.mxu0 0.0
    %5135 = vmatprep.subr.mxu0 0.0
    %5136 = vmatpush1.msra.mxu0 0.0
    %5137 = vmatprep.subr.mxu0 0.0
    %5138 = vmatpush1.msra.mxu0 0.0
    %5139 = vmatprep.subr.mxu0 0.0
    %5140 = vmatpush1.msra.mxu0 0.0
    %5141 = vmatprep.subr.mxu0 0.0
    %5142 = vmatpush1.msra.mxu0 0.0
    %5143 = vmatprep.subr.mxu0 0.0
    %5144 = vmatpush1.msra.mxu0 0.0
    %5145 = vmatprep.subr.mxu0 0.0
    %5146 = vmatpush1.msra.mxu0 0.0
    %5147 = vmatprep.subr.mxu0 0.0
    %5148 = vmatpush1.msra.mxu0 0.0
    %5149 = vmatprep.subr.mxu0 0.0
    %5150 = vmatpush1.msra.mxu0 0.0
    %5151 = vmatprep.subr.mxu0 0.0
    %5152 = vmatpush1.msra.mxu0 %v5116
    %5153 = vmatprep.subr.mxu0 0.0
    %5154 = vmatpush2.msra.mxu0 0.0
    %5155 = vmatprep.subr.mxu0 0.0
    %5156 = vmatpush2.msra.mxu0 0.0
    %5157 = vmatprep.subr.mxu0 0.0
    %5158 = vmatpush2.msra.mxu0 0.0
    %5159 = vmatprep.subr.mxu0 0.0
    %5160 = vmatpush2.msra.mxu0 0.0
    %5161 = vmatprep.subr.mxu0 0.0
    %5162 = vmatpush2.msra.mxu0 0.0
    %5163 = vmatprep.subr.mxu0 0.0
    %5164 = vmatpush2.msra.mxu0 0.0
    %5165 = vmatprep.subr.mxu0 0.0
    %5166 = vmatpush2.msra.mxu0 0.0
    %5167 = vmatprep.subr.mxu0 0.0
    %5168 = vmatpush2.msra.mxu0 0.0
    %5169 = vmatprep.subr.mxu0 0.0
    %5170 = vmatpush2.msra.mxu0 0.0
    %5171 = vmatprep.subr.mxu0 0.0
    %5172 = vmatpush2.msra.mxu0 0.0
    %5173 = vmatprep.subr.mxu0 0.0
    %5174 = vmatpush2.msra.mxu0 0.0
    %5175 = vmatprep.subr.mxu0 0.0
    %5176 = vmatpush2.msra.mxu0 0.0
    %5177 = vmatprep.subr.mxu0 0.0
    %5178 = vmatpush2.msra.mxu0 0.0
    %5179 = vmatprep.subr.mxu0 0.0
    %5180 = vmatpush2.msra.mxu0 0.0
    %5181 = vmatprep.subr.mxu0 0.0
    %5182 = vmatpush2.msra.mxu0 0.0
    %5183 = vmatprep.subr.mxu0 0.0
    %5184 = vmatpush2.msra.mxu0 0.0
    %5185 = vmatprep.mubr.f32.mxu0 0.0
    %5186 = vmatmul.mubr.f32.gmra.mxu0 %v5119
    %v5187 = vpop.f32.mrf.mxu0
    %v5188 = vadd.f32 0.0, %v5187
    %v5189 = vpop.f32.mrf.mxu0
    %5190 = vdwg.mxu0
    %5191 = vrot.lane.b32.xlu0 %v3937, 40
    %v5192 = vpop.permute.xlu0 %5191
    %v5195 = vsel %vm3943, %v5114, 0
    %5197 = vmatprep.subr.mxu0 0.0
    %5198 = vmatpush1.msra.mxu0 0.0
    %5199 = vmatprep.subr.mxu0 0.0
    %5200 = vmatpush1.msra.mxu0 0.0
    %5201 = vmatprep.subr.mxu0 0.0
    %5202 = vmatpush1.msra.mxu0 0.0
    %5203 = vmatprep.subr.mxu0 0.0
    %5204 = vmatpush1.msra.mxu0 0.0
    %5205 = vmatprep.subr.mxu0 0.0
    %5206 = vmatpush1.msra.mxu0 0.0
    %5207 = vmatprep.subr.mxu0 0.0
    %5208 = vmatpush1.msra.mxu0 0.0
    %5209 = vmatprep.subr.mxu0 0.0
    %5210 = vmatpush1.msra.mxu0 0.0
    %5211 = vmatprep.subr.mxu0 0.0
    %5212 = vmatpush1.msra.mxu0 0.0
    %5213 = vmatprep.subr.mxu0 0.0
    %5214 = vmatpush1.msra.mxu0 0.0
    %5215 = vmatprep.subr.mxu0 0.0
    %5216 = vmatpush1.msra.mxu0 0.0
    %5217 = vmatprep.subr.mxu0 0.0
    %5218 = vmatpush1.msra.mxu0 0.0
    %5219 = vmatprep.subr.mxu0 0.0
    %5220 = vmatpush1.msra.mxu0 0.0
    %5221 = vmatprep.subr.mxu0 0.0
    %5222 = vmatpush1.msra.mxu0 0.0
    %5223 = vmatprep.subr.mxu0 0.0
    %5224 = vmatpush1.msra.mxu0 0.0
    %5225 = vmatprep.subr.mxu0 0.0
    %5226 = vmatpush1.msra.mxu0 0.0
    %5227 = vmatprep.subr.mxu0 0.0
    %5228 = vmatpush1.msra.mxu0 %v5192
    %5229 = vmatprep.subr.mxu0 0.0
    %5230 = vmatpush2.msra.mxu0 0.0
    %5231 = vmatprep.subr.mxu0 0.0
    %5232 = vmatpush2.msra.mxu0 0.0
    %5233 = vmatprep.subr.mxu0 0.0
    %5234 = vmatpush2.msra.mxu0 0.0
    %5235 = vmatprep.subr.mxu0 0.0
    %5236 = vmatpush2.msra.mxu0 0.0
    %5237 = vmatprep.subr.mxu0 0.0
    %5238 = vmatpush2.msra.mxu0 0.0
    %5239 = vmatprep.subr.mxu0 0.0
    %5240 = vmatpush2.msra.mxu0 0.0
    %5241 = vmatprep.subr.mxu0 0.0
    %5242 = vmatpush2.msra.mxu0 0.0
    %5243 = vmatprep.subr.mxu0 0.0
    %5244 = vmatpush2.msra.mxu0 0.0
    %5245 = vmatprep.subr.mxu0 0.0
    %5246 = vmatpush2.msra.mxu0 0.0
    %5247 = vmatprep.subr.mxu0 0.0
    %5248 = vmatpush2.msra.mxu0 0.0
    %5249 = vmatprep.subr.mxu0 0.0
    %5250 = vmatpush2.msra.mxu0 0.0
    %5251 = vmatprep.subr.mxu0 0.0
    %5252 = vmatpush2.msra.mxu0 0.0
    %5253 = vmatprep.subr.mxu0 0.0
    %5254 = vmatpush2.msra.mxu0 0.0
    %5255 = vmatprep.subr.mxu0 0.0
    %5256 = vmatpush2.msra.mxu0 0.0
    %5257 = vmatprep.subr.mxu0 0.0
    %5258 = vmatpush2.msra.mxu0 0.0
    %5259 = vmatprep.subr.mxu0 0.0
    %5260 = vmatpush2.msra.mxu0 0.0
    %5261 = vmatprep.mubr.f32.mxu0 0.0
    %5262 = vmatmul.mubr.f32.gmra.mxu0 %v5195
    %v5263 = vpop.f32.mrf.mxu0
    %v5264 = vadd.f32 0.0, %v5263
    %v5265 = vpop.f32.mrf.mxu0
    %5266 = vdwg.mxu0
    %5269 = vrot.lane.b32.xlu0 %v4524, 8
    %v5270 = vpop.permute.xlu0 %5269
    %5271 = vrot.lane.b32.xlu0 %v4600, 8
    %v5272 = vpop.permute.xlu0 %5271
    %5277 = vrot.lane.b32.xlu0 %v4856, 16
    %v5278 = vpop.permute.xlu0 %5277
    %5279 = vrot.lane.b32.xlu0 %v4932, 16
    %v5280 = vpop.permute.xlu0 %5279
    %5285 = vrot.lane.b32.xlu0 %v5188, 24
    %v5286 = vpop.permute.xlu0 %5285
    %5287 = vrot.lane.b32.xlu0 %v5264, 24
    %v5288 = vpop.permute.xlu0 %5287
    %v5291 = vsel %vm3943, %v4192, %v5270
    %v5292 = vsel %vm3943, %v4268, %v5272
    %v5293 = vsel %vm1412, %v5291, %v5278
    %v5294 = vsel %vm1412, %v5292, %v5280
    %vm5295 = vcmask 195584
    %v5296 = vsel %vm5295, %v5293, %v5286
    %v5297 = vsel %vm5295, %v5294, %v5288
    %v5298 = vld [vmem:[%s14] sm:$0xff]
    %v5299 = vld [vmem:[%s14 + $0x8] sm:$0xff]
    %v5300 = vld [vmem:[%s14 + $0x10] sm:$0xff]
    %v5301 = vld [vmem:[%s14 + $0x18] sm:$0xff]
    %v5302 = vld [vmem:[%s15] sm:$0x1]
    %v5304 = vlaneseq
    %v5305 = vshrl.u32 %v5304, 7
    %v5306 = vsub.s32 0, %v5305
    %v5307 = vrot.slane %v5302, %v5306
    %v5310 = vsel %vm3762, %v5296, 0
    %v5313 = vsel %vm3762, %v5297, 0
    %5315 = vmatprep.subr.mxu0 0.0
    %5316 = vmatpush1.msra.mxu0 0.0
    %5317 = vmatprep.subr.mxu0 0.0
    %5318 = vmatpush1.msra.mxu0 0.0
    %5319 = vmatprep.subr.mxu0 0.0
    %5320 = vmatpush1.msra.mxu0 0.0
    %5321 = vmatprep.subr.mxu0 0.0
    %5322 = vmatpush1.msra.mxu0 0.0
    %5323 = vmatprep.subr.mxu0 0.0
    %5324 = vmatpush1.msra.mxu0 0.0
    %5325 = vmatprep.subr.mxu0 0.0
    %5326 = vmatpush1.msra.mxu0 0.0
    %5327 = vmatprep.subr.mxu0 0.0
    %5328 = vmatpush1.msra.mxu0 0.0
    %5329 = vmatprep.subr.mxu0 0.0
    %5330 = vmatpush1.msra.mxu0 0.0
    %5331 = vmatprep.subr.mxu0 0.0
    %5332 = vmatpush1.msra.mxu0 0.0
    %5333 = vmatprep.subr.mxu0 0.0
    %5334 = vmatpush1.msra.mxu0 0.0
    %5335 = vmatprep.subr.mxu0 0.0
    %5336 = vmatpush1.msra.mxu0 0.0
    %5337 = vmatprep.subr.mxu0 0.0
    %5338 = vmatpush1.msra.mxu0 0.0
    %5339 = vmatprep.subr.mxu0 0.0
    %5340 = vmatpush1.msra.mxu0 %v5301
    %5341 = vmatprep.subr.mxu0 0.0
    %5342 = vmatpush1.msra.mxu0 %v5300
    %5343 = vmatprep.subr.mxu0 0.0
    %5344 = vmatpush1.msra.mxu0 %v5299
    %5345 = vmatprep.subr.mxu0 0.0
    %5346 = vmatpush1.msra.mxu0 %v5298
    %5347 = vmatprep.subr.mxu0 0.0
    %5348 = vmatpush2.msra.mxu0 0.0
    %5349 = vmatprep.subr.mxu0 0.0
    %5350 = vmatpush2.msra.mxu0 0.0
    %5351 = vmatprep.subr.mxu0 0.0
    %5352 = vmatpush2.msra.mxu0 0.0
    %5353 = vmatprep.subr.mxu0 0.0
    %5354 = vmatpush2.msra.mxu0 0.0
    %5355 = vmatprep.subr.mxu0 0.0
    %5356 = vmatpush2.msra.mxu0 0.0
    %5357 = vmatprep.subr.mxu0 0.0
    %5358 = vmatpush2.msra.mxu0 0.0
    %5359 = vmatprep.subr.mxu0 0.0
    %5360 = vmatpush2.msra.mxu0 0.0
    %5361 = vmatprep.subr.mxu0 0.0
    %5362 = vmatpush2.msra.mxu0 0.0
    %5363 = vmatprep.subr.mxu0 0.0
    %5364 = vmatpush2.msra.mxu0 0.0
    %5365 = vmatprep.subr.mxu0 0.0
    %5366 = vmatpush2.msra.mxu0 0.0
    %5367 = vmatprep.subr.mxu0 0.0
    %5368 = vmatpush2.msra.mxu0 0.0
    %5369 = vmatprep.subr.mxu0 0.0
    %5370 = vmatpush2.msra.mxu0 0.0
    %5371 = vmatprep.subr.mxu0 0.0
    %5372 = vmatpush2.msra.mxu0 0.0
    %5373 = vmatprep.subr.mxu0 0.0
    %5374 = vmatpush2.msra.mxu0 0.0
    %5375 = vmatprep.subr.mxu0 0.0
    %5376 = vmatpush2.msra.mxu0 0.0
    %5377 = vmatprep.subr.mxu0 0.0
    %5378 = vmatpush2.msra.mxu0 0.0
    %5379 = vmatprep.mubr.f32.mxu0 0.0
    %5380 = vmatmul.mubr.f32.gmra.mxu0 %v5310
    %v5381 = vpop.f32.mrf.mxu0
    %v5382 = vadd.f32 %v5307, %v5381
    %v5383 = vpop.f32.mrf.mxu0
    %5384 = vmatprep.mubr.f32.mxu0 0.0
    %5385 = vmatmul.mubr.f32.gmra.mxu0 %v5313
    %v5386 = vpop.f32.mrf.mxu0
    %v5387 = vadd.f32 %v5307, %v5386
    %v5388 = vpop.f32.mrf.mxu0
    %5389 = vdwg.mxu0
    %v5390 = vadd.f32 %v3846, %v5382
    %v5391 = vadd.f32 %v3847, %v5387
    %v5392 = vsel %vm3762, %v5390, 0.0
    %5393 = vadd.xlane.f32.xlu0 %v5392
    %v5394 = vpop.xlane.xlu0 %5393
    %v5395 = vsel %vm3762, %v5391, 0.0
    %5396 = vadd.xlane.f32.xlu0 %v5395
    %v5397 = vpop.xlane.xlu0 %5396
    %v5398 = vrcp.pop 32.0
    %v5399 = vmul.f32 %v5394, %v5398
    %v5400 = vmul.f32 %v5397, %v5398
    %v5401 = vsub.f32 %v5390, %v5399
    %v5402 = vsub.f32 %v5391, %v5400
    %v5403 = vmul.f32 %v5401, %v5401
    %v5404 = vmul.f32 %v5402, %v5402
    %v5405 = vsel %vm3762, %v5403, 0.0
    %5406 = vadd.xlane.f32.xlu0 %v5405
    %v5407 = vpop.xlane.xlu0 %5406
    %v5408 = vsel %vm3762, %v5404, 0.0
    %5409 = vadd.xlane.f32.xlu0 %v5408
    %v5410 = vpop.xlane.xlu0 %5409
    %v5411 = vmul.f32 %v5407, %v5398
    %v5412 = vmul.f32 %v5410, %v5398
    %v5413 = vadd.f32 %v5411, 1e-05
    %v5414 = vadd.f32 %v5412, 1e-05
    %v5415 = vrsqrt.pop %v5413
    %v5416 = vrsqrt.pop %v5414
    %v5417 = vmul.f32 %v5401, %v5415
    %v5418 = vmul.f32 %v5402, %v5416
    %v5419 = vld [vmem:[%s20] sm:$0x1]
    %v5421 = vlaneseq
    %v5422 = vshrl.u32 %v5421, 7
    %v5423 = vsub.s32 0, %v5422
    %v5424 = vrot.slane %v5419, %v5423
    %v5426 = vmul.f32 %v5417, %v5424
    %v5427 = vmul.f32 %v5418, %v5424
    %v5428 = vld [vmem:[%s21] sm:$0x1]
    %v5430 = vlaneseq
    %v5431 = vshrl.u32 %v5430, 7
    %v5432 = vsub.s32 0, %v5431
    %v5433 = vrot.slane %v5428, %v5432
    %v5435 = vadd.f32 %v5426, %v5433
    %v5436 = vadd.f32 %v5427, %v5433
    %v5437 = vld [vmem:[%s16] sm:$0xff]
    %v5438 = vld [vmem:[%s16 + $0x8] sm:$0xff]
    %v5439 = vld [vmem:[%s16 + $0x10] sm:$0xff]
    %v5440 = vld [vmem:[%s16 + $0x18] sm:$0xff]
    %v5441 = vld [vmem:[%s17] sm:$0x1]
    %v5443 = vlaneseq
    %v5444 = vshrl.u32 %v5443, 7
    %v5445 = vsub.s32 0, %v5444
    %v5446 = vrot.slane %v5441, %v5445
    %v5449 = vsel %vm3762, %v5435, 0
    %v5452 = vsel %vm3762, %v5436, 0
    %5454 = vmatprep.subr.mxu0 0.0
    %5455 = vmatpush1.msra.mxu0 0.0
    %5456 = vmatprep.subr.mxu0 0.0
    %5457 = vmatpush1.msra.mxu0 0.0
    %5458 = vmatprep.subr.mxu0 0.0
    %5459 = vmatpush1.msra.mxu0 0.0
    %5460 = vmatprep.subr.mxu0 0.0
    %5461 = vmatpush1.msra.mxu0 0.0
    %5462 = vmatprep.subr.mxu0 0.0
    %5463 = vmatpush1.msra.mxu0 0.0
    %5464 = vmatprep.subr.mxu0 0.0
    %5465 = vmatpush1.msra.mxu0 0.0
    %5466 = vmatprep.subr.mxu0 0.0
    %5467 = vmatpush1.msra.mxu0 0.0
    %5468 = vmatprep.subr.mxu0 0.0
    %5469 = vmatpush1.msra.mxu0 0.0
    %5470 = vmatprep.subr.mxu0 0.0
    %5471 = vmatpush1.msra.mxu0 0.0
    %5472 = vmatprep.subr.mxu0 0.0
    %5473 = vmatpush1.msra.mxu0 0.0
    %5474 = vmatprep.subr.mxu0 0.0
    %5475 = vmatpush1.msra.mxu0 0.0
    %5476 = vmatprep.subr.mxu0 0.0
    %5477 = vmatpush1.msra.mxu0 0.0
    %5478 = vmatprep.subr.mxu0 0.0
    %5479 = vmatpush1.msra.mxu0 %v5440
    %5480 = vmatprep.subr.mxu0 0.0
    %5481 = vmatpush1.msra.mxu0 %v5439
    %5482 = vmatprep.subr.mxu0 0.0
    %5483 = vmatpush1.msra.mxu0 %v5438
    %5484 = vmatprep.subr.mxu0 0.0
    %5485 = vmatpush1.msra.mxu0 %v5437
    %5486 = vmatprep.subr.mxu0 0.0
    %5487 = vmatpush2.msra.mxu0 0.0
    %5488 = vmatprep.subr.mxu0 0.0
    %5489 = vmatpush2.msra.mxu0 0.0
    %5490 = vmatprep.subr.mxu0 0.0
    %5491 = vmatpush2.msra.mxu0 0.0
    %5492 = vmatprep.subr.mxu0 0.0
    %5493 = vmatpush2.msra.mxu0 0.0
    %5494 = vmatprep.subr.mxu0 0.0
    %5495 = vmatpush2.msra.mxu0 0.0
    %5496 = vmatprep.subr.mxu0 0.0
    %5497 = vmatpush2.msra.mxu0 0.0
    %5498 = vmatprep.subr.mxu0 0.0
    %5499 = vmatpush2.msra.mxu0 0.0
    %5500 = vmatprep.subr.mxu0 0.0
    %5501 = vmatpush2.msra.mxu0 0.0
    %5502 = vmatprep.subr.mxu0 0.0
    %5503 = vmatpush2.msra.mxu0 0.0
    %5504 = vmatprep.subr.mxu0 0.0
    %5505 = vmatpush2.msra.mxu0 0.0
    %5506 = vmatprep.subr.mxu0 0.0
    %5507 = vmatpush2.msra.mxu0 0.0
    %5508 = vmatprep.subr.mxu0 0.0
    %5509 = vmatpush2.msra.mxu0 0.0
    %5510 = vmatprep.subr.mxu0 0.0
    %5511 = vmatpush2.msra.mxu0 0.0
    %5512 = vmatprep.subr.mxu0 0.0
    %5513 = vmatpush2.msra.mxu0 0.0
    %5514 = vmatprep.subr.mxu0 0.0
    %5515 = vmatpush2.msra.mxu0 0.0
    %5516 = vmatprep.subr.mxu0 0.0
    %5517 = vmatpush2.msra.mxu0 0.0
    %5518 = vmatprep.mubr.f32.mxu0 0.0
    %5519 = vmatmul.mubr.f32.gmra.mxu0 %v5449
    %v5520 = vpop.f32.mrf.mxu0
    %v5521 = vadd.f32 %v5446, %v5520
    %v5522 = vpop.f32.mrf.mxu0
    %5523 = vmatprep.mubr.f32.mxu0 0.0
    %5524 = vmatmul.mubr.f32.gmra.mxu0 %v5452
    %v5525 = vpop.f32.mrf.mxu0
    %v5526 = vadd.f32 %v5446, %v5525
    %v5527 = vpop.f32.mrf.mxu0
    %5528 = vdwg.mxu0
    %v5529 = vmax.f32 %v5521, 0.0
    %v5530 = vmax.f32 %v5526, 0.0
    %v5531 = vld [vmem:[%s18] sm:$0xff]
    %v5532 = vld [vmem:[%s18 + $0x8] sm:$0xff]
    %v5533 = vld [vmem:[%s18 + $0x10] sm:$0xff]
    %v5534 = vld [vmem:[%s18 + $0x18] sm:$0xff]
    %v5535 = vld [vmem:[%s18 + $0x20] sm:$0xff]
    %v5536 = vld [vmem:[%s18 + $0x28] sm:$0xff]
    %v5537 = vld [vmem:[%s18 + $0x30] sm:$0xff]
    %v5538 = vld [vmem:[%s18 + $0x38] sm:$0xff]
    %v5539 = vld [vmem:[%s19] sm:$0x1]
    %v5541 = vlaneseq
    %v5542 = vshrl.u32 %v5541, 7
    %v5543 = vsub.s32 0, %v5542
    %v5544 = vrot.slane %v5539, %v5543
    %vm5546 = vcmask 523264
    %v5548 = vsel %vm5546, %v5529, 0
    %v5551 = vsel %vm5546, %v5530, 0
    %5553 = vmatprep.subr.mxu0 0.0
    %5554 = vmatpush1.msra.mxu0 0.0
    %5555 = vmatprep.subr.mxu0 0.0
    %5556 = vmatpush1.msra.mxu0 0.0
    %5557 = vmatprep.subr.mxu0 0.0
    %5558 = vmatpush1.msra.mxu0 0.0
    %5559 = vmatprep.subr.mxu0 0.0
    %5560 = vmatpush1.msra.mxu0 0.0
    %5561 = vmatprep.subr.mxu0 0.0
    %5562 = vmatpush1.msra.mxu0 0.0
    %5563 = vmatprep.subr.mxu0 0.0
    %5564 = vmatpush1.msra.mxu0 0.0
    %5565 = vmatprep.subr.mxu0 0.0
    %5566 = vmatpush1.msra.mxu0 0.0
    %5567 = vmatprep.subr.mxu0 0.0
    %5568 = vmatpush1.msra.mxu0 0.0
    %5569 = vmatprep.subr.mxu0 0.0
    %5570 = vmatpush1.msra.mxu0 %v5538
    %5571 = vmatprep.subr.mxu0 0.0
    %5572 = vmatpush1.msra.mxu0 %v5537
    %5573 = vmatprep.subr.mxu0 0.0
    %5574 = vmatpush1.msra.mxu0 %v5536
    %5575 = vmatprep.subr.mxu0 0.0
    %5576 = vmatpush1.msra.mxu0 %v5535
    %5577 = vmatprep.subr.mxu0 0.0
    %5578 = vmatpush1.msra.mxu0 %v5534
    %5579 = vmatprep.subr.mxu0 0.0
    %5580 = vmatpush1.msra.mxu0 %v5533
    %5581 = vmatprep.subr.mxu0 0.0
    %5582 = vmatpush1.msra.mxu0 %v5532
    %5583 = vmatprep.subr.mxu0 0.0
    %5584 = vmatpush1.msra.mxu0 %v5531
    %5585 = vmatprep.subr.mxu0 0.0
    %5586 = vmatpush2.msra.mxu0 0.0
    %5587 = vmatprep.subr.mxu0 0.0
    %5588 = vmatpush2.msra.mxu0 0.0
    %5589 = vmatprep.subr.mxu0 0.0
    %5590 = vmatpush2.msra.mxu0 0.0
    %5591 = vmatprep.subr.mxu0 0.0
    %5592 = vmatpush2.msra.mxu0 0.0
    %5593 = vmatprep.subr.mxu0 0.0
    %5594 = vmatpush2.msra.mxu0 0.0
    %5595 = vmatprep.subr.mxu0 0.0
    %5596 = vmatpush2.msra.mxu0 0.0
    %5597 = vmatprep.subr.mxu0 0.0
    %5598 = vmatpush2.msra.mxu0 0.0
    %5599 = vmatprep.subr.mxu0 0.0
    %5600 = vmatpush2.msra.mxu0 0.0
    %5601 = vmatprep.subr.mxu0 0.0
    %5602 = vmatpush2.msra.mxu0 0.0
    %5603 = vmatprep.subr.mxu0 0.0
    %5604 = vmatpush2.msra.mxu0 0.0
    %5605 = vmatprep.subr.mxu0 0.0
    %5606 = vmatpush2.msra.mxu0 0.0
    %5607 = vmatprep.subr.mxu0 0.0
    %5608 = vmatpush2.msra.mxu0 0.0
    %5609 = vmatprep.subr.mxu0 0.0
    %5610 = vmatpush2.msra.mxu0 0.0
    %5611 = vmatprep.subr.mxu0 0.0
    %5612 = vmatpush2.msra.mxu0 0.0
    %5613 = vmatprep.subr.mxu0 0.0
    %5614 = vmatpush2.msra.mxu0 0.0
    %5615 = vmatprep.subr.mxu0 0.0
    %5616 = vmatpush2.msra.mxu0 0.0
    %5617 = vmatprep.mubr.f32.mxu0 0.0
    %5618 = vmatmul.mubr.f32.gmra.mxu0 %v5548
    %v5619 = vpop.f32.mrf.mxu0
    %v5620 = vadd.f32 %v5544, %v5619
    %v5621 = vpop.f32.mrf.mxu0
    %5622 = vmatprep.mubr.f32.mxu0 0.0
    %5623 = vmatmul.mubr.f32.gmra.mxu0 %v5551
    %v5624 = vpop.f32.mrf.mxu0
    %v5625 = vadd.f32 %v5544, %v5624
    %v5626 = vpop.f32.mrf.mxu0
    %5627 = vdwg.mxu0
    %v5628 = vadd.f32 %v5435, %v5620
    %v5629 = vadd.f32 %v5436, %v5625
    %v5630 = vsel %vm3762, %v5628, 0.0
    %5631 = vadd.xlane.f32.xlu0 %v5630
    %v5632 = vpop.xlane.xlu0 %5631
    %v5633 = vsel %vm3762, %v5629, 0.0
    %5634 = vadd.xlane.f32.xlu0 %v5633
    %v5635 = vpop.xlane.xlu0 %5634
    %v5636 = vmul.f32 %v5632, %v5398
    %v5637 = vmul.f32 %v5635, %v5398
    %v5638 = vsub.f32 %v5628, %v5636
    %v5639 = vsub.f32 %v5629, %v5637
    %v5640 = vmul.f32 %v5638, %v5638
    %v5641 = vmul.f32 %v5639, %v5639
    %v5642 = vsel %vm3762, %v5640, 0.0
    %5643 = vadd.xlane.f32.xlu0 %v5642
    %v5644 = vpop.xlane.xlu0 %5643
    %v5645 = vsel %vm3762, %v5641, 0.0
    %5646 = vadd.xlane.f32.xlu0 %v5645
    %v5647 = vpop.xlane.xlu0 %5646
    %v5648 = vmul.f32 %v5644, %v5398
    %v5649 = vmul.f32 %v5647, %v5398
    %v5650 = vadd.f32 %v5648, 1e-05
    %v5651 = vadd.f32 %v5649, 1e-05
    %v5652 = vrsqrt.pop %v5650
    %v5653 = vrsqrt.pop %v5651
    %v5654 = vmul.f32 %v5638, %v5652
    %v5655 = vmul.f32 %v5639, %v5653
    %v5656 = vld [vmem:[%s22] sm:$0x1]
    %v5658 = vlaneseq
    %v5659 = vshrl.u32 %v5658, 7
    %v5660 = vsub.s32 0, %v5659
    %v5661 = vrot.slane %v5656, %v5660
    %v5663 = vmul.f32 %v5654, %v5661
    %v5664 = vmul.f32 %v5655, %v5661
    %v5665 = vld [vmem:[%s23] sm:$0x1]
    %v5667 = vlaneseq
    %v5668 = vshrl.u32 %v5667, 7
    %v5669 = vsub.s32 0, %v5668
    %v5670 = vrot.slane %v5665, %v5669
    %v5672 = vadd.f32 %v5663, %v5670
    %v5673 = vadd.f32 %v5664, %v5670
    %s5674 = scalar_lea.vmem %s12, 32
    %v5675 = vld [vmem:[%s5674] sm:$0xff]
    %v5676 = vld [vmem:[%s5674 + $0x8] sm:$0xff]
    %v5677 = vld [vmem:[%s5674 + $0x10] sm:$0xff]
    %v5678 = vld [vmem:[%s5674 + $0x18] sm:$0xff]
    %s5679 = scalar_lea.vmem %s13, 1
    %v5680 = vld [vmem:[%s5679] sm:$0x1]
    %v5682 = vlaneseq
    %v5683 = vshrl.u32 %v5682, 7
    %v5684 = vsub.s32 0, %v5683
    %v5685 = vrot.slane %v5680, %v5684
    %v5688 = vsel %vm3762, %v5672, 0
    %v5691 = vsel %vm3762, %v5673, 0
    %5693 = vmatprep.subr.mxu0 0.0
    %5694 = vmatpush1.msra.mxu0 0.0
    %5695 = vmatprep.subr.mxu0 0.0
    %5696 = vmatpush1.msra.mxu0 0.0
    %5697 = vmatprep.subr.mxu0 0.0
    %5698 = vmatpush1.msra.mxu0 0.0
    %5699 = vmatprep.subr.mxu0 0.0
    %5700 = vmatpush1.msra.mxu0 0.0
    %5701 = vmatprep.subr.mxu0 0.0
    %5702 = vmatpush1.msra.mxu0 0.0
    %5703 = vmatprep.subr.mxu0 0.0
    %5704 = vmatpush1.msra.mxu0 0.0
    %5705 = vmatprep.subr.mxu0 0.0
    %5706 = vmatpush1.msra.mxu0 0.0
    %5707 = vmatprep.subr.mxu0 0.0
    %5708 = vmatpush1.msra.mxu0 0.0
    %5709 = vmatprep.subr.mxu0 0.0
    %5710 = vmatpush1.msra.mxu0 0.0
    %5711 = vmatprep.subr.mxu0 0.0
    %5712 = vmatpush1.msra.mxu0 0.0
    %5713 = vmatprep.subr.mxu0 0.0
    %5714 = vmatpush1.msra.mxu0 0.0
    %5715 = vmatprep.subr.mxu0 0.0
    %5716 = vmatpush1.msra.mxu0 0.0
    %5717 = vmatprep.subr.mxu0 0.0
    %5718 = vmatpush1.msra.mxu0 %v5678
    %5719 = vmatprep.subr.mxu0 0.0
    %5720 = vmatpush1.msra.mxu0 %v5677
    %5721 = vmatprep.subr.mxu0 0.0
    %5722 = vmatpush1.msra.mxu0 %v5676
    %5723 = vmatprep.subr.mxu0 0.0
    %5724 = vmatpush1.msra.mxu0 %v5675
    %5725 = vmatprep.subr.mxu0 0.0
    %5726 = vmatpush2.msra.mxu0 0.0
    %5727 = vmatprep.subr.mxu0 0.0
    %5728 = vmatpush2.msra.mxu0 0.0
    %5729 = vmatprep.subr.mxu0 0.0
    %5730 = vmatpush2.msra.mxu0 0.0
    %5731 = vmatprep.subr.mxu0 0.0
    %5732 = vmatpush2.msra.mxu0 0.0
    %5733 = vmatprep.subr.mxu0 0.0
    %5734 = vmatpush2.msra.mxu0 0.0
    %5735 = vmatprep.subr.mxu0 0.0
    %5736 = vmatpush2.msra.mxu0 0.0
    %5737 = vmatprep.subr.mxu0 0.0
    %5738 = vmatpush2.msra.mxu0 0.0
    %5739 = vmatprep.subr.mxu0 0.0
    %5740 = vmatpush2.msra.mxu0 0.0
    %5741 = vmatprep.subr.mxu0 0.0
    %5742 = vmatpush2.msra.mxu0 0.0
    %5743 = vmatprep.subr.mxu0 0.0
    %5744 = vmatpush2.msra.mxu0 0.0
    %5745 = vmatprep.subr.mxu0 0.0
    %5746 = vmatpush2.msra.mxu0 0.0
    %5747 = vmatprep.subr.mxu0 0.0
    %5748 = vmatpush2.msra.mxu0 0.0
    %5749 = vmatprep.subr.mxu0 0.0
    %5750 = vmatpush2.msra.mxu0 0.0
    %5751 = vmatprep.subr.mxu0 0.0
    %5752 = vmatpush2.msra.mxu0 0.0
    %5753 = vmatprep.subr.mxu0 0.0
    %5754 = vmatpush2.msra.mxu0 0.0
    %5755 = vmatprep.subr.mxu0 0.0
    %5756 = vmatpush2.msra.mxu0 0.0
    %5757 = vmatprep.mubr.f32.mxu0 0.0
    %5758 = vmatmul.mubr.f32.gmra.mxu0 %v5688
    %v5759 = vpop.f32.mrf.mxu0
    %v5760 = vadd.f32 %v5685, %v5759
    %v5761 = vpop.f32.mrf.mxu0
    %5762 = vmatprep.mubr.f32.mxu0 0.0
    %5763 = vmatmul.mubr.f32.gmra.mxu0 %v5691
    %v5764 = vpop.f32.mrf.mxu0
    %v5765 = vadd.f32 %v5685, %v5764
    %v5766 = vpop.f32.mrf.mxu0
    %5767 = vdwg.mxu0
    %5769 = vrot.lane.b32.xlu0 %v5760, 96
    %v5770 = vpop.permute.xlu0 %5769
    %v5771 = vsel %vm3943, %v5760, 0
    %v5773 = vsel %vm3943, %v5770, 0
    %5775 = vmatprep.subr.mxu0 0.0
    %5776 = vmatpush1.xpose.msra.mxu0 0.0
    %5777 = vmatprep.subr.mxu0 0.0
    %5778 = vmatpush1.xpose.msra.mxu0 0.0
    %5779 = vmatprep.subr.mxu0 0.0
    %5780 = vmatpush1.xpose.msra.mxu0 0.0
    %5781 = vmatprep.subr.mxu0 0.0
    %5782 = vmatpush1.xpose.msra.mxu0 0.0
    %5783 = vmatprep.subr.mxu0 0.0
    %5784 = vmatpush1.xpose.msra.mxu0 0.0
    %5785 = vmatprep.subr.mxu0 0.0
    %5786 = vmatpush1.xpose.msra.mxu0 0.0
    %5787 = vmatprep.subr.mxu0 0.0
    %5788 = vmatpush1.xpose.msra.mxu0 0.0
    %5789 = vmatprep.subr.mxu0 0.0
    %5790 = vmatpush1.xpose.msra.mxu0 0.0
    %5791 = vmatprep.subr.mxu0 0.0
    %5792 = vmatpush1.xpose.msra.mxu0 0.0
    %5793 = vmatprep.subr.mxu0 0.0
    %5794 = vmatpush1.xpose.msra.mxu0 0.0
    %5795 = vmatprep.subr.mxu0 0.0
    %5796 = vmatpush1.xpose.msra.mxu0 0.0
    %5797 = vmatprep.subr.mxu0 0.0
    %5798 = vmatpush1.xpose.msra.mxu0 0.0
    %5799 = vmatprep.subr.mxu0 0.0
    %5800 = vmatpush1.xpose.msra.mxu0 0.0
    %5801 = vmatprep.subr.mxu0 0.0
    %5802 = vmatpush1.xpose.msra.mxu0 0.0
    %5803 = vmatprep.subr.mxu0 0.0
    %5804 = vmatpush1.xpose.msra.mxu0 0.0
    %5805 = vmatprep.subr.mxu0 0.0
    %5806 = vmatpush1.xpose.msra.mxu0 %v5773
    %5807 = vmatprep.subr.mxu0 0.0
    %5808 = vmatpush2.xpose.msra.mxu0 0.0
    %5809 = vmatprep.subr.mxu0 0.0
    %5810 = vmatpush2.xpose.msra.mxu0 0.0
    %5811 = vmatprep.subr.mxu0 0.0
    %5812 = vmatpush2.xpose.msra.mxu0 0.0
    %5813 = vmatprep.subr.mxu0 0.0
    %5814 = vmatpush2.xpose.msra.mxu0 0.0
    %5815 = vmatprep.subr.mxu0 0.0
    %5816 = vmatpush2.xpose.msra.mxu0 0.0
    %5817 = vmatprep.subr.mxu0 0.0
    %5818 = vmatpush2.xpose.msra.mxu0 0.0
    %5819 = vmatprep.subr.mxu0 0.0
    %5820 = vmatpush2.xpose.msra.mxu0 0.0
    %5821 = vmatprep.subr.mxu0 0.0
    %5822 = vmatpush2.xpose.msra.mxu0 0.0
    %5823 = vmatprep.subr.mxu0 0.0
    %5824 = vmatpush2.xpose.msra.mxu0 0.0
    %5825 = vmatprep.subr.mxu0 0.0
    %5826 = vmatpush2.xpose.msra.mxu0 0.0
    %5827 = vmatprep.subr.mxu0 0.0
    %5828 = vmatpush2.xpose.msra.mxu0 0.0
    %5829 = vmatprep.subr.mxu0 0.0
    %5830 = vmatpush2.xpose.msra.mxu0 0.0
    %5831 = vmatprep.subr.mxu0 0.0
    %5832 = vmatpush2.xpose.msra.mxu0 0.0
    %5833 = vmatprep.subr.mxu0 0.0
    %5834 = vmatpush2.xpose.msra.mxu0 0.0
    %5835 = vmatprep.subr.mxu0 0.0
    %5836 = vmatpush2.xpose.msra.mxu0 0.0
    %5837 = vmatprep.subr.mxu0 0.0
    %5838 = vmatpush2.xpose.msra.mxu0 0.0
    %5839 = vmatprep.mubr.f32.mxu0 0.0
    %5840 = vmatmul.mubr.f32.gmra.mxu0 %v5771
    %v5841 = vpop.f32.mrf.mxu0
    %v5842 = vadd.f32 0.0, %v5841
    %v5843 = vpop.f32.mrf.mxu0
    %5844 = vdwg.mxu0
    %5846 = vrot.lane.b32.xlu0 %v5765, 96
    %v5847 = vpop.permute.xlu0 %5846
    %v5848 = vsel %vm3943, %v5765, 0
    %v5850 = vsel %vm3943, %v5847, 0
    %5852 = vmatprep.subr.mxu0 0.0
    %5853 = vmatpush1.xpose.msra.mxu0 0.0
    %5854 = vmatprep.subr.mxu0 0.0
    %5855 = vmatpush1.xpose.msra.mxu0 0.0
    %5856 = vmatprep.subr.mxu0 0.0
    %5857 = vmatpush1.xpose.msra.mxu0 0.0
    %5858 = vmatprep.subr.mxu0 0.0
    %5859 = vmatpush1.xpose.msra.mxu0 0.0
    %5860 = vmatprep.subr.mxu0 0.0
    %5861 = vmatpush1.xpose.msra.mxu0 0.0
    %5862 = vmatprep.subr.mxu0 0.0
    %5863 = vmatpush1.xpose.msra.mxu0 0.0
    %5864 = vmatprep.subr.mxu0 0.0
    %5865 = vmatpush1.xpose.msra.mxu0 0.0
    %5866 = vmatprep.subr.mxu0 0.0
    %5867 = vmatpush1.xpose.msra.mxu0 0.0
    %5868 = vmatprep.subr.mxu0 0.0
    %5869 = vmatpush1.xpose.msra.mxu0 0.0
    %5870 = vmatprep.subr.mxu0 0.0
    %5871 = vmatpush1.xpose.msra.mxu0 0.0
    %5872 = vmatprep.subr.mxu0 0.0
    %5873 = vmatpush1.xpose.msra.mxu0 0.0
    %5874 = vmatprep.subr.mxu0 0.0
    %5875 = vmatpush1.xpose.msra.mxu0 0.0
    %5876 = vmatprep.subr.mxu0 0.0
    %5877 = vmatpush1.xpose.msra.mxu0 0.0
    %5878 = vmatprep.subr.mxu0 0.0
    %5879 = vmatpush1.xpose.msra.mxu0 0.0
    %5880 = vmatprep.subr.mxu0 0.0
    %5881 = vmatpush1.xpose.msra.mxu0 0.0
    %5882 = vmatprep.subr.mxu0 0.0
    %5883 = vmatpush1.xpose.msra.mxu0 %v5850
    %5884 = vmatprep.subr.mxu0 0.0
    %5885 = vmatpush2.xpose.msra.mxu0 0.0
    %5886 = vmatprep.subr.mxu0 0.0
    %5887 = vmatpush2.xpose.msra.mxu0 0.0
    %5888 = vmatprep.subr.mxu0 0.0
    %5889 = vmatpush2.xpose.msra.mxu0 0.0
    %5890 = vmatprep.subr.mxu0 0.0
    %5891 = vmatpush2.xpose.msra.mxu0 0.0
    %5892 = vmatprep.subr.mxu0 0.0
    %5893 = vmatpush2.xpose.msra.mxu0 0.0
    %5894 = vmatprep.subr.mxu0 0.0
    %5895 = vmatpush2.xpose.msra.mxu0 0.0
    %5896 = vmatprep.subr.mxu0 0.0
    %5897 = vmatpush2.xpose.msra.mxu0 0.0
    %5898 = vmatprep.subr.mxu0 0.0
    %5899 = vmatpush2.xpose.msra.mxu0 0.0
    %5900 = vmatprep.subr.mxu0 0.0
    %5901 = vmatpush2.xpose.msra.mxu0 0.0
    %5902 = vmatprep.subr.mxu0 0.0
    %5903 = vmatpush2.xpose.msra.mxu0 0.0
    %5904 = vmatprep.subr.mxu0 0.0
    %5905 = vmatpush2.xpose.msra.mxu0 0.0
    %5906 = vmatprep.subr.mxu0 0.0
    %5907 = vmatpush2.xpose.msra.mxu0 0.0
    %5908 = vmatprep.subr.mxu0 0.0
    %5909 = vmatpush2.xpose.msra.mxu0 0.0
    %5910 = vmatprep.subr.mxu0 0.0
    %5911 = vmatpush2.xpose.msra.mxu0 0.0
    %5912 = vmatprep.subr.mxu0 0.0
    %5913 = vmatpush2.xpose.msra.mxu0 0.0
    %5914 = vmatprep.subr.mxu0 0.0
    %5915 = vmatpush2.xpose.msra.mxu0 0.0
    %5916 = vmatprep.mubr.f32.mxu0 0.0
    %5917 = vmatmul.mubr.f32.gmra.mxu0 %v5848
    %v5918 = vpop.f32.mrf.mxu0
    %v5919 = vadd.f32 0.0, %v5918
    %v5920 = vpop.f32.mrf.mxu0
    %5921 = vdwg.mxu0
    %v5922 = vmul.f32 %v5842, 0.35355338
    %v5923 = vmul.f32 %v5919, 0.35355338
    %v5924 = vsel %vm3943, %v5922, -inf
    %5925 = vmax.xlane.f32.xlu0 %v5924
    %v5926 = vpop.xlane.xlu0 %5925
    %v5927 = vsel %vm3943, %v5923, -inf
    %5928 = vmax.xlane.f32.xlu0 %v5927
    %v5929 = vpop.xlane.xlu0 %5928
    %v5930 = vsub.f32 %v5922, %v5926
    %v5931 = vsub.f32 %v5923, %v5929
    %v5932 = vmul.f32 %v5930, 1.442695
    %v5933 = vpow.pop %v5932
    %v5934 = vmul.f32 %v5931, 1.442695
    %v5935 = vpow.pop %v5934
    %v5936 = vsel %vm3943, %v5933, 0.0
    %5937 = vadd.xlane.f32.xlu0 %v5936
    %v5938 = vpop.xlane.xlu0 %5937
    %v5939 = vsel %vm3943, %v5935, 0.0
    %5940 = vadd.xlane.f32.xlu0 %v5939
    %v5941 = vpop.xlane.xlu0 %5940
    %v5942 = vrcp.pop %v5938
    %v5943 = vrcp.pop %v5941
    %v5944 = vmul.f32 %v5933, %v5942
    %v5945 = vmul.f32 %v5935, %v5943
    %5946 = vrot.lane.b32.xlu0 %v5760, 64
    %v5947 = vpop.permute.xlu0 %5946
    %v5950 = vsel %vm3943, %v5944, 0
    %5952 = vmatprep.subr.mxu0 0.0
    %5953 = vmatpush1.msra.mxu0 0.0
    %5954 = vmatprep.subr.mxu0 0.0
    %5955 = vmatpush1.msra.mxu0 0.0
    %5956 = vmatprep.subr.mxu0 0.0
    %5957 = vmatpush1.msra.mxu0 0.0
    %5958 = vmatprep.subr.mxu0 0.0
    %5959 = vmatpush1.msra.mxu0 0.0
    %5960 = vmatprep.subr.mxu0 0.0
    %5961 = vmatpush1.msra.mxu0 0.0
    %5962 = vmatprep.subr.mxu0 0.0
    %5963 = vmatpush1.msra.mxu0 0.0
    %5964 = vmatprep.subr.mxu0 0.0
    %5965 = vmatpush1.msra.mxu0 0.0
    %5966 = vmatprep.subr.mxu0 0.0
    %5967 = vmatpush1.msra.mxu0 0.0
    %5968 = vmatprep.subr.mxu0 0.0
    %5969 = vmatpush1.msra.mxu0 0.0
    %5970 = vmatprep.subr.mxu0 0.0
    %5971 = vmatpush1.msra.mxu0 0.0
    %5972 = vmatprep.subr.mxu0 0.0
    %5973 = vmatpush1.msra.mxu0 0.0
    %5974 = vmatprep.subr.mxu0 0.0
    %5975 = vmatpush1.msra.mxu0 0.0
    %5976 = vmatprep.subr.mxu0 0.0
    %5977 = vmatpush1.msra.mxu0 0.0
    %5978 = vmatprep.subr.mxu0 0.0
    %5979 = vmatpush1.msra.mxu0 0.0
    %5980 = vmatprep.subr.mxu0 0.0
    %5981 = vmatpush1.msra.mxu0 0.0
    %5982 = vmatprep.subr.mxu0 0.0
    %5983 = vmatpush1.msra.mxu0 %v5947
    %5984 = vmatprep.subr.mxu0 0.0
    %5985 = vmatpush2.msra.mxu0 0.0
    %5986 = vmatprep.subr.mxu0 0.0
    %5987 = vmatpush2.msra.mxu0 0.0
    %5988 = vmatprep.subr.mxu0 0.0
    %5989 = vmatpush2.msra.mxu0 0.0
    %5990 = vmatprep.subr.mxu0 0.0
    %5991 = vmatpush2.msra.mxu0 0.0
    %5992 = vmatprep.subr.mxu0 0.0
    %5993 = vmatpush2.msra.mxu0 0.0
    %5994 = vmatprep.subr.mxu0 0.0
    %5995 = vmatpush2.msra.mxu0 0.0
    %5996 = vmatprep.subr.mxu0 0.0
    %5997 = vmatpush2.msra.mxu0 0.0
    %5998 = vmatprep.subr.mxu0 0.0
    %5999 = vmatpush2.msra.mxu0 0.0
    %6000 = vmatprep.subr.mxu0 0.0
    %6001 = vmatpush2.msra.mxu0 0.0
    %6002 = vmatprep.subr.mxu0 0.0
    %6003 = vmatpush2.msra.mxu0 0.0
    %6004 = vmatprep.subr.mxu0 0.0
    %6005 = vmatpush2.msra.mxu0 0.0
    %6006 = vmatprep.subr.mxu0 0.0
    %6007 = vmatpush2.msra.mxu0 0.0
    %6008 = vmatprep.subr.mxu0 0.0
    %6009 = vmatpush2.msra.mxu0 0.0
    %6010 = vmatprep.subr.mxu0 0.0
    %6011 = vmatpush2.msra.mxu0 0.0
    %6012 = vmatprep.subr.mxu0 0.0
    %6013 = vmatpush2.msra.mxu0 0.0
    %6014 = vmatprep.subr.mxu0 0.0
    %6015 = vmatpush2.msra.mxu0 0.0
    %6016 = vmatprep.mubr.f32.mxu0 0.0
    %6017 = vmatmul.mubr.f32.gmra.mxu0 %v5950
    %v6018 = vpop.f32.mrf.mxu0
    %v6019 = vadd.f32 0.0, %v6018
    %v6020 = vpop.f32.mrf.mxu0
    %6021 = vdwg.mxu0
    %6022 = vrot.lane.b32.xlu0 %v5765, 64
    %v6023 = vpop.permute.xlu0 %6022
    %v6026 = vsel %vm3943, %v5945, 0
    %6028 = vmatprep.subr.mxu0 0.0
    %6029 = vmatpush1.msra.mxu0 0.0
    %6030 = vmatprep.subr.mxu0 0.0
    %6031 = vmatpush1.msra.mxu0 0.0
    %6032 = vmatprep.subr.mxu0 0.0
    %6033 = vmatpush1.msra.mxu0 0.0
    %6034 = vmatprep.subr.mxu0 0.0
    %6035 = vmatpush1.msra.mxu0 0.0
    %6036 = vmatprep.subr.mxu0 0.0
    %6037 = vmatpush1.msra.mxu0 0.0
    %6038 = vmatprep.subr.mxu0 0.0
    %6039 = vmatpush1.msra.mxu0 0.0
    %6040 = vmatprep.subr.mxu0 0.0
    %6041 = vmatpush1.msra.mxu0 0.0
    %6042 = vmatprep.subr.mxu0 0.0
    %6043 = vmatpush1.msra.mxu0 0.0
    %6044 = vmatprep.subr.mxu0 0.0
    %6045 = vmatpush1.msra.mxu0 0.0
    %6046 = vmatprep.subr.mxu0 0.0
    %6047 = vmatpush1.msra.mxu0 0.0
    %6048 = vmatprep.subr.mxu0 0.0
    %6049 = vmatpush1.msra.mxu0 0.0
    %6050 = vmatprep.subr.mxu0 0.0
    %6051 = vmatpush1.msra.mxu0 0.0
    %6052 = vmatprep.subr.mxu0 0.0
    %6053 = vmatpush1.msra.mxu0 0.0
    %6054 = vmatprep.subr.mxu0 0.0
    %6055 = vmatpush1.msra.mxu0 0.0
    %6056 = vmatprep.subr.mxu0 0.0
    %6057 = vmatpush1.msra.mxu0 0.0
    %6058 = vmatprep.subr.mxu0 0.0
    %6059 = vmatpush1.msra.mxu0 %v6023
    %6060 = vmatprep.subr.mxu0 0.0
    %6061 = vmatpush2.msra.mxu0 0.0
    %6062 = vmatprep.subr.mxu0 0.0
    %6063 = vmatpush2.msra.mxu0 0.0
    %6064 = vmatprep.subr.mxu0 0.0
    %6065 = vmatpush2.msra.mxu0 0.0
    %6066 = vmatprep.subr.mxu0 0.0
    %6067 = vmatpush2.msra.mxu0 0.0
    %6068 = vmatprep.subr.mxu0 0.0
    %6069 = vmatpush2.msra.mxu0 0.0
    %6070 = vmatprep.subr.mxu0 0.0
    %6071 = vmatpush2.msra.mxu0 0.0
    %6072 = vmatprep.subr.mxu0 0.0
    %6073 = vmatpush2.msra.mxu0 0.0
    %6074 = vmatprep.subr.mxu0 0.0
    %6075 = vmatpush2.msra.mxu0 0.0
    %6076 = vmatprep.subr.mxu0 0.0
    %6077 = vmatpush2.msra.mxu0 0.0
    %6078 = vmatprep.subr.mxu0 0.0
    %6079 = vmatpush2.msra.mxu0 0.0
    %6080 = vmatprep.subr.mxu0 0.0
    %6081 = vmatpush2.msra.mxu0 0.0
    %6082 = vmatprep.subr.mxu0 0.0
    %6083 = vmatpush2.msra.mxu0 0.0
    %6084 = vmatprep.subr.mxu0 0.0
    %6085 = vmatpush2.msra.mxu0 0.0
    %6086 = vmatprep.subr.mxu0 0.0
    %6087 = vmatpush2.msra.mxu0 0.0
    %6088 = vmatprep.subr.mxu0 0.0
    %6089 = vmatpush2.msra.mxu0 0.0
    %6090 = vmatprep.subr.mxu0 0.0
    %6091 = vmatpush2.msra.mxu0 0.0
    %6092 = vmatprep.mubr.f32.mxu0 0.0
    %6093 = vmatmul.mubr.f32.gmra.mxu0 %v6026
    %v6094 = vpop.f32.mrf.mxu0
    %v6095 = vadd.f32 0.0, %v6094
    %v6096 = vpop.f32.mrf.mxu0
    %6097 = vdwg.mxu0
    %6098 = vrot.lane.b32.xlu0 %v5760, 120
    %v6099 = vpop.permute.xlu0 %6098
    %6100 = vrot.lane.b32.xlu0 %v5760, 88
    %v6101 = vpop.permute.xlu0 %6100
    %v6102 = vsel %vm3943, %v6099, 0
    %v6104 = vsel %vm3943, %v6101, 0
    %6106 = vmatprep.subr.mxu0 0.0
    %6107 = vmatpush1.xpose.msra.mxu0 0.0
    %6108 = vmatprep.subr.mxu0 0.0
    %6109 = vmatpush1.xpose.msra.mxu0 0.0
    %6110 = vmatprep.subr.mxu0 0.0
    %6111 = vmatpush1.xpose.msra.mxu0 0.0
    %6112 = vmatprep.subr.mxu0 0.0
    %6113 = vmatpush1.xpose.msra.mxu0 0.0
    %6114 = vmatprep.subr.mxu0 0.0
    %6115 = vmatpush1.xpose.msra.mxu0 0.0
    %6116 = vmatprep.subr.mxu0 0.0
    %6117 = vmatpush1.xpose.msra.mxu0 0.0
    %6118 = vmatprep.subr.mxu0 0.0
    %6119 = vmatpush1.xpose.msra.mxu0 0.0
    %6120 = vmatprep.subr.mxu0 0.0
    %6121 = vmatpush1.xpose.msra.mxu0 0.0
    %6122 = vmatprep.subr.mxu0 0.0
    %6123 = vmatpush1.xpose.msra.mxu0 0.0
    %6124 = vmatprep.subr.mxu0 0.0
    %6125 = vmatpush1.xpose.msra.mxu0 0.0
    %6126 = vmatprep.subr.mxu0 0.0
    %6127 = vmatpush1.xpose.msra.mxu0 0.0
    %6128 = vmatprep.subr.mxu0 0.0
    %6129 = vmatpush1.xpose.msra.mxu0 0.0
    %6130 = vmatprep.subr.mxu0 0.0
    %6131 = vmatpush1.xpose.msra.mxu0 0.0
    %6132 = vmatprep.subr.mxu0 0.0
    %6133 = vmatpush1.xpose.msra.mxu0 0.0
    %6134 = vmatprep.subr.mxu0 0.0
    %6135 = vmatpush1.xpose.msra.mxu0 0.0
    %6136 = vmatprep.subr.mxu0 0.0
    %6137 = vmatpush1.xpose.msra.mxu0 %v6104
    %6138 = vmatprep.subr.mxu0 0.0
    %6139 = vmatpush2.xpose.msra.mxu0 0.0
    %6140 = vmatprep.subr.mxu0 0.0
    %6141 = vmatpush2.xpose.msra.mxu0 0.0
    %6142 = vmatprep.subr.mxu0 0.0
    %6143 = vmatpush2.xpose.msra.mxu0 0.0
    %6144 = vmatprep.subr.mxu0 0.0
    %6145 = vmatpush2.xpose.msra.mxu0 0.0
    %6146 = vmatprep.subr.mxu0 0.0
    %6147 = vmatpush2.xpose.msra.mxu0 0.0
    %6148 = vmatprep.subr.mxu0 0.0
    %6149 = vmatpush2.xpose.msra.mxu0 0.0
    %6150 = vmatprep.subr.mxu0 0.0
    %6151 = vmatpush2.xpose.msra.mxu0 0.0
    %6152 = vmatprep.subr.mxu0 0.0
    %6153 = vmatpush2.xpose.msra.mxu0 0.0
    %6154 = vmatprep.subr.mxu0 0.0
    %6155 = vmatpush2.xpose.msra.mxu0 0.0
    %6156 = vmatprep.subr.mxu0 0.0
    %6157 = vmatpush2.xpose.msra.mxu0 0.0
    %6158 = vmatprep.subr.mxu0 0.0
    %6159 = vmatpush2.xpose.msra.mxu0 0.0
    %6160 = vmatprep.subr.mxu0 0.0
    %6161 = vmatpush2.xpose.msra.mxu0 0.0
    %6162 = vmatprep.subr.mxu0 0.0
    %6163 = vmatpush2.xpose.msra.mxu0 0.0
    %6164 = vmatprep.subr.mxu0 0.0
    %6165 = vmatpush2.xpose.msra.mxu0 0.0
    %6166 = vmatprep.subr.mxu0 0.0
    %6167 = vmatpush2.xpose.msra.mxu0 0.0
    %6168 = vmatprep.subr.mxu0 0.0
    %6169 = vmatpush2.xpose.msra.mxu0 0.0
    %6170 = vmatprep.mubr.f32.mxu0 0.0
    %6171 = vmatmul.mubr.f32.gmra.mxu0 %v6102
    %v6172 = vpop.f32.mrf.mxu0
    %v6173 = vadd.f32 0.0, %v6172
    %v6174 = vpop.f32.mrf.mxu0
    %6175 = vdwg.mxu0
    %6176 = vrot.lane.b32.xlu0 %v5765, 120
    %v6177 = vpop.permute.xlu0 %6176
    %6178 = vrot.lane.b32.xlu0 %v5765, 88
    %v6179 = vpop.permute.xlu0 %6178
    %v6180 = vsel %vm3943, %v6177, 0
    %v6182 = vsel %vm3943, %v6179, 0
    %6184 = vmatprep.subr.mxu0 0.0
    %6185 = vmatpush1.xpose.msra.mxu0 0.0
    %6186 = vmatprep.subr.mxu0 0.0
    %6187 = vmatpush1.xpose.msra.mxu0 0.0
    %6188 = vmatprep.subr.mxu0 0.0
    %6189 = vmatpush1.xpose.msra.mxu0 0.0
    %6190 = vmatprep.subr.mxu0 0.0
    %6191 = vmatpush1.xpose.msra.mxu0 0.0
    %6192 = vmatprep.subr.mxu0 0.0
    %6193 = vmatpush1.xpose.msra.mxu0 0.0
    %6194 = vmatprep.subr.mxu0 0.0
    %6195 = vmatpush1.xpose.msra.mxu0 0.0
    %6196 = vmatprep.subr.mxu0 0.0
    %6197 = vmatpush1.xpose.msra.mxu0 0.0
    %6198 = vmatprep.subr.mxu0 0.0
    %6199 = vmatpush1.xpose.msra.mxu0 0.0
    %6200 = vmatprep.subr.mxu0 0.0
    %6201 = vmatpush1.xpose.msra.mxu0 0.0
    %6202 = vmatprep.subr.mxu0 0.0
    %6203 = vmatpush1.xpose.msra.mxu0 0.0
    %6204 = vmatprep.subr.mxu0 0.0
    %6205 = vmatpush1.xpose.msra.mxu0 0.0
    %6206 = vmatprep.subr.mxu0 0.0
    %6207 = vmatpush1.xpose.msra.mxu0 0.0
    %6208 = vmatprep.subr.mxu0 0.0
    %6209 = vmatpush1.xpose.msra.mxu0 0.0
    %6210 = vmatprep.subr.mxu0 0.0
    %6211 = vmatpush1.xpose.msra.mxu0 0.0
    %6212 = vmatprep.subr.mxu0 0.0
    %6213 = vmatpush1.xpose.msra.mxu0 0.0
    %6214 = vmatprep.subr.mxu0 0.0
    %6215 = vmatpush1.xpose.msra.mxu0 %v6182
    %6216 = vmatprep.subr.mxu0 0.0
    %6217 = vmatpush2.xpose.msra.mxu0 0.0
    %6218 = vmatprep.subr.mxu0 0.0
    %6219 = vmatpush2.xpose.msra.mxu0 0.0
    %6220 = vmatprep.subr.mxu0 0.0
    %6221 = vmatpush2.xpose.msra.mxu0 0.0
    %6222 = vmatprep.subr.mxu0 0.0
    %6223 = vmatpush2.xpose.msra.mxu0 0.0
    %6224 = vmatprep.subr.mxu0 0.0
    %6225 = vmatpush2.xpose.msra.mxu0 0.0
    %6226 = vmatprep.subr.mxu0 0.0
    %6227 = vmatpush2.xpose.msra.mxu0 0.0
    %6228 = vmatprep.subr.mxu0 0.0
    %6229 = vmatpush2.xpose.msra.mxu0 0.0
    %6230 = vmatprep.subr.mxu0 0.0
    %6231 = vmatpush2.xpose.msra.mxu0 0.0
    %6232 = vmatprep.subr.mxu0 0.0
    %6233 = vmatpush2.xpose.msra.mxu0 0.0
    %6234 = vmatprep.subr.mxu0 0.0
    %6235 = vmatpush2.xpose.msra.mxu0 0.0
    %6236 = vmatprep.subr.mxu0 0.0
    %6237 = vmatpush2.xpose.msra.mxu0 0.0
    %6238 = vmatprep.subr.mxu0 0.0
    %6239 = vmatpush2.xpose.msra.mxu0 0.0
    %6240 = vmatprep.subr.mxu0 0.0
    %6241 = vmatpush2.xpose.msra.mxu0 0.0
    %6242 = vmatprep.subr.mxu0 0.0
    %6243 = vmatpush2.xpose.msra.mxu0 0.0
    %6244 = vmatprep.subr.mxu0 0.0
    %6245 = vmatpush2.xpose.msra.mxu0 0.0
    %6246 = vmatprep.subr.mxu0 0.0
    %6247 = vmatpush2.xpose.msra.mxu0 0.0
    %6248 = vmatprep.mubr.f32.mxu0 0.0
    %6249 = vmatmul.mubr.f32.gmra.mxu0 %v6180
    %v6250 = vpop.f32.mrf.mxu0
    %v6251 = vadd.f32 0.0, %v6250
    %v6252 = vpop.f32.mrf.mxu0
    %6253 = vdwg.mxu0
    %v6254 = vmul.f32 %v6173, 0.35355338
    %v6255 = vmul.f32 %v6251, 0.35355338
    %v6256 = vsel %vm3943, %v6254, -inf
    %6257 = vmax.xlane.f32.xlu0 %v6256
    %v6258 = vpop.xlane.xlu0 %6257
    %v6259 = vsel %vm3943, %v6255, -inf
    %6260 = vmax.xlane.f32.xlu0 %v6259
    %v6261 = vpop.xlane.xlu0 %6260
    %v6262 = vsub.f32 %v6254, %v6258
    %v6263 = vsub.f32 %v6255, %v6261
    %v6264 = vmul.f32 %v6262, 1.442695
    %v6265 = vpow.pop %v6264
    %v6266 = vmul.f32 %v6263, 1.442695
    %v6267 = vpow.pop %v6266
    %v6268 = vsel %vm3943, %v6265, 0.0
    %6269 = vadd.xlane.f32.xlu0 %v6268
    %v6270 = vpop.xlane.xlu0 %6269
    %v6271 = vsel %vm3943, %v6267, 0.0
    %6272 = vadd.xlane.f32.xlu0 %v6271
    %v6273 = vpop.xlane.xlu0 %6272
    %v6274 = vrcp.pop %v6270
    %v6275 = vrcp.pop %v6273
    %v6276 = vmul.f32 %v6265, %v6274
    %v6277 = vmul.f32 %v6267, %v6275
    %6278 = vrot.lane.b32.xlu0 %v5760, 56
    %v6279 = vpop.permute.xlu0 %6278
    %v6282 = vsel %vm3943, %v6276, 0
    %6284 = vmatprep.subr.mxu0 0.0
    %6285 = vmatpush1.msra.mxu0 0.0
    %6286 = vmatprep.subr.mxu0 0.0
    %6287 = vmatpush1.msra.mxu0 0.0
    %6288 = vmatprep.subr.mxu0 0.0
    %6289 = vmatpush1.msra.mxu0 0.0
    %6290 = vmatprep.subr.mxu0 0.0
    %6291 = vmatpush1.msra.mxu0 0.0
    %6292 = vmatprep.subr.mxu0 0.0
    %6293 = vmatpush1.msra.mxu0 0.0
    %6294 = vmatprep.subr.mxu0 0.0
    %6295 = vmatpush1.msra.mxu0 0.0
    %6296 = vmatprep.subr.mxu0 0.0
    %6297 = vmatpush1.msra.mxu0 0.0
    %6298 = vmatprep.subr.mxu0 0.0
    %6299 = vmatpush1.msra.mxu0 0.0
    %6300 = vmatprep.subr.mxu0 0.0
    %6301 = vmatpush1.msra.mxu0 0.0
    %6302 = vmatprep.subr.mxu0 0.0
    %6303 = vmatpush1.msra.mxu0 0.0
    %6304 = vmatprep.subr.mxu0 0.0
    %6305 = vmatpush1.msra.mxu0 0.0
    %6306 = vmatprep.subr.mxu0 0.0
    %6307 = vmatpush1.msra.mxu0 0.0
    %6308 = vmatprep.subr.mxu0 0.0
    %6309 = vmatpush1.msra.mxu0 0.0
    %6310 = vmatprep.subr.mxu0 0.0
    %6311 = vmatpush1.msra.mxu0 0.0
    %6312 = vmatprep.subr.mxu0 0.0
    %6313 = vmatpush1.msra.mxu0 0.0
    %6314 = vmatprep.subr.mxu0 0.0
    %6315 = vmatpush1.msra.mxu0 %v6279
    %6316 = vmatprep.subr.mxu0 0.0
    %6317 = vmatpush2.msra.mxu0 0.0
    %6318 = vmatprep.subr.mxu0 0.0
    %6319 = vmatpush2.msra.mxu0 0.0
    %6320 = vmatprep.subr.mxu0 0.0
    %6321 = vmatpush2.msra.mxu0 0.0
    %6322 = vmatprep.subr.mxu0 0.0
    %6323 = vmatpush2.msra.mxu0 0.0
    %6324 = vmatprep.subr.mxu0 0.0
    %6325 = vmatpush2.msra.mxu0 0.0
    %6326 = vmatprep.subr.mxu0 0.0
    %6327 = vmatpush2.msra.mxu0 0.0
    %6328 = vmatprep.subr.mxu0 0.0
    %6329 = vmatpush2.msra.mxu0 0.0
    %6330 = vmatprep.subr.mxu0 0.0
    %6331 = vmatpush2.msra.mxu0 0.0
    %6332 = vmatprep.subr.mxu0 0.0
    %6333 = vmatpush2.msra.mxu0 0.0
    %6334 = vmatprep.subr.mxu0 0.0
    %6335 = vmatpush2.msra.mxu0 0.0
    %6336 = vmatprep.subr.mxu0 0.0
    %6337 = vmatpush2.msra.mxu0 0.0
    %6338 = vmatprep.subr.mxu0 0.0
    %6339 = vmatpush2.msra.mxu0 0.0
    %6340 = vmatprep.subr.mxu0 0.0
    %6341 = vmatpush2.msra.mxu0 0.0
    %6342 = vmatprep.subr.mxu0 0.0
    %6343 = vmatpush2.msra.mxu0 0.0
    %6344 = vmatprep.subr.mxu0 0.0
    %6345 = vmatpush2.msra.mxu0 0.0
    %6346 = vmatprep.subr.mxu0 0.0
    %6347 = vmatpush2.msra.mxu0 0.0
    %6348 = vmatprep.mubr.f32.mxu0 0.0
    %6349 = vmatmul.mubr.f32.gmra.mxu0 %v6282
    %v6350 = vpop.f32.mrf.mxu0
    %v6351 = vadd.f32 0.0, %v6350
    %v6352 = vpop.f32.mrf.mxu0
    %6353 = vdwg.mxu0
    %6354 = vrot.lane.b32.xlu0 %v5765, 56
    %v6355 = vpop.permute.xlu0 %6354
    %v6358 = vsel %vm3943, %v6277, 0
    %6360 = vmatprep.subr.mxu0 0.0
    %6361 = vmatpush1.msra.mxu0 0.0
    %6362 = vmatprep.subr.mxu0 0.0
    %6363 = vmatpush1.msra.mxu0 0.0
    %6364 = vmatprep.subr.mxu0 0.0
    %6365 = vmatpush1.msra.mxu0 0.0
    %6366 = vmatprep.subr.mxu0 0.0
    %6367 = vmatpush1.msra.mxu0 0.0
    %6368 = vmatprep.subr.mxu0 0.0
    %6369 = vmatpush1.msra.mxu0 0.0
    %6370 = vmatprep.subr.mxu0 0.0
    %6371 = vmatpush1.msra.mxu0 0.0
    %6372 = vmatprep.subr.mxu0 0.0
    %6373 = vmatpush1.msra.mxu0 0.0
    %6374 = vmatprep.subr.mxu0 0.0
    %6375 = vmatpush1.msra.mxu0 0.0
    %6376 = vmatprep.subr.mxu0 0.0
    %6377 = vmatpush1.msra.mxu0 0.0
    %6378 = vmatprep.subr.mxu0 0.0
    %6379 = vmatpush1.msra.mxu0 0.0
    %6380 = vmatprep.subr.mxu0 0.0
    %6381 = vmatpush1.msra.mxu0 0.0
    %6382 = vmatprep.subr.mxu0 0.0
    %6383 = vmatpush1.msra.mxu0 0.0
    %6384 = vmatprep.subr.mxu0 0.0
    %6385 = vmatpush1.msra.mxu0 0.0
    %6386 = vmatprep.subr.mxu0 0.0
    %6387 = vmatpush1.msra.mxu0 0.0
    %6388 = vmatprep.subr.mxu0 0.0
    %6389 = vmatpush1.msra.mxu0 0.0
    %6390 = vmatprep.subr.mxu0 0.0
    %6391 = vmatpush1.msra.mxu0 %v6355
    %6392 = vmatprep.subr.mxu0 0.0
    %6393 = vmatpush2.msra.mxu0 0.0
    %6394 = vmatprep.subr.mxu0 0.0
    %6395 = vmatpush2.msra.mxu0 0.0
    %6396 = vmatprep.subr.mxu0 0.0
    %6397 = vmatpush2.msra.mxu0 0.0
    %6398 = vmatprep.subr.mxu0 0.0
    %6399 = vmatpush2.msra.mxu0 0.0
    %6400 = vmatprep.subr.mxu0 0.0
    %6401 = vmatpush2.msra.mxu0 0.0
    %6402 = vmatprep.subr.mxu0 0.0
    %6403 = vmatpush2.msra.mxu0 0.0
    %6404 = vmatprep.subr.mxu0 0.0
    %6405 = vmatpush2.msra.mxu0 0.0
    %6406 = vmatprep.subr.mxu0 0.0
    %6407 = vmatpush2.msra.mxu0 0.0
    %6408 = vmatprep.subr.mxu0 0.0
    %6409 = vmatpush2.msra.mxu0 0.0
    %6410 = vmatprep.subr.mxu0 0.0
    %6411 = vmatpush2.msra.mxu0 0.0
    %6412 = vmatprep.subr.mxu0 0.0
    %6413 = vmatpush2.msra.mxu0 0.0
    %6414 = vmatprep.subr.mxu0 0.0
    %6415 = vmatpush2.msra.mxu0 0.0
    %6416 = vmatprep.subr.mxu0 0.0
    %6417 = vmatpush2.msra.mxu0 0.0
    %6418 = vmatprep.subr.mxu0 0.0
    %6419 = vmatpush2.msra.mxu0 0.0
    %6420 = vmatprep.subr.mxu0 0.0
    %6421 = vmatpush2.msra.mxu0 0.0
    %6422 = vmatprep.subr.mxu0 0.0
    %6423 = vmatpush2.msra.mxu0 0.0
    %6424 = vmatprep.mubr.f32.mxu0 0.0
    %6425 = vmatmul.mubr.f32.gmra.mxu0 %v6358
    %v6426 = vpop.f32.mrf.mxu0
    %v6427 = vadd.f32 0.0, %v6426
    %v6428 = vpop.f32.mrf.mxu0
    %6429 = vdwg.mxu0
    %6430 = vrot.lane.b32.xlu0 %v5760, 112
    %v6431 = vpop.permute.xlu0 %6430
    %6432 = vrot.lane.b32.xlu0 %v5760, 80
    %v6433 = vpop.permute.xlu0 %6432
    %v6434 = vsel %vm3943, %v6431, 0
    %v6436 = vsel %vm3943, %v6433, 0
    %6438 = vmatprep.subr.mxu0 0.0
    %6439 = vmatpush1.xpose.msra.mxu0 0.0
    %6440 = vmatprep.subr.mxu0 0.0
    %6441 = vmatpush1.xpose.msra.mxu0 0.0
    %6442 = vmatprep.subr.mxu0 0.0
    %6443 = vmatpush1.xpose.msra.mxu0 0.0
    %6444 = vmatprep.subr.mxu0 0.0
    %6445 = vmatpush1.xpose.msra.mxu0 0.0
    %6446 = vmatprep.subr.mxu0 0.0
    %6447 = vmatpush1.xpose.msra.mxu0 0.0
    %6448 = vmatprep.subr.mxu0 0.0
    %6449 = vmatpush1.xpose.msra.mxu0 0.0
    %6450 = vmatprep.subr.mxu0 0.0
    %6451 = vmatpush1.xpose.msra.mxu0 0.0
    %6452 = vmatprep.subr.mxu0 0.0
    %6453 = vmatpush1.xpose.msra.mxu0 0.0
    %6454 = vmatprep.subr.mxu0 0.0
    %6455 = vmatpush1.xpose.msra.mxu0 0.0
    %6456 = vmatprep.subr.mxu0 0.0
    %6457 = vmatpush1.xpose.msra.mxu0 0.0
    %6458 = vmatprep.subr.mxu0 0.0
    %6459 = vmatpush1.xpose.msra.mxu0 0.0
    %6460 = vmatprep.subr.mxu0 0.0
    %6461 = vmatpush1.xpose.msra.mxu0 0.0
    %6462 = vmatprep.subr.mxu0 0.0
    %6463 = vmatpush1.xpose.msra.mxu0 0.0
    %6464 = vmatprep.subr.mxu0 0.0
    %6465 = vmatpush1.xpose.msra.mxu0 0.0
    %6466 = vmatprep.subr.mxu0 0.0
    %6467 = vmatpush1.xpose.msra.mxu0 0.0
    %6468 = vmatprep.subr.mxu0 0.0
    %6469 = vmatpush1.xpose.msra.mxu0 %v6436
    %6470 = vmatprep.subr.mxu0 0.0
    %6471 = vmatpush2.xpose.msra.mxu0 0.0
    %6472 = vmatprep.subr.mxu0 0.0
    %6473 = vmatpush2.xpose.msra.mxu0 0.0
    %6474 = vmatprep.subr.mxu0 0.0
    %6475 = vmatpush2.xpose.msra.mxu0 0.0
    %6476 = vmatprep.subr.mxu0 0.0
    %6477 = vmatpush2.xpose.msra.mxu0 0.0
    %6478 = vmatprep.subr.mxu0 0.0
    %6479 = vmatpush2.xpose.msra.mxu0 0.0
    %6480 = vmatprep.subr.mxu0 0.0
    %6481 = vmatpush2.xpose.msra.mxu0 0.0
    %6482 = vmatprep.subr.mxu0 0.0
    %6483 = vmatpush2.xpose.msra.mxu0 0.0
    %6484 = vmatprep.subr.mxu0 0.0
    %6485 = vmatpush2.xpose.msra.mxu0 0.0
    %6486 = vmatprep.subr.mxu0 0.0
    %6487 = vmatpush2.xpose.msra.mxu0 0.0
    %6488 = vmatprep.subr.mxu0 0.0
    %6489 = vmatpush2.xpose.msra.mxu0 0.0
    %6490 = vmatprep.subr.mxu0 0.0
    %6491 = vmatpush2.xpose.msra.mxu0 0.0
    %6492 = vmatprep.subr.mxu0 0.0
    %6493 = vmatpush2.xpose.msra.mxu0 0.0
    %6494 = vmatprep.subr.mxu0 0.0
    %6495 = vmatpush2.xpose.msra.mxu0 0.0
    %6496 = vmatprep.subr.mxu0 0.0
    %6497 = vmatpush2.xpose.msra.mxu0 0.0
    %6498 = vmatprep.subr.mxu0 0.0
    %6499 = vmatpush2.xpose.msra.mxu0 0.0
    %6500 = vmatprep.subr.mxu0 0.0
    %6501 = vmatpush2.xpose.msra.mxu0 0.0
    %6502 = vmatprep.mubr.f32.mxu0 0.0
    %6503 = vmatmul.mubr.f32.gmra.mxu0 %v6434
    %v6504 = vpop.f32.mrf.mxu0
    %v6505 = vadd.f32 0.0, %v6504
    %v6506 = vpop.f32.mrf.mxu0
    %6507 = vdwg.mxu0
    %6508 = vrot.lane.b32.xlu0 %v5765, 112
    %v6509 = vpop.permute.xlu0 %6508
    %6510 = vrot.lane.b32.xlu0 %v5765, 80
    %v6511 = vpop.permute.xlu0 %6510
    %v6512 = vsel %vm3943, %v6509, 0
    %v6514 = vsel %vm3943, %v6511, 0
    %6516 = vmatprep.subr.mxu0 0.0
    %6517 = vmatpush1.xpose.msra.mxu0 0.0
    %6518 = vmatprep.subr.mxu0 0.0
    %6519 = vmatpush1.xpose.msra.mxu0 0.0
    %6520 = vmatprep.subr.mxu0 0.0
    %6521 = vmatpush1.xpose.msra.mxu0 0.0
    %6522 = vmatprep.subr.mxu0 0.0
    %6523 = vmatpush1.xpose.msra.mxu0 0.0
    %6524 = vmatprep.subr.mxu0 0.0
    %6525 = vmatpush1.xpose.msra.mxu0 0.0
    %6526 = vmatprep.subr.mxu0 0.0
    %6527 = vmatpush1.xpose.msra.mxu0 0.0
    %6528 = vmatprep.subr.mxu0 0.0
    %6529 = vmatpush1.xpose.msra.mxu0 0.0
    %6530 = vmatprep.subr.mxu0 0.0
    %6531 = vmatpush1.xpose.msra.mxu0 0.0
    %6532 = vmatprep.subr.mxu0 0.0
    %6533 = vmatpush1.xpose.msra.mxu0 0.0
    %6534 = vmatprep.subr.mxu0 0.0
    %6535 = vmatpush1.xpose.msra.mxu0 0.0
    %6536 = vmatprep.subr.mxu0 0.0
    %6537 = vmatpush1.xpose.msra.mxu0 0.0
    %6538 = vmatprep.subr.mxu0 0.0
    %6539 = vmatpush1.xpose.msra.mxu0 0.0
    %6540 = vmatprep.subr.mxu0 0.0
    %6541 = vmatpush1.xpose.msra.mxu0 0.0
    %6542 = vmatprep.subr.mxu0 0.0
    %6543 = vmatpush1.xpose.msra.mxu0 0.0
    %6544 = vmatprep.subr.mxu0 0.0
    %6545 = vmatpush1.xpose.msra.mxu0 0.0
    %6546 = vmatprep.subr.mxu0 0.0
    %6547 = vmatpush1.xpose.msra.mxu0 %v6514
    %6548 = vmatprep.subr.mxu0 0.0
    %6549 = vmatpush2.xpose.msra.mxu0 0.0
    %6550 = vmatprep.subr.mxu0 0.0
    %6551 = vmatpush2.xpose.msra.mxu0 0.0
    %6552 = vmatprep.subr.mxu0 0.0
    %6553 = vmatpush2.xpose.msra.mxu0 0.0
    %6554 = vmatprep.subr.mxu0 0.0
    %6555 = vmatpush2.xpose.msra.mxu0 0.0
    %6556 = vmatprep.subr.mxu0 0.0
    %6557 = vmatpush2.xpose.msra.mxu0 0.0
    %6558 = vmatprep.subr.mxu0 0.0
    %6559 = vmatpush2.xpose.msra.mxu0 0.0
    %6560 = vmatprep.subr.mxu0 0.0
    %6561 = vmatpush2.xpose.msra.mxu0 0.0
    %6562 = vmatprep.subr.mxu0 0.0
    %6563 = vmatpush2.xpose.msra.mxu0 0.0
    %6564 = vmatprep.subr.mxu0 0.0
    %6565 = vmatpush2.xpose.msra.mxu0 0.0
    %6566 = vmatprep.subr.mxu0 0.0
    %6567 = vmatpush2.xpose.msra.mxu0 0.0
    %6568 = vmatprep.subr.mxu0 0.0
    %6569 = vmatpush2.xpose.msra.mxu0 0.0
    %6570 = vmatprep.subr.mxu0 0.0
    %6571 = vmatpush2.xpose.msra.mxu0 0.0
    %6572 = vmatprep.subr.mxu0 0.0
    %6573 = vmatpush2.xpose.msra.mxu0 0.0
    %6574 = vmatprep.subr.mxu0 0.0
    %6575 = vmatpush2.xpose.msra.mxu0 0.0
    %6576 = vmatprep.subr.mxu0 0.0
    %6577 = vmatpush2.xpose.msra.mxu0 0.0
    %6578 = vmatprep.subr.mxu0 0.0
    %6579 = vmatpush2.xpose.msra.mxu0 0.0
    %6580 = vmatprep.mubr.f32.mxu0 0.0
    %6581 = vmatmul.mubr.f32.gmra.mxu0 %v6512
    %v6582 = vpop.f32.mrf.mxu0
    %v6583 = vadd.f32 0.0, %v6582
    %v6584 = vpop.f32.mrf.mxu0
    %6585 = vdwg.mxu0
    %v6586 = vmul.f32 %v6505, 0.35355338
    %v6587 = vmul.f32 %v6583, 0.35355338
    %v6588 = vsel %vm3943, %v6586, -inf
    %6589 = vmax.xlane.f32.xlu0 %v6588
    %v6590 = vpop.xlane.xlu0 %6589
    %v6591 = vsel %vm3943, %v6587, -inf
    %6592 = vmax.xlane.f32.xlu0 %v6591
    %v6593 = vpop.xlane.xlu0 %6592
    %v6594 = vsub.f32 %v6586, %v6590
    %v6595 = vsub.f32 %v6587, %v6593
    %v6596 = vmul.f32 %v6594, 1.442695
    %v6597 = vpow.pop %v6596
    %v6598 = vmul.f32 %v6595, 1.442695
    %v6599 = vpow.pop %v6598
    %v6600 = vsel %vm3943, %v6597, 0.0
    %6601 = vadd.xlane.f32.xlu0 %v6600
    %v6602 = vpop.xlane.xlu0 %6601
    %v6603 = vsel %vm3943, %v6599, 0.0
    %6604 = vadd.xlane.f32.xlu0 %v6603
    %v6605 = vpop.xlane.xlu0 %6604
    %v6606 = vrcp.pop %v6602
    %v6607 = vrcp.pop %v6605
    %v6608 = vmul.f32 %v6597, %v6606
    %v6609 = vmul.f32 %v6599, %v6607
    %6610 = vrot.lane.b32.xlu0 %v5760, 48
    %v6611 = vpop.permute.xlu0 %6610
    %v6614 = vsel %vm3943, %v6608, 0
    %6616 = vmatprep.subr.mxu0 0.0
    %6617 = vmatpush1.msra.mxu0 0.0
    %6618 = vmatprep.subr.mxu0 0.0
    %6619 = vmatpush1.msra.mxu0 0.0
    %6620 = vmatprep.subr.mxu0 0.0
    %6621 = vmatpush1.msra.mxu0 0.0
    %6622 = vmatprep.subr.mxu0 0.0
    %6623 = vmatpush1.msra.mxu0 0.0
    %6624 = vmatprep.subr.mxu0 0.0
    %6625 = vmatpush1.msra.mxu0 0.0
    %6626 = vmatprep.subr.mxu0 0.0
    %6627 = vmatpush1.msra.mxu0 0.0
    %6628 = vmatprep.subr.mxu0 0.0
    %6629 = vmatpush1.msra.mxu0 0.0
    %6630 = vmatprep.subr.mxu0 0.0
    %6631 = vmatpush1.msra.mxu0 0.0
    %6632 = vmatprep.subr.mxu0 0.0
    %6633 = vmatpush1.msra.mxu0 0.0
    %6634 = vmatprep.subr.mxu0 0.0
    %6635 = vmatpush1.msra.mxu0 0.0
    %6636 = vmatprep.subr.mxu0 0.0
    %6637 = vmatpush1.msra.mxu0 0.0
    %6638 = vmatprep.subr.mxu0 0.0
    %6639 = vmatpush1.msra.mxu0 0.0
    %6640 = vmatprep.subr.mxu0 0.0
    %6641 = vmatpush1.msra.mxu0 0.0
    %6642 = vmatprep.subr.mxu0 0.0
    %6643 = vmatpush1.msra.mxu0 0.0
    %6644 = vmatprep.subr.mxu0 0.0
    %6645 = vmatpush1.msra.mxu0 0.0
    %6646 = vmatprep.subr.mxu0 0.0
    %6647 = vmatpush1.msra.mxu0 %v6611
    %6648 = vmatprep.subr.mxu0 0.0
    %6649 = vmatpush2.msra.mxu0 0.0
    %6650 = vmatprep.subr.mxu0 0.0
    %6651 = vmatpush2.msra.mxu0 0.0
    %6652 = vmatprep.subr.mxu0 0.0
    %6653 = vmatpush2.msra.mxu0 0.0
    %6654 = vmatprep.subr.mxu0 0.0
    %6655 = vmatpush2.msra.mxu0 0.0
    %6656 = vmatprep.subr.mxu0 0.0
    %6657 = vmatpush2.msra.mxu0 0.0
    %6658 = vmatprep.subr.mxu0 0.0
    %6659 = vmatpush2.msra.mxu0 0.0
    %6660 = vmatprep.subr.mxu0 0.0
    %6661 = vmatpush2.msra.mxu0 0.0
    %6662 = vmatprep.subr.mxu0 0.0
    %6663 = vmatpush2.msra.mxu0 0.0
    %6664 = vmatprep.subr.mxu0 0.0
    %6665 = vmatpush2.msra.mxu0 0.0
    %6666 = vmatprep.subr.mxu0 0.0
    %6667 = vmatpush2.msra.mxu0 0.0
    %6668 = vmatprep.subr.mxu0 0.0
    %6669 = vmatpush2.msra.mxu0 0.0
    %6670 = vmatprep.subr.mxu0 0.0
    %6671 = vmatpush2.msra.mxu0 0.0
    %6672 = vmatprep.subr.mxu0 0.0
    %6673 = vmatpush2.msra.mxu0 0.0
    %6674 = vmatprep.subr.mxu0 0.0
    %6675 = vmatpush2.msra.mxu0 0.0
    %6676 = vmatprep.subr.mxu0 0.0
    %6677 = vmatpush2.msra.mxu0 0.0
    %6678 = vmatprep.subr.mxu0 0.0
    %6679 = vmatpush2.msra.mxu0 0.0
    %6680 = vmatprep.mubr.f32.mxu0 0.0
    %6681 = vmatmul.mubr.f32.gmra.mxu0 %v6614
    %v6682 = vpop.f32.mrf.mxu0
    %v6683 = vadd.f32 0.0, %v6682
    %v6684 = vpop.f32.mrf.mxu0
    %6685 = vdwg.mxu0
    %6686 = vrot.lane.b32.xlu0 %v5765, 48
    %v6687 = vpop.permute.xlu0 %6686
    %v6690 = vsel %vm3943, %v6609, 0
    %6692 = vmatprep.subr.mxu0 0.0
    %6693 = vmatpush1.msra.mxu0 0.0
    %6694 = vmatprep.subr.mxu0 0.0
    %6695 = vmatpush1.msra.mxu0 0.0
    %6696 = vmatprep.subr.mxu0 0.0
    %6697 = vmatpush1.msra.mxu0 0.0
    %6698 = vmatprep.subr.mxu0 0.0
    %6699 = vmatpush1.msra.mxu0 0.0
    %6700 = vmatprep.subr.mxu0 0.0
    %6701 = vmatpush1.msra.mxu0 0.0
    %6702 = vmatprep.subr.mxu0 0.0
    %6703 = vmatpush1.msra.mxu0 0.0
    %6704 = vmatprep.subr.mxu0 0.0
    %6705 = vmatpush1.msra.mxu0 0.0
    %6706 = vmatprep.subr.mxu0 0.0
    %6707 = vmatpush1.msra.mxu0 0.0
    %6708 = vmatprep.subr.mxu0 0.0
    %6709 = vmatpush1.msra.mxu0 0.0
    %6710 = vmatprep.subr.mxu0 0.0
    %6711 = vmatpush1.msra.mxu0 0.0
    %6712 = vmatprep.subr.mxu0 0.0
    %6713 = vmatpush1.msra.mxu0 0.0
    %6714 = vmatprep.subr.mxu0 0.0
    %6715 = vmatpush1.msra.mxu0 0.0
    %6716 = vmatprep.subr.mxu0 0.0
    %6717 = vmatpush1.msra.mxu0 0.0
    %6718 = vmatprep.subr.mxu0 0.0
    %6719 = vmatpush1.msra.mxu0 0.0
    %6720 = vmatprep.subr.mxu0 0.0
    %6721 = vmatpush1.msra.mxu0 0.0
    %6722 = vmatprep.subr.mxu0 0.0
    %6723 = vmatpush1.msra.mxu0 %v6687
    %6724 = vmatprep.subr.mxu0 0.0
    %6725 = vmatpush2.msra.mxu0 0.0
    %6726 = vmatprep.subr.mxu0 0.0
    %6727 = vmatpush2.msra.mxu0 0.0
    %6728 = vmatprep.subr.mxu0 0.0
    %6729 = vmatpush2.msra.mxu0 0.0
    %6730 = vmatprep.subr.mxu0 0.0
    %6731 = vmatpush2.msra.mxu0 0.0
    %6732 = vmatprep.subr.mxu0 0.0
    %6733 = vmatpush2.msra.mxu0 0.0
    %6734 = vmatprep.subr.mxu0 0.0
    %6735 = vmatpush2.msra.mxu0 0.0
    %6736 = vmatprep.subr.mxu0 0.0
    %6737 = vmatpush2.msra.mxu0 0.0
    %6738 = vmatprep.subr.mxu0 0.0
    %6739 = vmatpush2.msra.mxu0 0.0
    %6740 = vmatprep.subr.mxu0 0.0
    %6741 = vmatpush2.msra.mxu0 0.0
    %6742 = vmatprep.subr.mxu0 0.0
    %6743 = vmatpush2.msra.mxu0 0.0
    %6744 = vmatprep.subr.mxu0 0.0
    %6745 = vmatpush2.msra.mxu0 0.0
    %6746 = vmatprep.subr.mxu0 0.0
    %6747 = vmatpush2.msra.mxu0 0.0
    %6748 = vmatprep.subr.mxu0 0.0
    %6749 = vmatpush2.msra.mxu0 0.0
    %6750 = vmatprep.subr.mxu0 0.0
    %6751 = vmatpush2.msra.mxu0 0.0
    %6752 = vmatprep.subr.mxu0 0.0
    %6753 = vmatpush2.msra.mxu0 0.0
    %6754 = vmatprep.subr.mxu0 0.0
    %6755 = vmatpush2.msra.mxu0 0.0
    %6756 = vmatprep.mubr.f32.mxu0 0.0
    %6757 = vmatmul.mubr.f32.gmra.mxu0 %v6690
    %v6758 = vpop.f32.mrf.mxu0
    %v6759 = vadd.f32 0.0, %v6758
    %v6760 = vpop.f32.mrf.mxu0
    %6761 = vdwg.mxu0
    %6762 = vrot.lane.b32.xlu0 %v5760, 104
    %v6763 = vpop.permute.xlu0 %6762
    %6764 = vrot.lane.b32.xlu0 %v5760, 72
    %v6765 = vpop.permute.xlu0 %6764
    %v6766 = vsel %vm3943, %v6763, 0
    %v6768 = vsel %vm3943, %v6765, 0
    %6770 = vmatprep.subr.mxu0 0.0
    %6771 = vmatpush1.xpose.msra.mxu0 0.0
    %6772 = vmatprep.subr.mxu0 0.0
    %6773 = vmatpush1.xpose.msra.mxu0 0.0
    %6774 = vmatprep.subr.mxu0 0.0
    %6775 = vmatpush1.xpose.msra.mxu0 0.0
    %6776 = vmatprep.subr.mxu0 0.0
    %6777 = vmatpush1.xpose.msra.mxu0 0.0
    %6778 = vmatprep.subr.mxu0 0.0
    %6779 = vmatpush1.xpose.msra.mxu0 0.0
    %6780 = vmatprep.subr.mxu0 0.0
    %6781 = vmatpush1.xpose.msra.mxu0 0.0
    %6782 = vmatprep.subr.mxu0 0.0
    %6783 = vmatpush1.xpose.msra.mxu0 0.0
    %6784 = vmatprep.subr.mxu0 0.0
    %6785 = vmatpush1.xpose.msra.mxu0 0.0
    %6786 = vmatprep.subr.mxu0 0.0
    %6787 = vmatpush1.xpose.msra.mxu0 0.0
    %6788 = vmatprep.subr.mxu0 0.0
    %6789 = vmatpush1.xpose.msra.mxu0 0.0
    %6790 = vmatprep.subr.mxu0 0.0
    %6791 = vmatpush1.xpose.msra.mxu0 0.0
    %6792 = vmatprep.subr.mxu0 0.0
    %6793 = vmatpush1.xpose.msra.mxu0 0.0
    %6794 = vmatprep.subr.mxu0 0.0
    %6795 = vmatpush1.xpose.msra.mxu0 0.0
    %6796 = vmatprep.subr.mxu0 0.0
    %6797 = vmatpush1.xpose.msra.mxu0 0.0
    %6798 = vmatprep.subr.mxu0 0.0
    %6799 = vmatpush1.xpose.msra.mxu0 0.0
    %6800 = vmatprep.subr.mxu0 0.0
    %6801 = vmatpush1.xpose.msra.mxu0 %v6768
    %6802 = vmatprep.subr.mxu0 0.0
    %6803 = vmatpush2.xpose.msra.mxu0 0.0
    %6804 = vmatprep.subr.mxu0 0.0
    %6805 = vmatpush2.xpose.msra.mxu0 0.0
    %6806 = vmatprep.subr.mxu0 0.0
    %6807 = vmatpush2.xpose.msra.mxu0 0.0
    %6808 = vmatprep.subr.mxu0 0.0
    %6809 = vmatpush2.xpose.msra.mxu0 0.0
    %6810 = vmatprep.subr.mxu0 0.0
    %6811 = vmatpush2.xpose.msra.mxu0 0.0
    %6812 = vmatprep.subr.mxu0 0.0
    %6813 = vmatpush2.xpose.msra.mxu0 0.0
    %6814 = vmatprep.subr.mxu0 0.0
    %6815 = vmatpush2.xpose.msra.mxu0 0.0
    %6816 = vmatprep.subr.mxu0 0.0
    %6817 = vmatpush2.xpose.msra.mxu0 0.0
    %6818 = vmatprep.subr.mxu0 0.0
    %6819 = vmatpush2.xpose.msra.mxu0 0.0
    %6820 = vmatprep.subr.mxu0 0.0
    %6821 = vmatpush2.xpose.msra.mxu0 0.0
    %6822 = vmatprep.subr.mxu0 0.0
    %6823 = vmatpush2.xpose.msra.mxu0 0.0
    %6824 = vmatprep.subr.mxu0 0.0
    %6825 = vmatpush2.xpose.msra.mxu0 0.0
    %6826 = vmatprep.subr.mxu0 0.0
    %6827 = vmatpush2.xpose.msra.mxu0 0.0
    %6828 = vmatprep.subr.mxu0 0.0
    %6829 = vmatpush2.xpose.msra.mxu0 0.0
    %6830 = vmatprep.subr.mxu0 0.0
    %6831 = vmatpush2.xpose.msra.mxu0 0.0
    %6832 = vmatprep.subr.mxu0 0.0
    %6833 = vmatpush2.xpose.msra.mxu0 0.0
    %6834 = vmatprep.mubr.f32.mxu0 0.0
    %6835 = vmatmul.mubr.f32.gmra.mxu0 %v6766
    %v6836 = vpop.f32.mrf.mxu0
    %v6837 = vadd.f32 0.0, %v6836
    %v6838 = vpop.f32.mrf.mxu0
    %6839 = vdwg.mxu0
    %6840 = vrot.lane.b32.xlu0 %v5765, 104
    %v6841 = vpop.permute.xlu0 %6840
    %6842 = vrot.lane.b32.xlu0 %v5765, 72
    %v6843 = vpop.permute.xlu0 %6842
    %v6844 = vsel %vm3943, %v6841, 0
    %v6846 = vsel %vm3943, %v6843, 0
    %6848 = vmatprep.subr.mxu0 0.0
    %6849 = vmatpush1.xpose.msra.mxu0 0.0
    %6850 = vmatprep.subr.mxu0 0.0
    %6851 = vmatpush1.xpose.msra.mxu0 0.0
    %6852 = vmatprep.subr.mxu0 0.0
    %6853 = vmatpush1.xpose.msra.mxu0 0.0
    %6854 = vmatprep.subr.mxu0 0.0
    %6855 = vmatpush1.xpose.msra.mxu0 0.0
    %6856 = vmatprep.subr.mxu0 0.0
    %6857 = vmatpush1.xpose.msra.mxu0 0.0
    %6858 = vmatprep.subr.mxu0 0.0
    %6859 = vmatpush1.xpose.msra.mxu0 0.0
    %6860 = vmatprep.subr.mxu0 0.0
    %6861 = vmatpush1.xpose.msra.mxu0 0.0
    %6862 = vmatprep.subr.mxu0 0.0
    %6863 = vmatpush1.xpose.msra.mxu0 0.0
    %6864 = vmatprep.subr.mxu0 0.0
    %6865 = vmatpush1.xpose.msra.mxu0 0.0
    %6866 = vmatprep.subr.mxu0 0.0
    %6867 = vmatpush1.xpose.msra.mxu0 0.0
    %6868 = vmatprep.subr.mxu0 0.0
    %6869 = vmatpush1.xpose.msra.mxu0 0.0
    %6870 = vmatprep.subr.mxu0 0.0
    %6871 = vmatpush1.xpose.msra.mxu0 0.0
    %6872 = vmatprep.subr.mxu0 0.0
    %6873 = vmatpush1.xpose.msra.mxu0 0.0
    %6874 = vmatprep.subr.mxu0 0.0
    %6875 = vmatpush1.xpose.msra.mxu0 0.0
    %6876 = vmatprep.subr.mxu0 0.0
    %6877 = vmatpush1.xpose.msra.mxu0 0.0
    %6878 = vmatprep.subr.mxu0 0.0
    %6879 = vmatpush1.xpose.msra.mxu0 %v6846
    %6880 = vmatprep.subr.mxu0 0.0
    %6881 = vmatpush2.xpose.msra.mxu0 0.0
    %6882 = vmatprep.subr.mxu0 0.0
    %6883 = vmatpush2.xpose.msra.mxu0 0.0
    %6884 = vmatprep.subr.mxu0 0.0
    %6885 = vmatpush2.xpose.msra.mxu0 0.0
    %6886 = vmatprep.subr.mxu0 0.0
    %6887 = vmatpush2.xpose.msra.mxu0 0.0
    %6888 = vmatprep.subr.mxu0 0.0
    %6889 = vmatpush2.xpose.msra.mxu0 0.0
    %6890 = vmatprep.subr.mxu0 0.0
    %6891 = vmatpush2.xpose.msra.mxu0 0.0
    %6892 = vmatprep.subr.mxu0 0.0
    %6893 = vmatpush2.xpose.msra.mxu0 0.0
    %6894 = vmatprep.subr.mxu0 0.0
    %6895 = vmatpush2.xpose.msra.mxu0 0.0
    %6896 = vmatprep.subr.mxu0 0.0
    %6897 = vmatpush2.xpose.msra.mxu0 0.0
    %6898 = vmatprep.subr.mxu0 0.0
    %6899 = vmatpush2.xpose.msra.mxu0 0.0
    %6900 = vmatprep.subr.mxu0 0.0
    %6901 = vmatpush2.xpose.msra.mxu0 0.0
    %6902 = vmatprep.subr.mxu0 0.0
    %6903 = vmatpush2.xpose.msra.mxu0 0.0
    %6904 = vmatprep.subr.mxu0 0.0
    %6905 = vmatpush2.xpose.msra.mxu0 0.0
    %6906 = vmatprep.subr.mxu0 0.0
    %6907 = vmatpush2.xpose.msra.mxu0 0.0
    %6908 = vmatprep.subr.mxu0 0.0
    %6909 = vmatpush2.xpose.msra.mxu0 0.0
    %6910 = vmatprep.subr.mxu0 0.0
    %6911 = vmatpush2.xpose.msra.mxu0 0.0
    %6912 = vmatprep.mubr.f32.mxu0 0.0
    %6913 = vmatmul.mubr.f32.gmra.mxu0 %v6844
    %v6914 = vpop.f32.mrf.mxu0
    %v6915 = vadd.f32 0.0, %v6914
    %v6916 = vpop.f32.mrf.mxu0
    %6917 = vdwg.mxu0
    %v6918 = vmul.f32 %v6837, 0.35355338
    %v6919 = vmul.f32 %v6915, 0.35355338
    %v6920 = vsel %vm3943, %v6918, -inf
    %6921 = vmax.xlane.f32.xlu0 %v6920
    %v6922 = vpop.xlane.xlu0 %6921
    %v6923 = vsel %vm3943, %v6919, -inf
    %6924 = vmax.xlane.f32.xlu0 %v6923
    %v6925 = vpop.xlane.xlu0 %6924
    %v6926 = vsub.f32 %v6918, %v6922
    %v6927 = vsub.f32 %v6919, %v6925
    %v6928 = vmul.f32 %v6926, 1.442695
    %v6929 = vpow.pop %v6928
    %v6930 = vmul.f32 %v6927, 1.442695
    %v6931 = vpow.pop %v6930
    %v6932 = vsel %vm3943, %v6929, 0.0
    %6933 = vadd.xlane.f32.xlu0 %v6932
    %v6934 = vpop.xlane.xlu0 %6933
    %v6935 = vsel %vm3943, %v6931, 0.0
    %6936 = vadd.xlane.f32.xlu0 %v6935
    %v6937 = vpop.xlane.xlu0 %6936
    %v6938 = vrcp.pop %v6934
    %v6939 = vrcp.pop %v6937
    %v6940 = vmul.f32 %v6929, %v6938
    %v6941 = vmul.f32 %v6931, %v6939
    %6942 = vrot.lane.b32.xlu0 %v5760, 40
    %v6943 = vpop.permute.xlu0 %6942
    %v6946 = vsel %vm3943, %v6940, 0
    %6948 = vmatprep.subr.mxu0 0.0
    %6949 = vmatpush1.msra.mxu0 0.0
    %6950 = vmatprep.subr.mxu0 0.0
    %6951 = vmatpush1.msra.mxu0 0.0
    %6952 = vmatprep.subr.mxu0 0.0
    %6953 = vmatpush1.msra.mxu0 0.0
    %6954 = vmatprep.subr.mxu0 0.0
    %6955 = vmatpush1.msra.mxu0 0.0
    %6956 = vmatprep.subr.mxu0 0.0
    %6957 = vmatpush1.msra.mxu0 0.0
    %6958 = vmatprep.subr.mxu0 0.0
    %6959 = vmatpush1.msra.mxu0 0.0
    %6960 = vmatprep.subr.mxu0 0.0
    %6961 = vmatpush1.msra.mxu0 0.0
    %6962 = vmatprep.subr.mxu0 0.0
    %6963 = vmatpush1.msra.mxu0 0.0
    %6964 = vmatprep.subr.mxu0 0.0
    %6965 = vmatpush1.msra.mxu0 0.0
    %6966 = vmatprep.subr.mxu0 0.0
    %6967 = vmatpush1.msra.mxu0 0.0
    %6968 = vmatprep.subr.mxu0 0.0
    %6969 = vmatpush1.msra.mxu0 0.0
    %6970 = vmatprep.subr.mxu0 0.0
    %6971 = vmatpush1.msra.mxu0 0.0
    %6972 = vmatprep.subr.mxu0 0.0
    %6973 = vmatpush1.msra.mxu0 0.0
    %6974 = vmatprep.subr.mxu0 0.0
    %6975 = vmatpush1.msra.mxu0 0.0
    %6976 = vmatprep.subr.mxu0 0.0
    %6977 = vmatpush1.msra.mxu0 0.0
    %6978 = vmatprep.subr.mxu0 0.0
    %6979 = vmatpush1.msra.mxu0 %v6943
    %6980 = vmatprep.subr.mxu0 0.0
    %6981 = vmatpush2.msra.mxu0 0.0
    %6982 = vmatprep.subr.mxu0 0.0
    %6983 = vmatpush2.msra.mxu0 0.0
    %6984 = vmatprep.subr.mxu0 0.0
    %6985 = vmatpush2.msra.mxu0 0.0
    %6986 = vmatprep.subr.mxu0 0.0
    %6987 = vmatpush2.msra.mxu0 0.0
    %6988 = vmatprep.subr.mxu0 0.0
    %6989 = vmatpush2.msra.mxu0 0.0
    %6990 = vmatprep.subr.mxu0 0.0
    %6991 = vmatpush2.msra.mxu0 0.0
    %6992 = vmatprep.subr.mxu0 0.0
    %6993 = vmatpush2.msra.mxu0 0.0
    %6994 = vmatprep.subr.mxu0 0.0
    %6995 = vmatpush2.msra.mxu0 0.0
    %6996 = vmatprep.subr.mxu0 0.0
    %6997 = vmatpush2.msra.mxu0 0.0
    %6998 = vmatprep.subr.mxu0 0.0
    %6999 = vmatpush2.msra.mxu0 0.0
    %7000 = vmatprep.subr.mxu0 0.0
    %7001 = vmatpush2.msra.mxu0 0.0
    %7002 = vmatprep.subr.mxu0 0.0
    %7003 = vmatpush2.msra.mxu0 0.0
    %7004 = vmatprep.subr.mxu0 0.0
    %7005 = vmatpush2.msra.mxu0 0.0
    %7006 = vmatprep.subr.mxu0 0.0
    %7007 = vmatpush2.msra.mxu0 0.0
    %7008 = vmatprep.subr.mxu0 0.0
    %7009 = vmatpush2.msra.mxu0 0.0
    %7010 = vmatprep.subr.mxu0 0.0
    %7011 = vmatpush2.msra.mxu0 0.0
    %7012 = vmatprep.mubr.f32.mxu0 0.0
    %7013 = vmatmul.mubr.f32.gmra.mxu0 %v6946
    %v7014 = vpop.f32.mrf.mxu0
    %v7015 = vadd.f32 0.0, %v7014
    %v7016 = vpop.f32.mrf.mxu0
    %7017 = vdwg.mxu0
    %7018 = vrot.lane.b32.xlu0 %v5765, 40
    %v7019 = vpop.permute.xlu0 %7018
    %v7022 = vsel %vm3943, %v6941, 0
    %7024 = vmatprep.subr.mxu0 0.0
    %7025 = vmatpush1.msra.mxu0 0.0
    %7026 = vmatprep.subr.mxu0 0.0
    %7027 = vmatpush1.msra.mxu0 0.0
    %7028 = vmatprep.subr.mxu0 0.0
    %7029 = vmatpush1.msra.mxu0 0.0
    %7030 = vmatprep.subr.mxu0 0.0
    %7031 = vmatpush1.msra.mxu0 0.0
    %7032 = vmatprep.subr.mxu0 0.0
    %7033 = vmatpush1.msra.mxu0 0.0
    %7034 = vmatprep.subr.mxu0 0.0
    %7035 = vmatpush1.msra.mxu0 0.0
    %7036 = vmatprep.subr.mxu0 0.0
    %7037 = vmatpush1.msra.mxu0 0.0
    %7038 = vmatprep.subr.mxu0 0.0
    %7039 = vmatpush1.msra.mxu0 0.0
    %7040 = vmatprep.subr.mxu0 0.0
    %7041 = vmatpush1.msra.mxu0 0.0
    %7042 = vmatprep.subr.mxu0 0.0
    %7043 = vmatpush1.msra.mxu0 0.0
    %7044 = vmatprep.subr.mxu0 0.0
    %7045 = vmatpush1.msra.mxu0 0.0
    %7046 = vmatprep.subr.mxu0 0.0
    %7047 = vmatpush1.msra.mxu0 0.0
    %7048 = vmatprep.subr.mxu0 0.0
    %7049 = vmatpush1.msra.mxu0 0.0
    %7050 = vmatprep.subr.mxu0 0.0
    %7051 = vmatpush1.msra.mxu0 0.0
    %7052 = vmatprep.subr.mxu0 0.0
    %7053 = vmatpush1.msra.mxu0 0.0
    %7054 = vmatprep.subr.mxu0 0.0
    %7055 = vmatpush1.msra.mxu0 %v7019
    %7056 = vmatprep.subr.mxu0 0.0
    %7057 = vmatpush2.msra.mxu0 0.0
    %7058 = vmatprep.subr.mxu0 0.0
    %7059 = vmatpush2.msra.mxu0 0.0
    %7060 = vmatprep.subr.mxu0 0.0
    %7061 = vmatpush2.msra.mxu0 0.0
    %7062 = vmatprep.subr.mxu0 0.0
    %7063 = vmatpush2.msra.mxu0 0.0
    %7064 = vmatprep.subr.mxu0 0.0
    %7065 = vmatpush2.msra.mxu0 0.0
    %7066 = vmatprep.subr.mxu0 0.0
    %7067 = vmatpush2.msra.mxu0 0.0
    %7068 = vmatprep.subr.mxu0 0.0
    %7069 = vmatpush2.msra.mxu0 0.0
    %7070 = vmatprep.subr.mxu0 0.0
    %7071 = vmatpush2.msra.mxu0 0.0
    %7072 = vmatprep.subr.mxu0 0.0
    %7073 = vmatpush2.msra.mxu0 0.0
    %7074 = vmatprep.subr.mxu0 0.0
    %7075 = vmatpush2.msra.mxu0 0.0
    %7076 = vmatprep.subr.mxu0 0.0
    %7077 = vmatpush2.msra.mxu0 0.0
    %7078 = vmatprep.subr.mxu0 0.0
    %7079 = vmatpush2.msra.mxu0 0.0
    %7080 = vmatprep.subr.mxu0 0.0
    %7081 = vmatpush2.msra.mxu0 0.0
    %7082 = vmatprep.subr.mxu0 0.0
    %7083 = vmatpush2.msra.mxu0 0.0
    %7084 = vmatprep.subr.mxu0 0.0
    %7085 = vmatpush2.msra.mxu0 0.0
    %7086 = vmatprep.subr.mxu0 0.0
    %7087 = vmatpush2.msra.mxu0 0.0
    %7088 = vmatprep.mubr.f32.mxu0 0.0
    %7089 = vmatmul.mubr.f32.gmra.mxu0 %v7022
    %v7090 = vpop.f32.mrf.mxu0
    %v7091 = vadd.f32 0.0, %v7090
    %v7092 = vpop.f32.mrf.mxu0
    %7093 = vdwg.mxu0
    %7096 = vrot.lane.b32.xlu0 %v6351, 8
    %v7097 = vpop.permute.xlu0 %7096
    %7098 = vrot.lane.b32.xlu0 %v6427, 8
    %v7099 = vpop.permute.xlu0 %7098
    %7104 = vrot.lane.b32.xlu0 %v6683, 16
    %v7105 = vpop.permute.xlu0 %7104
    %7106 = vrot.lane.b32.xlu0 %v6759, 16
    %v7107 = vpop.permute.xlu0 %7106
    %7112 = vrot.lane.b32.xlu0 %v7015, 24
    %v7113 = vpop.permute.xlu0 %7112
    %7114 = vrot.lane.b32.xlu0 %v7091, 24
    %v7115 = vpop.permute.xlu0 %7114
    %v7118 = vsel %vm3943, %v6019, %v7097
    %v7119 = vsel %vm3943, %v6095, %v7099
    %v7120 = vsel %vm1412, %v7118, %v7105
    %v7121 = vsel %vm1412, %v7119, %v7107
    %v7122 = vsel %vm5295, %v7120, %v7113
    %v7123 = vsel %vm5295, %v7121, %v7115
    %s7124 = scalar_lea.vmem %s14, 32
    %v7125 = vld [vmem:[%s7124] sm:$0xff]
    %v7126 = vld [vmem:[%s7124 + $0x8] sm:$0xff]
    %v7127 = vld [vmem:[%s7124 + $0x10] sm:$0xff]
    %v7128 = vld [vmem:[%s7124 + $0x18] sm:$0xff]
    %s7129 = scalar_lea.vmem %s15, 1
    %v7130 = vld [vmem:[%s7129] sm:$0x1]
    %v7132 = vlaneseq
    %v7133 = vshrl.u32 %v7132, 7
    %v7134 = vsub.s32 0, %v7133
    %v7135 = vrot.slane %v7130, %v7134
    %v7138 = vsel %vm3762, %v7122, 0
    %v7141 = vsel %vm3762, %v7123, 0
    %7143 = vmatprep.subr.mxu0 0.0
    %7144 = vmatpush1.msra.mxu0 0.0
    %7145 = vmatprep.subr.mxu0 0.0
    %7146 = vmatpush1.msra.mxu0 0.0
    %7147 = vmatprep.subr.mxu0 0.0
    %7148 = vmatpush1.msra.mxu0 0.0
    %7149 = vmatprep.subr.mxu0 0.0
    %7150 = vmatpush1.msra.mxu0 0.0
    %7151 = vmatprep.subr.mxu0 0.0
    %7152 = vmatpush1.msra.mxu0 0.0
    %7153 = vmatprep.subr.mxu0 0.0
    %7154 = vmatpush1.msra.mxu0 0.0
    %7155 = vmatprep.subr.mxu0 0.0
    %7156 = vmatpush1.msra.mxu0 0.0
    %7157 = vmatprep.subr.mxu0 0.0
    %7158 = vmatpush1.msra.mxu0 0.0
    %7159 = vmatprep.subr.mxu0 0.0
    %7160 = vmatpush1.msra.mxu0 0.0
    %7161 = vmatprep.subr.mxu0 0.0
    %7162 = vmatpush1.msra.mxu0 0.0
    %7163 = vmatprep.subr.mxu0 0.0
    %7164 = vmatpush1.msra.mxu0 0.0
    %7165 = vmatprep.subr.mxu0 0.0
    %7166 = vmatpush1.msra.mxu0 0.0
    %7167 = vmatprep.subr.mxu0 0.0
    %7168 = vmatpush1.msra.mxu0 %v7128
    %7169 = vmatprep.subr.mxu0 0.0
    %7170 = vmatpush1.msra.mxu0 %v7127
    %7171 = vmatprep.subr.mxu0 0.0
    %7172 = vmatpush1.msra.mxu0 %v7126
    %7173 = vmatprep.subr.mxu0 0.0
    %7174 = vmatpush1.msra.mxu0 %v7125
    %7175 = vmatprep.subr.mxu0 0.0
    %7176 = vmatpush2.msra.mxu0 0.0
    %7177 = vmatprep.subr.mxu0 0.0
    %7178 = vmatpush2.msra.mxu0 0.0
    %7179 = vmatprep.subr.mxu0 0.0
    %7180 = vmatpush2.msra.mxu0 0.0
    %7181 = vmatprep.subr.mxu0 0.0
    %7182 = vmatpush2.msra.mxu0 0.0
    %7183 = vmatprep.subr.mxu0 0.0
    %7184 = vmatpush2.msra.mxu0 0.0
    %7185 = vmatprep.subr.mxu0 0.0
    %7186 = vmatpush2.msra.mxu0 0.0
    %7187 = vmatprep.subr.mxu0 0.0
    %7188 = vmatpush2.msra.mxu0 0.0
    %7189 = vmatprep.subr.mxu0 0.0
    %7190 = vmatpush2.msra.mxu0 0.0
    %7191 = vmatprep.subr.mxu0 0.0
    %7192 = vmatpush2.msra.mxu0 0.0
    %7193 = vmatprep.subr.mxu0 0.0
    %7194 = vmatpush2.msra.mxu0 0.0
    %7195 = vmatprep.subr.mxu0 0.0
    %7196 = vmatpush2.msra.mxu0 0.0
    %7197 = vmatprep.subr.mxu0 0.0
    %7198 = vmatpush2.msra.mxu0 0.0
    %7199 = vmatprep.subr.mxu0 0.0
    %7200 = vmatpush2.msra.mxu0 0.0
    %7201 = vmatprep.subr.mxu0 0.0
    %7202 = vmatpush2.msra.mxu0 0.0
    %7203 = vmatprep.subr.mxu0 0.0
    %7204 = vmatpush2.msra.mxu0 0.0
    %7205 = vmatprep.subr.mxu0 0.0
    %7206 = vmatpush2.msra.mxu0 0.0
    %7207 = vmatprep.mubr.f32.mxu0 0.0
    %7208 = vmatmul.mubr.f32.gmra.mxu0 %v7138
    %v7209 = vpop.f32.mrf.mxu0
    %v7210 = vadd.f32 %v7135, %v7209
    %v7211 = vpop.f32.mrf.mxu0
    %7212 = vmatprep.mubr.f32.mxu0 0.0
    %7213 = vmatmul.mubr.f32.gmra.mxu0 %v7141
    %v7214 = vpop.f32.mrf.mxu0
    %v7215 = vadd.f32 %v7135, %v7214
    %v7216 = vpop.f32.mrf.mxu0
    %7217 = vdwg.mxu0
    %v7218 = vadd.f32 %v5672, %v7210
    %v7219 = vadd.f32 %v5673, %v7215
    %v7220 = vsel %vm3762, %v7218, 0.0
    %7221 = vadd.xlane.f32.xlu0 %v7220
    %v7222 = vpop.xlane.xlu0 %7221
    %v7223 = vsel %vm3762, %v7219, 0.0
    %7224 = vadd.xlane.f32.xlu0 %v7223
    %v7225 = vpop.xlane.xlu0 %7224
    %v7226 = vmul.f32 %v7222, %v5398
    %v7227 = vmul.f32 %v7225, %v5398
    %v7228 = vsub.f32 %v7218, %v7226
    %v7229 = vsub.f32 %v7219, %v7227
    %v7230 = vmul.f32 %v7228, %v7228
    %v7231 = vmul.f32 %v7229, %v7229
    %v7232 = vsel %vm3762, %v7230, 0.0
    %7233 = vadd.xlane.f32.xlu0 %v7232
    %v7234 = vpop.xlane.xlu0 %7233
    %v7235 = vsel %vm3762, %v7231, 0.0
    %7236 = vadd.xlane.f32.xlu0 %v7235
    %v7237 = vpop.xlane.xlu0 %7236
    %v7238 = vmul.f32 %v7234, %v5398
    %v7239 = vmul.f32 %v7237, %v5398
    %v7240 = vadd.f32 %v7238, 1e-05
    %v7241 = vadd.f32 %v7239, 1e-05
    %v7242 = vrsqrt.pop %v7240
    %v7243 = vrsqrt.pop %v7241
    %v7244 = vmul.f32 %v7228, %v7242
    %v7245 = vmul.f32 %v7229, %v7243
    %s7246 = scalar_lea.vmem %s20, 1
    %v7247 = vld [vmem:[%s7246] sm:$0x1]
    %v7249 = vlaneseq
    %v7250 = vshrl.u32 %v7249, 7
    %v7251 = vsub.s32 0, %v7250
    %v7252 = vrot.slane %v7247, %v7251
    %v7254 = vmul.f32 %v7244, %v7252
    %v7255 = vmul.f32 %v7245, %v7252
    %s7256 = scalar_lea.vmem %s21, 1
    %v7257 = vld [vmem:[%s7256] sm:$0x1]
    %v7259 = vlaneseq
    %v7260 = vshrl.u32 %v7259, 7
    %v7261 = vsub.s32 0, %v7260
    %v7262 = vrot.slane %v7257, %v7261
    %v7264 = vadd.f32 %v7254, %v7262
    %v7265 = vadd.f32 %v7255, %v7262
    %s7266 = scalar_lea.vmem %s16, 32
    %v7267 = vld [vmem:[%s7266] sm:$0xff]
    %v7268 = vld [vmem:[%s7266 + $0x8] sm:$0xff]
    %v7269 = vld [vmem:[%s7266 + $0x10] sm:$0xff]
    %v7270 = vld [vmem:[%s7266 + $0x18] sm:$0xff]
    %s7271 = scalar_lea.vmem %s17, 1
    %v7272 = vld [vmem:[%s7271] sm:$0x1]
    %v7274 = vlaneseq
    %v7275 = vshrl.u32 %v7274, 7
    %v7276 = vsub.s32 0, %v7275
    %v7277 = vrot.slane %v7272, %v7276
    %v7280 = vsel %vm3762, %v7264, 0
    %v7283 = vsel %vm3762, %v7265, 0
    %7285 = vmatprep.subr.mxu0 0.0
    %7286 = vmatpush1.msra.mxu0 0.0
    %7287 = vmatprep.subr.mxu0 0.0
    %7288 = vmatpush1.msra.mxu0 0.0
    %7289 = vmatprep.subr.mxu0 0.0
    %7290 = vmatpush1.msra.mxu0 0.0
    %7291 = vmatprep.subr.mxu0 0.0
    %7292 = vmatpush1.msra.mxu0 0.0
    %7293 = vmatprep.subr.mxu0 0.0
    %7294 = vmatpush1.msra.mxu0 0.0
    %7295 = vmatprep.subr.mxu0 0.0
    %7296 = vmatpush1.msra.mxu0 0.0
    %7297 = vmatprep.subr.mxu0 0.0
    %7298 = vmatpush1.msra.mxu0 0.0
    %7299 = vmatprep.subr.mxu0 0.0
    %7300 = vmatpush1.msra.mxu0 0.0
    %7301 = vmatprep.subr.mxu0 0.0
    %7302 = vmatpush1.msra.mxu0 0.0
    %7303 = vmatprep.subr.mxu0 0.0
    %7304 = vmatpush1.msra.mxu0 0.0
    %7305 = vmatprep.subr.mxu0 0.0
    %7306 = vmatpush1.msra.mxu0 0.0
    %7307 = vmatprep.subr.mxu0 0.0
    %7308 = vmatpush1.msra.mxu0 0.0
    %7309 = vmatprep.subr.mxu0 0.0
    %7310 = vmatpush1.msra.mxu0 %v7270
    %7311 = vmatprep.subr.mxu0 0.0
    %7312 = vmatpush1.msra.mxu0 %v7269
    %7313 = vmatprep.subr.mxu0 0.0
    %7314 = vmatpush1.msra.mxu0 %v7268
    %7315 = vmatprep.subr.mxu0 0.0
    %7316 = vmatpush1.msra.mxu0 %v7267
    %7317 = vmatprep.subr.mxu0 0.0
    %7318 = vmatpush2.msra.mxu0 0.0
    %7319 = vmatprep.subr.mxu0 0.0
    %7320 = vmatpush2.msra.mxu0 0.0
    %7321 = vmatprep.subr.mxu0 0.0
    %7322 = vmatpush2.msra.mxu0 0.0
    %7323 = vmatprep.subr.mxu0 0.0
    %7324 = vmatpush2.msra.mxu0 0.0
    %7325 = vmatprep.subr.mxu0 0.0
    %7326 = vmatpush2.msra.mxu0 0.0
    %7327 = vmatprep.subr.mxu0 0.0
    %7328 = vmatpush2.msra.mxu0 0.0
    %7329 = vmatprep.subr.mxu0 0.0
    %7330 = vmatpush2.msra.mxu0 0.0
    %7331 = vmatprep.subr.mxu0 0.0
    %7332 = vmatpush2.msra.mxu0 0.0
    %7333 = vmatprep.subr.mxu0 0.0
    %7334 = vmatpush2.msra.mxu0 0.0
    %7335 = vmatprep.subr.mxu0 0.0
    %7336 = vmatpush2.msra.mxu0 0.0
    %7337 = vmatprep.subr.mxu0 0.0
    %7338 = vmatpush2.msra.mxu0 0.0
    %7339 = vmatprep.subr.mxu0 0.0
    %7340 = vmatpush2.msra.mxu0 0.0
    %7341 = vmatprep.subr.mxu0 0.0
    %7342 = vmatpush2.msra.mxu0 0.0
    %7343 = vmatprep.subr.mxu0 0.0
    %7344 = vmatpush2.msra.mxu0 0.0
    %7345 = vmatprep.subr.mxu0 0.0
    %7346 = vmatpush2.msra.mxu0 0.0
    %7347 = vmatprep.subr.mxu0 0.0
    %7348 = vmatpush2.msra.mxu0 0.0
    %7349 = vmatprep.mubr.f32.mxu0 0.0
    %7350 = vmatmul.mubr.f32.gmra.mxu0 %v7280
    %v7351 = vpop.f32.mrf.mxu0
    %v7352 = vadd.f32 %v7277, %v7351
    %v7353 = vpop.f32.mrf.mxu0
    %7354 = vmatprep.mubr.f32.mxu0 0.0
    %7355 = vmatmul.mubr.f32.gmra.mxu0 %v7283
    %v7356 = vpop.f32.mrf.mxu0
    %v7357 = vadd.f32 %v7277, %v7356
    %v7358 = vpop.f32.mrf.mxu0
    %7359 = vdwg.mxu0
    %v7360 = vmax.f32 %v7352, 0.0
    %v7361 = vmax.f32 %v7357, 0.0
    %s7362 = scalar_lea.vmem %s18, 64
    %v7363 = vld [vmem:[%s7362] sm:$0xff]
    %v7364 = vld [vmem:[%s7362 + $0x8] sm:$0xff]
    %v7365 = vld [vmem:[%s7362 + $0x10] sm:$0xff]
    %v7366 = vld [vmem:[%s7362 + $0x18] sm:$0xff]
    %v7367 = vld [vmem:[%s7362 + $0x20] sm:$0xff]
    %v7368 = vld [vmem:[%s7362 + $0x28] sm:$0xff]
    %v7369 = vld [vmem:[%s7362 + $0x30] sm:$0xff]
    %v7370 = vld [vmem:[%s7362 + $0x38] sm:$0xff]
    %s7371 = scalar_lea.vmem %s19, 1
    %v7372 = vld [vmem:[%s7371] sm:$0x1]
    %v7374 = vlaneseq
    %v7375 = vshrl.u32 %v7374, 7
    %v7376 = vsub.s32 0, %v7375
    %v7377 = vrot.slane %v7372, %v7376
    %v7380 = vsel %vm5546, %v7360, 0
    %v7383 = vsel %vm5546, %v7361, 0
    %7385 = vmatprep.subr.mxu0 0.0
    %7386 = vmatpush1.msra.mxu0 0.0
    %7387 = vmatprep.subr.mxu0 0.0
    %7388 = vmatpush1.msra.mxu0 0.0
    %7389 = vmatprep.subr.mxu0 0.0
    %7390 = vmatpush1.msra.mxu0 0.0
    %7391 = vmatprep.subr.mxu0 0.0
    %7392 = vmatpush1.msra.mxu0 0.0
    %7393 = vmatprep.subr.mxu0 0.0
    %7394 = vmatpush1.msra.mxu0 0.0
    %7395 = vmatprep.subr.mxu0 0.0
    %7396 = vmatpush1.msra.mxu0 0.0
    %7397 = vmatprep.subr.mxu0 0.0
    %7398 = vmatpush1.msra.mxu0 0.0
    %7399 = vmatprep.subr.mxu0 0.0
    %7400 = vmatpush1.msra.mxu0 0.0
    %7401 = vmatprep.subr.mxu0 0.0
    %7402 = vmatpush1.msra.mxu0 %v7370
    %7403 = vmatprep.subr.mxu0 0.0
    %7404 = vmatpush1.msra.mxu0 %v7369
    %7405 = vmatprep.subr.mxu0 0.0
    %7406 = vmatpush1.msra.mxu0 %v7368
    %7407 = vmatprep.subr.mxu0 0.0
    %7408 = vmatpush1.msra.mxu0 %v7367
    %7409 = vmatprep.subr.mxu0 0.0
    %7410 = vmatpush1.msra.mxu0 %v7366
    %7411 = vmatprep.subr.mxu0 0.0
    %7412 = vmatpush1.msra.mxu0 %v7365
    %7413 = vmatprep.subr.mxu0 0.0
    %7414 = vmatpush1.msra.mxu0 %v7364
    %7415 = vmatprep.subr.mxu0 0.0
    %7416 = vmatpush1.msra.mxu0 %v7363
    %7417 = vmatprep.subr.mxu0 0.0
    %7418 = vmatpush2.msra.mxu0 0.0
    %7419 = vmatprep.subr.mxu0 0.0
    %7420 = vmatpush2.msra.mxu0 0.0
    %7421 = vmatprep.subr.mxu0 0.0
    %7422 = vmatpush2.msra.mxu0 0.0
    %7423 = vmatprep.subr.mxu0 0.0
    %7424 = vmatpush2.msra.mxu0 0.0
    %7425 = vmatprep.subr.mxu0 0.0
    %7426 = vmatpush2.msra.mxu0 0.0
    %7427 = vmatprep.subr.mxu0 0.0
    %7428 = vmatpush2.msra.mxu0 0.0
    %7429 = vmatprep.subr.mxu0 0.0
    %7430 = vmatpush2.msra.mxu0 0.0
    %7431 = vmatprep.subr.mxu0 0.0
    %7432 = vmatpush2.msra.mxu0 0.0
    %7433 = vmatprep.subr.mxu0 0.0
    %7434 = vmatpush2.msra.mxu0 0.0
    %7435 = vmatprep.subr.mxu0 0.0
    %7436 = vmatpush2.msra.mxu0 0.0
    %7437 = vmatprep.subr.mxu0 0.0
    %7438 = vmatpush2.msra.mxu0 0.0
    %7439 = vmatprep.subr.mxu0 0.0
    %7440 = vmatpush2.msra.mxu0 0.0
    %7441 = vmatprep.subr.mxu0 0.0
    %7442 = vmatpush2.msra.mxu0 0.0
    %7443 = vmatprep.subr.mxu0 0.0
    %7444 = vmatpush2.msra.mxu0 0.0
    %7445 = vmatprep.subr.mxu0 0.0
    %7446 = vmatpush2.msra.mxu0 0.0
    %7447 = vmatprep.subr.mxu0 0.0
    %7448 = vmatpush2.msra.mxu0 0.0
    %7449 = vmatprep.mubr.f32.mxu0 0.0
    %7450 = vmatmul.mubr.f32.gmra.mxu0 %v7380
    %v7451 = vpop.f32.mrf.mxu0
    %v7452 = vadd.f32 %v7377, %v7451
    %v7453 = vpop.f32.mrf.mxu0
    %7454 = vmatprep.mubr.f32.mxu0 0.0
    %7455 = vmatmul.mubr.f32.gmra.mxu0 %v7383
    %v7456 = vpop.f32.mrf.mxu0
    %v7457 = vadd.f32 %v7377, %v7456
    %v7458 = vpop.f32.mrf.mxu0
    %7459 = vdwg.mxu0
    %v7460 = vadd.f32 %v7264, %v7452
    %v7461 = vadd.f32 %v7265, %v7457
    %v7462 = vsel %vm3762, %v7460, 0.0
    %7463 = vadd.xlane.f32.xlu0 %v7462
    %v7464 = vpop.xlane.xlu0 %7463
    %v7465 = vsel %vm3762, %v7461, 0.0
    %7466 = vadd.xlane.f32.xlu0 %v7465
    %v7467 = vpop.xlane.xlu0 %7466
    %v7468 = vmul.f32 %v7464, %v5398
    %v7469 = vmul.f32 %v7467, %v5398
    %v7470 = vsub.f32 %v7460, %v7468
    %v7471 = vsub.f32 %v7461, %v7469
    %v7472 = vmul.f32 %v7470, %v7470
    %v7473 = vmul.f32 %v7471, %v7471
    %v7474 = vsel %vm3762, %v7472, 0.0
    %7475 = vadd.xlane.f32.xlu0 %v7474
    %v7476 = vpop.xlane.xlu0 %7475
    %v7477 = vsel %vm3762, %v7473, 0.0
    %7478 = vadd.xlane.f32.xlu0 %v7477
    %v7479 = vpop.xlane.xlu0 %7478
    %v7480 = vmul.f32 %v7476, %v5398
    %v7481 = vmul.f32 %v7479, %v5398
    %v7482 = vadd.f32 %v7480, 1e-05
    %v7483 = vadd.f32 %v7481, 1e-05
    %v7484 = vrsqrt.pop %v7482
    %v7485 = vrsqrt.pop %v7483
    %v7486 = vmul.f32 %v7470, %v7484
    %v7487 = vmul.f32 %v7471, %v7485
    %s7488 = scalar_lea.vmem %s22, 1
    %v7489 = vld [vmem:[%s7488] sm:$0x1]
    %v7491 = vlaneseq
    %v7492 = vshrl.u32 %v7491, 7
    %v7493 = vsub.s32 0, %v7492
    %v7494 = vrot.slane %v7489, %v7493
    %v7496 = vmul.f32 %v7486, %v7494
    %v7497 = vmul.f32 %v7487, %v7494
    %s7498 = scalar_lea.vmem %s23, 1
    %v7499 = vld [vmem:[%s7498] sm:$0x1]
    %v7501 = vlaneseq
    %v7502 = vshrl.u32 %v7501, 7
    %v7503 = vsub.s32 0, %v7502
    %v7504 = vrot.slane %v7499, %v7503
    %v7506 = vadd.f32 %v7496, %v7504
    %v7507 = vadd.f32 %v7497, %v7504
    %v7508 = vsel %vm3762, %v7506, 0.0
    %v7509 = vrot.slane %v7508, 4
    %v7510 = vadd.f32 %v7508, %v7509
    %v7511 = vrot.slane %v7510, 2
    %v7512 = vadd.f32 %v7510, %v7511
    %v7513 = vrot.slane %v7512, 1
    %v7514 = vadd.f32 %v7512, %v7513
    %v7515 = vsel %vm3762, %v7507, 0.0
    %v7516 = vrot.slane %v7515, 4
    %v7517 = vadd.f32 %v7515, %v7516
    %v7518 = vrot.slane %v7517, 2
    %v7519 = vadd.f32 %v7517, %v7518
    %v7520 = vrot.slane %v7519, 1
    %v7521 = vadd.f32 %v7519, %v7520
    %v7522 = vrcp.pop 8.0
    %v7523 = vmul.f32 %v7514, %v7522
    %v7524 = vmul.f32 %v7521, %v7522
    %v7525 = vld [vmem:[%s24] sm:$0xff]
    %v7526 = vld [vmem:[%s24 + $0x8] sm:$0xff]
    %v7527 = vld [vmem:[%s24 + $0x10] sm:$0xff]
    %v7528 = vld [vmem:[%s24 + $0x18] sm:$0xff]
    %v7529 = vld [vmem:[%s25] sm:$0x1]
    %v7531 = vlaneseq
    %v7532 = vshrl.u32 %v7531, 7
    %v7533 = vsub.s32 0, %v7532
    %v7534 = vrot.slane %v7529, %v7533
    %vm7538 = vcmask 1041409
    %v7539 = vsel %vm7538, %v7524, %v7523
    %v7540 = vsel %vm3762, %v7539, 0
    %7542 = vmatprep.subr.mxu0 0.0
    %7543 = vmatpush1.msra.mxu0 0.0
    %7544 = vmatprep.subr.mxu0 0.0
    %7545 = vmatpush1.msra.mxu0 0.0
    %7546 = vmatprep.subr.mxu0 0.0
    %7547 = vmatpush1.msra.mxu0 0.0
    %7548 = vmatprep.subr.mxu0 0.0
    %7549 = vmatpush1.msra.mxu0 0.0
    %7550 = vmatprep.subr.mxu0 0.0
    %7551 = vmatpush1.msra.mxu0 0.0
    %7552 = vmatprep.subr.mxu0 0.0
    %7553 = vmatpush1.msra.mxu0 0.0
    %7554 = vmatprep.subr.mxu0 0.0
    %7555 = vmatpush1.msra.mxu0 0.0
    %7556 = vmatprep.subr.mxu0 0.0
    %7557 = vmatpush1.msra.mxu0 0.0
    %7558 = vmatprep.subr.mxu0 0.0
    %7559 = vmatpush1.msra.mxu0 0.0
    %7560 = vmatprep.subr.mxu0 0.0
    %7561 = vmatpush1.msra.mxu0 0.0
    %7562 = vmatprep.subr.mxu0 0.0
    %7563 = vmatpush1.msra.mxu0 0.0
    %7564 = vmatprep.subr.mxu0 0.0
    %7565 = vmatpush1.msra.mxu0 0.0
    %7566 = vmatprep.subr.mxu0 0.0
    %7567 = vmatpush1.msra.mxu0 %v7528
    %7568 = vmatprep.subr.mxu0 0.0
    %7569 = vmatpush1.msra.mxu0 %v7527
    %7570 = vmatprep.subr.mxu0 0.0
    %7571 = vmatpush1.msra.mxu0 %v7526
    %7572 = vmatprep.subr.mxu0 0.0
    %7573 = vmatpush1.msra.mxu0 %v7525
    %7574 = vmatprep.subr.mxu0 0.0
    %7575 = vmatpush2.msra.mxu0 0.0
    %7576 = vmatprep.subr.mxu0 0.0
    %7577 = vmatpush2.msra.mxu0 0.0
    %7578 = vmatprep.subr.mxu0 0.0
    %7579 = vmatpush2.msra.mxu0 0.0
    %7580 = vmatprep.subr.mxu0 0.0
    %7581 = vmatpush2.msra.mxu0 0.0
    %7582 = vmatprep.subr.mxu0 0.0
    %7583 = vmatpush2.msra.mxu0 0.0
    %7584 = vmatprep.subr.mxu0 0.0
    %7585 = vmatpush2.msra.mxu0 0.0
    %7586 = vmatprep.subr.mxu0 0.0
    %7587 = vmatpush2.msra.mxu0 0.0
    %7588 = vmatprep.subr.mxu0 0.0
    %7589 = vmatpush2.msra.mxu0 0.0
    %7590 = vmatprep.subr.mxu0 0.0
    %7591 = vmatpush2.msra.mxu0 0.0
    %7592 = vmatprep.subr.mxu0 0.0
    %7593 = vmatpush2.msra.mxu0 0.0
    %7594 = vmatprep.subr.mxu0 0.0
    %7595 = vmatpush2.msra.mxu0 0.0
    %7596 = vmatprep.subr.mxu0 0.0
    %7597 = vmatpush2.msra.mxu0 0.0
    %7598 = vmatprep.subr.mxu0 0.0
    %7599 = vmatpush2.msra.mxu0 0.0
    %7600 = vmatprep.subr.mxu0 0.0
    %7601 = vmatpush2.msra.mxu0 0.0
    %7602 = vmatprep.subr.mxu0 0.0
    %7603 = vmatpush2.msra.mxu0 0.0
    %7604 = vmatprep.subr.mxu0 0.0
    %7605 = vmatpush2.msra.mxu0 0.0
    %7606 = vmatprep.mubr.f32.mxu0 0.0
    %7607 = vmatmul.mubr.f32.gmra.mxu0 %v7540
    %v7608 = vpop.f32.mrf.mxu0
    %v7609 = vadd.f32 %v7534, %v7608
    %v7610 = vpop.f32.mrf.mxu0
    %7611 = vdwg.mxu0
    %vm7612 = vcmask 9216
    %7613 = vst.msk [vmem:[#allocation5] sm:$0x3] %vm7612, %v7609
    // Predicated region
    $region110: #{tpu_custom_call.1} parent=1 // pred_check
      _
    $region111: #{tpu_custom_call.1} parent=1 // pred_check_branch
      %7615 = sbr.rel (0) target = $region113
    $region112: #{tpu_custom_call.1} parent=1 // pred_region
      %s7617 = ssub.s32 32, 32
      %7618 = vsyncadd [#allocation4], %s7617
      %s7620 = sshll.u32 [#allocation5], 4
      %s7621 = int_to_ptr.vmem [resolvable:$true] %s7620
      %7623 = dma.vmem_to_hbm [thread:$0]  %s7621, 32, %s26, [#allocation4]
    $region113: #{tpu_custom_call.1} parent=1 // pred_fallthru
      _
    // Predicated region
    $region114: #{tpu_custom_call.1} parent=1 // pred_check
      _
    $region115: #{tpu_custom_call.1} parent=1 // pred_check_branch
      %7625 = sbr.rel (0) target = $region117
    $region116: #{tpu_custom_call.1} parent=1 // pred_region
      %7626 = dma.done [#allocation4], 32
    $region117: #{tpu_custom_call.1} parent=1 // pred_fallthru
      _
    %7627 = vsyncpa [#allocation3], 1
    %7628 = vsyncpa [#allocation4], 1

</llo_original>
